<compile_context>
chip_gen: v6e
topology: v6e:2x2x1
jax: 0.10.0
libtpu: 0.0.40
codegen_flags: <defaults>
</compile_context>

<pallas_src>
import functools

import jax
import jax.numpy as jnp
from jax.experimental import pallas as pl
from jax.experimental.pallas import tpu as pltpu

_EPS = 1e-5
_LANES = 128


def conv2d_size_out(size, kernel_size=5, stride=2):
    return (size - (kernel_size - 1) - 1) // stride + 1


def _row_chunks(m, max_chunk=128):
    chunks, s = [], 0
    while s < m:
        c = min(max_chunk, m - s)
        chunks.append((s, c))
        s += c
    return tuple(chunks)


def _bn_scale_shift(s1, s2, m, gamma, beta, eps):
    # Training-mode BatchNorm: batch mean / biased variance over the matmul rows.
    mean = s1 * (1.0 / m)
    var = jnp.maximum(s2 * (1.0 / m) - mean * mean, 0.0)
    scale = jax.lax.rsqrt(var + eps) * gamma
    shift = beta - mean * scale
    return scale, shift


# --------------------------------------------------------------------------------------
# Kernel A: conv1 = im2col-matmul + BatchNorm + ReLU (chunked, single-pass statistics).
# --------------------------------------------------------------------------------------
def _conv_bn_relu_kernel(x_ref, w_ref, aux_ref, o_ref, *, chunks, eps):
    """o = relu(batchnorm(x @ w + b)).

    x:[M,Kp] bf16, w:[Kp,128] bf16, o:[M,128] bf16.
    aux rows: 0=bias, 1=gamma, 2=beta (padded to 128 lanes; padded channels are zero so
    they stay exactly zero through BN/ReLU).
    Pass 1 computes per-chunk matmul + accumulates sum / sum-of-squares and stages the
    raw pre-BN rows in o_ref (VMEM); pass 2 normalizes in place.
    """
    bias = aux_ref[0:1, :]
    gamma = aux_ref[1:2, :]
    beta = aux_ref[2:3, :]
    m_total = sum(c for _, c in chunks)

    s1 = jnp.zeros((1, _LANES), jnp.float32)
    s2 = jnp.zeros((1, _LANES), jnp.float32)
    for (s, c) in chunks:
        y = jnp.dot(x_ref[s:s + c, :], w_ref[...],
                    preferred_element_type=jnp.float32) + bias
        s1 = s1 + jnp.sum(y, axis=0, keepdims=True)
        s2 = s2 + jnp.sum(y * y, axis=0, keepdims=True)
        o_ref[s:s + c, :] = y.astype(o_ref.dtype)

    scale, shift = _bn_scale_shift(s1, s2, m_total, gamma, beta, eps)

    for (s, c) in chunks:
        y = o_ref[s:s + c, :].astype(jnp.float32)
        o_ref[s:s + c, :] = jnp.maximum(y * scale + shift, 0.0).astype(o_ref.dtype)


def conv_bn_relu(x2d, w, aux):
    m, kp = x2d.shape
    kp2, c = w.shape
    assert kp == kp2 and c == _LANES
    chunks = _row_chunks(m)
    kernel = functools.partial(_conv_bn_relu_kernel, chunks=chunks, eps=_EPS)
    flops = 2 * m * kp * c + 8 * m * c
    bytes_accessed = x2d.size * 2 + w.size * 2 + aux.size * 4 + 2 * m * c * 2
    return pl.pallas_call(
        kernel,
        out_shape=jax.ShapeDtypeStruct((m, c), jnp.bfloat16),
        grid=(1,),
        in_specs=[
            pl.BlockSpec((m, kp), lambda i: (0, 0)),
            pl.BlockSpec((kp, c), lambda i: (0, 0)),
            pl.BlockSpec((8, _LANES), lambda i: (0, 0)),
        ],
        out_specs=pl.BlockSpec((m, c), lambda i: (0, 0)),
        compiler_params=pltpu.CompilerParams(dimension_semantics=("arbitrary",)),
        cost_estimate=pl.CostEstimate(flops=flops, transcendentals=c,
                                      bytes_accessed=bytes_accessed),
    )(x2d, w, aux)


# --------------------------------------------------------------------------------------
# Kernel B: conv2 + conv3 + Linear head, fully fused (conv3 patches gathered in-kernel).
# --------------------------------------------------------------------------------------
def _tail_kernel(p2_ref, w2_ref, t_ref, w3_ref, wh_ref, aux_ref, o_ref, *,
                 batch, pos, cin3, taps, eps):
    """p2:[M2,K2p] bf16 im2col patches of conv2; w2:[K2p,128] bf16.
    t  :[taps*M3, M2] bf16 0/1 row-selection (conv3 patch gather), M3 = batch*pos.
    w3 :[taps, cin3, 128] bf16 per-tap conv3 weights; wh:[pos,128,128] bf16 head weights.
    aux rows: 0..2 conv2 (bias,gamma,beta), 3..5 conv3, 6 head bias.
    o  :[batch, n_actions] f32.
    """
    m2 = p2_ref.shape[0]
    m3 = batch * pos

    # ---- conv2: matmul + BN + ReLU -----------------------------------------------
    y2 = jnp.dot(p2_ref[...], w2_ref[...], preferred_element_type=jnp.float32)
    y2 = y2 + aux_ref[0:1, :]
    s1 = jnp.sum(y2, axis=0, keepdims=True)
    s2 = jnp.sum(y2 * y2, axis=0, keepdims=True)
    scale, shift = _bn_scale_shift(s1, s2, m2, aux_ref[1:2, :], aux_ref[2:3, :], eps)
    a2 = jnp.maximum(y2 * scale + shift, 0.0).astype(jnp.bfloat16)        # [M2, 128]

    # ---- conv3: gather the 25 patch rows per output position with one selection
    # ---- matmul, then accumulate per-tap matmuls; BN + ReLU ------------------------
    p3 = jnp.dot(t_ref[...], a2, preferred_element_type=jnp.float32)       # [taps*M3,128]
    y3 = jnp.zeros((m3, _LANES), jnp.float32)
    for t in range(taps):
        lhs = p3[t * m3:(t + 1) * m3, :cin3].astype(jnp.bfloat16)          # [M3, cin3]
        y3 = y3 + jnp.dot(lhs, w3_ref[t], preferred_element_type=jnp.float32)
    y3 = y3 + aux_ref[3:4, :]
    s1 = jnp.sum(y3, axis=0, keepdims=True)
    s2 = jnp.sum(y3 * y3, axis=0, keepdims=True)
    scale, shift = _bn_scale_shift(s1, s2, m3, aux_ref[4:5, :], aux_ref[5:6, :], eps)
    a3 = jnp.maximum(y3 * scale + shift, 0.0)                              # [M3, 128] f32

    # ---- head: PyTorch (C,H,W) flatten already folded into wh's layout -------------
    hb = aux_ref[6:7, :]
    n_out = o_ref.shape[1]
    for n in range(batch):
        acc = jnp.zeros((1, _LANES), jnp.float32)
        for p in range(pos):
            row = a3[n * pos + p:n * pos + p + 1, :].astype(jnp.bfloat16)
            acc = acc + jnp.dot(row, wh_ref[p], preferred_element_type=jnp.float32)
        o_ref[n:n + 1, :] = (acc + hb)[:, :n_out]


def tail_forward(p2, w2, t_sel, w3, wh, aux, *, batch, pos, n_actions):
    m2, k2p = p2.shape
    taps, cin3, _ = w3.shape
    m3 = batch * pos
    kernel = functools.partial(_tail_kernel, batch=batch, pos=pos, cin3=cin3,
                               taps=taps, eps=_EPS)
    flops = 2 * (m2 * k2p * _LANES + taps * m3 * m2 * _LANES
                 + taps * m3 * cin3 * _LANES + batch * pos * _LANES * _LANES)
    bytes_accessed = ((p2.size + w2.size + t_sel.size + w3.size + wh.size) * 2
                      + aux.size * 4 + batch * n_actions * 4)
    return pl.pallas_call(
        kernel,
        out_shape=jax.ShapeDtypeStruct((batch, n_actions), jnp.float32),
        grid=(1,),
        in_specs=[
            pl.BlockSpec((m2, k2p), lambda i: (0, 0)),
            pl.BlockSpec(w2.shape, lambda i: (0, 0)),
            pl.BlockSpec(t_sel.shape, lambda i: (0, 0)),
            pl.BlockSpec(w3.shape, lambda i: (0, 0, 0)),
            pl.BlockSpec(wh.shape, lambda i: (0, 0, 0)),
            pl.BlockSpec(aux.shape, lambda i: (0, 0)),
        ],
        out_specs=pl.BlockSpec((batch, n_actions), lambda i: (0, 0)),
        compiler_params=pltpu.CompilerParams(dimension_semantics=("arbitrary",)),
        cost_estimate=pl.CostEstimate(flops=flops, transcendentals=2 * _LANES,
                                      bytes_accessed=bytes_accessed),
    )(p2, w2, t_sel, w3, wh, aux)


# --------------------------------------------------------------------------------------
# JAX-side glue (im2col on HBM-resident activations) and parameter packing.
# --------------------------------------------------------------------------------------
def _im2col(x_nhwc, k=5, s=2):
    """k x k patches, stride s, no padding.  Column order = (kh, kw, Cin)."""
    N, H, W, C = x_nhwc.shape
    Ho = conv2d_size_out(H, k, s)
    Wo = conv2d_size_out(W, k, s)
    cols = []
    for i in range(k):
        for j in range(k):
            cols.append(x_nhwc[:, i:i + s * (Ho - 1) + 1:s, j:j + s * (Wo - 1) + 1:s, :])
    p = jnp.stack(cols, axis=3)                    # [N, Ho, Wo, k*k, C]
    return p.reshape(N * Ho * Wo, k * k * C), N, Ho, Wo


def _pad_cols(x, target):
    pad = target - x.shape[1]
    return x if pad == 0 else jnp.pad(x, ((0, 0), (0, pad)))


def _pad_to(x, shape):
    return jnp.pad(x, [(0, t - s) for s, t in zip(x.shape, shape)])


def init_dqn_params(key, h, w, outputs, batch):
    """Synthetic parameters matching DQN.__init__ shapes, pre-packed into the padded /
    bf16 layouts the Pallas kernels consume."""
    specs = [(3, 16), (16, 32), (32, 32)]
    raw = []
    for (cin, cout) in specs:
        key, k1, k2, k3, k4 = jax.random.split(key, 5)
        fan_in = cin * 25
        wgt = jax.random.normal(k1, (5, 5, cin, cout), jnp.float32) / jnp.sqrt(fan_in)
        b = 0.1 * jax.random.normal(k2, (cout,), jnp.float32)
        gamma = 1.0 + 0.1 * jax.random.normal(k3, (cout,), jnp.float32)
        beta = 0.1 * jax.random.normal(k4, (cout,), jnp.float32)
        raw.append((wgt, b, gamma, beta))

    def aux_rows(rows):
        out = jnp.zeros((8, _LANES), jnp.float32)
        for r, v in enumerate(rows):
            out = out.at[r, :v.shape[0]].set(v)
        return out

    h1, w1o = conv2d_size_out(h), conv2d_size_out(w)
    h2, w2o = conv2d_size_out(h1), conv2d_size_out(w1o)
    h3, w3o = conv2d_size_out(h2), conv2d_size_out(w2o)
    pos = h3 * w3o
    lin_in = pos * 32
    key, k1, k2 = jax.random.split(key, 3)
    head_w = jax.random.normal(k1, (lin_in, outputs), jnp.float32) / jnp.sqrt(lin_in)
    head_b = 0.1 * jax.random.normal(k2, (outputs,), jnp.float32)

    params = {}
    # conv1: (kh,kw,cin) flatten -> [75,16] -> K and Cout padded -> [128,128] bf16.
    w1, b1, g1, be1 = raw[0]
    k1p = -(-25 * 3 // _LANES) * _LANES
    params["w1"] = _pad_to(w1.reshape(25 * 3, 16), (k1p, _LANES)).astype(jnp.bfloat16)
    params["aux1"] = aux_rows([b1, g1, be1])
    # conv2: [400,32] -> [512,128] bf16.
    w2, b2, g2, be2 = raw[1]
    k2p = -(-25 * 16 // _LANES) * _LANES
    params["w2"] = _pad_to(w2.reshape(25 * 16, 32), (k2p, _LANES)).astype(jnp.bfloat16)
    # conv3: per-tap weights [25, 32, 128] bf16.
    w3, b3, g3, be3 = raw[2]
    params["w3"] = _pad_to(w3.reshape(25, 32, 32), (25, 32, _LANES)).astype(jnp.bfloat16)
    params["aux2"] = aux_rows([b2, g2, be2, b3, g3, be3, head_b])
    # conv3 patch-gather: one-hot rows picking a2 rows, ordered (tap, n, ho, wo).
    idx = []
    for kh in range(5):
        for kw in range(5):
            for n in range(batch):
                for ho in range(h3):
                    for wo in range(w3o):
                        idx.append(n * h2 * w2o + (2 * ho + kh) * w2o + (2 * wo + kw))
    params["t_sel"] = jax.nn.one_hot(jnp.array(idx, jnp.int32), batch * h2 * w2o,
                                     dtype=jnp.bfloat16)
    # head: fold PyTorch's (C,H,W) flatten: wh[p, c, o] = head_w[c*pos + p, o].
    wh = head_w.reshape(32, pos, outputs).transpose(1, 0, 2)
    params["wh"] = _pad_to(wh, (pos, _LANES, _LANES)).astype(jnp.bfloat16)
    return params


def dqn_forward(params, x_nchw, n_actions):
    batch = x_nchw.shape[0]
    x = jnp.transpose(x_nchw, (0, 2, 3, 1)).astype(jnp.float32)        # NCHW -> NHWC
    # conv1 (kernel A): im2col on the raw input, fused matmul+BN+ReLU in Pallas.
    p1, n, h1, w1o = _im2col(x)
    p1 = _pad_cols(p1, params["w1"].shape[0]).astype(jnp.bfloat16)
    a1 = conv_bn_relu(p1, params["w1"], params["aux1"])                # [n*h1*w1o, 128]
    # conv2 patches: keep the 16 real channels, pad K to the packed weight's K.
    a1 = a1.reshape(n, h1, w1o, _LANES)[..., :16]
    p2, _, h2, w2o = _im2col(a1)
    p2 = _pad_cols(p2, params["w2"].shape[0])
    # conv2 + conv3 + head fully fused on-chip (kernel B).
    h3, w3o = conv2d_size_out(h2), conv2d_size_out(w2o)
    return tail_forward(p2, params["w2"], params["t_sel"], params["w3"], params["wh"],
                        params["aux2"], batch=batch, pos=h3 * w3o, n_actions=n_actions)


if __name__ == "__main__":
    key = jax.random.PRNGKey(0)
    kp, kx = jax.random.split(key)
    # h = w = 40 -> spatial 18 -> 7 -> 2, linear_input_size = 2*2*32 = 128, batch = 2.
    h, w, n_actions, batch = 40, 40, 4, 2
    params = init_dqn_params(kp, h, w, n_actions, batch)
    x = jax.random.normal(kx, (batch, 3, h, w), jnp.float32)           # NCHW like PyTorch
    fwd = jax.jit(dqn_forward, static_argnums=(2,))
    out = fwd(params, x, n_actions)
    jax.block_until_ready(out)
    assert out.shape == (batch, n_actions)
    assert out.dtype == jnp.float32
    print("KERNEL_OK")
</pallas_src>

<mosaic_0001>
module attributes {stable_mosaic.version = 11 : i64} {
  func.func @_conv_bn_relu_kernel(%arg0: i32, %arg1: memref<648x128xbf16, #tpu.memory_space<vmem>>, %arg2: memref<128x128xbf16, #tpu.memory_space<vmem>>, %arg3: memref<8x128xf32, #tpu.memory_space<vmem>>, %arg4: memref<648x128xbf16, #tpu.memory_space<vmem>>) attributes {dimension_semantics = [#tpu.dimension_semantics<arbitrary>], iteration_bounds = array<i64: 1>, scalar_prefetch = 0 : i64, scratch_operands = 0 : i64, tpu.core_type = #tpu.core_type<tc>, window_params = [{pipeline_mode = #tpu.pipeline_mode<synchronous>, transform_indices = @transform_0, window_bounds = array<i64: 648, 128>}, {pipeline_mode = #tpu.pipeline_mode<synchronous>, transform_indices = @transform_1, window_bounds = array<i64: 128, 128>}, {pipeline_mode = #tpu.pipeline_mode<synchronous>, transform_indices = @transform_2, window_bounds = array<i64: 8, 128>}, {pipeline_mode = #tpu.pipeline_mode<synchronous>, transform_indices = @transform_3, window_bounds = array<i64: 648, 128>}]} {
    %c0 = arith.constant 0 : index
    %c0_0 = arith.constant 0 : index
    %0 = vector.load %arg3[%c0, %c0_0] : memref<8x128xf32, #tpu.memory_space<vmem>>, vector<1x128xf32>
    %c1 = arith.constant 1 : index
    %c0_1 = arith.constant 0 : index
    %1 = vector.load %arg3[%c1, %c0_1] : memref<8x128xf32, #tpu.memory_space<vmem>>, vector<1x128xf32>
    %c2 = arith.constant 2 : index
    %c0_2 = arith.constant 0 : index
    %2 = vector.load %arg3[%c2, %c0_2] : memref<8x128xf32, #tpu.memory_space<vmem>>, vector<1x128xf32>
    %cst = arith.constant 0.000000e+00 : f32
    %3 = vector.broadcast %cst : f32 to vector<1x128xf32>
    %cst_3 = arith.constant 0.000000e+00 : f32
    %4 = vector.broadcast %cst_3 : f32 to vector<1x128xf32>
    %c0_4 = arith.constant 0 : index
    %c0_5 = arith.constant 0 : index
    %5 = vector.load %arg1[%c0_4, %c0_5] : memref<648x128xbf16, #tpu.memory_space<vmem>>, vector<128x128xbf16>
    %c0_6 = arith.constant 0 : index
    %c0_7 = arith.constant 0 : index
    %6 = vector.load %arg2[%c0_6, %c0_7] : memref<128x128xbf16, #tpu.memory_space<vmem>>, vector<128x128xbf16>
    %cst_8 = arith.constant dense<0.000000e+00> : vector<128x128xf32>
    %7 = tpu.matmul %5, %6, %cst_8 {dimension_numbers = #tpu.dot_dimension_numbers<[1], [0], [0], [1], [0, 0, 1, 1], [], []>} : vector<128x128xbf16>, vector<128x128xbf16>, vector<128x128xf32> -> vector<128x128xf32>
    %8 = vector.broadcast %0 : vector<1x128xf32> to vector<128x128xf32>
    %9 = arith.addf %7, %8 : vector<128x128xf32>
    %cst_9 = arith.constant dense<0.000000e+00> : vector<128xf32>
    %10 = vector.multi_reduction <add>, %9, %cst_9 [0] : vector<128x128xf32> to vector<128xf32>
    %11 = vector.shape_cast %10 : vector<128xf32> to vector<1x128xf32>
    %12 = arith.addf %3, %11 : vector<1x128xf32>
    %13 = arith.mulf %9, %9 : vector<128x128xf32>
    %cst_10 = arith.constant dense<0.000000e+00> : vector<128xf32>
    %14 = vector.multi_reduction <add>, %13, %cst_10 [0] : vector<128x128xf32> to vector<128xf32>
    %15 = vector.shape_cast %14 : vector<128xf32> to vector<1x128xf32>
    %16 = arith.addf %4, %15 : vector<1x128xf32>
    %17 = arith.truncf %9 : vector<128x128xf32> to vector<128x128xbf16>
    %c0_11 = arith.constant 0 : index
    %c0_12 = arith.constant 0 : index
    %18 = vector.load %arg4[%c0_11, %c0_12] : memref<648x128xbf16, #tpu.memory_space<vmem>>, vector<128x128xbf16>
    tpu.vector_store %arg4[%c0_11, %c0_12], %17 {strides = array<i32>} : memref<648x128xbf16, #tpu.memory_space<vmem>>, vector<128x128xbf16>,
    %c128 = arith.constant 128 : index
    %c0_13 = arith.constant 0 : index
    %19 = vector.load %arg1[%c128, %c0_13] : memref<648x128xbf16, #tpu.memory_space<vmem>>, vector<128x128xbf16>
    %c0_14 = arith.constant 0 : index
    %c0_15 = arith.constant 0 : index
    %20 = vector.load %arg2[%c0_14, %c0_15] : memref<128x128xbf16, #tpu.memory_space<vmem>>, vector<128x128xbf16>
    %cst_16 = arith.constant dense<0.000000e+00> : vector<128x128xf32>
    %21 = tpu.matmul %19, %20, %cst_16 {dimension_numbers = #tpu.dot_dimension_numbers<[1], [0], [0], [1], [0, 0, 1, 1], [], []>} : vector<128x128xbf16>, vector<128x128xbf16>, vector<128x128xf32> -> vector<128x128xf32>
    %22 = vector.broadcast %0 : vector<1x128xf32> to vector<128x128xf32>
    %23 = arith.addf %21, %22 : vector<128x128xf32>
    %cst_17 = arith.constant dense<0.000000e+00> : vector<128xf32>
    %24 = vector.multi_reduction <add>, %23, %cst_17 [0] : vector<128x128xf32> to vector<128xf32>
    %25 = vector.shape_cast %24 : vector<128xf32> to vector<1x128xf32>
    %26 = arith.addf %12, %25 : vector<1x128xf32>
    %27 = arith.mulf %23, %23 : vector<128x128xf32>
    %cst_18 = arith.constant dense<0.000000e+00> : vector<128xf32>
    %28 = vector.multi_reduction <add>, %27, %cst_18 [0] : vector<128x128xf32> to vector<128xf32>
    %29 = vector.shape_cast %28 : vector<128xf32> to vector<1x128xf32>
    %30 = arith.addf %16, %29 : vector<1x128xf32>
    %31 = arith.truncf %23 : vector<128x128xf32> to vector<128x128xbf16>
    %c128_19 = arith.constant 128 : index
    %c0_20 = arith.constant 0 : index
    %32 = vector.load %arg4[%c128_19, %c0_20] : memref<648x128xbf16, #tpu.memory_space<vmem>>, vector<128x128xbf16>
    tpu.vector_store %arg4[%c128_19, %c0_20], %31 {strides = array<i32>} : memref<648x128xbf16, #tpu.memory_space<vmem>>, vector<128x128xbf16>,
    %c256 = arith.constant 256 : index
    %c0_21 = arith.constant 0 : index
    %33 = vector.load %arg1[%c256, %c0_21] : memref<648x128xbf16, #tpu.memory_space<vmem>>, vector<128x128xbf16>
    %c0_22 = arith.constant 0 : index
    %c0_23 = arith.constant 0 : index
    %34 = vector.load %arg2[%c0_22, %c0_23] : memref<128x128xbf16, #tpu.memory_space<vmem>>, vector<128x128xbf16>
    %cst_24 = arith.constant dense<0.000000e+00> : vector<128x128xf32>
    %35 = tpu.matmul %33, %34, %cst_24 {dimension_numbers = #tpu.dot_dimension_numbers<[1], [0], [0], [1], [0, 0, 1, 1], [], []>} : vector<128x128xbf16>, vector<128x128xbf16>, vector<128x128xf32> -> vector<128x128xf32>
    %36 = vector.broadcast %0 : vector<1x128xf32> to vector<128x128xf32>
    %37 = arith.addf %35, %36 : vector<128x128xf32>
    %cst_25 = arith.constant dense<0.000000e+00> : vector<128xf32>
    %38 = vector.multi_reduction <add>, %37, %cst_25 [0] : vector<128x128xf32> to vector<128xf32>
    %39 = vector.shape_cast %38 : vector<128xf32> to vector<1x128xf32>
    %40 = arith.addf %26, %39 : vector<1x128xf32>
    %41 = arith.mulf %37, %37 : vector<128x128xf32>
    %cst_26 = arith.constant dense<0.000000e+00> : vector<128xf32>
    %42 = vector.multi_reduction <add>, %41, %cst_26 [0] : vector<128x128xf32> to vector<128xf32>
    %43 = vector.shape_cast %42 : vector<128xf32> to vector<1x128xf32>
    %44 = arith.addf %30, %43 : vector<1x128xf32>
    %45 = arith.truncf %37 : vector<128x128xf32> to vector<128x128xbf16>
    %c256_27 = arith.constant 256 : index
    %c0_28 = arith.constant 0 : index
    %46 = vector.load %arg4[%c256_27, %c0_28] : memref<648x128xbf16, #tpu.memory_space<vmem>>, vector<128x128xbf16>
    tpu.vector_store %arg4[%c256_27, %c0_28], %45 {strides = array<i32>} : memref<648x128xbf16, #tpu.memory_space<vmem>>, vector<128x128xbf16>,
    %c384 = arith.constant 384 : index
    %c0_29 = arith.constant 0 : index
    %47 = vector.load %arg1[%c384, %c0_29] : memref<648x128xbf16, #tpu.memory_space<vmem>>, vector<128x128xbf16>
    %c0_30 = arith.constant 0 : index
    %c0_31 = arith.constant 0 : index
    %48 = vector.load %arg2[%c0_30, %c0_31] : memref<128x128xbf16, #tpu.memory_space<vmem>>, vector<128x128xbf16>
    %cst_32 = arith.constant dense<0.000000e+00> : vector<128x128xf32>
    %49 = tpu.matmul %47, %48, %cst_32 {dimension_numbers = #tpu.dot_dimension_numbers<[1], [0], [0], [1], [0, 0, 1, 1], [], []>} : vector<128x128xbf16>, vector<128x128xbf16>, vector<128x128xf32> -> vector<128x128xf32>
    %50 = vector.broadcast %0 : vector<1x128xf32> to vector<128x128xf32>
    %51 = arith.addf %49, %50 : vector<128x128xf32>
    %cst_33 = arith.constant dense<0.000000e+00> : vector<128xf32>
    %52 = vector.multi_reduction <add>, %51, %cst_33 [0] : vector<128x128xf32> to vector<128xf32>
    %53 = vector.shape_cast %52 : vector<128xf32> to vector<1x128xf32>
    %54 = arith.addf %40, %53 : vector<1x128xf32>
    %55 = arith.mulf %51, %51 : vector<128x128xf32>
    %cst_34 = arith.constant dense<0.000000e+00> : vector<128xf32>
    %56 = vector.multi_reduction <add>, %55, %cst_34 [0] : vector<128x128xf32> to vector<128xf32>
    %57 = vector.shape_cast %56 : vector<128xf32> to vector<1x128xf32>
    %58 = arith.addf %44, %57 : vector<1x128xf32>
    %59 = arith.truncf %51 : vector<128x128xf32> to vector<128x128xbf16>
    %c384_35 = arith.constant 384 : index
    %c0_36 = arith.constant 0 : index
    %60 = vector.load %arg4[%c384_35, %c0_36] : memref<648x128xbf16, #tpu.memory_space<vmem>>, vector<128x128xbf16>
    tpu.vector_store %arg4[%c384_35, %c0_36], %59 {strides = array<i32>} : memref<648x128xbf16, #tpu.memory_space<vmem>>, vector<128x128xbf16>,
    %c512 = arith.constant 512 : index
    %c0_37 = arith.constant 0 : index
    %61 = vector.load %arg1[%c512, %c0_37] : memref<648x128xbf16, #tpu.memory_space<vmem>>, vector<128x128xbf16>
    %c0_38 = arith.constant 0 : index
    %c0_39 = arith.constant 0 : index
    %62 = vector.load %arg2[%c0_38, %c0_39] : memref<128x128xbf16, #tpu.memory_space<vmem>>, vector<128x128xbf16>
    %cst_40 = arith.constant dense<0.000000e+00> : vector<128x128xf32>
    %63 = tpu.matmul %61, %62, %cst_40 {dimension_numbers = #tpu.dot_dimension_numbers<[1], [0], [0], [1], [0, 0, 1, 1], [], []>} : vector<128x128xbf16>, vector<128x128xbf16>, vector<128x128xf32> -> vector<128x128xf32>
    %64 = vector.broadcast %0 : vector<1x128xf32> to vector<128x128xf32>
    %65 = arith.addf %63, %64 : vector<128x128xf32>
    %cst_41 = arith.constant dense<0.000000e+00> : vector<128xf32>
    %66 = vector.multi_reduction <add>, %65, %cst_41 [0] : vector<128x128xf32> to vector<128xf32>
    %67 = vector.shape_cast %66 : vector<128xf32> to vector<1x128xf32>
    %68 = arith.addf %54, %67 : vector<1x128xf32>
    %69 = arith.mulf %65, %65 : vector<128x128xf32>
    %cst_42 = arith.constant dense<0.000000e+00> : vector<128xf32>
    %70 = vector.multi_reduction <add>, %69, %cst_42 [0] : vector<128x128xf32> to vector<128xf32>
    %71 = vector.shape_cast %70 : vector<128xf32> to vector<1x128xf32>
    %72 = arith.addf %58, %71 : vector<1x128xf32>
    %73 = arith.truncf %65 : vector<128x128xf32> to vector<128x128xbf16>
    %c512_43 = arith.constant 512 : index
    %c0_44 = arith.constant 0 : index
    %74 = vector.load %arg4[%c512_43, %c0_44] : memref<648x128xbf16, #tpu.memory_space<vmem>>, vector<128x128xbf16>
    tpu.vector_store %arg4[%c512_43, %c0_44], %73 {strides = array<i32>} : memref<648x128xbf16, #tpu.memory_space<vmem>>, vector<128x128xbf16>,
    %c640 = arith.constant 640 : index
    %c0_45 = arith.constant 0 : index
    %75 = vector.load %arg1[%c640, %c0_45] : memref<648x128xbf16, #tpu.memory_space<vmem>>, vector<8x128xbf16>
    %c0_46 = arith.constant 0 : index
    %c0_47 = arith.constant 0 : index
    %76 = vector.load %arg2[%c0_46, %c0_47] : memref<128x128xbf16, #tpu.memory_space<vmem>>, vector<128x128xbf16>
    %cst_48 = arith.constant dense<0.000000e+00> : vector<8x128xf32>
    %77 = tpu.matmul %75, %76, %cst_48 {dimension_numbers = #tpu.dot_dimension_numbers<[1], [0], [0], [1], [0, 0, 1, 1], [], []>} : vector<8x128xbf16>, vector<128x128xbf16>, vector<8x128xf32> -> vector<8x128xf32>
    %78 = vector.broadcast %0 : vector<1x128xf32> to vector<8x128xf32>
    %79 = arith.addf %77, %78 : vector<8x128xf32>
    %cst_49 = arith.constant dense<0.000000e+00> : vector<128xf32>
    %80 = vector.multi_reduction <add>, %79, %cst_49 [0] : vector<8x128xf32> to vector<128xf32>
    %81 = vector.shape_cast %80 : vector<128xf32> to vector<1x128xf32>
    %82 = arith.addf %68, %81 : vector<1x128xf32>
    %83 = arith.mulf %79, %79 : vector<8x128xf32>
    %cst_50 = arith.constant dense<0.000000e+00> : vector<128xf32>
    %84 = vector.multi_reduction <add>, %83, %cst_50 [0] : vector<8x128xf32> to vector<128xf32>
    %85 = vector.shape_cast %84 : vector<128xf32> to vector<1x128xf32>
    %86 = arith.addf %72, %85 : vector<1x128xf32>
    %87 = arith.truncf %79 : vector<8x128xf32> to vector<8x128xbf16>
    %c640_51 = arith.constant 640 : index
    %c0_52 = arith.constant 0 : index
    %88 = vector.load %arg4[%c640_51, %c0_52] : memref<648x128xbf16, #tpu.memory_space<vmem>>, vector<8x128xbf16>
    tpu.vector_store %arg4[%c640_51, %c0_52], %87 {strides = array<i32>} : memref<648x128xbf16, #tpu.memory_space<vmem>>, vector<8x128xbf16>,
    %cst_53 = arith.constant 0.00154320989 : f32
    %89 = vector.broadcast %cst_53 : f32 to vector<1x128xf32>
    %90 = arith.mulf %82, %89 : vector<1x128xf32>
    %cst_54 = arith.constant 0.00154320989 : f32
    %91 = vector.broadcast %cst_54 : f32 to vector<1x128xf32>
    %92 = arith.mulf %86, %91 : vector<1x128xf32>
    %93 = arith.mulf %90, %90 : vector<1x128xf32>
    %94 = arith.subf %92, %93 : vector<1x128xf32>
    %cst_55 = arith.constant 0.000000e+00 : f32
    %95 = vector.broadcast %cst_55 : f32 to vector<1x128xf32>
    %96 = arith.maximumf %94, %95 : vector<1x128xf32>
    %cst_56 = arith.constant 9.99999974E-6 : f32
    %97 = vector.broadcast %cst_56 : f32 to vector<1x128xf32>
    %98 = arith.addf %96, %97 : vector<1x128xf32>
    %99 = math.rsqrt %98 : vector<1x128xf32>
    %100 = arith.mulf %99, %1 : vector<1x128xf32>
    %101 = arith.mulf %90, %100 : vector<1x128xf32>
    %102 = arith.subf %2, %101 : vector<1x128xf32>
    %c0_57 = arith.constant 0 : index
    %c0_58 = arith.constant 0 : index
    %103 = vector.load %arg4[%c0_57, %c0_58] : memref<648x128xbf16, #tpu.memory_space<vmem>>, vector<128x128xbf16>
    %104 = arith.extf %103 : vector<128x128xbf16> to vector<128x128xf32>
    %105 = vector.broadcast %100 : vector<1x128xf32> to vector<128x128xf32>
    %106 = arith.mulf %104, %105 : vector<128x128xf32>
    %107 = vector.broadcast %102 : vector<1x128xf32> to vector<128x128xf32>
    %108 = arith.addf %106, %107 : vector<128x128xf32>
    %cst_59 = arith.constant 0.000000e+00 : f32
    %109 = vector.broadcast %cst_59 : f32 to vector<128x128xf32>
    %110 = arith.maximumf %108, %109 : vector<128x128xf32>
    %111 = arith.truncf %110 : vector<128x128xf32> to vector<128x128xbf16>
    %c0_60 = arith.constant 0 : index
    %c0_61 = arith.constant 0 : index
    %112 = vector.load %arg4[%c0_60, %c0_61] : memref<648x128xbf16, #tpu.memory_space<vmem>>, vector<128x128xbf16>
    tpu.vector_store %arg4[%c0_60, %c0_61], %111 {strides = array<i32>} : memref<648x128xbf16, #tpu.memory_space<vmem>>, vector<128x128xbf16>,
    %c128_62 = arith.constant 128 : index
    %c0_63 = arith.constant 0 : index
    %113 = vector.load %arg4[%c128_62, %c0_63] : memref<648x128xbf16, #tpu.memory_space<vmem>>, vector<128x128xbf16>
    %114 = arith.extf %113 : vector<128x128xbf16> to vector<128x128xf32>
    %115 = vector.broadcast %100 : vector<1x128xf32> to vector<128x128xf32>
    %116 = arith.mulf %114, %115 : vector<128x128xf32>
    %117 = vector.broadcast %102 : vector<1x128xf32> to vector<128x128xf32>
    %118 = arith.addf %116, %117 : vector<128x128xf32>
    %cst_64 = arith.constant 0.000000e+00 : f32
    %119 = vector.broadcast %cst_64 : f32 to vector<128x128xf32>
    %120 = arith.maximumf %118, %119 : vector<128x128xf32>
    %121 = arith.truncf %120 : vector<128x128xf32> to vector<128x128xbf16>
    %c128_65 = arith.constant 128 : index
    %c0_66 = arith.constant 0 : index
    %122 = vector.load %arg4[%c128_65, %c0_66] : memref<648x128xbf16, #tpu.memory_space<vmem>>, vector<128x128xbf16>
    tpu.vector_store %arg4[%c128_65, %c0_66], %121 {strides = array<i32>} : memref<648x128xbf16, #tpu.memory_space<vmem>>, vector<128x128xbf16>,
    %c256_67 = arith.constant 256 : index
    %c0_68 = arith.constant 0 : index
    %123 = vector.load %arg4[%c256_67, %c0_68] : memref<648x128xbf16, #tpu.memory_space<vmem>>, vector<128x128xbf16>
    %124 = arith.extf %123 : vector<128x128xbf16> to vector<128x128xf32>
    %125 = vector.broadcast %100 : vector<1x128xf32> to vector<128x128xf32>
    %126 = arith.mulf %124, %125 : vector<128x128xf32>
    %127 = vector.broadcast %102 : vector<1x128xf32> to vector<128x128xf32>
    %128 = arith.addf %126, %127 : vector<128x128xf32>
    %cst_69 = arith.constant 0.000000e+00 : f32
    %129 = vector.broadcast %cst_69 : f32 to vector<128x128xf32>
    %130 = arith.maximumf %128, %129 : vector<128x128xf32>
    %131 = arith.truncf %130 : vector<128x128xf32> to vector<128x128xbf16>
    %c256_70 = arith.constant 256 : index
    %c0_71 = arith.constant 0 : index
    %132 = vector.load %arg4[%c256_70, %c0_71] : memref<648x128xbf16, #tpu.memory_space<vmem>>, vector<128x128xbf16>
    tpu.vector_store %arg4[%c256_70, %c0_71], %131 {strides = array<i32>} : memref<648x128xbf16, #tpu.memory_space<vmem>>, vector<128x128xbf16>,
    %c384_72 = arith.constant 384 : index
    %c0_73 = arith.constant 0 : index
    %133 = vector.load %arg4[%c384_72, %c0_73] : memref<648x128xbf16, #tpu.memory_space<vmem>>, vector<128x128xbf16>
    %134 = arith.extf %133 : vector<128x128xbf16> to vector<128x128xf32>
    %135 = vector.broadcast %100 : vector<1x128xf32> to vector<128x128xf32>
    %136 = arith.mulf %134, %135 : vector<128x128xf32>
    %137 = vector.broadcast %102 : vector<1x128xf32> to vector<128x128xf32>
    %138 = arith.addf %136, %137 : vector<128x128xf32>
    %cst_74 = arith.constant 0.000000e+00 : f32
    %139 = vector.broadcast %cst_74 : f32 to vector<128x128xf32>
    %140 = arith.maximumf %138, %139 : vector<128x128xf32>
    %141 = arith.truncf %140 : vector<128x128xf32> to vector<128x128xbf16>
    %c384_75 = arith.constant 384 : index
    %c0_76 = arith.constant 0 : index
    %142 = vector.load %arg4[%c384_75, %c0_76] : memref<648x128xbf16, #tpu.memory_space<vmem>>, vector<128x128xbf16>
    tpu.vector_store %arg4[%c384_75, %c0_76], %141 {strides = array<i32>} : memref<648x128xbf16, #tpu.memory_space<vmem>>, vector<128x128xbf16>,
    %c512_77 = arith.constant 512 : index
    %c0_78 = arith.constant 0 : index
    %143 = vector.load %arg4[%c512_77, %c0_78] : memref<648x128xbf16, #tpu.memory_space<vmem>>, vector<128x128xbf16>
    %144 = arith.extf %143 : vector<128x128xbf16> to vector<128x128xf32>
    %145 = vector.broadcast %100 : vector<1x128xf32> to vector<128x128xf32>
    %146 = arith.mulf %144, %145 : vector<128x128xf32>
    %147 = vector.broadcast %102 : vector<1x128xf32> to vector<128x128xf32>
    %148 = arith.addf %146, %147 : vector<128x128xf32>
    %cst_79 = arith.constant 0.000000e+00 : f32
    %149 = vector.broadcast %cst_79 : f32 to vector<128x128xf32>
    %150 = arith.maximumf %148, %149 : vector<128x128xf32>
    %151 = arith.truncf %150 : vector<128x128xf32> to vector<128x128xbf16>
    %c512_80 = arith.constant 512 : index
    %c0_81 = arith.constant 0 : index
    %152 = vector.load %arg4[%c512_80, %c0_81] : memref<648x128xbf16, #tpu.memory_space<vmem>>, vector<128x128xbf16>
    tpu.vector_store %arg4[%c512_80, %c0_81], %151 {strides = array<i32>} : memref<648x128xbf16, #tpu.memory_space<vmem>>, vector<128x128xbf16>,
    %c640_82 = arith.constant 640 : index
    %c0_83 = arith.constant 0 : index
    %153 = vector.load %arg4[%c640_82, %c0_83] : memref<648x128xbf16, #tpu.memory_space<vmem>>, vector<8x128xbf16>
    %154 = arith.extf %153 : vector<8x128xbf16> to vector<8x128xf32>
    %155 = vector.broadcast %100 : vector<1x128xf32> to vector<8x128xf32>
    %156 = arith.mulf %154, %155 : vector<8x128xf32>
    %157 = vector.broadcast %102 : vector<1x128xf32> to vector<8x128xf32>
    %158 = arith.addf %156, %157 : vector<8x128xf32>
    %cst_84 = arith.constant 0.000000e+00 : f32
    %159 = vector.broadcast %cst_84 : f32 to vector<8x128xf32>
    %160 = arith.maximumf %158, %159 : vector<8x128xf32>
    %161 = arith.truncf %160 : vector<8x128xf32> to vector<8x128xbf16>
    %c640_85 = arith.constant 640 : index
    %c0_86 = arith.constant 0 : index
    %162 = vector.load %arg4[%c640_85, %c0_86] : memref<648x128xbf16, #tpu.memory_space<vmem>>, vector<8x128xbf16>
    tpu.vector_store %arg4[%c640_85, %c0_86], %161 {strides = array<i32>} : memref<648x128xbf16, #tpu.memory_space<vmem>>, vector<8x128xbf16>,
    return
  }
  func.func @transform_0(%arg0: i32) -> (i32, i32) {
    %c0_i32 = arith.constant 0 : i32
    %c0_i32_0 = arith.constant 0 : i32
    %c0_i32_1 = arith.constant 0 : i32
    return %c0_i32, %c0_i32_0 : i32, i32
  }
  func.func @transform_1(%arg0: i32) -> (i32, i32) {
    %c0_i32 = arith.constant 0 : i32
    %c0_i32_0 = arith.constant 0 : i32
    %c0_i32_1 = arith.constant 0 : i32
    return %c0_i32, %c0_i32_0 : i32, i32
  }
  func.func @transform_2(%arg0: i32) -> (i32, i32) {
    %c0_i32 = arith.constant 0 : i32
    %c0_i32_0 = arith.constant 0 : i32
    %c0_i32_1 = arith.constant 0 : i32
    return %c0_i32, %c0_i32_0 : i32, i32
  }
  func.func @transform_3(%arg0: i32) -> (i32, i32) {
    %c0_i32 = arith.constant 0 : i32
    %c0_i32_0 = arith.constant 0 : i32
    %c0_i32_1 = arith.constant 0 : i32
    return %c0_i32, %c0_i32_0 : i32, i32
  }
}

module attributes {stable_mosaic.version = 11 : i64} {
  func.func @_tail_kernel(%arg0: i32, %arg1: memref<98x512xbf16, #tpu.memory_space<vmem>>, %arg2: memref<512x128xbf16, #tpu.memory_space<vmem>>, %arg3: memref<200x98xbf16, #tpu.memory_space<vmem>>, %arg4: memref<25x32x128xbf16, #tpu.memory_space<vmem>>, %arg5: memref<4x128x128xbf16, #tpu.memory_space<vmem>>, %arg6: memref<8x128xf32, #tpu.memory_space<vmem>>, %arg7: memref<2x4xf32, #tpu.memory_space<vmem>>) attributes {dimension_semantics = [#tpu.dimension_semantics<arbitrary>], iteration_bounds = array<i64: 1>, scalar_prefetch = 0 : i64, scratch_operands = 0 : i64, tpu.core_type = #tpu.core_type<tc>, window_params = [{pipeline_mode = #tpu.pipeline_mode<synchronous>, transform_indices = @transform_0, window_bounds = array<i64: 98, 512>}, {pipeline_mode = #tpu.pipeline_mode<synchronous>, transform_indices = @transform_1, window_bounds = array<i64: 512, 128>}, {pipeline_mode = #tpu.pipeline_mode<synchronous>, transform_indices = @transform_2, window_bounds = array<i64: 200, 98>}, {pipeline_mode = #tpu.pipeline_mode<synchronous>, transform_indices = @transform_3, window_bounds = array<i64: 25, 32, 128>}, {pipeline_mode = #tpu.pipeline_mode<synchronous>, transform_indices = @transform_4, window_bounds = array<i64: 4, 128, 128>}, {pipeline_mode = #tpu.pipeline_mode<synchronous>, transform_indices = @transform_5, window_bounds = array<i64: 8, 128>}, {pipeline_mode = #tpu.pipeline_mode<synchronous>, transform_indices = @transform_6, window_bounds = array<i64: 2, 4>}]} {
    %c0 = arith.constant 0 : index
    %c0_0 = arith.constant 0 : index
    %0 = vector.load %arg1[%c0, %c0_0] : memref<98x512xbf16, #tpu.memory_space<vmem>>, vector<98x512xbf16>
    %c0_1 = arith.constant 0 : index
    %c0_2 = arith.constant 0 : index
    %1 = vector.load %arg2[%c0_1, %c0_2] : memref<512x128xbf16, #tpu.memory_space<vmem>>, vector<512x128xbf16>
    %cst = arith.constant dense<0.000000e+00> : vector<98x128xf32>
    %2 = tpu.matmul %0, %1, %cst {dimension_numbers = #tpu.dot_dimension_numbers<[1], [0], [0], [1], [0, 0, 1, 1], [], []>} : vector<98x512xbf16>, vector<512x128xbf16>, vector<98x128xf32> -> vector<98x128xf32>
    %c0_3 = arith.constant 0 : index
    %c0_4 = arith.constant 0 : index
    %3 = vector.load %arg6[%c0_3, %c0_4] : memref<8x128xf32, #tpu.memory_space<vmem>>, vector<1x128xf32>
    %4 = vector.broadcast %3 : vector<1x128xf32> to vector<98x128xf32>
    %5 = arith.addf %2, %4 : vector<98x128xf32>
    %cst_5 = arith.constant dense<0.000000e+00> : vector<128xf32>
    %6 = vector.multi_reduction <add>, %5, %cst_5 [0] : vector<98x128xf32> to vector<128xf32>
    %7 = vector.shape_cast %6 : vector<128xf32> to vector<1x128xf32>
    %8 = arith.mulf %5, %5 : vector<98x128xf32>
    %cst_6 = arith.constant dense<0.000000e+00> : vector<128xf32>
    %9 = vector.multi_reduction <add>, %8, %cst_6 [0] : vector<98x128xf32> to vector<128xf32>
    %10 = vector.shape_cast %9 : vector<128xf32> to vector<1x128xf32>
    %c1 = arith.constant 1 : index
    %c0_7 = arith.constant 0 : index
    %11 = vector.load %arg6[%c1, %c0_7] : memref<8x128xf32, #tpu.memory_space<vmem>>, vector<1x128xf32>
    %c2 = arith.constant 2 : index
    %c0_8 = arith.constant 0 : index
    %12 = vector.load %arg6[%c2, %c0_8] : memref<8x128xf32, #tpu.memory_space<vmem>>, vector<1x128xf32>
    %cst_9 = arith.constant 0.0102040814 : f32
    %13 = vector.broadcast %cst_9 : f32 to vector<1x128xf32>
    %14 = arith.mulf %7, %13 : vector<1x128xf32>
    %cst_10 = arith.constant 0.0102040814 : f32
    %15 = vector.broadcast %cst_10 : f32 to vector<1x128xf32>
    %16 = arith.mulf %10, %15 : vector<1x128xf32>
    %17 = arith.mulf %14, %14 : vector<1x128xf32>
    %18 = arith.subf %16, %17 : vector<1x128xf32>
    %cst_11 = arith.constant 0.000000e+00 : f32
    %19 = vector.broadcast %cst_11 : f32 to vector<1x128xf32>
    %20 = arith.maximumf %18, %19 : vector<1x128xf32>
    %cst_12 = arith.constant 9.99999974E-6 : f32
    %21 = vector.broadcast %cst_12 : f32 to vector<1x128xf32>
    %22 = arith.addf %20, %21 : vector<1x128xf32>
    %23 = math.rsqrt %22 : vector<1x128xf32>
    %24 = arith.mulf %23, %11 : vector<1x128xf32>
    %25 = arith.mulf %14, %24 : vector<1x128xf32>
    %26 = arith.subf %12, %25 : vector<1x128xf32>
    %27 = vector.broadcast %24 : vector<1x128xf32> to vector<98x128xf32>
    %28 = arith.mulf %5, %27 : vector<98x128xf32>
    %29 = vector.broadcast %26 : vector<1x128xf32> to vector<98x128xf32>
    %30 = arith.addf %28, %29 : vector<98x128xf32>
    %cst_13 = arith.constant 0.000000e+00 : f32
    %31 = vector.broadcast %cst_13 : f32 to vector<98x128xf32>
    %32 = arith.maximumf %30, %31 : vector<98x128xf32>
    %33 = arith.truncf %32 : vector<98x128xf32> to vector<98x128xbf16>
    %c0_14 = arith.constant 0 : index
    %c0_15 = arith.constant 0 : index
    %34 = vector.load %arg3[%c0_14, %c0_15] : memref<200x98xbf16, #tpu.memory_space<vmem>>, vector<200x98xbf16>
    %cst_16 = arith.constant dense<0.000000e+00> : vector<200x128xf32>
    %35 = tpu.matmul %34, %33, %cst_16 {dimension_numbers = #tpu.dot_dimension_numbers<[1], [0], [0], [1], [0, 0, 1, 1], [], []>} : vector<200x98xbf16>, vector<98x128xbf16>, vector<200x128xf32> -> vector<200x128xf32>
    %cst_17 = arith.constant 0.000000e+00 : f32
    %36 = vector.broadcast %cst_17 : f32 to vector<8x128xf32>
    %37 = vector.extract_strided_slice %35 {offsets = [0, 0], sizes = [8, 32], strides = [1, 1]} : vector<200x128xf32> to vector<8x32xf32>
    %38 = arith.truncf %37 : vector<8x32xf32> to vector<8x32xbf16>
    %c0_18 = arith.constant 0 : index
    %c0_19 = arith.constant 0 : index
    %c0_20 = arith.constant 0 : index
    %39 = vector.load %arg4[%c0_18, %c0_19, %c0_20] : memref<25x32x128xbf16, #tpu.memory_space<vmem>>, vector<1x32x128xbf16>
    %40 = vector.shape_cast %39 : vector<1x32x128xbf16> to vector<32x128xbf16>
    %cst_21 = arith.constant dense<0.000000e+00> : vector<8x128xf32>
    %41 = tpu.matmul %38, %40, %cst_21 {dimension_numbers = #tpu.dot_dimension_numbers<[1], [0], [0], [1], [0, 0, 1, 1], [], []>} : vector<8x32xbf16>, vector<32x128xbf16>, vector<8x128xf32> -> vector<8x128xf32>
    %42 = arith.addf %36, %41 : vector<8x128xf32>
    %43 = vector.extract_strided_slice %35 {offsets = [8, 0], sizes = [8, 32], strides = [1, 1]} : vector<200x128xf32> to vector<8x32xf32>
    %44 = arith.truncf %43 : vector<8x32xf32> to vector<8x32xbf16>
    %c1_22 = arith.constant 1 : index
    %c0_23 = arith.constant 0 : index
    %c0_24 = arith.constant 0 : index
    %45 = vector.load %arg4[%c1_22, %c0_23, %c0_24] : memref<25x32x128xbf16, #tpu.memory_space<vmem>>, vector<1x32x128xbf16>
    %46 = vector.shape_cast %45 : vector<1x32x128xbf16> to vector<32x128xbf16>
    %cst_25 = arith.constant dense<0.000000e+00> : vector<8x128xf32>
    %47 = tpu.matmul %44, %46, %cst_25 {dimension_numbers = #tpu.dot_dimension_numbers<[1], [0], [0], [1], [0, 0, 1, 1], [], []>} : vector<8x32xbf16>, vector<32x128xbf16>, vector<8x128xf32> -> vector<8x128xf32>
    %48 = arith.addf %42, %47 : vector<8x128xf32>
    %49 = vector.extract_strided_slice %35 {offsets = [16, 0], sizes = [8, 32], strides = [1, 1]} : vector<200x128xf32> to vector<8x32xf32>
    %50 = arith.truncf %49 : vector<8x32xf32> to vector<8x32xbf16>
    %c2_26 = arith.constant 2 : index
    %c0_27 = arith.constant 0 : index
    %c0_28 = arith.constant 0 : index
    %51 = vector.load %arg4[%c2_26, %c0_27, %c0_28] : memref<25x32x128xbf16, #tpu.memory_space<vmem>>, vector<1x32x128xbf16>
    %52 = vector.shape_cast %51 : vector<1x32x128xbf16> to vector<32x128xbf16>
    %cst_29 = arith.constant dense<0.000000e+00> : vector<8x128xf32>
    %53 = tpu.matmul %50, %52, %cst_29 {dimension_numbers = #tpu.dot_dimension_numbers<[1], [0], [0], [1], [0, 0, 1, 1], [], []>} : vector<8x32xbf16>, vector<32x128xbf16>, vector<8x128xf32> -> vector<8x128xf32>
    %54 = arith.addf %48, %53 : vector<8x128xf32>
    %55 = vector.extract_strided_slice %35 {offsets = [24, 0], sizes = [8, 32], strides = [1, 1]} : vector<200x128xf32> to vector<8x32xf32>
    %56 = arith.truncf %55 : vector<8x32xf32> to vector<8x32xbf16>
    %c3 = arith.constant 3 : index
    %c0_30 = arith.constant 0 : index
    %c0_31 = arith.constant 0 : index
    %57 = vector.load %arg4[%c3, %c0_30, %c0_31] : memref<25x32x128xbf16, #tpu.memory_space<vmem>>, vector<1x32x128xbf16>
    %58 = vector.shape_cast %57 : vector<1x32x128xbf16> to vector<32x128xbf16>
    %cst_32 = arith.constant dense<0.000000e+00> : vector<8x128xf32>
    %59 = tpu.matmul %56, %58, %cst_32 {dimension_numbers = #tpu.dot_dimension_numbers<[1], [0], [0], [1], [0, 0, 1, 1], [], []>} : vector<8x32xbf16>, vector<32x128xbf16>, vector<8x128xf32> -> vector<8x128xf32>
    %60 = arith.addf %54, %59 : vector<8x128xf32>
    %61 = vector.extract_strided_slice %35 {offsets = [32, 0], sizes = [8, 32], strides = [1, 1]} : vector<200x128xf32> to vector<8x32xf32>
    %62 = arith.truncf %61 : vector<8x32xf32> to vector<8x32xbf16>
    %c4 = arith.constant 4 : index
    %c0_33 = arith.constant 0 : index
    %c0_34 = arith.constant 0 : index
    %63 = vector.load %arg4[%c4, %c0_33, %c0_34] : memref<25x32x128xbf16, #tpu.memory_space<vmem>>, vector<1x32x128xbf16>
    %64 = vector.shape_cast %63 : vector<1x32x128xbf16> to vector<32x128xbf16>
    %cst_35 = arith.constant dense<0.000000e+00> : vector<8x128xf32>
    %65 = tpu.matmul %62, %64, %cst_35 {dimension_numbers = #tpu.dot_dimension_numbers<[1], [0], [0], [1], [0, 0, 1, 1], [], []>} : vector<8x32xbf16>, vector<32x128xbf16>, vector<8x128xf32> -> vector<8x128xf32>
    %66 = arith.addf %60, %65 : vector<8x128xf32>
    %67 = vector.extract_strided_slice %35 {offsets = [40, 0], sizes = [8, 32], strides = [1, 1]} : vector<200x128xf32> to vector<8x32xf32>
    %68 = arith.truncf %67 : vector<8x32xf32> to vector<8x32xbf16>
    %c5 = arith.constant 5 : index
    %c0_36 = arith.constant 0 : index
    %c0_37 = arith.constant 0 : index
    %69 = vector.load %arg4[%c5, %c0_36, %c0_37] : memref<25x32x128xbf16, #tpu.memory_space<vmem>>, vector<1x32x128xbf16>
    %70 = vector.shape_cast %69 : vector<1x32x128xbf16> to vector<32x128xbf16>
    %cst_38 = arith.constant dense<0.000000e+00> : vector<8x128xf32>
    %71 = tpu.matmul %68, %70, %cst_38 {dimension_numbers = #tpu.dot_dimension_numbers<[1], [0], [0], [1], [0, 0, 1, 1], [], []>} : vector<8x32xbf16>, vector<32x128xbf16>, vector<8x128xf32> -> vector<8x128xf32>
    %72 = arith.addf %66, %71 : vector<8x128xf32>
    %73 = vector.extract_strided_slice %35 {offsets = [48, 0], sizes = [8, 32], strides = [1, 1]} : vector<200x128xf32> to vector<8x32xf32>
    %74 = arith.truncf %73 : vector<8x32xf32> to vector<8x32xbf16>
    %c6 = arith.constant 6 : index
    %c0_39 = arith.constant 0 : index
    %c0_40 = arith.constant 0 : index
    %75 = vector.load %arg4[%c6, %c0_39, %c0_40] : memref<25x32x128xbf16, #tpu.memory_space<vmem>>, vector<1x32x128xbf16>
    %76 = vector.shape_cast %75 : vector<1x32x128xbf16> to vector<32x128xbf16>
    %cst_41 = arith.constant dense<0.000000e+00> : vector<8x128xf32>
    %77 = tpu.matmul %74, %76, %cst_41 {dimension_numbers = #tpu.dot_dimension_numbers<[1], [0], [0], [1], [0, 0, 1, 1], [], []>} : vector<8x32xbf16>, vector<32x128xbf16>, vector<8x128xf32> -> vector<8x128xf32>
    %78 = arith.addf %72, %77 : vector<8x128xf32>
    %79 = vector.extract_strided_slice %35 {offsets = [56, 0], sizes = [8, 32], strides = [1, 1]} : vector<200x128xf32> to vector<8x32xf32>
    %80 = arith.truncf %79 : vector<8x32xf32> to vector<8x32xbf16>
    %c7 = arith.constant 7 : index
    %c0_42 = arith.constant 0 : index
    %c0_43 = arith.constant 0 : index
    %81 = vector.load %arg4[%c7, %c0_42, %c0_43] : memref<25x32x128xbf16, #tpu.memory_space<vmem>>, vector<1x32x128xbf16>
    %82 = vector.shape_cast %81 : vector<1x32x128xbf16> to vector<32x128xbf16>
    %cst_44 = arith.constant dense<0.000000e+00> : vector<8x128xf32>
    %83 = tpu.matmul %80, %82, %cst_44 {dimension_numbers = #tpu.dot_dimension_numbers<[1], [0], [0], [1], [0, 0, 1, 1], [], []>} : vector<8x32xbf16>, vector<32x128xbf16>, vector<8x128xf32> -> vector<8x128xf32>
    %84 = arith.addf %78, %83 : vector<8x128xf32>
    %85 = vector.extract_strided_slice %35 {offsets = [64, 0], sizes = [8, 32], strides = [1, 1]} : vector<200x128xf32> to vector<8x32xf32>
    %86 = arith.truncf %85 : vector<8x32xf32> to vector<8x32xbf16>
    %c8 = arith.constant 8 : index
    %c0_45 = arith.constant 0 : index
    %c0_46 = arith.constant 0 : index
    %87 = vector.load %arg4[%c8, %c0_45, %c0_46] : memref<25x32x128xbf16, #tpu.memory_space<vmem>>, vector<1x32x128xbf16>
    %88 = vector.shape_cast %87 : vector<1x32x128xbf16> to vector<32x128xbf16>
    %cst_47 = arith.constant dense<0.000000e+00> : vector<8x128xf32>
    %89 = tpu.matmul %86, %88, %cst_47 {dimension_numbers = #tpu.dot_dimension_numbers<[1], [0], [0], [1], [0, 0, 1, 1], [], []>} : vector<8x32xbf16>, vector<32x128xbf16>, vector<8x128xf32> -> vector<8x128xf32>
    %90 = arith.addf %84, %89 : vector<8x128xf32>
    %91 = vector.extract_strided_slice %35 {offsets = [72, 0], sizes = [8, 32], strides = [1, 1]} : vector<200x128xf32> to vector<8x32xf32>
    %92 = arith.truncf %91 : vector<8x32xf32> to vector<8x32xbf16>
    %c9 = arith.constant 9 : index
    %c0_48 = arith.constant 0 : index
    %c0_49 = arith.constant 0 : index
    %93 = vector.load %arg4[%c9, %c0_48, %c0_49] : memref<25x32x128xbf16, #tpu.memory_space<vmem>>, vector<1x32x128xbf16>
    %94 = vector.shape_cast %93 : vector<1x32x128xbf16> to vector<32x128xbf16>
    %cst_50 = arith.constant dense<0.000000e+00> : vector<8x128xf32>
    %95 = tpu.matmul %92, %94, %cst_50 {dimension_numbers = #tpu.dot_dimension_numbers<[1], [0], [0], [1], [0, 0, 1, 1], [], []>} : vector<8x32xbf16>, vector<32x128xbf16>, vector<8x128xf32> -> vector<8x128xf32>
    %96 = arith.addf %90, %95 : vector<8x128xf32>
    %97 = vector.extract_strided_slice %35 {offsets = [80, 0], sizes = [8, 32], strides = [1, 1]} : vector<200x128xf32> to vector<8x32xf32>
    %98 = arith.truncf %97 : vector<8x32xf32> to vector<8x32xbf16>
    %c10 = arith.constant 10 : index
    %c0_51 = arith.constant 0 : index
    %c0_52 = arith.constant 0 : index
    %99 = vector.load %arg4[%c10, %c0_51, %c0_52] : memref<25x32x128xbf16, #tpu.memory_space<vmem>>, vector<1x32x128xbf16>
    %100 = vector.shape_cast %99 : vector<1x32x128xbf16> to vector<32x128xbf16>
    %cst_53 = arith.constant dense<0.000000e+00> : vector<8x128xf32>
    %101 = tpu.matmul %98, %100, %cst_53 {dimension_numbers = #tpu.dot_dimension_numbers<[1], [0], [0], [1], [0, 0, 1, 1], [], []>} : vector<8x32xbf16>, vector<32x128xbf16>, vector<8x128xf32> -> vector<8x128xf32>
    %102 = arith.addf %96, %101 : vector<8x128xf32>
    %103 = vector.extract_strided_slice %35 {offsets = [88, 0], sizes = [8, 32], strides = [1, 1]} : vector<200x128xf32> to vector<8x32xf32>
    %104 = arith.truncf %103 : vector<8x32xf32> to vector<8x32xbf16>
    %c11 = arith.constant 11 : index
    %c0_54 = arith.constant 0 : index
    %c0_55 = arith.constant 0 : index
    %105 = vector.load %arg4[%c11, %c0_54, %c0_55] : memref<25x32x128xbf16, #tpu.memory_space<vmem>>, vector<1x32x128xbf16>
    %106 = vector.shape_cast %105 : vector<1x32x128xbf16> to vector<32x128xbf16>
    %cst_56 = arith.constant dense<0.000000e+00> : vector<8x128xf32>
    %107 = tpu.matmul %104, %106, %cst_56 {dimension_numbers = #tpu.dot_dimension_numbers<[1], [0], [0], [1], [0, 0, 1, 1], [], []>} : vector<8x32xbf16>, vector<32x128xbf16>, vector<8x128xf32> -> vector<8x128xf32>
    %108 = arith.addf %102, %107 : vector<8x128xf32>
    %109 = vector.extract_strided_slice %35 {offsets = [96, 0], sizes = [8, 32], strides = [1, 1]} : vector<200x128xf32> to vector<8x32xf32>
    %110 = arith.truncf %109 : vector<8x32xf32> to vector<8x32xbf16>
    %c12 = arith.constant 12 : index
    %c0_57 = arith.constant 0 : index
    %c0_58 = arith.constant 0 : index
    %111 = vector.load %arg4[%c12, %c0_57, %c0_58] : memref<25x32x128xbf16, #tpu.memory_space<vmem>>, vector<1x32x128xbf16>
    %112 = vector.shape_cast %111 : vector<1x32x128xbf16> to vector<32x128xbf16>
    %cst_59 = arith.constant dense<0.000000e+00> : vector<8x128xf32>
    %113 = tpu.matmul %110, %112, %cst_59 {dimension_numbers = #tpu.dot_dimension_numbers<[1], [0], [0], [1], [0, 0, 1, 1], [], []>} : vector<8x32xbf16>, vector<32x128xbf16>, vector<8x128xf32> -> vector<8x128xf32>
    %114 = arith.addf %108, %113 : vector<8x128xf32>
    %115 = vector.extract_strided_slice %35 {offsets = [104, 0], sizes = [8, 32], strides = [1, 1]} : vector<200x128xf32> to vector<8x32xf32>
    %116 = arith.truncf %115 : vector<8x32xf32> to vector<8x32xbf16>
    %c13 = arith.constant 13 : index
    %c0_60 = arith.constant 0 : index
    %c0_61 = arith.constant 0 : index
    %117 = vector.load %arg4[%c13, %c0_60, %c0_61] : memref<25x32x128xbf16, #tpu.memory_space<vmem>>, vector<1x32x128xbf16>
    %118 = vector.shape_cast %117 : vector<1x32x128xbf16> to vector<32x128xbf16>
    %cst_62 = arith.constant dense<0.000000e+00> : vector<8x128xf32>
    %119 = tpu.matmul %116, %118, %cst_62 {dimension_numbers = #tpu.dot_dimension_numbers<[1], [0], [0], [1], [0, 0, 1, 1], [], []>} : vector<8x32xbf16>, vector<32x128xbf16>, vector<8x128xf32> -> vector<8x128xf32>
    %120 = arith.addf %114, %119 : vector<8x128xf32>
    %121 = vector.extract_strided_slice %35 {offsets = [112, 0], sizes = [8, 32], strides = [1, 1]} : vector<200x128xf32> to vector<8x32xf32>
    %122 = arith.truncf %121 : vector<8x32xf32> to vector<8x32xbf16>
    %c14 = arith.constant 14 : index
    %c0_63 = arith.constant 0 : index
    %c0_64 = arith.constant 0 : index
    %123 = vector.load %arg4[%c14, %c0_63, %c0_64] : memref<25x32x128xbf16, #tpu.memory_space<vmem>>, vector<1x32x128xbf16>
    %124 = vector.shape_cast %123 : vector<1x32x128xbf16> to vector<32x128xbf16>
    %cst_65 = arith.constant dense<0.000000e+00> : vector<8x128xf32>
    %125 = tpu.matmul %122, %124, %cst_65 {dimension_numbers = #tpu.dot_dimension_numbers<[1], [0], [0], [1], [0, 0, 1, 1], [], []>} : vector<8x32xbf16>, vector<32x128xbf16>, vector<8x128xf32> -> vector<8x128xf32>
    %126 = arith.addf %120, %125 : vector<8x128xf32>
    %127 = vector.extract_strided_slice %35 {offsets = [120, 0], sizes = [8, 32], strides = [1, 1]} : vector<200x128xf32> to vector<8x32xf32>
    %128 = arith.truncf %127 : vector<8x32xf32> to vector<8x32xbf16>
    %c15 = arith.constant 15 : index
    %c0_66 = arith.constant 0 : index
    %c0_67 = arith.constant 0 : index
    %129 = vector.load %arg4[%c15, %c0_66, %c0_67] : memref<25x32x128xbf16, #tpu.memory_space<vmem>>, vector<1x32x128xbf16>
    %130 = vector.shape_cast %129 : vector<1x32x128xbf16> to vector<32x128xbf16>
    %cst_68 = arith.constant dense<0.000000e+00> : vector<8x128xf32>
    %131 = tpu.matmul %128, %130, %cst_68 {dimension_numbers = #tpu.dot_dimension_numbers<[1], [0], [0], [1], [0, 0, 1, 1], [], []>} : vector<8x32xbf16>, vector<32x128xbf16>, vector<8x128xf32> -> vector<8x128xf32>
    %132 = arith.addf %126, %131 : vector<8x128xf32>
    %133 = vector.extract_strided_slice %35 {offsets = [128, 0], sizes = [8, 32], strides = [1, 1]} : vector<200x128xf32> to vector<8x32xf32>
    %134 = arith.truncf %133 : vector<8x32xf32> to vector<8x32xbf16>
    %c16 = arith.constant 16 : index
    %c0_69 = arith.constant 0 : index
    %c0_70 = arith.constant 0 : index
    %135 = vector.load %arg4[%c16, %c0_69, %c0_70] : memref<25x32x128xbf16, #tpu.memory_space<vmem>>, vector<1x32x128xbf16>
    %136 = vector.shape_cast %135 : vector<1x32x128xbf16> to vector<32x128xbf16>
    %cst_71 = arith.constant dense<0.000000e+00> : vector<8x128xf32>
    %137 = tpu.matmul %134, %136, %cst_71 {dimension_numbers = #tpu.dot_dimension_numbers<[1], [0], [0], [1], [0, 0, 1, 1], [], []>} : vector<8x32xbf16>, vector<32x128xbf16>, vector<8x128xf32> -> vector<8x128xf32>
    %138 = arith.addf %132, %137 : vector<8x128xf32>
    %139 = vector.extract_strided_slice %35 {offsets = [136, 0], sizes = [8, 32], strides = [1, 1]} : vector<200x128xf32> to vector<8x32xf32>
    %140 = arith.truncf %139 : vector<8x32xf32> to vector<8x32xbf16>
    %c17 = arith.constant 17 : index
    %c0_72 = arith.constant 0 : index
    %c0_73 = arith.constant 0 : index
    %141 = vector.load %arg4[%c17, %c0_72, %c0_73] : memref<25x32x128xbf16, #tpu.memory_space<vmem>>, vector<1x32x128xbf16>
    %142 = vector.shape_cast %141 : vector<1x32x128xbf16> to vector<32x128xbf16>
    %cst_74 = arith.constant dense<0.000000e+00> : vector<8x128xf32>
    %143 = tpu.matmul %140, %142, %cst_74 {dimension_numbers = #tpu.dot_dimension_numbers<[1], [0], [0], [1], [0, 0, 1, 1], [], []>} : vector<8x32xbf16>, vector<32x128xbf16>, vector<8x128xf32> -> vector<8x128xf32>
    %144 = arith.addf %138, %143 : vector<8x128xf32>
    %145 = vector.extract_strided_slice %35 {offsets = [144, 0], sizes = [8, 32], strides = [1, 1]} : vector<200x128xf32> to vector<8x32xf32>
    %146 = arith.truncf %145 : vector<8x32xf32> to vector<8x32xbf16>
    %c18 = arith.constant 18 : index
    %c0_75 = arith.constant 0 : index
    %c0_76 = arith.constant 0 : index
    %147 = vector.load %arg4[%c18, %c0_75, %c0_76] : memref<25x32x128xbf16, #tpu.memory_space<vmem>>, vector<1x32x128xbf16>
    %148 = vector.shape_cast %147 : vector<1x32x128xbf16> to vector<32x128xbf16>
    %cst_77 = arith.constant dense<0.000000e+00> : vector<8x128xf32>
    %149 = tpu.matmul %146, %148, %cst_77 {dimension_numbers = #tpu.dot_dimension_numbers<[1], [0], [0], [1], [0, 0, 1, 1], [], []>} : vector<8x32xbf16>, vector<32x128xbf16>, vector<8x128xf32> -> vector<8x128xf32>
    %150 = arith.addf %144, %149 : vector<8x128xf32>
    %151 = vector.extract_strided_slice %35 {offsets = [152, 0], sizes = [8, 32], strides = [1, 1]} : vector<200x128xf32> to vector<8x32xf32>
    %152 = arith.truncf %151 : vector<8x32xf32> to vector<8x32xbf16>
    %c19 = arith.constant 19 : index
    %c0_78 = arith.constant 0 : index
    %c0_79 = arith.constant 0 : index
    %153 = vector.load %arg4[%c19, %c0_78, %c0_79] : memref<25x32x128xbf16, #tpu.memory_space<vmem>>, vector<1x32x128xbf16>
    %154 = vector.shape_cast %153 : vector<1x32x128xbf16> to vector<32x128xbf16>
    %cst_80 = arith.constant dense<0.000000e+00> : vector<8x128xf32>
    %155 = tpu.matmul %152, %154, %cst_80 {dimension_numbers = #tpu.dot_dimension_numbers<[1], [0], [0], [1], [0, 0, 1, 1], [], []>} : vector<8x32xbf16>, vector<32x128xbf16>, vector<8x128xf32> -> vector<8x128xf32>
    %156 = arith.addf %150, %155 : vector<8x128xf32>
    %157 = vector.extract_strided_slice %35 {offsets = [160, 0], sizes = [8, 32], strides = [1, 1]} : vector<200x128xf32> to vector<8x32xf32>
    %158 = arith.truncf %157 : vector<8x32xf32> to vector<8x32xbf16>
    %c20 = arith.constant 20 : index
    %c0_81 = arith.constant 0 : index
    %c0_82 = arith.constant 0 : index
    %159 = vector.load %arg4[%c20, %c0_81, %c0_82] : memref<25x32x128xbf16, #tpu.memory_space<vmem>>, vector<1x32x128xbf16>
    %160 = vector.shape_cast %159 : vector<1x32x128xbf16> to vector<32x128xbf16>
    %cst_83 = arith.constant dense<0.000000e+00> : vector<8x128xf32>
    %161 = tpu.matmul %158, %160, %cst_83 {dimension_numbers = #tpu.dot_dimension_numbers<[1], [0], [0], [1], [0, 0, 1, 1], [], []>} : vector<8x32xbf16>, vector<32x128xbf16>, vector<8x128xf32> -> vector<8x128xf32>
    %162 = arith.addf %156, %161 : vector<8x128xf32>
    %163 = vector.extract_strided_slice %35 {offsets = [168, 0], sizes = [8, 32], strides = [1, 1]} : vector<200x128xf32> to vector<8x32xf32>
    %164 = arith.truncf %163 : vector<8x32xf32> to vector<8x32xbf16>
    %c21 = arith.constant 21 : index
    %c0_84 = arith.constant 0 : index
    %c0_85 = arith.constant 0 : index
    %165 = vector.load %arg4[%c21, %c0_84, %c0_85] : memref<25x32x128xbf16, #tpu.memory_space<vmem>>, vector<1x32x128xbf16>
    %166 = vector.shape_cast %165 : vector<1x32x128xbf16> to vector<32x128xbf16>
    %cst_86 = arith.constant dense<0.000000e+00> : vector<8x128xf32>
    %167 = tpu.matmul %164, %166, %cst_86 {dimension_numbers = #tpu.dot_dimension_numbers<[1], [0], [0], [1], [0, 0, 1, 1], [], []>} : vector<8x32xbf16>, vector<32x128xbf16>, vector<8x128xf32> -> vector<8x128xf32>
    %168 = arith.addf %162, %167 : vector<8x128xf32>
    %169 = vector.extract_strided_slice %35 {offsets = [176, 0], sizes = [8, 32], strides = [1, 1]} : vector<200x128xf32> to vector<8x32xf32>
    %170 = arith.truncf %169 : vector<8x32xf32> to vector<8x32xbf16>
    %c22 = arith.constant 22 : index
    %c0_87 = arith.constant 0 : index
    %c0_88 = arith.constant 0 : index
    %171 = vector.load %arg4[%c22, %c0_87, %c0_88] : memref<25x32x128xbf16, #tpu.memory_space<vmem>>, vector<1x32x128xbf16>
    %172 = vector.shape_cast %171 : vector<1x32x128xbf16> to vector<32x128xbf16>
    %cst_89 = arith.constant dense<0.000000e+00> : vector<8x128xf32>
    %173 = tpu.matmul %170, %172, %cst_89 {dimension_numbers = #tpu.dot_dimension_numbers<[1], [0], [0], [1], [0, 0, 1, 1], [], []>} : vector<8x32xbf16>, vector<32x128xbf16>, vector<8x128xf32> -> vector<8x128xf32>
    %174 = arith.addf %168, %173 : vector<8x128xf32>
    %175 = vector.extract_strided_slice %35 {offsets = [184, 0], sizes = [8, 32], strides = [1, 1]} : vector<200x128xf32> to vector<8x32xf32>
    %176 = arith.truncf %175 : vector<8x32xf32> to vector<8x32xbf16>
    %c23 = arith.constant 23 : index
    %c0_90 = arith.constant 0 : index
    %c0_91 = arith.constant 0 : index
    %177 = vector.load %arg4[%c23, %c0_90, %c0_91] : memref<25x32x128xbf16, #tpu.memory_space<vmem>>, vector<1x32x128xbf16>
    %178 = vector.shape_cast %177 : vector<1x32x128xbf16> to vector<32x128xbf16>
    %cst_92 = arith.constant dense<0.000000e+00> : vector<8x128xf32>
    %179 = tpu.matmul %176, %178, %cst_92 {dimension_numbers = #tpu.dot_dimension_numbers<[1], [0], [0], [1], [0, 0, 1, 1], [], []>} : vector<8x32xbf16>, vector<32x128xbf16>, vector<8x128xf32> -> vector<8x128xf32>
    %180 = arith.addf %174, %179 : vector<8x128xf32>
    %181 = vector.extract_strided_slice %35 {offsets = [192, 0], sizes = [8, 32], strides = [1, 1]} : vector<200x128xf32> to vector<8x32xf32>
    %182 = arith.truncf %181 : vector<8x32xf32> to vector<8x32xbf16>
    %c24 = arith.constant 24 : index
    %c0_93 = arith.constant 0 : index
    %c0_94 = arith.constant 0 : index
    %183 = vector.load %arg4[%c24, %c0_93, %c0_94] : memref<25x32x128xbf16, #tpu.memory_space<vmem>>, vector<1x32x128xbf16>
    %184 = vector.shape_cast %183 : vector<1x32x128xbf16> to vector<32x128xbf16>
    %cst_95 = arith.constant dense<0.000000e+00> : vector<8x128xf32>
    %185 = tpu.matmul %182, %184, %cst_95 {dimension_numbers = #tpu.dot_dimension_numbers<[1], [0], [0], [1], [0, 0, 1, 1], [], []>} : vector<8x32xbf16>, vector<32x128xbf16>, vector<8x128xf32> -> vector<8x128xf32>
    %186 = arith.addf %180, %185 : vector<8x128xf32>
    %c3_96 = arith.constant 3 : index
    %c0_97 = arith.constant 0 : index
    %187 = vector.load %arg6[%c3_96, %c0_97] : memref<8x128xf32, #tpu.memory_space<vmem>>, vector<1x128xf32>
    %188 = vector.broadcast %187 : vector<1x128xf32> to vector<8x128xf32>
    %189 = arith.addf %186, %188 : vector<8x128xf32>
    %cst_98 = arith.constant dense<0.000000e+00> : vector<128xf32>
    %190 = vector.multi_reduction <add>, %189, %cst_98 [0] : vector<8x128xf32> to vector<128xf32>
    %191 = vector.shape_cast %190 : vector<128xf32> to vector<1x128xf32>
    %192 = arith.mulf %189, %189 : vector<8x128xf32>
    %cst_99 = arith.constant dense<0.000000e+00> : vector<128xf32>
    %193 = vector.multi_reduction <add>, %192, %cst_99 [0] : vector<8x128xf32> to vector<128xf32>
    %194 = vector.shape_cast %193 : vector<128xf32> to vector<1x128xf32>
    %c4_100 = arith.constant 4 : index
    %c0_101 = arith.constant 0 : index
    %195 = vector.load %arg6[%c4_100, %c0_101] : memref<8x128xf32, #tpu.memory_space<vmem>>, vector<1x128xf32>
    %c5_102 = arith.constant 5 : index
    %c0_103 = arith.constant 0 : index
    %196 = vector.load %arg6[%c5_102, %c0_103] : memref<8x128xf32, #tpu.memory_space<vmem>>, vector<1x128xf32>
    %cst_104 = arith.constant 1.250000e-01 : f32
    %197 = vector.broadcast %cst_104 : f32 to vector<1x128xf32>
    %198 = arith.mulf %191, %197 : vector<1x128xf32>
    %cst_105 = arith.constant 1.250000e-01 : f32
    %199 = vector.broadcast %cst_105 : f32 to vector<1x128xf32>
    %200 = arith.mulf %194, %199 : vector<1x128xf32>
    %201 = arith.mulf %198, %198 : vector<1x128xf32>
    %202 = arith.subf %200, %201 : vector<1x128xf32>
    %cst_106 = arith.constant 0.000000e+00 : f32
    %203 = vector.broadcast %cst_106 : f32 to vector<1x128xf32>
    %204 = arith.maximumf %202, %203 : vector<1x128xf32>
    %cst_107 = arith.constant 9.99999974E-6 : f32
    %205 = vector.broadcast %cst_107 : f32 to vector<1x128xf32>
    %206 = arith.addf %204, %205 : vector<1x128xf32>
    %207 = math.rsqrt %206 : vector<1x128xf32>
    %208 = arith.mulf %207, %195 : vector<1x128xf32>
    %209 = arith.mulf %198, %208 : vector<1x128xf32>
    %210 = arith.subf %196, %209 : vector<1x128xf32>
    %211 = vector.broadcast %208 : vector<1x128xf32> to vector<8x128xf32>
    %212 = arith.mulf %189, %211 : vector<8x128xf32>
    %213 = vector.broadcast %210 : vector<1x128xf32> to vector<8x128xf32>
    %214 = arith.addf %212, %213 : vector<8x128xf32>
    %cst_108 = arith.constant 0.000000e+00 : f32
    %215 = vector.broadcast %cst_108 : f32 to vector<8x128xf32>
    %216 = arith.maximumf %214, %215 : vector<8x128xf32>
    %c6_109 = arith.constant 6 : index
    %c0_110 = arith.constant 0 : index
    %217 = vector.load %arg6[%c6_109, %c0_110] : memref<8x128xf32, #tpu.memory_space<vmem>>, vector<1x128xf32>
    %cst_111 = arith.constant 0.000000e+00 : f32
    %218 = vector.broadcast %cst_111 : f32 to vector<1x128xf32>
    %219 = vector.extract_strided_slice %216 {offsets = [0, 0], sizes = [1, 128], strides = [1, 1]} : vector<8x128xf32> to vector<1x128xf32>
    %220 = arith.truncf %219 : vector<1x128xf32> to vector<1x128xbf16>
    %c0_112 = arith.constant 0 : index
    %c0_113 = arith.constant 0 : index
    %c0_114 = arith.constant 0 : index
    %221 = vector.load %arg5[%c0_112, %c0_113, %c0_114] : memref<4x128x128xbf16, #tpu.memory_space<vmem>>, vector<1x128x128xbf16>
    %222 = vector.shape_cast %221 : vector<1x128x128xbf16> to vector<128x128xbf16>
    %cst_115 = arith.constant dense<0.000000e+00> : vector<1x128xf32>
    %223 = tpu.matmul %220, %222, %cst_115 {dimension_numbers = #tpu.dot_dimension_numbers<[1], [0], [0], [1], [0, 0, 1, 1], [], []>} : vector<1x128xbf16>, vector<128x128xbf16>, vector<1x128xf32> -> vector<1x128xf32>
    %224 = arith.addf %218, %223 : vector<1x128xf32>
    %225 = vector.extract_strided_slice %216 {offsets = [1, 0], sizes = [1, 128], strides = [1, 1]} : vector<8x128xf32> to vector<1x128xf32>
    %226 = arith.truncf %225 : vector<1x128xf32> to vector<1x128xbf16>
    %c1_116 = arith.constant 1 : index
    %c0_117 = arith.constant 0 : index
    %c0_118 = arith.constant 0 : index
    %227 = vector.load %arg5[%c1_116, %c0_117, %c0_118] : memref<4x128x128xbf16, #tpu.memory_space<vmem>>, vector<1x128x128xbf16>
    %228 = vector.shape_cast %227 : vector<1x128x128xbf16> to vector<128x128xbf16>
    %cst_119 = arith.constant dense<0.000000e+00> : vector<1x128xf32>
    %229 = tpu.matmul %226, %228, %cst_119 {dimension_numbers = #tpu.dot_dimension_numbers<[1], [0], [0], [1], [0, 0, 1, 1], [], []>} : vector<1x128xbf16>, vector<128x128xbf16>, vector<1x128xf32> -> vector<1x128xf32>
    %230 = arith.addf %224, %229 : vector<1x128xf32>
    %231 = vector.extract_strided_slice %216 {offsets = [2, 0], sizes = [1, 128], strides = [1, 1]} : vector<8x128xf32> to vector<1x128xf32>
    %232 = arith.truncf %231 : vector<1x128xf32> to vector<1x128xbf16>
    %c2_120 = arith.constant 2 : index
    %c0_121 = arith.constant 0 : index
    %c0_122 = arith.constant 0 : index
    %233 = vector.load %arg5[%c2_120, %c0_121, %c0_122] : memref<4x128x128xbf16, #tpu.memory_space<vmem>>, vector<1x128x128xbf16>
    %234 = vector.shape_cast %233 : vector<1x128x128xbf16> to vector<128x128xbf16>
    %cst_123 = arith.constant dense<0.000000e+00> : vector<1x128xf32>
    %235 = tpu.matmul %232, %234, %cst_123 {dimension_numbers = #tpu.dot_dimension_numbers<[1], [0], [0], [1], [0, 0, 1, 1], [], []>} : vector<1x128xbf16>, vector<128x128xbf16>, vector<1x128xf32> -> vector<1x128xf32>
    %236 = arith.addf %230, %235 : vector<1x128xf32>
    %237 = vector.extract_strided_slice %216 {offsets = [3, 0], sizes = [1, 128], strides = [1, 1]} : vector<8x128xf32> to vector<1x128xf32>
    %238 = arith.truncf %237 : vector<1x128xf32> to vector<1x128xbf16>
    %c3_124 = arith.constant 3 : index
    %c0_125 = arith.constant 0 : index
    %c0_126 = arith.constant 0 : index
    %239 = vector.load %arg5[%c3_124, %c0_125, %c0_126] : memref<4x128x128xbf16, #tpu.memory_space<vmem>>, vector<1x128x128xbf16>
    %240 = vector.shape_cast %239 : vector<1x128x128xbf16> to vector<128x128xbf16>
    %cst_127 = arith.constant dense<0.000000e+00> : vector<1x128xf32>
    %241 = tpu.matmul %238, %240, %cst_127 {dimension_numbers = #tpu.dot_dimension_numbers<[1], [0], [0], [1], [0, 0, 1, 1], [], []>} : vector<1x128xbf16>, vector<128x128xbf16>, vector<1x128xf32> -> vector<1x128xf32>
    %242 = arith.addf %236, %241 : vector<1x128xf32>
    %243 = arith.addf %242, %217 : vector<1x128xf32>
    %244 = vector.extract_strided_slice %243 {offsets = [0, 0], sizes = [1, 4], strides = [1, 1]} : vector<1x128xf32> to vector<1x4xf32>
    %c0_128 = arith.constant 0 : index
    %c0_129 = arith.constant 0 : index
    %245 = vector.load %arg7[%c0_128, %c0_129] : memref<2x4xf32, #tpu.memory_space<vmem>>, vector<1x4xf32>
    tpu.vector_store %arg7[%c0_128, %c0_129], %244 {strides = array<i32>} : memref<2x4xf32, #tpu.memory_space<vmem>>, vector<1x4xf32>,
    %cst_130 = arith.constant 0.000000e+00 : f32
    %246 = vector.broadcast %cst_130 : f32 to vector<1x128xf32>
    %247 = vector.extract_strided_slice %216 {offsets = [4, 0], sizes = [1, 128], strides = [1, 1]} : vector<8x128xf32> to vector<1x128xf32>
    %248 = arith.truncf %247 : vector<1x128xf32> to vector<1x128xbf16>
    %c0_131 = arith.constant 0 : index
    %c0_132 = arith.constant 0 : index
    %c0_133 = arith.constant 0 : index
    %249 = vector.load %arg5[%c0_131, %c0_132, %c0_133] : memref<4x128x128xbf16, #tpu.memory_space<vmem>>, vector<1x128x128xbf16>
    %250 = vector.shape_cast %249 : vector<1x128x128xbf16> to vector<128x128xbf16>
    %cst_134 = arith.constant dense<0.000000e+00> : vector<1x128xf32>
    %251 = tpu.matmul %248, %250, %cst_134 {dimension_numbers = #tpu.dot_dimension_numbers<[1], [0], [0], [1], [0, 0, 1, 1], [], []>} : vector<1x128xbf16>, vector<128x128xbf16>, vector<1x128xf32> -> vector<1x128xf32>
    %252 = arith.addf %246, %251 : vector<1x128xf32>
    %253 = vector.extract_strided_slice %216 {offsets = [5, 0], sizes = [1, 128], strides = [1, 1]} : vector<8x128xf32> to vector<1x128xf32>
    %254 = arith.truncf %253 : vector<1x128xf32> to vector<1x128xbf16>
    %c1_135 = arith.constant 1 : index
    %c0_136 = arith.constant 0 : index
    %c0_137 = arith.constant 0 : index
    %255 = vector.load %arg5[%c1_135, %c0_136, %c0_137] : memref<4x128x128xbf16, #tpu.memory_space<vmem>>, vector<1x128x128xbf16>
    %256 = vector.shape_cast %255 : vector<1x128x128xbf16> to vector<128x128xbf16>
    %cst_138 = arith.constant dense<0.000000e+00> : vector<1x128xf32>
    %257 = tpu.matmul %254, %256, %cst_138 {dimension_numbers = #tpu.dot_dimension_numbers<[1], [0], [0], [1], [0, 0, 1, 1], [], []>} : vector<1x128xbf16>, vector<128x128xbf16>, vector<1x128xf32> -> vector<1x128xf32>
    %258 = arith.addf %252, %257 : vector<1x128xf32>
    %259 = vector.extract_strided_slice %216 {offsets = [6, 0], sizes = [1, 128], strides = [1, 1]} : vector<8x128xf32> to vector<1x128xf32>
    %260 = arith.truncf %259 : vector<1x128xf32> to vector<1x128xbf16>
    %c2_139 = arith.constant 2 : index
    %c0_140 = arith.constant 0 : index
    %c0_141 = arith.constant 0 : index
    %261 = vector.load %arg5[%c2_139, %c0_140, %c0_141] : memref<4x128x128xbf16, #tpu.memory_space<vmem>>, vector<1x128x128xbf16>
    %262 = vector.shape_cast %261 : vector<1x128x128xbf16> to vector<128x128xbf16>
    %cst_142 = arith.constant dense<0.000000e+00> : vector<1x128xf32>
    %263 = tpu.matmul %260, %262, %cst_142 {dimension_numbers = #tpu.dot_dimension_numbers<[1], [0], [0], [1], [0, 0, 1, 1], [], []>} : vector<1x128xbf16>, vector<128x128xbf16>, vector<1x128xf32> -> vector<1x128xf32>
    %264 = arith.addf %258, %263 : vector<1x128xf32>
    %265 = vector.extract_strided_slice %216 {offsets = [7, 0], sizes = [1, 128], strides = [1, 1]} : vector<8x128xf32> to vector<1x128xf32>
    %266 = arith.truncf %265 : vector<1x128xf32> to vector<1x128xbf16>
    %c3_143 = arith.constant 3 : index
    %c0_144 = arith.constant 0 : index
    %c0_145 = arith.constant 0 : index
    %267 = vector.load %arg5[%c3_143, %c0_144, %c0_145] : memref<4x128x128xbf16, #tpu.memory_space<vmem>>, vector<1x128x128xbf16>
    %268 = vector.shape_cast %267 : vector<1x128x128xbf16> to vector<128x128xbf16>
    %cst_146 = arith.constant dense<0.000000e+00> : vector<1x128xf32>
    %269 = tpu.matmul %266, %268, %cst_146 {dimension_numbers = #tpu.dot_dimension_numbers<[1], [0], [0], [1], [0, 0, 1, 1], [], []>} : vector<1x128xbf16>, vector<128x128xbf16>, vector<1x128xf32> -> vector<1x128xf32>
    %270 = arith.addf %264, %269 : vector<1x128xf32>
    %271 = arith.addf %270, %217 : vector<1x128xf32>
    %272 = vector.extract_strided_slice %271 {offsets = [0, 0], sizes = [1, 4], strides = [1, 1]} : vector<1x128xf32> to vector<1x4xf32>
    %c1_147 = arith.constant 1 : index
    %c0_148 = arith.constant 0 : index
    %273 = vector.load %arg7[%c1_147, %c0_148] : memref<2x4xf32, #tpu.memory_space<vmem>>, vector<1x4xf32>
    tpu.vector_store %arg7[%c1_147, %c0_148], %272 {strides = array<i32>} : memref<2x4xf32, #tpu.memory_space<vmem>>, vector<1x4xf32>,
    return
  }
  func.func @transform_0(%arg0: i32) -> (i32, i32) {
    %c0_i32 = arith.constant 0 : i32
    %c0_i32_0 = arith.constant 0 : i32
    %c0_i32_1 = arith.constant 0 : i32
    return %c0_i32, %c0_i32_0 : i32, i32
  }
  func.func @transform_1(%arg0: i32) -> (i32, i32) {
    %c0_i32 = arith.constant 0 : i32
    %c0_i32_0 = arith.constant 0 : i32
    %c0_i32_1 = arith.constant 0 : i32
    return %c0_i32, %c0_i32_0 : i32, i32
  }
  func.func @transform_2(%arg0: i32) -> (i32, i32) {
    %c0_i32 = arith.constant 0 : i32
    %c0_i32_0 = arith.constant 0 : i32
    %c0_i32_1 = arith.constant 0 : i32
    return %c0_i32, %c0_i32_0 : i32, i32
  }
  func.func @transform_3(%arg0: i32) -> (i32, i32, i32) {
    %c0_i32 = arith.constant 0 : i32
    %c0_i32_0 = arith.constant 0 : i32
    %c0_i32_1 = arith.constant 0 : i32
    %c0_i32_2 = arith.constant 0 : i32
    return %c0_i32, %c0_i32_0, %c0_i32_1 : i32, i32, i32
  }
  func.func @transform_4(%arg0: i32) -> (i32, i32, i32) {
    %c0_i32 = arith.constant 0 : i32
    %c0_i32_0 = arith.constant 0 : i32
    %c0_i32_1 = arith.constant 0 : i32
    %c0_i32_2 = arith.constant 0 : i32
    return %c0_i32, %c0_i32_0, %c0_i32_1 : i32, i32, i32
  }
  func.func @transform_5(%arg0: i32) -> (i32, i32) {
    %c0_i32 = arith.constant 0 : i32
    %c0_i32_0 = arith.constant 0 : i32
    %c0_i32_1 = arith.constant 0 : i32
    return %c0_i32, %c0_i32_0 : i32, i32
  }
  func.func @transform_6(%arg0: i32) -> (i32, i32) {
    %c0_i32 = arith.constant 0 : i32
    %c0_i32_0 = arith.constant 0 : i32
    %c0_i32_1 = arith.constant 0 : i32
    return %c0_i32, %c0_i32_0 : i32, i32
  }
}

</mosaic_0001>

<llo_original>
// kernel: dqn_forward.2
$region0: #{dqn_forward.2}
  #allocation0 [shape = 'u32[]', space=smem, size = 0x4, offset = 0x4, fixed_abs, tag = 'smem constant byte address 0x4 - core index']
  #allocation1 [shape = 'u32[144,128]{1,0:T(1,128)}', space=vmem, size = 0x12000, scoped, tag = 'internal scratch']
  %s0 = inlined_call_operand.vmem [shape: bf16[648,128], index: 0, kind: input, shape index: {}]
  %s1 = inlined_call_operand.vmem [shape: bf16[128,128], index: 1, kind: input, shape index: {}]
  %s2 = inlined_call_operand.vmem [shape: f32[8,128], index: 2, kind: input, shape index: {}]
  %s3 = inlined_call_operand.vmem [shape: bf16[648,128], index: 3, kind: output, shape index: {}]
  %s4 = sld [smem:[#allocation0]]
  $region22: #{dqn_forward.2} parent=0
    _
  %s6 = ssub.s32 1, %s4
  %s7 = scalar_select 0, %s6, %s4
  // Predicated region
  $region2: #{dqn_forward.2} parent=0 // pred_check
    _
  $region3: #{dqn_forward.2} parent=0 // pred_check_branch
    %9 = sbr.rel (0) target = $region5
  $region4: #{dqn_forward.2} parent=0 // pred_region
    _
  $region5: #{dqn_forward.2} parent=0 // pred_fallthru
    _
  // Predicated region
  $region6: #{dqn_forward.2} parent=0 // pred_check
    _
  $region7: #{dqn_forward.2} parent=0 // pred_check_branch
    %11 = sbr.rel (0) target = $region9
  $region8: #{dqn_forward.2} parent=0 // pred_region
    _
  $region9: #{dqn_forward.2} parent=0 // pred_fallthru
    _
  // Predicated region
  $region10: #{dqn_forward.2} parent=0 // pred_check
    _
  $region11: #{dqn_forward.2} parent=0 // pred_check_branch
    %13 = sbr.rel (0) target = $region13
  $region12: #{dqn_forward.2} parent=0 // pred_region
    _
  $region13: #{dqn_forward.2} parent=0 // pred_fallthru
    _
  %v15 = vld [vmem:[%s2] sm:$0x1]
  %v16 = vld [vmem:[%s2 + $0x1] sm:$0x1]
  %v17 = vld [vmem:[%s2 + $0x2] sm:$0x1]
  %v18 = vld [vmem:[%s0] sm:$0xf]
  %v19 = vld [vmem:[%s0 + $0x4] sm:$0xf]
  %v20 = vld [vmem:[%s0 + $0x8] sm:$0xf]
  %v21 = vld [vmem:[%s0 + $0xc] sm:$0xf]
  %v22 = vld [vmem:[%s0 + $0x10] sm:$0xf]
  %v23 = vld [vmem:[%s0 + $0x14] sm:$0xf]
  %v24 = vld [vmem:[%s0 + $0x18] sm:$0xf]
  %v25 = vld [vmem:[%s0 + $0x1c] sm:$0xf]
  %v26 = vld [vmem:[%s0 + $0x20] sm:$0xf]
  %v27 = vld [vmem:[%s0 + $0x24] sm:$0xf]
  %v28 = vld [vmem:[%s0 + $0x28] sm:$0xf]
  %v29 = vld [vmem:[%s0 + $0x2c] sm:$0xf]
  %v30 = vld [vmem:[%s0 + $0x30] sm:$0xf]
  %v31 = vld [vmem:[%s0 + $0x34] sm:$0xf]
  %v32 = vld [vmem:[%s0 + $0x38] sm:$0xf]
  %v33 = vld [vmem:[%s0 + $0x3c] sm:$0xf]
  %v34 = vld [vmem:[%s1] sm:$0xf]
  %v35 = vld [vmem:[%s1 + $0x4] sm:$0xf]
  %v36 = vld [vmem:[%s1 + $0x8] sm:$0xf]
  %v37 = vld [vmem:[%s1 + $0xc] sm:$0xf]
  %v38 = vld [vmem:[%s1 + $0x10] sm:$0xf]
  %v39 = vld [vmem:[%s1 + $0x14] sm:$0xf]
  %v40 = vld [vmem:[%s1 + $0x18] sm:$0xf]
  %v41 = vld [vmem:[%s1 + $0x1c] sm:$0xf]
  %v42 = vld [vmem:[%s1 + $0x20] sm:$0xf]
  %v43 = vld [vmem:[%s1 + $0x24] sm:$0xf]
  %v44 = vld [vmem:[%s1 + $0x28] sm:$0xf]
  %v45 = vld [vmem:[%s1 + $0x2c] sm:$0xf]
  %v46 = vld [vmem:[%s1 + $0x30] sm:$0xf]
  %v47 = vld [vmem:[%s1 + $0x34] sm:$0xf]
  %v48 = vld [vmem:[%s1 + $0x38] sm:$0xf]
  %v49 = vld [vmem:[%s1 + $0x3c] sm:$0xf]
  %v50 = vlaneseq
  %v51 = vshrl.u32 %v50, 7
  %v52 = vsub.s32 0, %v51
  %v53 = vrot.slane %v15, %v52
  %v70 = vunpack.c.l.b16 %v18
  %v71 = vunpack.c.l.b16 %v19
  %v72 = vunpack.c.l.b16 %v20
  %v73 = vunpack.c.l.b16 %v21
  %v74 = vunpack.c.l.b16 %v22
  %v75 = vunpack.c.l.b16 %v23
  %v76 = vunpack.c.l.b16 %v24
  %v77 = vunpack.c.l.b16 %v25
  %v78 = vunpack.c.l.b16 %v26
  %v79 = vunpack.c.l.b16 %v27
  %v80 = vunpack.c.l.b16 %v28
  %v81 = vunpack.c.l.b16 %v29
  %v82 = vunpack.c.l.b16 %v30
  %v83 = vunpack.c.l.b16 %v31
  %v84 = vunpack.c.l.b16 %v32
  %v85 = vunpack.c.l.b16 %v33
  %v86 = vpack.c.b16 %v71, %v70
  %v87 = vpack.c.b16 %v73, %v72
  %v88 = vpack.c.b16 %v75, %v74
  %v89 = vpack.c.b16 %v77, %v76
  %v90 = vpack.c.b16 %v79, %v78
  %v91 = vpack.c.b16 %v81, %v80
  %v92 = vpack.c.b16 %v83, %v82
  %v93 = vpack.c.b16 %v85, %v84
  %v118 = vunpack.c.l.b16 %v34
  %v119 = vunpack.c.l.b16 %v35
  %v120 = vunpack.c.l.b16 %v36
  %v121 = vunpack.c.l.b16 %v37
  %v122 = vunpack.c.l.b16 %v38
  %v123 = vunpack.c.l.b16 %v39
  %v124 = vunpack.c.l.b16 %v40
  %v125 = vunpack.c.l.b16 %v41
  %v126 = vunpack.c.l.b16 %v42
  %v127 = vunpack.c.l.b16 %v43
  %v128 = vunpack.c.l.b16 %v44
  %v129 = vunpack.c.l.b16 %v45
  %v130 = vunpack.c.l.b16 %v46
  %v131 = vunpack.c.l.b16 %v47
  %v132 = vunpack.c.l.b16 %v48
  %v133 = vunpack.c.l.b16 %v49
  %v134 = vpack.c.b16 %v119, %v118
  %v135 = vpack.c.b16 %v121, %v120
  %v136 = vpack.c.b16 %v123, %v122
  %v137 = vpack.c.b16 %v125, %v124
  %v138 = vpack.c.b16 %v127, %v126
  %v139 = vpack.c.b16 %v129, %v128
  %v140 = vpack.c.b16 %v131, %v130
  %v141 = vpack.c.b16 %v133, %v132
  %150 = vmatprep.subr.bf16.mxu0 0
  %151 = vmatpush1.bf16.msra.mxu0 %v141
  %152 = vmatprep.subr.bf16.mxu0 0
  %153 = vmatpush1.bf16.msra.mxu0 %v140
  %154 = vmatprep.subr.bf16.mxu0 0
  %155 = vmatpush1.bf16.msra.mxu0 %v139
  %156 = vmatprep.subr.bf16.mxu0 0
  %157 = vmatpush1.bf16.msra.mxu0 %v138
  %158 = vmatprep.subr.bf16.mxu0 0
  %159 = vmatpush1.bf16.msra.mxu0 %v137
  %160 = vmatprep.subr.bf16.mxu0 0
  %161 = vmatpush1.bf16.msra.mxu0 %v136
  %162 = vmatprep.subr.bf16.mxu0 0
  %163 = vmatpush1.bf16.msra.mxu0 %v135
  %164 = vmatprep.subr.bf16.mxu0 0
  %165 = vmatpush1.bf16.msra.mxu0 %v134
  %166 = vmatprep.subr.bf16.mxu0 0
  %167 = vmatpush2.bf16.msra.mxu0 0
  %168 = vmatprep.subr.bf16.mxu0 0
  %169 = vmatpush2.bf16.msra.mxu0 0
  %170 = vmatprep.subr.bf16.mxu0 0
  %171 = vmatpush2.bf16.msra.mxu0 0
  %172 = vmatprep.subr.bf16.mxu0 0
  %173 = vmatpush2.bf16.msra.mxu0 0
  %174 = vmatprep.subr.bf16.mxu0 0
  %175 = vmatpush2.bf16.msra.mxu0 0
  %176 = vmatprep.subr.bf16.mxu0 0
  %177 = vmatpush2.bf16.msra.mxu0 0
  %178 = vmatprep.subr.bf16.mxu0 0
  %179 = vmatpush2.bf16.msra.mxu0 0
  %180 = vmatprep.subr.bf16.mxu0 0
  %181 = vmatpush2.bf16.msra.mxu0 0
  %182 = vmatprep.mubr.bf16.mxu0 0
  %183 = vmatmul.mubr.bf16.gmra.mxu0 %v86
  %v184 = vpop.f32.mrf.mxu0
  %v185 = vadd.f32 %v53, %v184
  %v186 = vpop.f32.mrf.mxu0
  %v187 = vpop.f32.mrf.mxu0
  %v188 = vadd.f32 %v53, %v187
  %v189 = vpop.f32.mrf.mxu0
  %190 = vmatprep.mubr.bf16.mxu0 0
  %191 = vmatmul.mubr.bf16.gmra.mxu0 %v87
  %v192 = vpop.f32.mrf.mxu0
  %v193 = vadd.f32 %v53, %v192
  %v194 = vpop.f32.mrf.mxu0
  %v195 = vpop.f32.mrf.mxu0
  %v196 = vadd.f32 %v53, %v195
  %v197 = vpop.f32.mrf.mxu0
  %198 = vmatprep.mubr.bf16.mxu0 0
  %199 = vmatmul.mubr.bf16.gmra.mxu0 %v88
  %v200 = vpop.f32.mrf.mxu0
  %v201 = vadd.f32 %v53, %v200
  %v202 = vpop.f32.mrf.mxu0
  %v203 = vpop.f32.mrf.mxu0
  %v204 = vadd.f32 %v53, %v203
  %v205 = vpop.f32.mrf.mxu0
  %206 = vmatprep.mubr.bf16.mxu0 0
  %207 = vmatmul.mubr.bf16.gmra.mxu0 %v89
  %v208 = vpop.f32.mrf.mxu0
  %v209 = vadd.f32 %v53, %v208
  %v210 = vpop.f32.mrf.mxu0
  %v211 = vpop.f32.mrf.mxu0
  %v212 = vadd.f32 %v53, %v211
  %v213 = vpop.f32.mrf.mxu0
  %214 = vmatprep.mubr.bf16.mxu0 0
  %215 = vmatmul.mubr.bf16.gmra.mxu0 %v90
  %v216 = vpop.f32.mrf.mxu0
  %v217 = vadd.f32 %v53, %v216
  %v218 = vpop.f32.mrf.mxu0
  %v219 = vpop.f32.mrf.mxu0
  %v220 = vadd.f32 %v53, %v219
  %v221 = vpop.f32.mrf.mxu0
  %222 = vmatprep.mubr.bf16.mxu0 0
  %223 = vmatmul.mubr.bf16.gmra.mxu0 %v91
  %v224 = vpop.f32.mrf.mxu0
  %v225 = vadd.f32 %v53, %v224
  %v226 = vpop.f32.mrf.mxu0
  %v227 = vpop.f32.mrf.mxu0
  %v228 = vadd.f32 %v53, %v227
  %v229 = vpop.f32.mrf.mxu0
  %230 = vmatprep.mubr.bf16.mxu0 0
  %231 = vmatmul.mubr.bf16.gmra.mxu0 %v92
  %v232 = vpop.f32.mrf.mxu0
  %v233 = vadd.f32 %v53, %v232
  %v234 = vpop.f32.mrf.mxu0
  %v235 = vpop.f32.mrf.mxu0
  %v236 = vadd.f32 %v53, %v235
  %v237 = vpop.f32.mrf.mxu0
  %238 = vmatprep.mubr.bf16.mxu0 0
  %239 = vmatmul.mubr.bf16.gmra.mxu0 %v93
  %v240 = vpop.f32.mrf.mxu0
  %v241 = vadd.f32 %v53, %v240
  %v242 = vpop.f32.mrf.mxu0
  %v243 = vpop.f32.mrf.mxu0
  %v244 = vadd.f32 %v53, %v243
  %v245 = vpop.f32.mrf.mxu0
  %246 = vdwg.mxu0
  %v247 = vadd.f32 %v185, %v188
  %v248 = vadd.f32 %v247, %v193
  %v249 = vadd.f32 %v248, %v196
  %v250 = vadd.f32 %v249, %v201
  %v251 = vadd.f32 %v250, %v204
  %v252 = vadd.f32 %v251, %v209
  %v253 = vadd.f32 %v252, %v212
  %v254 = vadd.f32 %v253, %v217
  %v255 = vadd.f32 %v254, %v220
  %v256 = vadd.f32 %v255, %v225
  %v257 = vadd.f32 %v256, %v228
  %v258 = vadd.f32 %v257, %v233
  %v259 = vadd.f32 %v258, %v236
  %v260 = vadd.f32 %v259, %v241
  %v261 = vadd.f32 %v260, %v244
  %v262 = vrot.slane %v261, 4
  %v263 = vadd.f32 %v261, %v262
  %v264 = vrot.slane %v263, 2
  %v265 = vadd.f32 %v263, %v264
  %v266 = vrot.slane %v265, 1
  %v267 = vadd.f32 %v265, %v266
  %v268 = vadd.f32 %v267, 0.0
  %v269 = vmul.f32 %v185, %v185
  %v270 = vmul.f32 %v188, %v188
  %v271 = vmul.f32 %v193, %v193
  %v272 = vmul.f32 %v196, %v196
  %v273 = vmul.f32 %v201, %v201
  %v274 = vmul.f32 %v204, %v204
  %v275 = vmul.f32 %v209, %v209
  %v276 = vmul.f32 %v212, %v212
  %v277 = vmul.f32 %v217, %v217
  %v278 = vmul.f32 %v220, %v220
  %v279 = vmul.f32 %v225, %v225
  %v280 = vmul.f32 %v228, %v228
  %v281 = vmul.f32 %v233, %v233
  %v282 = vmul.f32 %v236, %v236
  %v283 = vmul.f32 %v241, %v241
  %v284 = vmul.f32 %v244, %v244
  %v285 = vadd.f32 %v269, %v270
  %v286 = vadd.f32 %v285, %v271
  %v287 = vadd.f32 %v286, %v272
  %v288 = vadd.f32 %v287, %v273
  %v289 = vadd.f32 %v288, %v274
  %v290 = vadd.f32 %v289, %v275
  %v291 = vadd.f32 %v290, %v276
  %v292 = vadd.f32 %v291, %v277
  %v293 = vadd.f32 %v292, %v278
  %v294 = vadd.f32 %v293, %v279
  %v295 = vadd.f32 %v294, %v280
  %v296 = vadd.f32 %v295, %v281
  %v297 = vadd.f32 %v296, %v282
  %v298 = vadd.f32 %v297, %v283
  %v299 = vadd.f32 %v298, %v284
  %v300 = vrot.slane %v299, 4
  %v301 = vadd.f32 %v299, %v300
  %v302 = vrot.slane %v301, 2
  %v303 = vadd.f32 %v301, %v302
  %v304 = vrot.slane %v303, 1
  %v305 = vadd.f32 %v303, %v304
  %v306 = vadd.f32 %v305, 0.0
  %v307 = vpack.c.bf16 %v188, %v185
  %v308 = vpack.c.bf16 %v196, %v193
  %v309 = vpack.c.bf16 %v204, %v201
  %v310 = vpack.c.bf16 %v212, %v209
  %v311 = vpack.c.bf16 %v220, %v217
  %v312 = vpack.c.bf16 %v228, %v225
  %v313 = vpack.c.bf16 %v236, %v233
  %v314 = vpack.c.bf16 %v244, %v241
  %v323 = vunpack.c.l.b16 %v307
  %v324 = vunpack.c.h.b16 %v307
  %v325 = vunpack.c.l.b16 %v308
  %v326 = vunpack.c.h.b16 %v308
  %v327 = vunpack.c.l.b16 %v309
  %v328 = vunpack.c.h.b16 %v309
  %v329 = vunpack.c.l.b16 %v310
  %v330 = vunpack.c.h.b16 %v310
  %v331 = vunpack.c.l.b16 %v311
  %v332 = vunpack.c.h.b16 %v311
  %v333 = vunpack.c.l.b16 %v312
  %v334 = vunpack.c.h.b16 %v312
  %v335 = vunpack.c.l.b16 %v313
  %v336 = vunpack.c.h.b16 %v313
  %v337 = vunpack.c.l.b16 %v314
  %v338 = vunpack.c.h.b16 %v314
  %v339 = vpack.c.b16 %v323, %v323
  %v340 = vpack.c.b16 %v324, %v324
  %v341 = vpack.c.b16 %v325, %v325
  %v342 = vpack.c.b16 %v326, %v326
  %v343 = vpack.c.b16 %v327, %v327
  %v344 = vpack.c.b16 %v328, %v328
  %v345 = vpack.c.b16 %v329, %v329
  %v346 = vpack.c.b16 %v330, %v330
  %v347 = vpack.c.b16 %v331, %v331
  %v348 = vpack.c.b16 %v332, %v332
  %v349 = vpack.c.b16 %v333, %v333
  %v350 = vpack.c.b16 %v334, %v334
  %v351 = vpack.c.b16 %v335, %v335
  %v352 = vpack.c.b16 %v336, %v336
  %v353 = vpack.c.b16 %v337, %v337
  %v354 = vpack.c.b16 %v338, %v338
  %371 = vst [vmem:[%s3] sm:$0xf] %v339
  %372 = vst [vmem:[%s3 + $0x4] sm:$0xf] %v340
  %373 = vst [vmem:[%s3 + $0x8] sm:$0xf] %v341
  %374 = vst [vmem:[%s3 + $0xc] sm:$0xf] %v342
  %375 = vst [vmem:[%s3 + $0x10] sm:$0xf] %v343
  %376 = vst [vmem:[%s3 + $0x14] sm:$0xf] %v344
  %377 = vst [vmem:[%s3 + $0x18] sm:$0xf] %v345
  %378 = vst [vmem:[%s3 + $0x1c] sm:$0xf] %v346
  %379 = vst [vmem:[%s3 + $0x20] sm:$0xf] %v347
  %380 = vst [vmem:[%s3 + $0x24] sm:$0xf] %v348
  %381 = vst [vmem:[%s3 + $0x28] sm:$0xf] %v349
  %382 = vst [vmem:[%s3 + $0x2c] sm:$0xf] %v350
  %383 = vst [vmem:[%s3 + $0x30] sm:$0xf] %v351
  %384 = vst [vmem:[%s3 + $0x34] sm:$0xf] %v352
  %385 = vst [vmem:[%s3 + $0x38] sm:$0xf] %v353
  %386 = vst [vmem:[%s3 + $0x3c] sm:$0xf] %v354
  %v387 = vld [vmem:[%s0 + $0x40] sm:$0xf]
  %v388 = vld [vmem:[%s0 + $0x44] sm:$0xf]
  %v389 = vld [vmem:[%s0 + $0x48] sm:$0xf]
  %v390 = vld [vmem:[%s0 + $0x4c] sm:$0xf]
  %v391 = vld [vmem:[%s0 + $0x50] sm:$0xf]
  %v392 = vld [vmem:[%s0 + $0x54] sm:$0xf]
  %v393 = vld [vmem:[%s0 + $0x58] sm:$0xf]
  %v394 = vld [vmem:[%s0 + $0x5c] sm:$0xf]
  %v395 = vld [vmem:[%s0 + $0x60] sm:$0xf]
  %v396 = vld [vmem:[%s0 + $0x64] sm:$0xf]
  %v397 = vld [vmem:[%s0 + $0x68] sm:$0xf]
  %v398 = vld [vmem:[%s0 + $0x6c] sm:$0xf]
  %v399 = vld [vmem:[%s0 + $0x70] sm:$0xf]
  %v400 = vld [vmem:[%s0 + $0x74] sm:$0xf]
  %v401 = vld [vmem:[%s0 + $0x78] sm:$0xf]
  %v402 = vld [vmem:[%s0 + $0x7c] sm:$0xf]
  %v403 = vld [vmem:[%s1] sm:$0xf]
  %v404 = vld [vmem:[%s1 + $0x4] sm:$0xf]
  %v405 = vld [vmem:[%s1 + $0x8] sm:$0xf]
  %v406 = vld [vmem:[%s1 + $0xc] sm:$0xf]
  %v407 = vld [vmem:[%s1 + $0x10] sm:$0xf]
  %v408 = vld [vmem:[%s1 + $0x14] sm:$0xf]
  %v409 = vld [vmem:[%s1 + $0x18] sm:$0xf]
  %v410 = vld [vmem:[%s1 + $0x1c] sm:$0xf]
  %v411 = vld [vmem:[%s1 + $0x20] sm:$0xf]
  %v412 = vld [vmem:[%s1 + $0x24] sm:$0xf]
  %v413 = vld [vmem:[%s1 + $0x28] sm:$0xf]
  %v414 = vld [vmem:[%s1 + $0x2c] sm:$0xf]
  %v415 = vld [vmem:[%s1 + $0x30] sm:$0xf]
  %v416 = vld [vmem:[%s1 + $0x34] sm:$0xf]
  %v417 = vld [vmem:[%s1 + $0x38] sm:$0xf]
  %v418 = vld [vmem:[%s1 + $0x3c] sm:$0xf]
  %v435 = vunpack.c.l.b16 %v387
  %v436 = vunpack.c.l.b16 %v388
  %v437 = vunpack.c.l.b16 %v389
  %v438 = vunpack.c.l.b16 %v390
  %v439 = vunpack.c.l.b16 %v391
  %v440 = vunpack.c.l.b16 %v392
  %v441 = vunpack.c.l.b16 %v393
  %v442 = vunpack.c.l.b16 %v394
  %v443 = vunpack.c.l.b16 %v395
  %v444 = vunpack.c.l.b16 %v396
  %v445 = vunpack.c.l.b16 %v397
  %v446 = vunpack.c.l.b16 %v398
  %v447 = vunpack.c.l.b16 %v399
  %v448 = vunpack.c.l.b16 %v400
  %v449 = vunpack.c.l.b16 %v401
  %v450 = vunpack.c.l.b16 %v402
  %v451 = vpack.c.b16 %v436, %v435
  %v452 = vpack.c.b16 %v438, %v437
  %v453 = vpack.c.b16 %v440, %v439
  %v454 = vpack.c.b16 %v442, %v441
  %v455 = vpack.c.b16 %v444, %v443
  %v456 = vpack.c.b16 %v446, %v445
  %v457 = vpack.c.b16 %v448, %v447
  %v458 = vpack.c.b16 %v450, %v449
  %v483 = vunpack.c.l.b16 %v403
  %v484 = vunpack.c.l.b16 %v404
  %v485 = vunpack.c.l.b16 %v405
  %v486 = vunpack.c.l.b16 %v406
  %v487 = vunpack.c.l.b16 %v407
  %v488 = vunpack.c.l.b16 %v408
  %v489 = vunpack.c.l.b16 %v409
  %v490 = vunpack.c.l.b16 %v410
  %v491 = vunpack.c.l.b16 %v411
  %v492 = vunpack.c.l.b16 %v412
  %v493 = vunpack.c.l.b16 %v413
  %v494 = vunpack.c.l.b16 %v414
  %v495 = vunpack.c.l.b16 %v415
  %v496 = vunpack.c.l.b16 %v416
  %v497 = vunpack.c.l.b16 %v417
  %v498 = vunpack.c.l.b16 %v418
  %v499 = vpack.c.b16 %v484, %v483
  %v500 = vpack.c.b16 %v486, %v485
  %v501 = vpack.c.b16 %v488, %v487
  %v502 = vpack.c.b16 %v490, %v489
  %v503 = vpack.c.b16 %v492, %v491
  %v504 = vpack.c.b16 %v494, %v493
  %v505 = vpack.c.b16 %v496, %v495
  %v506 = vpack.c.b16 %v498, %v497
  %515 = vmatprep.subr.bf16.mxu0 0
  %516 = vmatpush1.bf16.msra.mxu0 %v506
  %517 = vmatprep.subr.bf16.mxu0 0
  %518 = vmatpush1.bf16.msra.mxu0 %v505
  %519 = vmatprep.subr.bf16.mxu0 0
  %520 = vmatpush1.bf16.msra.mxu0 %v504
  %521 = vmatprep.subr.bf16.mxu0 0
  %522 = vmatpush1.bf16.msra.mxu0 %v503
  %523 = vmatprep.subr.bf16.mxu0 0
  %524 = vmatpush1.bf16.msra.mxu0 %v502
  %525 = vmatprep.subr.bf16.mxu0 0
  %526 = vmatpush1.bf16.msra.mxu0 %v501
  %527 = vmatprep.subr.bf16.mxu0 0
  %528 = vmatpush1.bf16.msra.mxu0 %v500
  %529 = vmatprep.subr.bf16.mxu0 0
  %530 = vmatpush1.bf16.msra.mxu0 %v499
  %531 = vmatprep.subr.bf16.mxu0 0
  %532 = vmatpush2.bf16.msra.mxu0 0
  %533 = vmatprep.subr.bf16.mxu0 0
  %534 = vmatpush2.bf16.msra.mxu0 0
  %535 = vmatprep.subr.bf16.mxu0 0
  %536 = vmatpush2.bf16.msra.mxu0 0
  %537 = vmatprep.subr.bf16.mxu0 0
  %538 = vmatpush2.bf16.msra.mxu0 0
  %539 = vmatprep.subr.bf16.mxu0 0
  %540 = vmatpush2.bf16.msra.mxu0 0
  %541 = vmatprep.subr.bf16.mxu0 0
  %542 = vmatpush2.bf16.msra.mxu0 0
  %543 = vmatprep.subr.bf16.mxu0 0
  %544 = vmatpush2.bf16.msra.mxu0 0
  %545 = vmatprep.subr.bf16.mxu0 0
  %546 = vmatpush2.bf16.msra.mxu0 0
  %547 = vmatprep.mubr.bf16.mxu0 0
  %548 = vmatmul.mubr.bf16.gmra.mxu0 %v451
  %v549 = vpop.f32.mrf.mxu0
  %v550 = vadd.f32 %v53, %v549
  %v551 = vpop.f32.mrf.mxu0
  %v552 = vpop.f32.mrf.mxu0
  %v553 = vadd.f32 %v53, %v552
  %v554 = vpop.f32.mrf.mxu0
  %555 = vmatprep.mubr.bf16.mxu0 0
  %556 = vmatmul.mubr.bf16.gmra.mxu0 %v452
  %v557 = vpop.f32.mrf.mxu0
  %v558 = vadd.f32 %v53, %v557
  %v559 = vpop.f32.mrf.mxu0
  %v560 = vpop.f32.mrf.mxu0
  %v561 = vadd.f32 %v53, %v560
  %v562 = vpop.f32.mrf.mxu0
  %563 = vmatprep.mubr.bf16.mxu0 0
  %564 = vmatmul.mubr.bf16.gmra.mxu0 %v453
  %v565 = vpop.f32.mrf.mxu0
  %v566 = vadd.f32 %v53, %v565
  %v567 = vpop.f32.mrf.mxu0
  %v568 = vpop.f32.mrf.mxu0
  %v569 = vadd.f32 %v53, %v568
  %v570 = vpop.f32.mrf.mxu0
  %571 = vmatprep.mubr.bf16.mxu0 0
  %572 = vmatmul.mubr.bf16.gmra.mxu0 %v454
  %v573 = vpop.f32.mrf.mxu0
  %v574 = vadd.f32 %v53, %v573
  %v575 = vpop.f32.mrf.mxu0
  %v576 = vpop.f32.mrf.mxu0
  %v577 = vadd.f32 %v53, %v576
  %v578 = vpop.f32.mrf.mxu0
  %579 = vmatprep.mubr.bf16.mxu0 0
  %580 = vmatmul.mubr.bf16.gmra.mxu0 %v455
  %v581 = vpop.f32.mrf.mxu0
  %v582 = vadd.f32 %v53, %v581
  %v583 = vpop.f32.mrf.mxu0
  %v584 = vpop.f32.mrf.mxu0
  %v585 = vadd.f32 %v53, %v584
  %v586 = vpop.f32.mrf.mxu0
  %587 = vmatprep.mubr.bf16.mxu0 0
  %588 = vmatmul.mubr.bf16.gmra.mxu0 %v456
  %v589 = vpop.f32.mrf.mxu0
  %v590 = vadd.f32 %v53, %v589
  %v591 = vpop.f32.mrf.mxu0
  %v592 = vpop.f32.mrf.mxu0
  %v593 = vadd.f32 %v53, %v592
  %v594 = vpop.f32.mrf.mxu0
  %595 = vmatprep.mubr.bf16.mxu0 0
  %596 = vmatmul.mubr.bf16.gmra.mxu0 %v457
  %v597 = vpop.f32.mrf.mxu0
  %v598 = vadd.f32 %v53, %v597
  %v599 = vpop.f32.mrf.mxu0
  %v600 = vpop.f32.mrf.mxu0
  %v601 = vadd.f32 %v53, %v600
  %v602 = vpop.f32.mrf.mxu0
  %603 = vmatprep.mubr.bf16.mxu0 0
  %604 = vmatmul.mubr.bf16.gmra.mxu0 %v458
  %v605 = vpop.f32.mrf.mxu0
  %v606 = vadd.f32 %v53, %v605
  %v607 = vpop.f32.mrf.mxu0
  %v608 = vpop.f32.mrf.mxu0
  %v609 = vadd.f32 %v53, %v608
  %v610 = vpop.f32.mrf.mxu0
  %611 = vdwg.mxu0
  %v612 = vadd.f32 %v550, %v553
  %v613 = vadd.f32 %v612, %v558
  %v614 = vadd.f32 %v613, %v561
  %v615 = vadd.f32 %v614, %v566
  %v616 = vadd.f32 %v615, %v569
  %v617 = vadd.f32 %v616, %v574
  %v618 = vadd.f32 %v617, %v577
  %v619 = vadd.f32 %v618, %v582
  %v620 = vadd.f32 %v619, %v585
  %v621 = vadd.f32 %v620, %v590
  %v622 = vadd.f32 %v621, %v593
  %v623 = vadd.f32 %v622, %v598
  %v624 = vadd.f32 %v623, %v601
  %v625 = vadd.f32 %v624, %v606
  %v626 = vadd.f32 %v625, %v609
  %v627 = vrot.slane %v626, 4
  %v628 = vadd.f32 %v626, %v627
  %v629 = vrot.slane %v628, 2
  %v630 = vadd.f32 %v628, %v629
  %v631 = vrot.slane %v630, 1
  %v632 = vadd.f32 %v630, %v631
  %v633 = vadd.f32 %v268, %v632
  %v634 = vmul.f32 %v550, %v550
  %v635 = vmul.f32 %v553, %v553
  %v636 = vmul.f32 %v558, %v558
  %v637 = vmul.f32 %v561, %v561
  %v638 = vmul.f32 %v566, %v566
  %v639 = vmul.f32 %v569, %v569
  %v640 = vmul.f32 %v574, %v574
  %v641 = vmul.f32 %v577, %v577
  %v642 = vmul.f32 %v582, %v582
  %v643 = vmul.f32 %v585, %v585
  %v644 = vmul.f32 %v590, %v590
  %v645 = vmul.f32 %v593, %v593
  %v646 = vmul.f32 %v598, %v598
  %v647 = vmul.f32 %v601, %v601
  %v648 = vmul.f32 %v606, %v606
  %v649 = vmul.f32 %v609, %v609
  %v650 = vadd.f32 %v634, %v635
  %v651 = vadd.f32 %v650, %v636
  %v652 = vadd.f32 %v651, %v637
  %v653 = vadd.f32 %v652, %v638
  %v654 = vadd.f32 %v653, %v639
  %v655 = vadd.f32 %v654, %v640
  %v656 = vadd.f32 %v655, %v641
  %v657 = vadd.f32 %v656, %v642
  %v658 = vadd.f32 %v657, %v643
  %v659 = vadd.f32 %v658, %v644
  %v660 = vadd.f32 %v659, %v645
  %v661 = vadd.f32 %v660, %v646
  %v662 = vadd.f32 %v661, %v647
  %v663 = vadd.f32 %v662, %v648
  %v664 = vadd.f32 %v663, %v649
  %v665 = vrot.slane %v664, 4
  %v666 = vadd.f32 %v664, %v665
  %v667 = vrot.slane %v666, 2
  %v668 = vadd.f32 %v666, %v667
  %v669 = vrot.slane %v668, 1
  %v670 = vadd.f32 %v668, %v669
  %v671 = vadd.f32 %v306, %v670
  %v672 = vpack.c.bf16 %v553, %v550
  %v673 = vpack.c.bf16 %v561, %v558
  %v674 = vpack.c.bf16 %v569, %v566
  %v675 = vpack.c.bf16 %v577, %v574
  %v676 = vpack.c.bf16 %v585, %v582
  %v677 = vpack.c.bf16 %v593, %v590
  %v678 = vpack.c.bf16 %v601, %v598
  %v679 = vpack.c.bf16 %v609, %v606
  %v688 = vunpack.c.l.b16 %v672
  %v689 = vunpack.c.h.b16 %v672
  %v690 = vunpack.c.l.b16 %v673
  %v691 = vunpack.c.h.b16 %v673
  %v692 = vunpack.c.l.b16 %v674
  %v693 = vunpack.c.h.b16 %v674
  %v694 = vunpack.c.l.b16 %v675
  %v695 = vunpack.c.h.b16 %v675
  %v696 = vunpack.c.l.b16 %v676
  %v697 = vunpack.c.h.b16 %v676
  %v698 = vunpack.c.l.b16 %v677
  %v699 = vunpack.c.h.b16 %v677
  %v700 = vunpack.c.l.b16 %v678
  %v701 = vunpack.c.h.b16 %v678
  %v702 = vunpack.c.l.b16 %v679
  %v703 = vunpack.c.h.b16 %v679
  %v704 = vpack.c.b16 %v688, %v688
  %v705 = vpack.c.b16 %v689, %v689
  %v706 = vpack.c.b16 %v690, %v690
  %v707 = vpack.c.b16 %v691, %v691
  %v708 = vpack.c.b16 %v692, %v692
  %v709 = vpack.c.b16 %v693, %v693
  %v710 = vpack.c.b16 %v694, %v694
  %v711 = vpack.c.b16 %v695, %v695
  %v712 = vpack.c.b16 %v696, %v696
  %v713 = vpack.c.b16 %v697, %v697
  %v714 = vpack.c.b16 %v698, %v698
  %v715 = vpack.c.b16 %v699, %v699
  %v716 = vpack.c.b16 %v700, %v700
  %v717 = vpack.c.b16 %v701, %v701
  %v718 = vpack.c.b16 %v702, %v702
  %v719 = vpack.c.b16 %v703, %v703
  %736 = vst [vmem:[%s3 + $0x40] sm:$0xf] %v704
  %737 = vst [vmem:[%s3 + $0x44] sm:$0xf] %v705
  %738 = vst [vmem:[%s3 + $0x48] sm:$0xf] %v706
  %739 = vst [vmem:[%s3 + $0x4c] sm:$0xf] %v707
  %740 = vst [vmem:[%s3 + $0x50] sm:$0xf] %v708
  %741 = vst [vmem:[%s3 + $0x54] sm:$0xf] %v709
  %742 = vst [vmem:[%s3 + $0x58] sm:$0xf] %v710
  %743 = vst [vmem:[%s3 + $0x5c] sm:$0xf] %v711
  %744 = vst [vmem:[%s3 + $0x60] sm:$0xf] %v712
  %745 = vst [vmem:[%s3 + $0x64] sm:$0xf] %v713
  %746 = vst [vmem:[%s3 + $0x68] sm:$0xf] %v714
  %747 = vst [vmem:[%s3 + $0x6c] sm:$0xf] %v715
  %748 = vst [vmem:[%s3 + $0x70] sm:$0xf] %v716
  %749 = vst [vmem:[%s3 + $0x74] sm:$0xf] %v717
  %750 = vst [vmem:[%s3 + $0x78] sm:$0xf] %v718
  %751 = vst [vmem:[%s3 + $0x7c] sm:$0xf] %v719
  %v752 = vld [vmem:[%s0 + $0x80] sm:$0xf]
  %v753 = vld [vmem:[%s0 + $0x84] sm:$0xf]
  %v754 = vld [vmem:[%s0 + $0x88] sm:$0xf]
  %v755 = vld [vmem:[%s0 + $0x8c] sm:$0xf]
  %v756 = vld [vmem:[%s0 + $0x90] sm:$0xf]
  %v757 = vld [vmem:[%s0 + $0x94] sm:$0xf]
  %v758 = vld [vmem:[%s0 + $0x98] sm:$0xf]
  %v759 = vld [vmem:[%s0 + $0x9c] sm:$0xf]
  %v760 = vld [vmem:[%s0 + $0xa0] sm:$0xf]
  %v761 = vld [vmem:[%s0 + $0xa4] sm:$0xf]
  %v762 = vld [vmem:[%s0 + $0xa8] sm:$0xf]
  %v763 = vld [vmem:[%s0 + $0xac] sm:$0xf]
  %v764 = vld [vmem:[%s0 + $0xb0] sm:$0xf]
  %v765 = vld [vmem:[%s0 + $0xb4] sm:$0xf]
  %v766 = vld [vmem:[%s0 + $0xb8] sm:$0xf]
  %v767 = vld [vmem:[%s0 + $0xbc] sm:$0xf]
  %v768 = vld [vmem:[%s1] sm:$0xf]
  %v769 = vld [vmem:[%s1 + $0x4] sm:$0xf]
  %v770 = vld [vmem:[%s1 + $0x8] sm:$0xf]
  %v771 = vld [vmem:[%s1 + $0xc] sm:$0xf]
  %v772 = vld [vmem:[%s1 + $0x10] sm:$0xf]
  %v773 = vld [vmem:[%s1 + $0x14] sm:$0xf]
  %v774 = vld [vmem:[%s1 + $0x18] sm:$0xf]
  %v775 = vld [vmem:[%s1 + $0x1c] sm:$0xf]
  %v776 = vld [vmem:[%s1 + $0x20] sm:$0xf]
  %v777 = vld [vmem:[%s1 + $0x24] sm:$0xf]
  %v778 = vld [vmem:[%s1 + $0x28] sm:$0xf]
  %v779 = vld [vmem:[%s1 + $0x2c] sm:$0xf]
  %v780 = vld [vmem:[%s1 + $0x30] sm:$0xf]
  %v781 = vld [vmem:[%s1 + $0x34] sm:$0xf]
  %v782 = vld [vmem:[%s1 + $0x38] sm:$0xf]
  %v783 = vld [vmem:[%s1 + $0x3c] sm:$0xf]
  %v800 = vunpack.c.l.b16 %v752
  %v801 = vunpack.c.l.b16 %v753
  %v802 = vunpack.c.l.b16 %v754
  %v803 = vunpack.c.l.b16 %v755
  %v804 = vunpack.c.l.b16 %v756
  %v805 = vunpack.c.l.b16 %v757
  %v806 = vunpack.c.l.b16 %v758
  %v807 = vunpack.c.l.b16 %v759
  %v808 = vunpack.c.l.b16 %v760
  %v809 = vunpack.c.l.b16 %v761
  %v810 = vunpack.c.l.b16 %v762
  %v811 = vunpack.c.l.b16 %v763
  %v812 = vunpack.c.l.b16 %v764
  %v813 = vunpack.c.l.b16 %v765
  %v814 = vunpack.c.l.b16 %v766
  %v815 = vunpack.c.l.b16 %v767
  %v816 = vpack.c.b16 %v801, %v800
  %v817 = vpack.c.b16 %v803, %v802
  %v818 = vpack.c.b16 %v805, %v804
  %v819 = vpack.c.b16 %v807, %v806
  %v820 = vpack.c.b16 %v809, %v808
  %v821 = vpack.c.b16 %v811, %v810
  %v822 = vpack.c.b16 %v813, %v812
  %v823 = vpack.c.b16 %v815, %v814
  %v848 = vunpack.c.l.b16 %v768
  %v849 = vunpack.c.l.b16 %v769
  %v850 = vunpack.c.l.b16 %v770
  %v851 = vunpack.c.l.b16 %v771
  %v852 = vunpack.c.l.b16 %v772
  %v853 = vunpack.c.l.b16 %v773
  %v854 = vunpack.c.l.b16 %v774
  %v855 = vunpack.c.l.b16 %v775
  %v856 = vunpack.c.l.b16 %v776
  %v857 = vunpack.c.l.b16 %v777
  %v858 = vunpack.c.l.b16 %v778
  %v859 = vunpack.c.l.b16 %v779
  %v860 = vunpack.c.l.b16 %v780
  %v861 = vunpack.c.l.b16 %v781
  %v862 = vunpack.c.l.b16 %v782
  %v863 = vunpack.c.l.b16 %v783
  %v864 = vpack.c.b16 %v849, %v848
  %v865 = vpack.c.b16 %v851, %v850
  %v866 = vpack.c.b16 %v853, %v852
  %v867 = vpack.c.b16 %v855, %v854
  %v868 = vpack.c.b16 %v857, %v856
  %v869 = vpack.c.b16 %v859, %v858
  %v870 = vpack.c.b16 %v861, %v860
  %v871 = vpack.c.b16 %v863, %v862
  %880 = vmatprep.subr.bf16.mxu0 0
  %881 = vmatpush1.bf16.msra.mxu0 %v871
  %882 = vmatprep.subr.bf16.mxu0 0
  %883 = vmatpush1.bf16.msra.mxu0 %v870
  %884 = vmatprep.subr.bf16.mxu0 0
  %885 = vmatpush1.bf16.msra.mxu0 %v869
  %886 = vmatprep.subr.bf16.mxu0 0
  %887 = vmatpush1.bf16.msra.mxu0 %v868
  %888 = vmatprep.subr.bf16.mxu0 0
  %889 = vmatpush1.bf16.msra.mxu0 %v867
  %890 = vmatprep.subr.bf16.mxu0 0
  %891 = vmatpush1.bf16.msra.mxu0 %v866
  %892 = vmatprep.subr.bf16.mxu0 0
  %893 = vmatpush1.bf16.msra.mxu0 %v865
  %894 = vmatprep.subr.bf16.mxu0 0
  %895 = vmatpush1.bf16.msra.mxu0 %v864
  %896 = vmatprep.subr.bf16.mxu0 0
  %897 = vmatpush2.bf16.msra.mxu0 0
  %898 = vmatprep.subr.bf16.mxu0 0
  %899 = vmatpush2.bf16.msra.mxu0 0
  %900 = vmatprep.subr.bf16.mxu0 0
  %901 = vmatpush2.bf16.msra.mxu0 0
  %902 = vmatprep.subr.bf16.mxu0 0
  %903 = vmatpush2.bf16.msra.mxu0 0
  %904 = vmatprep.subr.bf16.mxu0 0
  %905 = vmatpush2.bf16.msra.mxu0 0
  %906 = vmatprep.subr.bf16.mxu0 0
  %907 = vmatpush2.bf16.msra.mxu0 0
  %908 = vmatprep.subr.bf16.mxu0 0
  %909 = vmatpush2.bf16.msra.mxu0 0
  %910 = vmatprep.subr.bf16.mxu0 0
  %911 = vmatpush2.bf16.msra.mxu0 0
  %912 = vmatprep.mubr.bf16.mxu0 0
  %913 = vmatmul.mubr.bf16.gmra.mxu0 %v816
  %v914 = vpop.f32.mrf.mxu0
  %v915 = vadd.f32 %v53, %v914
  %v916 = vpop.f32.mrf.mxu0
  %v917 = vpop.f32.mrf.mxu0
  %v918 = vadd.f32 %v53, %v917
  %v919 = vpop.f32.mrf.mxu0
  %920 = vmatprep.mubr.bf16.mxu0 0
  %921 = vmatmul.mubr.bf16.gmra.mxu0 %v817
  %v922 = vpop.f32.mrf.mxu0
  %v923 = vadd.f32 %v53, %v922
  %v924 = vpop.f32.mrf.mxu0
  %v925 = vpop.f32.mrf.mxu0
  %v926 = vadd.f32 %v53, %v925
  %v927 = vpop.f32.mrf.mxu0
  %928 = vmatprep.mubr.bf16.mxu0 0
  %929 = vmatmul.mubr.bf16.gmra.mxu0 %v818
  %v930 = vpop.f32.mrf.mxu0
  %v931 = vadd.f32 %v53, %v930
  %v932 = vpop.f32.mrf.mxu0
  %v933 = vpop.f32.mrf.mxu0
  %v934 = vadd.f32 %v53, %v933
  %v935 = vpop.f32.mrf.mxu0
  %936 = vmatprep.mubr.bf16.mxu0 0
  %937 = vmatmul.mubr.bf16.gmra.mxu0 %v819
  %v938 = vpop.f32.mrf.mxu0
  %v939 = vadd.f32 %v53, %v938
  %v940 = vpop.f32.mrf.mxu0
  %v941 = vpop.f32.mrf.mxu0
  %v942 = vadd.f32 %v53, %v941
  %v943 = vpop.f32.mrf.mxu0
  %944 = vmatprep.mubr.bf16.mxu0 0
  %945 = vmatmul.mubr.bf16.gmra.mxu0 %v820
  %v946 = vpop.f32.mrf.mxu0
  %v947 = vadd.f32 %v53, %v946
  %v948 = vpop.f32.mrf.mxu0
  %v949 = vpop.f32.mrf.mxu0
  %v950 = vadd.f32 %v53, %v949
  %v951 = vpop.f32.mrf.mxu0
  %952 = vmatprep.mubr.bf16.mxu0 0
  %953 = vmatmul.mubr.bf16.gmra.mxu0 %v821
  %v954 = vpop.f32.mrf.mxu0
  %v955 = vadd.f32 %v53, %v954
  %v956 = vpop.f32.mrf.mxu0
  %v957 = vpop.f32.mrf.mxu0
  %v958 = vadd.f32 %v53, %v957
  %v959 = vpop.f32.mrf.mxu0
  %960 = vmatprep.mubr.bf16.mxu0 0
  %961 = vmatmul.mubr.bf16.gmra.mxu0 %v822
  %v962 = vpop.f32.mrf.mxu0
  %v963 = vadd.f32 %v53, %v962
  %v964 = vpop.f32.mrf.mxu0
  %v965 = vpop.f32.mrf.mxu0
  %v966 = vadd.f32 %v53, %v965
  %v967 = vpop.f32.mrf.mxu0
  %968 = vmatprep.mubr.bf16.mxu0 0
  %969 = vmatmul.mubr.bf16.gmra.mxu0 %v823
  %v970 = vpop.f32.mrf.mxu0
  %v971 = vadd.f32 %v53, %v970
  %v972 = vpop.f32.mrf.mxu0
  %v973 = vpop.f32.mrf.mxu0
  %v974 = vadd.f32 %v53, %v973
  %v975 = vpop.f32.mrf.mxu0
  %976 = vdwg.mxu0
  %v977 = vadd.f32 %v915, %v918
  %v978 = vadd.f32 %v977, %v923
  %v979 = vadd.f32 %v978, %v926
  %v980 = vadd.f32 %v979, %v931
  %v981 = vadd.f32 %v980, %v934
  %v982 = vadd.f32 %v981, %v939
  %v983 = vadd.f32 %v982, %v942
  %v984 = vadd.f32 %v983, %v947
  %v985 = vadd.f32 %v984, %v950
  %v986 = vadd.f32 %v985, %v955
  %v987 = vadd.f32 %v986, %v958
  %v988 = vadd.f32 %v987, %v963
  %v989 = vadd.f32 %v988, %v966
  %v990 = vadd.f32 %v989, %v971
  %v991 = vadd.f32 %v990, %v974
  %v992 = vrot.slane %v991, 4
  %v993 = vadd.f32 %v991, %v992
  %v994 = vrot.slane %v993, 2
  %v995 = vadd.f32 %v993, %v994
  %v996 = vrot.slane %v995, 1
  %v997 = vadd.f32 %v995, %v996
  %v998 = vadd.f32 %v633, %v997
  %v999 = vmul.f32 %v915, %v915
  %v1000 = vmul.f32 %v918, %v918
  %v1001 = vmul.f32 %v923, %v923
  %v1002 = vmul.f32 %v926, %v926
  %v1003 = vmul.f32 %v931, %v931
  %v1004 = vmul.f32 %v934, %v934
  %v1005 = vmul.f32 %v939, %v939
  %v1006 = vmul.f32 %v942, %v942
  %v1007 = vmul.f32 %v947, %v947
  %v1008 = vmul.f32 %v950, %v950
  %v1009 = vmul.f32 %v955, %v955
  %v1010 = vmul.f32 %v958, %v958
  %v1011 = vmul.f32 %v963, %v963
  %v1012 = vmul.f32 %v966, %v966
  %v1013 = vmul.f32 %v971, %v971
  %v1014 = vmul.f32 %v974, %v974
  %v1015 = vadd.f32 %v999, %v1000
  %v1016 = vadd.f32 %v1015, %v1001
  %v1017 = vadd.f32 %v1016, %v1002
  %v1018 = vadd.f32 %v1017, %v1003
  %v1019 = vadd.f32 %v1018, %v1004
  %v1020 = vadd.f32 %v1019, %v1005
  %v1021 = vadd.f32 %v1020, %v1006
  %v1022 = vadd.f32 %v1021, %v1007
  %v1023 = vadd.f32 %v1022, %v1008
  %v1024 = vadd.f32 %v1023, %v1009
  %v1025 = vadd.f32 %v1024, %v1010
  %v1026 = vadd.f32 %v1025, %v1011
  %v1027 = vadd.f32 %v1026, %v1012
  %v1028 = vadd.f32 %v1027, %v1013
  %v1029 = vadd.f32 %v1028, %v1014
  %v1030 = vrot.slane %v1029, 4
  %v1031 = vadd.f32 %v1029, %v1030
  %v1032 = vrot.slane %v1031, 2
  %v1033 = vadd.f32 %v1031, %v1032
  %v1034 = vrot.slane %v1033, 1
  %v1035 = vadd.f32 %v1033, %v1034
  %v1036 = vadd.f32 %v671, %v1035
  %v1037 = vpack.c.bf16 %v918, %v915
  %v1038 = vpack.c.bf16 %v926, %v923
  %v1039 = vpack.c.bf16 %v934, %v931
  %v1040 = vpack.c.bf16 %v942, %v939
  %v1041 = vpack.c.bf16 %v950, %v947
  %v1042 = vpack.c.bf16 %v958, %v955
  %v1043 = vpack.c.bf16 %v966, %v963
  %v1044 = vpack.c.bf16 %v974, %v971
  %v1053 = vunpack.c.l.b16 %v1037
  %v1054 = vunpack.c.h.b16 %v1037
  %v1055 = vunpack.c.l.b16 %v1038
  %v1056 = vunpack.c.h.b16 %v1038
  %v1057 = vunpack.c.l.b16 %v1039
  %v1058 = vunpack.c.h.b16 %v1039
  %v1059 = vunpack.c.l.b16 %v1040
  %v1060 = vunpack.c.h.b16 %v1040
  %v1061 = vunpack.c.l.b16 %v1041
  %v1062 = vunpack.c.h.b16 %v1041
  %v1063 = vunpack.c.l.b16 %v1042
  %v1064 = vunpack.c.h.b16 %v1042
  %v1065 = vunpack.c.l.b16 %v1043
  %v1066 = vunpack.c.h.b16 %v1043
  %v1067 = vunpack.c.l.b16 %v1044
  %v1068 = vunpack.c.h.b16 %v1044
  %v1069 = vpack.c.b16 %v1053, %v1053
  %v1070 = vpack.c.b16 %v1054, %v1054
  %v1071 = vpack.c.b16 %v1055, %v1055
  %v1072 = vpack.c.b16 %v1056, %v1056
  %v1073 = vpack.c.b16 %v1057, %v1057
  %v1074 = vpack.c.b16 %v1058, %v1058
  %v1075 = vpack.c.b16 %v1059, %v1059
  %v1076 = vpack.c.b16 %v1060, %v1060
  %v1077 = vpack.c.b16 %v1061, %v1061
  %v1078 = vpack.c.b16 %v1062, %v1062
  %v1079 = vpack.c.b16 %v1063, %v1063
  %v1080 = vpack.c.b16 %v1064, %v1064
  %v1081 = vpack.c.b16 %v1065, %v1065
  %v1082 = vpack.c.b16 %v1066, %v1066
  %v1083 = vpack.c.b16 %v1067, %v1067
  %v1084 = vpack.c.b16 %v1068, %v1068
  %1101 = vst [vmem:[%s3 + $0x80] sm:$0xf] %v1069
  %1102 = vst [vmem:[%s3 + $0x84] sm:$0xf] %v1070
  %1103 = vst [vmem:[%s3 + $0x88] sm:$0xf] %v1071
  %1104 = vst [vmem:[%s3 + $0x8c] sm:$0xf] %v1072
  %1105 = vst [vmem:[%s3 + $0x90] sm:$0xf] %v1073
  %1106 = vst [vmem:[%s3 + $0x94] sm:$0xf] %v1074
  %1107 = vst [vmem:[%s3 + $0x98] sm:$0xf] %v1075
  %1108 = vst [vmem:[%s3 + $0x9c] sm:$0xf] %v1076
  %1109 = vst [vmem:[%s3 + $0xa0] sm:$0xf] %v1077
  %1110 = vst [vmem:[%s3 + $0xa4] sm:$0xf] %v1078
  %1111 = vst [vmem:[%s3 + $0xa8] sm:$0xf] %v1079
  %1112 = vst [vmem:[%s3 + $0xac] sm:$0xf] %v1080
  %1113 = vst [vmem:[%s3 + $0xb0] sm:$0xf] %v1081
  %1114 = vst [vmem:[%s3 + $0xb4] sm:$0xf] %v1082
  %1115 = vst [vmem:[%s3 + $0xb8] sm:$0xf] %v1083
  %1116 = vst [vmem:[%s3 + $0xbc] sm:$0xf] %v1084
  %v1117 = vld [vmem:[%s0 + $0xc0] sm:$0xf]
  %v1118 = vld [vmem:[%s0 + $0xc4] sm:$0xf]
  %v1119 = vld [vmem:[%s0 + $0xc8] sm:$0xf]
  %v1120 = vld [vmem:[%s0 + $0xcc] sm:$0xf]
  %v1121 = vld [vmem:[%s0 + $0xd0] sm:$0xf]
  %v1122 = vld [vmem:[%s0 + $0xd4] sm:$0xf]
  %v1123 = vld [vmem:[%s0 + $0xd8] sm:$0xf]
  %v1124 = vld [vmem:[%s0 + $0xdc] sm:$0xf]
  %v1125 = vld [vmem:[%s0 + $0xe0] sm:$0xf]
  %v1126 = vld [vmem:[%s0 + $0xe4] sm:$0xf]
  %v1127 = vld [vmem:[%s0 + $0xe8] sm:$0xf]
  %v1128 = vld [vmem:[%s0 + $0xec] sm:$0xf]
  %v1129 = vld [vmem:[%s0 + $0xf0] sm:$0xf]
  %v1130 = vld [vmem:[%s0 + $0xf4] sm:$0xf]
  %v1131 = vld [vmem:[%s0 + $0xf8] sm:$0xf]
  %v1132 = vld [vmem:[%s0 + $0xfc] sm:$0xf]
  %v1133 = vld [vmem:[%s1] sm:$0xf]
  %v1134 = vld [vmem:[%s1 + $0x4] sm:$0xf]
  %v1135 = vld [vmem:[%s1 + $0x8] sm:$0xf]
  %v1136 = vld [vmem:[%s1 + $0xc] sm:$0xf]
  %v1137 = vld [vmem:[%s1 + $0x10] sm:$0xf]
  %v1138 = vld [vmem:[%s1 + $0x14] sm:$0xf]
  %v1139 = vld [vmem:[%s1 + $0x18] sm:$0xf]
  %v1140 = vld [vmem:[%s1 + $0x1c] sm:$0xf]
  %v1141 = vld [vmem:[%s1 + $0x20] sm:$0xf]
  %v1142 = vld [vmem:[%s1 + $0x24] sm:$0xf]
  %v1143 = vld [vmem:[%s1 + $0x28] sm:$0xf]
  %v1144 = vld [vmem:[%s1 + $0x2c] sm:$0xf]
  %v1145 = vld [vmem:[%s1 + $0x30] sm:$0xf]
  %v1146 = vld [vmem:[%s1 + $0x34] sm:$0xf]
  %v1147 = vld [vmem:[%s1 + $0x38] sm:$0xf]
  %v1148 = vld [vmem:[%s1 + $0x3c] sm:$0xf]
  %v1165 = vunpack.c.l.b16 %v1117
  %v1166 = vunpack.c.l.b16 %v1118
  %v1167 = vunpack.c.l.b16 %v1119
  %v1168 = vunpack.c.l.b16 %v1120
  %v1169 = vunpack.c.l.b16 %v1121
  %v1170 = vunpack.c.l.b16 %v1122
  %v1171 = vunpack.c.l.b16 %v1123
  %v1172 = vunpack.c.l.b16 %v1124
  %v1173 = vunpack.c.l.b16 %v1125
  %v1174 = vunpack.c.l.b16 %v1126
  %v1175 = vunpack.c.l.b16 %v1127
  %v1176 = vunpack.c.l.b16 %v1128
  %v1177 = vunpack.c.l.b16 %v1129
  %v1178 = vunpack.c.l.b16 %v1130
  %v1179 = vunpack.c.l.b16 %v1131
  %v1180 = vunpack.c.l.b16 %v1132
  %v1181 = vpack.c.b16 %v1166, %v1165
  %v1182 = vpack.c.b16 %v1168, %v1167
  %v1183 = vpack.c.b16 %v1170, %v1169
  %v1184 = vpack.c.b16 %v1172, %v1171
  %v1185 = vpack.c.b16 %v1174, %v1173
  %v1186 = vpack.c.b16 %v1176, %v1175
  %v1187 = vpack.c.b16 %v1178, %v1177
  %v1188 = vpack.c.b16 %v1180, %v1179
  %v1213 = vunpack.c.l.b16 %v1133
  %v1214 = vunpack.c.l.b16 %v1134
  %v1215 = vunpack.c.l.b16 %v1135
  %v1216 = vunpack.c.l.b16 %v1136
  %v1217 = vunpack.c.l.b16 %v1137
  %v1218 = vunpack.c.l.b16 %v1138
  %v1219 = vunpack.c.l.b16 %v1139
  %v1220 = vunpack.c.l.b16 %v1140
  %v1221 = vunpack.c.l.b16 %v1141
  %v1222 = vunpack.c.l.b16 %v1142
  %v1223 = vunpack.c.l.b16 %v1143
  %v1224 = vunpack.c.l.b16 %v1144
  %v1225 = vunpack.c.l.b16 %v1145
  %v1226 = vunpack.c.l.b16 %v1146
  %v1227 = vunpack.c.l.b16 %v1147
  %v1228 = vunpack.c.l.b16 %v1148
  %v1229 = vpack.c.b16 %v1214, %v1213
  %v1230 = vpack.c.b16 %v1216, %v1215
  %v1231 = vpack.c.b16 %v1218, %v1217
  %v1232 = vpack.c.b16 %v1220, %v1219
  %v1233 = vpack.c.b16 %v1222, %v1221
  %v1234 = vpack.c.b16 %v1224, %v1223
  %v1235 = vpack.c.b16 %v1226, %v1225
  %v1236 = vpack.c.b16 %v1228, %v1227
  %1245 = vmatprep.subr.bf16.mxu0 0
  %1246 = vmatpush1.bf16.msra.mxu0 %v1236
  %1247 = vmatprep.subr.bf16.mxu0 0
  %1248 = vmatpush1.bf16.msra.mxu0 %v1235
  %1249 = vmatprep.subr.bf16.mxu0 0
  %1250 = vmatpush1.bf16.msra.mxu0 %v1234
  %1251 = vmatprep.subr.bf16.mxu0 0
  %1252 = vmatpush1.bf16.msra.mxu0 %v1233
  %1253 = vmatprep.subr.bf16.mxu0 0
  %1254 = vmatpush1.bf16.msra.mxu0 %v1232
  %1255 = vmatprep.subr.bf16.mxu0 0
  %1256 = vmatpush1.bf16.msra.mxu0 %v1231
  %1257 = vmatprep.subr.bf16.mxu0 0
  %1258 = vmatpush1.bf16.msra.mxu0 %v1230
  %1259 = vmatprep.subr.bf16.mxu0 0
  %1260 = vmatpush1.bf16.msra.mxu0 %v1229
  %1261 = vmatprep.subr.bf16.mxu0 0
  %1262 = vmatpush2.bf16.msra.mxu0 0
  %1263 = vmatprep.subr.bf16.mxu0 0
  %1264 = vmatpush2.bf16.msra.mxu0 0
  %1265 = vmatprep.subr.bf16.mxu0 0
  %1266 = vmatpush2.bf16.msra.mxu0 0
  %1267 = vmatprep.subr.bf16.mxu0 0
  %1268 = vmatpush2.bf16.msra.mxu0 0
  %1269 = vmatprep.subr.bf16.mxu0 0
  %1270 = vmatpush2.bf16.msra.mxu0 0
  %1271 = vmatprep.subr.bf16.mxu0 0
  %1272 = vmatpush2.bf16.msra.mxu0 0
  %1273 = vmatprep.subr.bf16.mxu0 0
  %1274 = vmatpush2.bf16.msra.mxu0 0
  %1275 = vmatprep.subr.bf16.mxu0 0
  %1276 = vmatpush2.bf16.msra.mxu0 0
  %1277 = vmatprep.mubr.bf16.mxu0 0
  %1278 = vmatmul.mubr.bf16.gmra.mxu0 %v1181
  %v1279 = vpop.f32.mrf.mxu0
  %v1280 = vadd.f32 %v53, %v1279
  %v1281 = vpop.f32.mrf.mxu0
  %v1282 = vpop.f32.mrf.mxu0
  %v1283 = vadd.f32 %v53, %v1282
  %v1284 = vpop.f32.mrf.mxu0
  %1285 = vmatprep.mubr.bf16.mxu0 0
  %1286 = vmatmul.mubr.bf16.gmra.mxu0 %v1182
  %v1287 = vpop.f32.mrf.mxu0
  %v1288 = vadd.f32 %v53, %v1287
  %v1289 = vpop.f32.mrf.mxu0
  %v1290 = vpop.f32.mrf.mxu0
  %v1291 = vadd.f32 %v53, %v1290
  %v1292 = vpop.f32.mrf.mxu0
  %1293 = vmatprep.mubr.bf16.mxu0 0
  %1294 = vmatmul.mubr.bf16.gmra.mxu0 %v1183
  %v1295 = vpop.f32.mrf.mxu0
  %v1296 = vadd.f32 %v53, %v1295
  %v1297 = vpop.f32.mrf.mxu0
  %v1298 = vpop.f32.mrf.mxu0
  %v1299 = vadd.f32 %v53, %v1298
  %v1300 = vpop.f32.mrf.mxu0
  %1301 = vmatprep.mubr.bf16.mxu0 0
  %1302 = vmatmul.mubr.bf16.gmra.mxu0 %v1184
  %v1303 = vpop.f32.mrf.mxu0
  %v1304 = vadd.f32 %v53, %v1303
  %v1305 = vpop.f32.mrf.mxu0
  %v1306 = vpop.f32.mrf.mxu0
  %v1307 = vadd.f32 %v53, %v1306
  %v1308 = vpop.f32.mrf.mxu0
  %1309 = vmatprep.mubr.bf16.mxu0 0
  %1310 = vmatmul.mubr.bf16.gmra.mxu0 %v1185
  %v1311 = vpop.f32.mrf.mxu0
  %v1312 = vadd.f32 %v53, %v1311
  %v1313 = vpop.f32.mrf.mxu0
  %v1314 = vpop.f32.mrf.mxu0
  %v1315 = vadd.f32 %v53, %v1314
  %v1316 = vpop.f32.mrf.mxu0
  %1317 = vmatprep.mubr.bf16.mxu0 0
  %1318 = vmatmul.mubr.bf16.gmra.mxu0 %v1186
  %v1319 = vpop.f32.mrf.mxu0
  %v1320 = vadd.f32 %v53, %v1319
  %v1321 = vpop.f32.mrf.mxu0
  %v1322 = vpop.f32.mrf.mxu0
  %v1323 = vadd.f32 %v53, %v1322
  %v1324 = vpop.f32.mrf.mxu0
  %1325 = vmatprep.mubr.bf16.mxu0 0
  %1326 = vmatmul.mubr.bf16.gmra.mxu0 %v1187
  %v1327 = vpop.f32.mrf.mxu0
  %v1328 = vadd.f32 %v53, %v1327
  %v1329 = vpop.f32.mrf.mxu0
  %v1330 = vpop.f32.mrf.mxu0
  %v1331 = vadd.f32 %v53, %v1330
  %v1332 = vpop.f32.mrf.mxu0
  %1333 = vmatprep.mubr.bf16.mxu0 0
  %1334 = vmatmul.mubr.bf16.gmra.mxu0 %v1188
  %v1335 = vpop.f32.mrf.mxu0
  %v1336 = vadd.f32 %v53, %v1335
  %v1337 = vpop.f32.mrf.mxu0
  %v1338 = vpop.f32.mrf.mxu0
  %v1339 = vadd.f32 %v53, %v1338
  %v1340 = vpop.f32.mrf.mxu0
  %1341 = vdwg.mxu0
  %v1342 = vadd.f32 %v1280, %v1283
  %v1343 = vadd.f32 %v1342, %v1288
  %v1344 = vadd.f32 %v1343, %v1291
  %v1345 = vadd.f32 %v1344, %v1296
  %v1346 = vadd.f32 %v1345, %v1299
  %v1347 = vadd.f32 %v1346, %v1304
  %v1348 = vadd.f32 %v1347, %v1307
  %v1349 = vadd.f32 %v1348, %v1312
  %v1350 = vadd.f32 %v1349, %v1315
  %v1351 = vadd.f32 %v1350, %v1320
  %v1352 = vadd.f32 %v1351, %v1323
  %v1353 = vadd.f32 %v1352, %v1328
  %v1354 = vadd.f32 %v1353, %v1331
  %v1355 = vadd.f32 %v1354, %v1336
  %v1356 = vadd.f32 %v1355, %v1339
  %v1357 = vrot.slane %v1356, 4
  %v1358 = vadd.f32 %v1356, %v1357
  %v1359 = vrot.slane %v1358, 2
  %v1360 = vadd.f32 %v1358, %v1359
  %v1361 = vrot.slane %v1360, 1
  %v1362 = vadd.f32 %v1360, %v1361
  %v1363 = vadd.f32 %v998, %v1362
  %v1364 = vmul.f32 %v1280, %v1280
  %v1365 = vmul.f32 %v1283, %v1283
  %v1366 = vmul.f32 %v1288, %v1288
  %v1367 = vmul.f32 %v1291, %v1291
  %v1368 = vmul.f32 %v1296, %v1296
  %v1369 = vmul.f32 %v1299, %v1299
  %v1370 = vmul.f32 %v1304, %v1304
  %v1371 = vmul.f32 %v1307, %v1307
  %v1372 = vmul.f32 %v1312, %v1312
  %v1373 = vmul.f32 %v1315, %v1315
  %v1374 = vmul.f32 %v1320, %v1320
  %v1375 = vmul.f32 %v1323, %v1323
  %v1376 = vmul.f32 %v1328, %v1328
  %v1377 = vmul.f32 %v1331, %v1331
  %v1378 = vmul.f32 %v1336, %v1336
  %v1379 = vmul.f32 %v1339, %v1339
  %v1380 = vadd.f32 %v1364, %v1365
  %v1381 = vadd.f32 %v1380, %v1366
  %v1382 = vadd.f32 %v1381, %v1367
  %v1383 = vadd.f32 %v1382, %v1368
  %v1384 = vadd.f32 %v1383, %v1369
  %v1385 = vadd.f32 %v1384, %v1370
  %v1386 = vadd.f32 %v1385, %v1371
  %v1387 = vadd.f32 %v1386, %v1372
  %v1388 = vadd.f32 %v1387, %v1373
  %v1389 = vadd.f32 %v1388, %v1374
  %v1390 = vadd.f32 %v1389, %v1375
  %v1391 = vadd.f32 %v1390, %v1376
  %v1392 = vadd.f32 %v1391, %v1377
  %v1393 = vadd.f32 %v1392, %v1378
  %v1394 = vadd.f32 %v1393, %v1379
  %v1395 = vrot.slane %v1394, 4
  %v1396 = vadd.f32 %v1394, %v1395
  %v1397 = vrot.slane %v1396, 2
  %v1398 = vadd.f32 %v1396, %v1397
  %v1399 = vrot.slane %v1398, 1
  %v1400 = vadd.f32 %v1398, %v1399
  %v1401 = vadd.f32 %v1036, %v1400
  %v1402 = vpack.c.bf16 %v1283, %v1280
  %v1403 = vpack.c.bf16 %v1291, %v1288
  %v1404 = vpack.c.bf16 %v1299, %v1296
  %v1405 = vpack.c.bf16 %v1307, %v1304
  %v1406 = vpack.c.bf16 %v1315, %v1312
  %v1407 = vpack.c.bf16 %v1323, %v1320
  %v1408 = vpack.c.bf16 %v1331, %v1328
  %v1409 = vpack.c.bf16 %v1339, %v1336
  %v1418 = vunpack.c.l.b16 %v1402
  %v1419 = vunpack.c.h.b16 %v1402
  %v1420 = vunpack.c.l.b16 %v1403
  %v1421 = vunpack.c.h.b16 %v1403
  %v1422 = vunpack.c.l.b16 %v1404
  %v1423 = vunpack.c.h.b16 %v1404
  %v1424 = vunpack.c.l.b16 %v1405
  %v1425 = vunpack.c.h.b16 %v1405
  %v1426 = vunpack.c.l.b16 %v1406
  %v1427 = vunpack.c.h.b16 %v1406
  %v1428 = vunpack.c.l.b16 %v1407
  %v1429 = vunpack.c.h.b16 %v1407
  %v1430 = vunpack.c.l.b16 %v1408
  %v1431 = vunpack.c.h.b16 %v1408
  %v1432 = vunpack.c.l.b16 %v1409
  %v1433 = vunpack.c.h.b16 %v1409
  %v1434 = vpack.c.b16 %v1418, %v1418
  %v1435 = vpack.c.b16 %v1419, %v1419
  %v1436 = vpack.c.b16 %v1420, %v1420
  %v1437 = vpack.c.b16 %v1421, %v1421
  %v1438 = vpack.c.b16 %v1422, %v1422
  %v1439 = vpack.c.b16 %v1423, %v1423
  %v1440 = vpack.c.b16 %v1424, %v1424
  %v1441 = vpack.c.b16 %v1425, %v1425
  %v1442 = vpack.c.b16 %v1426, %v1426
  %v1443 = vpack.c.b16 %v1427, %v1427
  %v1444 = vpack.c.b16 %v1428, %v1428
  %v1445 = vpack.c.b16 %v1429, %v1429
  %v1446 = vpack.c.b16 %v1430, %v1430
  %v1447 = vpack.c.b16 %v1431, %v1431
  %v1448 = vpack.c.b16 %v1432, %v1432
  %v1449 = vpack.c.b16 %v1433, %v1433
  %1466 = vst [vmem:[%s3 + $0xc0] sm:$0xf] %v1434
  %1467 = vst [vmem:[%s3 + $0xc4] sm:$0xf] %v1435
  %1468 = vst [vmem:[%s3 + $0xc8] sm:$0xf] %v1436
  %1469 = vst [vmem:[%s3 + $0xcc] sm:$0xf] %v1437
  %1470 = vst [vmem:[%s3 + $0xd0] sm:$0xf] %v1438
  %1471 = vst [vmem:[%s3 + $0xd4] sm:$0xf] %v1439
  %1472 = vst [vmem:[%s3 + $0xd8] sm:$0xf] %v1440
  %1473 = vst [vmem:[%s3 + $0xdc] sm:$0xf] %v1441
  %1474 = vst [vmem:[%s3 + $0xe0] sm:$0xf] %v1442
  %1475 = vst [vmem:[%s3 + $0xe4] sm:$0xf] %v1443
  %1476 = vst [vmem:[%s3 + $0xe8] sm:$0xf] %v1444
  %1477 = vst [vmem:[%s3 + $0xec] sm:$0xf] %v1445
  %1478 = vst [vmem:[%s3 + $0xf0] sm:$0xf] %v1446
  %1479 = vst [vmem:[%s3 + $0xf4] sm:$0xf] %v1447
  %1480 = vst [vmem:[%s3 + $0xf8] sm:$0xf] %v1448
  %1481 = vst [vmem:[%s3 + $0xfc] sm:$0xf] %v1449
  %v1482 = vld [vmem:[%s0 + $0x100] sm:$0xf]
  %v1483 = vld [vmem:[%s0 + $0x104] sm:$0xf]
  %v1484 = vld [vmem:[%s0 + $0x108] sm:$0xf]
  %v1485 = vld [vmem:[%s0 + $0x10c] sm:$0xf]
  %v1486 = vld [vmem:[%s0 + $0x110] sm:$0xf]
  %v1487 = vld [vmem:[%s0 + $0x114] sm:$0xf]
  %v1488 = vld [vmem:[%s0 + $0x118] sm:$0xf]
  %v1489 = vld [vmem:[%s0 + $0x11c] sm:$0xf]
  %v1490 = vld [vmem:[%s0 + $0x120] sm:$0xf]
  %v1491 = vld [vmem:[%s0 + $0x124] sm:$0xf]
  %v1492 = vld [vmem:[%s0 + $0x128] sm:$0xf]
  %v1493 = vld [vmem:[%s0 + $0x12c] sm:$0xf]
  %v1494 = vld [vmem:[%s0 + $0x130] sm:$0xf]
  %v1495 = vld [vmem:[%s0 + $0x134] sm:$0xf]
  %v1496 = vld [vmem:[%s0 + $0x138] sm:$0xf]
  %v1497 = vld [vmem:[%s0 + $0x13c] sm:$0xf]
  %v1498 = vld [vmem:[%s1] sm:$0xf]
  %v1499 = vld [vmem:[%s1 + $0x4] sm:$0xf]
  %v1500 = vld [vmem:[%s1 + $0x8] sm:$0xf]
  %v1501 = vld [vmem:[%s1 + $0xc] sm:$0xf]
  %v1502 = vld [vmem:[%s1 + $0x10] sm:$0xf]
  %v1503 = vld [vmem:[%s1 + $0x14] sm:$0xf]
  %v1504 = vld [vmem:[%s1 + $0x18] sm:$0xf]
  %v1505 = vld [vmem:[%s1 + $0x1c] sm:$0xf]
  %v1506 = vld [vmem:[%s1 + $0x20] sm:$0xf]
  %v1507 = vld [vmem:[%s1 + $0x24] sm:$0xf]
  %v1508 = vld [vmem:[%s1 + $0x28] sm:$0xf]
  %v1509 = vld [vmem:[%s1 + $0x2c] sm:$0xf]
  %v1510 = vld [vmem:[%s1 + $0x30] sm:$0xf]
  %v1511 = vld [vmem:[%s1 + $0x34] sm:$0xf]
  %v1512 = vld [vmem:[%s1 + $0x38] sm:$0xf]
  %v1513 = vld [vmem:[%s1 + $0x3c] sm:$0xf]
  %v1530 = vunpack.c.l.b16 %v1482
  %v1531 = vunpack.c.l.b16 %v1483
  %v1532 = vunpack.c.l.b16 %v1484
  %v1533 = vunpack.c.l.b16 %v1485
  %v1534 = vunpack.c.l.b16 %v1486
  %v1535 = vunpack.c.l.b16 %v1487
  %v1536 = vunpack.c.l.b16 %v1488
  %v1537 = vunpack.c.l.b16 %v1489
  %v1538 = vunpack.c.l.b16 %v1490
  %v1539 = vunpack.c.l.b16 %v1491
  %v1540 = vunpack.c.l.b16 %v1492
  %v1541 = vunpack.c.l.b16 %v1493
  %v1542 = vunpack.c.l.b16 %v1494
  %v1543 = vunpack.c.l.b16 %v1495
  %v1544 = vunpack.c.l.b16 %v1496
  %v1545 = vunpack.c.l.b16 %v1497
  %v1546 = vpack.c.b16 %v1531, %v1530
  %v1547 = vpack.c.b16 %v1533, %v1532
  %v1548 = vpack.c.b16 %v1535, %v1534
  %v1549 = vpack.c.b16 %v1537, %v1536
  %v1550 = vpack.c.b16 %v1539, %v1538
  %v1551 = vpack.c.b16 %v1541, %v1540
  %v1552 = vpack.c.b16 %v1543, %v1542
  %v1553 = vpack.c.b16 %v1545, %v1544
  %v1578 = vunpack.c.l.b16 %v1498
  %v1579 = vunpack.c.l.b16 %v1499
  %v1580 = vunpack.c.l.b16 %v1500
  %v1581 = vunpack.c.l.b16 %v1501
  %v1582 = vunpack.c.l.b16 %v1502
  %v1583 = vunpack.c.l.b16 %v1503
  %v1584 = vunpack.c.l.b16 %v1504
  %v1585 = vunpack.c.l.b16 %v1505
  %v1586 = vunpack.c.l.b16 %v1506
  %v1587 = vunpack.c.l.b16 %v1507
  %v1588 = vunpack.c.l.b16 %v1508
  %v1589 = vunpack.c.l.b16 %v1509
  %v1590 = vunpack.c.l.b16 %v1510
  %v1591 = vunpack.c.l.b16 %v1511
  %v1592 = vunpack.c.l.b16 %v1512
  %v1593 = vunpack.c.l.b16 %v1513
  %v1594 = vpack.c.b16 %v1579, %v1578
  %v1595 = vpack.c.b16 %v1581, %v1580
  %v1596 = vpack.c.b16 %v1583, %v1582
  %v1597 = vpack.c.b16 %v1585, %v1584
  %v1598 = vpack.c.b16 %v1587, %v1586
  %v1599 = vpack.c.b16 %v1589, %v1588
  %v1600 = vpack.c.b16 %v1591, %v1590
  %v1601 = vpack.c.b16 %v1593, %v1592
  %1610 = vmatprep.subr.bf16.mxu0 0
  %1611 = vmatpush1.bf16.msra.mxu0 %v1601
  %1612 = vmatprep.subr.bf16.mxu0 0
  %1613 = vmatpush1.bf16.msra.mxu0 %v1600
  %1614 = vmatprep.subr.bf16.mxu0 0
  %1615 = vmatpush1.bf16.msra.mxu0 %v1599
  %1616 = vmatprep.subr.bf16.mxu0 0
  %1617 = vmatpush1.bf16.msra.mxu0 %v1598
  %1618 = vmatprep.subr.bf16.mxu0 0
  %1619 = vmatpush1.bf16.msra.mxu0 %v1597
  %1620 = vmatprep.subr.bf16.mxu0 0
  %1621 = vmatpush1.bf16.msra.mxu0 %v1596
  %1622 = vmatprep.subr.bf16.mxu0 0
  %1623 = vmatpush1.bf16.msra.mxu0 %v1595
  %1624 = vmatprep.subr.bf16.mxu0 0
  %1625 = vmatpush1.bf16.msra.mxu0 %v1594
  %1626 = vmatprep.subr.bf16.mxu0 0
  %1627 = vmatpush2.bf16.msra.mxu0 0
  %1628 = vmatprep.subr.bf16.mxu0 0
  %1629 = vmatpush2.bf16.msra.mxu0 0
  %1630 = vmatprep.subr.bf16.mxu0 0
  %1631 = vmatpush2.bf16.msra.mxu0 0
  %1632 = vmatprep.subr.bf16.mxu0 0
  %1633 = vmatpush2.bf16.msra.mxu0 0
  %1634 = vmatprep.subr.bf16.mxu0 0
  %1635 = vmatpush2.bf16.msra.mxu0 0
  %1636 = vmatprep.subr.bf16.mxu0 0
  %1637 = vmatpush2.bf16.msra.mxu0 0
  %1638 = vmatprep.subr.bf16.mxu0 0
  %1639 = vmatpush2.bf16.msra.mxu0 0
  %1640 = vmatprep.subr.bf16.mxu0 0
  %1641 = vmatpush2.bf16.msra.mxu0 0
  %1642 = vmatprep.mubr.bf16.mxu0 0
  %1643 = vmatmul.mubr.bf16.gmra.mxu0 %v1546
  %v1644 = vpop.f32.mrf.mxu0
  %v1645 = vadd.f32 %v53, %v1644
  %v1646 = vpop.f32.mrf.mxu0
  %v1647 = vpop.f32.mrf.mxu0
  %v1648 = vadd.f32 %v53, %v1647
  %v1649 = vpop.f32.mrf.mxu0
  %1650 = vmatprep.mubr.bf16.mxu0 0
  %1651 = vmatmul.mubr.bf16.gmra.mxu0 %v1547
  %v1652 = vpop.f32.mrf.mxu0
  %v1653 = vadd.f32 %v53, %v1652
  %v1654 = vpop.f32.mrf.mxu0
  %v1655 = vpop.f32.mrf.mxu0
  %v1656 = vadd.f32 %v53, %v1655
  %v1657 = vpop.f32.mrf.mxu0
  %1658 = vmatprep.mubr.bf16.mxu0 0
  %1659 = vmatmul.mubr.bf16.gmra.mxu0 %v1548
  %v1660 = vpop.f32.mrf.mxu0
  %v1661 = vadd.f32 %v53, %v1660
  %v1662 = vpop.f32.mrf.mxu0
  %v1663 = vpop.f32.mrf.mxu0
  %v1664 = vadd.f32 %v53, %v1663
  %v1665 = vpop.f32.mrf.mxu0
  %1666 = vmatprep.mubr.bf16.mxu0 0
  %1667 = vmatmul.mubr.bf16.gmra.mxu0 %v1549
  %v1668 = vpop.f32.mrf.mxu0
  %v1669 = vadd.f32 %v53, %v1668
  %v1670 = vpop.f32.mrf.mxu0
  %v1671 = vpop.f32.mrf.mxu0
  %v1672 = vadd.f32 %v53, %v1671
  %v1673 = vpop.f32.mrf.mxu0
  %1674 = vmatprep.mubr.bf16.mxu0 0
  %1675 = vmatmul.mubr.bf16.gmra.mxu0 %v1550
  %v1676 = vpop.f32.mrf.mxu0
  %v1677 = vadd.f32 %v53, %v1676
  %v1678 = vpop.f32.mrf.mxu0
  %v1679 = vpop.f32.mrf.mxu0
  %v1680 = vadd.f32 %v53, %v1679
  %v1681 = vpop.f32.mrf.mxu0
  %1682 = vmatprep.mubr.bf16.mxu0 0
  %1683 = vmatmul.mubr.bf16.gmra.mxu0 %v1551
  %v1684 = vpop.f32.mrf.mxu0
  %v1685 = vadd.f32 %v53, %v1684
  %v1686 = vpop.f32.mrf.mxu0
  %v1687 = vpop.f32.mrf.mxu0
  %v1688 = vadd.f32 %v53, %v1687
  %v1689 = vpop.f32.mrf.mxu0
  %1690 = vmatprep.mubr.bf16.mxu0 0
  %1691 = vmatmul.mubr.bf16.gmra.mxu0 %v1552
  %v1692 = vpop.f32.mrf.mxu0
  %v1693 = vadd.f32 %v53, %v1692
  %v1694 = vpop.f32.mrf.mxu0
  %v1695 = vpop.f32.mrf.mxu0
  %v1696 = vadd.f32 %v53, %v1695
  %v1697 = vpop.f32.mrf.mxu0
  %1698 = vmatprep.mubr.bf16.mxu0 0
  %1699 = vmatmul.mubr.bf16.gmra.mxu0 %v1553
  %v1700 = vpop.f32.mrf.mxu0
  %v1701 = vadd.f32 %v53, %v1700
  %v1702 = vpop.f32.mrf.mxu0
  %v1703 = vpop.f32.mrf.mxu0
  %v1704 = vadd.f32 %v53, %v1703
  %v1705 = vpop.f32.mrf.mxu0
  %1706 = vdwg.mxu0
  %v1707 = vadd.f32 %v1645, %v1648
  %v1708 = vadd.f32 %v1707, %v1653
  %v1709 = vadd.f32 %v1708, %v1656
  %v1710 = vadd.f32 %v1709, %v1661
  %v1711 = vadd.f32 %v1710, %v1664
  %v1712 = vadd.f32 %v1711, %v1669
  %v1713 = vadd.f32 %v1712, %v1672
  %v1714 = vadd.f32 %v1713, %v1677
  %v1715 = vadd.f32 %v1714, %v1680
  %v1716 = vadd.f32 %v1715, %v1685
  %v1717 = vadd.f32 %v1716, %v1688
  %v1718 = vadd.f32 %v1717, %v1693
  %v1719 = vadd.f32 %v1718, %v1696
  %v1720 = vadd.f32 %v1719, %v1701
  %v1721 = vadd.f32 %v1720, %v1704
  %v1722 = vrot.slane %v1721, 4
  %v1723 = vadd.f32 %v1721, %v1722
  %v1724 = vrot.slane %v1723, 2
  %v1725 = vadd.f32 %v1723, %v1724
  %v1726 = vrot.slane %v1725, 1
  %v1727 = vadd.f32 %v1725, %v1726
  %v1728 = vadd.f32 %v1363, %v1727
  %v1729 = vmul.f32 %v1645, %v1645
  %v1730 = vmul.f32 %v1648, %v1648
  %v1731 = vmul.f32 %v1653, %v1653
  %v1732 = vmul.f32 %v1656, %v1656
  %v1733 = vmul.f32 %v1661, %v1661
  %v1734 = vmul.f32 %v1664, %v1664
  %v1735 = vmul.f32 %v1669, %v1669
  %v1736 = vmul.f32 %v1672, %v1672
  %v1737 = vmul.f32 %v1677, %v1677
  %v1738 = vmul.f32 %v1680, %v1680
  %v1739 = vmul.f32 %v1685, %v1685
  %v1740 = vmul.f32 %v1688, %v1688
  %v1741 = vmul.f32 %v1693, %v1693
  %v1742 = vmul.f32 %v1696, %v1696
  %v1743 = vmul.f32 %v1701, %v1701
  %v1744 = vmul.f32 %v1704, %v1704
  %v1745 = vadd.f32 %v1729, %v1730
  %v1746 = vadd.f32 %v1745, %v1731
  %v1747 = vadd.f32 %v1746, %v1732
  %v1748 = vadd.f32 %v1747, %v1733
  %v1749 = vadd.f32 %v1748, %v1734
  %v1750 = vadd.f32 %v1749, %v1735
  %v1751 = vadd.f32 %v1750, %v1736
  %v1752 = vadd.f32 %v1751, %v1737
  %v1753 = vadd.f32 %v1752, %v1738
  %v1754 = vadd.f32 %v1753, %v1739
  %v1755 = vadd.f32 %v1754, %v1740
  %v1756 = vadd.f32 %v1755, %v1741
  %v1757 = vadd.f32 %v1756, %v1742
  %v1758 = vadd.f32 %v1757, %v1743
  %v1759 = vadd.f32 %v1758, %v1744
  %v1760 = vrot.slane %v1759, 4
  %v1761 = vadd.f32 %v1759, %v1760
  %v1762 = vrot.slane %v1761, 2
  %v1763 = vadd.f32 %v1761, %v1762
  %v1764 = vrot.slane %v1763, 1
  %v1765 = vadd.f32 %v1763, %v1764
  %v1766 = vadd.f32 %v1401, %v1765
  %v1767 = vpack.c.bf16 %v1648, %v1645
  %v1768 = vpack.c.bf16 %v1656, %v1653
  %v1769 = vpack.c.bf16 %v1664, %v1661
  %v1770 = vpack.c.bf16 %v1672, %v1669
  %v1771 = vpack.c.bf16 %v1680, %v1677
  %v1772 = vpack.c.bf16 %v1688, %v1685
  %v1773 = vpack.c.bf16 %v1696, %v1693
  %v1774 = vpack.c.bf16 %v1704, %v1701
  %v1783 = vunpack.c.l.b16 %v1767
  %v1784 = vunpack.c.h.b16 %v1767
  %v1785 = vunpack.c.l.b16 %v1768
  %v1786 = vunpack.c.h.b16 %v1768
  %v1787 = vunpack.c.l.b16 %v1769
  %v1788 = vunpack.c.h.b16 %v1769
  %v1789 = vunpack.c.l.b16 %v1770
  %v1790 = vunpack.c.h.b16 %v1770
  %v1791 = vunpack.c.l.b16 %v1771
  %v1792 = vunpack.c.h.b16 %v1771
  %v1793 = vunpack.c.l.b16 %v1772
  %v1794 = vunpack.c.h.b16 %v1772
  %v1795 = vunpack.c.l.b16 %v1773
  %v1796 = vunpack.c.h.b16 %v1773
  %v1797 = vunpack.c.l.b16 %v1774
  %v1798 = vunpack.c.h.b16 %v1774
  %v1799 = vpack.c.b16 %v1783, %v1783
  %v1800 = vpack.c.b16 %v1784, %v1784
  %v1801 = vpack.c.b16 %v1785, %v1785
  %v1802 = vpack.c.b16 %v1786, %v1786
  %v1803 = vpack.c.b16 %v1787, %v1787
  %v1804 = vpack.c.b16 %v1788, %v1788
  %v1805 = vpack.c.b16 %v1789, %v1789
  %v1806 = vpack.c.b16 %v1790, %v1790
  %v1807 = vpack.c.b16 %v1791, %v1791
  %v1808 = vpack.c.b16 %v1792, %v1792
  %v1809 = vpack.c.b16 %v1793, %v1793
  %v1810 = vpack.c.b16 %v1794, %v1794
  %v1811 = vpack.c.b16 %v1795, %v1795
  %v1812 = vpack.c.b16 %v1796, %v1796
  %v1813 = vpack.c.b16 %v1797, %v1797
  %v1814 = vpack.c.b16 %v1798, %v1798
  %1831 = vst [vmem:[%s3 + $0x100] sm:$0xf] %v1799
  %1832 = vst [vmem:[%s3 + $0x104] sm:$0xf] %v1800
  %1833 = vst [vmem:[%s3 + $0x108] sm:$0xf] %v1801
  %1834 = vst [vmem:[%s3 + $0x10c] sm:$0xf] %v1802
  %1835 = vst [vmem:[%s3 + $0x110] sm:$0xf] %v1803
  %1836 = vst [vmem:[%s3 + $0x114] sm:$0xf] %v1804
  %1837 = vst [vmem:[%s3 + $0x118] sm:$0xf] %v1805
  %1838 = vst [vmem:[%s3 + $0x11c] sm:$0xf] %v1806
  %1839 = vst [vmem:[%s3 + $0x120] sm:$0xf] %v1807
  %1840 = vst [vmem:[%s3 + $0x124] sm:$0xf] %v1808
  %1841 = vst [vmem:[%s3 + $0x128] sm:$0xf] %v1809
  %1842 = vst [vmem:[%s3 + $0x12c] sm:$0xf] %v1810
  %1843 = vst [vmem:[%s3 + $0x130] sm:$0xf] %v1811
  %1844 = vst [vmem:[%s3 + $0x134] sm:$0xf] %v1812
  %1845 = vst [vmem:[%s3 + $0x138] sm:$0xf] %v1813
  %1846 = vst [vmem:[%s3 + $0x13c] sm:$0xf] %v1814
  %v1847 = vld [vmem:[%s0 + $0x140] sm:$0xf]
  %v1848 = vld [vmem:[%s1] sm:$0xf]
  %v1849 = vld [vmem:[%s1 + $0x4] sm:$0xf]
  %v1850 = vld [vmem:[%s1 + $0x8] sm:$0xf]
  %v1851 = vld [vmem:[%s1 + $0xc] sm:$0xf]
  %v1852 = vld [vmem:[%s1 + $0x10] sm:$0xf]
  %v1853 = vld [vmem:[%s1 + $0x14] sm:$0xf]
  %v1854 = vld [vmem:[%s1 + $0x18] sm:$0xf]
  %v1855 = vld [vmem:[%s1 + $0x1c] sm:$0xf]
  %v1856 = vld [vmem:[%s1 + $0x20] sm:$0xf]
  %v1857 = vld [vmem:[%s1 + $0x24] sm:$0xf]
  %v1858 = vld [vmem:[%s1 + $0x28] sm:$0xf]
  %v1859 = vld [vmem:[%s1 + $0x2c] sm:$0xf]
  %v1860 = vld [vmem:[%s1 + $0x30] sm:$0xf]
  %v1861 = vld [vmem:[%s1 + $0x34] sm:$0xf]
  %v1862 = vld [vmem:[%s1 + $0x38] sm:$0xf]
  %v1863 = vld [vmem:[%s1 + $0x3c] sm:$0xf]
  %v1880 = vunpack.c.l.b16 %v1848
  %v1881 = vunpack.c.l.b16 %v1849
  %v1882 = vunpack.c.l.b16 %v1850
  %v1883 = vunpack.c.l.b16 %v1851
  %v1884 = vunpack.c.l.b16 %v1852
  %v1885 = vunpack.c.l.b16 %v1853
  %v1886 = vunpack.c.l.b16 %v1854
  %v1887 = vunpack.c.l.b16 %v1855
  %v1888 = vunpack.c.l.b16 %v1856
  %v1889 = vunpack.c.l.b16 %v1857
  %v1890 = vunpack.c.l.b16 %v1858
  %v1891 = vunpack.c.l.b16 %v1859
  %v1892 = vunpack.c.l.b16 %v1860
  %v1893 = vunpack.c.l.b16 %v1861
  %v1894 = vunpack.c.l.b16 %v1862
  %v1895 = vunpack.c.l.b16 %v1863
  %v1896 = vpack.c.b16 %v1881, %v1880
  %v1897 = vpack.c.b16 %v1883, %v1882
  %v1898 = vpack.c.b16 %v1885, %v1884
  %v1899 = vpack.c.b16 %v1887, %v1886
  %v1900 = vpack.c.b16 %v1889, %v1888
  %v1901 = vpack.c.b16 %v1891, %v1890
  %v1902 = vpack.c.b16 %v1893, %v1892
  %v1903 = vpack.c.b16 %v1895, %v1894
  %1912 = vmatprep.subr.bf16.mxu0 0
  %1913 = vmatpush1.bf16.msra.mxu0 %v1903
  %1914 = vmatprep.subr.bf16.mxu0 0
  %1915 = vmatpush1.bf16.msra.mxu0 %v1902
  %1916 = vmatprep.subr.bf16.mxu0 0
  %1917 = vmatpush1.bf16.msra.mxu0 %v1901
  %1918 = vmatprep.subr.bf16.mxu0 0
  %1919 = vmatpush1.bf16.msra.mxu0 %v1900
  %1920 = vmatprep.subr.bf16.mxu0 0
  %1921 = vmatpush1.bf16.msra.mxu0 %v1899
  %1922 = vmatprep.subr.bf16.mxu0 0
  %1923 = vmatpush1.bf16.msra.mxu0 %v1898
  %1924 = vmatprep.subr.bf16.mxu0 0
  %1925 = vmatpush1.bf16.msra.mxu0 %v1897
  %1926 = vmatprep.subr.bf16.mxu0 0
  %1927 = vmatpush1.bf16.msra.mxu0 %v1896
  %1928 = vmatprep.subr.bf16.mxu0 0
  %1929 = vmatpush2.bf16.msra.mxu0 0
  %1930 = vmatprep.subr.bf16.mxu0 0
  %1931 = vmatpush2.bf16.msra.mxu0 0
  %1932 = vmatprep.subr.bf16.mxu0 0
  %1933 = vmatpush2.bf16.msra.mxu0 0
  %1934 = vmatprep.subr.bf16.mxu0 0
  %1935 = vmatpush2.bf16.msra.mxu0 0
  %1936 = vmatprep.subr.bf16.mxu0 0
  %1937 = vmatpush2.bf16.msra.mxu0 0
  %1938 = vmatprep.subr.bf16.mxu0 0
  %1939 = vmatpush2.bf16.msra.mxu0 0
  %1940 = vmatprep.subr.bf16.mxu0 0
  %1941 = vmatpush2.bf16.msra.mxu0 0
  %1942 = vmatprep.subr.bf16.mxu0 0
  %1943 = vmatpush2.bf16.msra.mxu0 0
  %1944 = vmatprep.mubr.bf16.mxu0 0
  %1945 = vmatmul.mubr.bf16.gmra.mxu0 %v1847
  %v1946 = vpop.f32.mrf.mxu0
  %v1947 = vadd.f32 %v53, %v1946
  %v1948 = vpop.f32.mrf.mxu0
  %v1949 = vpop.f32.mrf.mxu0
  %v1950 = vpop.f32.mrf.mxu0
  %1951 = vdwg.mxu0
  %v1952 = vrot.slane %v1947, 4
  %v1953 = vadd.f32 %v1947, %v1952
  %v1954 = vrot.slane %v1953, 2
  %v1955 = vadd.f32 %v1953, %v1954
  %v1956 = vrot.slane %v1955, 1
  %v1957 = vadd.f32 %v1955, %v1956
  %v1958 = vadd.f32 %v1728, %v1957
  %v1959 = vmul.f32 %v1947, %v1947
  %v1960 = vrot.slane %v1959, 4
  %v1961 = vadd.f32 %v1959, %v1960
  %v1962 = vrot.slane %v1961, 2
  %v1963 = vadd.f32 %v1961, %v1962
  %v1964 = vrot.slane %v1963, 1
  %v1965 = vadd.f32 %v1963, %v1964
  %v1966 = vadd.f32 %v1766, %v1965
  %v1967 = vpack.c.bf16 %v1947, %v1947
  %1968 = vst [vmem:[%s3 + $0x140] sm:$0xf] %v1967
  %v1969 = vmul.f32 %v1958, 0.0015432099
  %v1970 = vmul.f32 %v1966, 0.0015432099
  %v1971 = vmul.f32 %v1969, %v1969
  %v1972 = vsub.f32 %v1970, %v1971
  %v1973 = vmax.f32 %v1972, 0.0
  %v1974 = vadd.f32 %v1973, 1e-05
  %v1975 = vrsqrt.pop %v1974
  %v1976 = vmul.f32 %v1975, %v16
  %v1977 = vmul.f32 %v1969, %v1976
  %v1978 = vsub.f32 %v17, %v1977
  %v1979 = vld [vmem:[%s3] sm:$0xf]
  %v1980 = vld [vmem:[%s3 + $0x4] sm:$0xf]
  %v1981 = vld [vmem:[%s3 + $0x8] sm:$0xf]
  %v1982 = vld [vmem:[%s3 + $0xc] sm:$0xf]
  %v1983 = vld [vmem:[%s3 + $0x10] sm:$0xf]
  %v1984 = vld [vmem:[%s3 + $0x14] sm:$0xf]
  %v1985 = vld [vmem:[%s3 + $0x18] sm:$0xf]
  %v1986 = vld [vmem:[%s3 + $0x1c] sm:$0xf]
  %v1987 = vld [vmem:[%s3 + $0x20] sm:$0xf]
  %v1988 = vld [vmem:[%s3 + $0x24] sm:$0xf]
  %v1989 = vld [vmem:[%s3 + $0x28] sm:$0xf]
  %v1990 = vld [vmem:[%s3 + $0x2c] sm:$0xf]
  %v1991 = vld [vmem:[%s3 + $0x30] sm:$0xf]
  %v1992 = vld [vmem:[%s3 + $0x34] sm:$0xf]
  %v1993 = vld [vmem:[%s3 + $0x38] sm:$0xf]
  %v1994 = vld [vmem:[%s3 + $0x3c] sm:$0xf]
  %v1995 = vunpack.c.l.bf16 %v1979
  %v1996 = vunpack.c.l.bf16 %v1980
  %v1997 = vunpack.c.l.bf16 %v1981
  %v1998 = vunpack.c.l.bf16 %v1982
  %v1999 = vunpack.c.l.bf16 %v1983
  %v2000 = vunpack.c.l.bf16 %v1984
  %v2001 = vunpack.c.l.bf16 %v1985
  %v2002 = vunpack.c.l.bf16 %v1986
  %v2003 = vunpack.c.l.bf16 %v1987
  %v2004 = vunpack.c.l.bf16 %v1988
  %v2005 = vunpack.c.l.bf16 %v1989
  %v2006 = vunpack.c.l.bf16 %v1990
  %v2007 = vunpack.c.l.bf16 %v1991
  %v2008 = vunpack.c.l.bf16 %v1992
  %v2009 = vunpack.c.l.bf16 %v1993
  %v2010 = vunpack.c.l.bf16 %v1994
  %v2011 = vlaneseq
  %v2012 = vshrl.u32 %v2011, 7
  %v2013 = vsub.s32 0, %v2012
  %v2014 = vrot.slane %v1976, %v2013
  %v2015 = vmul.f32 %v1995, %v2014
  %v2016 = vmul.f32 %v1996, %v2014
  %v2017 = vmul.f32 %v1997, %v2014
  %v2018 = vmul.f32 %v1998, %v2014
  %v2019 = vmul.f32 %v1999, %v2014
  %v2020 = vmul.f32 %v2000, %v2014
  %v2021 = vmul.f32 %v2001, %v2014
  %v2022 = vmul.f32 %v2002, %v2014
  %v2023 = vmul.f32 %v2003, %v2014
  %v2024 = vmul.f32 %v2004, %v2014
  %v2025 = vmul.f32 %v2005, %v2014
  %v2026 = vmul.f32 %v2006, %v2014
  %v2027 = vmul.f32 %v2007, %v2014
  %v2028 = vmul.f32 %v2008, %v2014
  %v2029 = vmul.f32 %v2009, %v2014
  %v2030 = vmul.f32 %v2010, %v2014
  %v2031 = vlaneseq
  %v2032 = vshrl.u32 %v2031, 7
  %v2033 = vsub.s32 0, %v2032
  %v2034 = vrot.slane %v1978, %v2033
  %v2035 = vadd.f32 %v2015, %v2034
  %v2036 = vadd.f32 %v2016, %v2034
  %v2037 = vadd.f32 %v2017, %v2034
  %v2038 = vadd.f32 %v2018, %v2034
  %v2039 = vadd.f32 %v2019, %v2034
  %v2040 = vadd.f32 %v2020, %v2034
  %v2041 = vadd.f32 %v2021, %v2034
  %v2042 = vadd.f32 %v2022, %v2034
  %v2043 = vadd.f32 %v2023, %v2034
  %v2044 = vadd.f32 %v2024, %v2034
  %v2045 = vadd.f32 %v2025, %v2034
  %v2046 = vadd.f32 %v2026, %v2034
  %v2047 = vadd.f32 %v2027, %v2034
  %v2048 = vadd.f32 %v2028, %v2034
  %v2049 = vadd.f32 %v2029, %v2034
  %v2050 = vadd.f32 %v2030, %v2034
  %v2051 = vmax.f32 %v2035, 0.0
  %v2052 = vmax.f32 %v2036, 0.0
  %v2053 = vmax.f32 %v2037, 0.0
  %v2054 = vmax.f32 %v2038, 0.0
  %v2055 = vmax.f32 %v2039, 0.0
  %v2056 = vmax.f32 %v2040, 0.0
  %v2057 = vmax.f32 %v2041, 0.0
  %v2058 = vmax.f32 %v2042, 0.0
  %v2059 = vmax.f32 %v2043, 0.0
  %v2060 = vmax.f32 %v2044, 0.0
  %v2061 = vmax.f32 %v2045, 0.0
  %v2062 = vmax.f32 %v2046, 0.0
  %v2063 = vmax.f32 %v2047, 0.0
  %v2064 = vmax.f32 %v2048, 0.0
  %v2065 = vmax.f32 %v2049, 0.0
  %v2066 = vmax.f32 %v2050, 0.0
  %v2067 = vpack.c.bf16 %v2052, %v2051
  %v2068 = vpack.c.bf16 %v2054, %v2053
  %v2069 = vpack.c.bf16 %v2056, %v2055
  %v2070 = vpack.c.bf16 %v2058, %v2057
  %v2071 = vpack.c.bf16 %v2060, %v2059
  %v2072 = vpack.c.bf16 %v2062, %v2061
  %v2073 = vpack.c.bf16 %v2064, %v2063
  %v2074 = vpack.c.bf16 %v2066, %v2065
  %v2083 = vunpack.c.l.b16 %v2067
  %v2084 = vunpack.c.h.b16 %v2067
  %v2085 = vunpack.c.l.b16 %v2068
  %v2086 = vunpack.c.h.b16 %v2068
  %v2087 = vunpack.c.l.b16 %v2069
  %v2088 = vunpack.c.h.b16 %v2069
  %v2089 = vunpack.c.l.b16 %v2070
  %v2090 = vunpack.c.h.b16 %v2070
  %v2091 = vunpack.c.l.b16 %v2071
  %v2092 = vunpack.c.h.b16 %v2071
  %v2093 = vunpack.c.l.b16 %v2072
  %v2094 = vunpack.c.h.b16 %v2072
  %v2095 = vunpack.c.l.b16 %v2073
  %v2096 = vunpack.c.h.b16 %v2073
  %v2097 = vunpack.c.l.b16 %v2074
  %v2098 = vunpack.c.h.b16 %v2074
  %v2099 = vpack.c.b16 %v2083, %v2083
  %v2100 = vpack.c.b16 %v2084, %v2084
  %v2101 = vpack.c.b16 %v2085, %v2085
  %v2102 = vpack.c.b16 %v2086, %v2086
  %v2103 = vpack.c.b16 %v2087, %v2087
  %v2104 = vpack.c.b16 %v2088, %v2088
  %v2105 = vpack.c.b16 %v2089, %v2089
  %v2106 = vpack.c.b16 %v2090, %v2090
  %v2107 = vpack.c.b16 %v2091, %v2091
  %v2108 = vpack.c.b16 %v2092, %v2092
  %v2109 = vpack.c.b16 %v2093, %v2093
  %v2110 = vpack.c.b16 %v2094, %v2094
  %v2111 = vpack.c.b16 %v2095, %v2095
  %v2112 = vpack.c.b16 %v2096, %v2096
  %v2113 = vpack.c.b16 %v2097, %v2097
  %v2114 = vpack.c.b16 %v2098, %v2098
  %2131 = vst [vmem:[%s3] sm:$0xf] %v2099
  %2132 = vst [vmem:[%s3 + $0x4] sm:$0xf] %v2100
  %2133 = vst [vmem:[%s3 + $0x8] sm:$0xf] %v2101
  %2134 = vst [vmem:[%s3 + $0xc] sm:$0xf] %v2102
  %2135 = vst [vmem:[%s3 + $0x10] sm:$0xf] %v2103
  %2136 = vst [vmem:[%s3 + $0x14] sm:$0xf] %v2104
  %2137 = vst [vmem:[%s3 + $0x18] sm:$0xf] %v2105
  %2138 = vst [vmem:[%s3 + $0x1c] sm:$0xf] %v2106
  %2139 = vst [vmem:[%s3 + $0x20] sm:$0xf] %v2107
  %2140 = vst [vmem:[%s3 + $0x24] sm:$0xf] %v2108
  %2141 = vst [vmem:[%s3 + $0x28] sm:$0xf] %v2109
  %2142 = vst [vmem:[%s3 + $0x2c] sm:$0xf] %v2110
  %2143 = vst [vmem:[%s3 + $0x30] sm:$0xf] %v2111
  %2144 = vst [vmem:[%s3 + $0x34] sm:$0xf] %v2112
  %2145 = vst [vmem:[%s3 + $0x38] sm:$0xf] %v2113
  %2146 = vst [vmem:[%s3 + $0x3c] sm:$0xf] %v2114
  %v2147 = vld [vmem:[%s3 + $0x40] sm:$0xf]
  %v2148 = vld [vmem:[%s3 + $0x44] sm:$0xf]
  %v2149 = vld [vmem:[%s3 + $0x48] sm:$0xf]
  %v2150 = vld [vmem:[%s3 + $0x4c] sm:$0xf]
  %v2151 = vld [vmem:[%s3 + $0x50] sm:$0xf]
  %v2152 = vld [vmem:[%s3 + $0x54] sm:$0xf]
  %v2153 = vld [vmem:[%s3 + $0x58] sm:$0xf]
  %v2154 = vld [vmem:[%s3 + $0x5c] sm:$0xf]
  %v2155 = vld [vmem:[%s3 + $0x60] sm:$0xf]
  %v2156 = vld [vmem:[%s3 + $0x64] sm:$0xf]
  %v2157 = vld [vmem:[%s3 + $0x68] sm:$0xf]
  %v2158 = vld [vmem:[%s3 + $0x6c] sm:$0xf]
  %v2159 = vld [vmem:[%s3 + $0x70] sm:$0xf]
  %v2160 = vld [vmem:[%s3 + $0x74] sm:$0xf]
  %v2161 = vld [vmem:[%s3 + $0x78] sm:$0xf]
  %v2162 = vld [vmem:[%s3 + $0x7c] sm:$0xf]
  %v2163 = vunpack.c.l.bf16 %v2147
  %v2164 = vunpack.c.l.bf16 %v2148
  %v2165 = vunpack.c.l.bf16 %v2149
  %v2166 = vunpack.c.l.bf16 %v2150
  %v2167 = vunpack.c.l.bf16 %v2151
  %v2168 = vunpack.c.l.bf16 %v2152
  %v2169 = vunpack.c.l.bf16 %v2153
  %v2170 = vunpack.c.l.bf16 %v2154
  %v2171 = vunpack.c.l.bf16 %v2155
  %v2172 = vunpack.c.l.bf16 %v2156
  %v2173 = vunpack.c.l.bf16 %v2157
  %v2174 = vunpack.c.l.bf16 %v2158
  %v2175 = vunpack.c.l.bf16 %v2159
  %v2176 = vunpack.c.l.bf16 %v2160
  %v2177 = vunpack.c.l.bf16 %v2161
  %v2178 = vunpack.c.l.bf16 %v2162
  %v2179 = vmul.f32 %v2163, %v2014
  %v2180 = vmul.f32 %v2164, %v2014
  %v2181 = vmul.f32 %v2165, %v2014
  %v2182 = vmul.f32 %v2166, %v2014
  %v2183 = vmul.f32 %v2167, %v2014
  %v2184 = vmul.f32 %v2168, %v2014
  %v2185 = vmul.f32 %v2169, %v2014
  %v2186 = vmul.f32 %v2170, %v2014
  %v2187 = vmul.f32 %v2171, %v2014
  %v2188 = vmul.f32 %v2172, %v2014
  %v2189 = vmul.f32 %v2173, %v2014
  %v2190 = vmul.f32 %v2174, %v2014
  %v2191 = vmul.f32 %v2175, %v2014
  %v2192 = vmul.f32 %v2176, %v2014
  %v2193 = vmul.f32 %v2177, %v2014
  %v2194 = vmul.f32 %v2178, %v2014
  %v2195 = vadd.f32 %v2179, %v2034
  %v2196 = vadd.f32 %v2180, %v2034
  %v2197 = vadd.f32 %v2181, %v2034
  %v2198 = vadd.f32 %v2182, %v2034
  %v2199 = vadd.f32 %v2183, %v2034
  %v2200 = vadd.f32 %v2184, %v2034
  %v2201 = vadd.f32 %v2185, %v2034
  %v2202 = vadd.f32 %v2186, %v2034
  %v2203 = vadd.f32 %v2187, %v2034
  %v2204 = vadd.f32 %v2188, %v2034
  %v2205 = vadd.f32 %v2189, %v2034
  %v2206 = vadd.f32 %v2190, %v2034
  %v2207 = vadd.f32 %v2191, %v2034
  %v2208 = vadd.f32 %v2192, %v2034
  %v2209 = vadd.f32 %v2193, %v2034
  %v2210 = vadd.f32 %v2194, %v2034
  %v2211 = vmax.f32 %v2195, 0.0
  %v2212 = vmax.f32 %v2196, 0.0
  %v2213 = vmax.f32 %v2197, 0.0
  %v2214 = vmax.f32 %v2198, 0.0
  %v2215 = vmax.f32 %v2199, 0.0
  %v2216 = vmax.f32 %v2200, 0.0
  %v2217 = vmax.f32 %v2201, 0.0
  %v2218 = vmax.f32 %v2202, 0.0
  %v2219 = vmax.f32 %v2203, 0.0
  %v2220 = vmax.f32 %v2204, 0.0
  %v2221 = vmax.f32 %v2205, 0.0
  %v2222 = vmax.f32 %v2206, 0.0
  %v2223 = vmax.f32 %v2207, 0.0
  %v2224 = vmax.f32 %v2208, 0.0
  %v2225 = vmax.f32 %v2209, 0.0
  %v2226 = vmax.f32 %v2210, 0.0
  %v2227 = vpack.c.bf16 %v2212, %v2211
  %v2228 = vpack.c.bf16 %v2214, %v2213
  %v2229 = vpack.c.bf16 %v2216, %v2215
  %v2230 = vpack.c.bf16 %v2218, %v2217
  %v2231 = vpack.c.bf16 %v2220, %v2219
  %v2232 = vpack.c.bf16 %v2222, %v2221
  %v2233 = vpack.c.bf16 %v2224, %v2223
  %v2234 = vpack.c.bf16 %v2226, %v2225
  %v2243 = vunpack.c.l.b16 %v2227
  %v2244 = vunpack.c.h.b16 %v2227
  %v2245 = vunpack.c.l.b16 %v2228
  %v2246 = vunpack.c.h.b16 %v2228
  %v2247 = vunpack.c.l.b16 %v2229
  %v2248 = vunpack.c.h.b16 %v2229
  %v2249 = vunpack.c.l.b16 %v2230
  %v2250 = vunpack.c.h.b16 %v2230
  %v2251 = vunpack.c.l.b16 %v2231
  %v2252 = vunpack.c.h.b16 %v2231
  %v2253 = vunpack.c.l.b16 %v2232
  %v2254 = vunpack.c.h.b16 %v2232
  %v2255 = vunpack.c.l.b16 %v2233
  %v2256 = vunpack.c.h.b16 %v2233
  %v2257 = vunpack.c.l.b16 %v2234
  %v2258 = vunpack.c.h.b16 %v2234
  %v2259 = vpack.c.b16 %v2243, %v2243
  %v2260 = vpack.c.b16 %v2244, %v2244
  %v2261 = vpack.c.b16 %v2245, %v2245
  %v2262 = vpack.c.b16 %v2246, %v2246
  %v2263 = vpack.c.b16 %v2247, %v2247
  %v2264 = vpack.c.b16 %v2248, %v2248
  %v2265 = vpack.c.b16 %v2249, %v2249
  %v2266 = vpack.c.b16 %v2250, %v2250
  %v2267 = vpack.c.b16 %v2251, %v2251
  %v2268 = vpack.c.b16 %v2252, %v2252
  %v2269 = vpack.c.b16 %v2253, %v2253
  %v2270 = vpack.c.b16 %v2254, %v2254
  %v2271 = vpack.c.b16 %v2255, %v2255
  %v2272 = vpack.c.b16 %v2256, %v2256
  %v2273 = vpack.c.b16 %v2257, %v2257
  %v2274 = vpack.c.b16 %v2258, %v2258
  %2291 = vst [vmem:[%s3 + $0x40] sm:$0xf] %v2259
  %2292 = vst [vmem:[%s3 + $0x44] sm:$0xf] %v2260
  %2293 = vst [vmem:[%s3 + $0x48] sm:$0xf] %v2261
  %2294 = vst [vmem:[%s3 + $0x4c] sm:$0xf] %v2262
  %2295 = vst [vmem:[%s3 + $0x50] sm:$0xf] %v2263
  %2296 = vst [vmem:[%s3 + $0x54] sm:$0xf] %v2264
  %2297 = vst [vmem:[%s3 + $0x58] sm:$0xf] %v2265
  %2298 = vst [vmem:[%s3 + $0x5c] sm:$0xf] %v2266
  %2299 = vst [vmem:[%s3 + $0x60] sm:$0xf] %v2267
  %2300 = vst [vmem:[%s3 + $0x64] sm:$0xf] %v2268
  %2301 = vst [vmem:[%s3 + $0x68] sm:$0xf] %v2269
  %2302 = vst [vmem:[%s3 + $0x6c] sm:$0xf] %v2270
  %2303 = vst [vmem:[%s3 + $0x70] sm:$0xf] %v2271
  %2304 = vst [vmem:[%s3 + $0x74] sm:$0xf] %v2272
  %2305 = vst [vmem:[%s3 + $0x78] sm:$0xf] %v2273
  %2306 = vst [vmem:[%s3 + $0x7c] sm:$0xf] %v2274
  %v2307 = vld [vmem:[%s3 + $0x80] sm:$0xf]
  %v2308 = vld [vmem:[%s3 + $0x84] sm:$0xf]
  %v2309 = vld [vmem:[%s3 + $0x88] sm:$0xf]
  %v2310 = vld [vmem:[%s3 + $0x8c] sm:$0xf]
  %v2311 = vld [vmem:[%s3 + $0x90] sm:$0xf]
  %v2312 = vld [vmem:[%s3 + $0x94] sm:$0xf]
  %v2313 = vld [vmem:[%s3 + $0x98] sm:$0xf]
  %v2314 = vld [vmem:[%s3 + $0x9c] sm:$0xf]
  %v2315 = vld [vmem:[%s3 + $0xa0] sm:$0xf]
  %v2316 = vld [vmem:[%s3 + $0xa4] sm:$0xf]
  %v2317 = vld [vmem:[%s3 + $0xa8] sm:$0xf]
  %v2318 = vld [vmem:[%s3 + $0xac] sm:$0xf]
  %v2319 = vld [vmem:[%s3 + $0xb0] sm:$0xf]
  %v2320 = vld [vmem:[%s3 + $0xb4] sm:$0xf]
  %v2321 = vld [vmem:[%s3 + $0xb8] sm:$0xf]
  %v2322 = vld [vmem:[%s3 + $0xbc] sm:$0xf]
  %v2323 = vunpack.c.l.bf16 %v2307
  %v2324 = vunpack.c.l.bf16 %v2308
  %v2325 = vunpack.c.l.bf16 %v2309
  %v2326 = vunpack.c.l.bf16 %v2310
  %v2327 = vunpack.c.l.bf16 %v2311
  %v2328 = vunpack.c.l.bf16 %v2312
  %v2329 = vunpack.c.l.bf16 %v2313
  %v2330 = vunpack.c.l.bf16 %v2314
  %v2331 = vunpack.c.l.bf16 %v2315
  %v2332 = vunpack.c.l.bf16 %v2316
  %v2333 = vunpack.c.l.bf16 %v2317
  %v2334 = vunpack.c.l.bf16 %v2318
  %v2335 = vunpack.c.l.bf16 %v2319
  %v2336 = vunpack.c.l.bf16 %v2320
  %v2337 = vunpack.c.l.bf16 %v2321
  %v2338 = vunpack.c.l.bf16 %v2322
  %v2339 = vmul.f32 %v2323, %v2014
  %v2340 = vmul.f32 %v2324, %v2014
  %v2341 = vmul.f32 %v2325, %v2014
  %v2342 = vmul.f32 %v2326, %v2014
  %v2343 = vmul.f32 %v2327, %v2014
  %v2344 = vmul.f32 %v2328, %v2014
  %v2345 = vmul.f32 %v2329, %v2014
  %v2346 = vmul.f32 %v2330, %v2014
  %v2347 = vmul.f32 %v2331, %v2014
  %v2348 = vmul.f32 %v2332, %v2014
  %v2349 = vmul.f32 %v2333, %v2014
  %v2350 = vmul.f32 %v2334, %v2014
  %v2351 = vmul.f32 %v2335, %v2014
  %v2352 = vmul.f32 %v2336, %v2014
  %v2353 = vmul.f32 %v2337, %v2014
  %v2354 = vmul.f32 %v2338, %v2014
  %v2355 = vadd.f32 %v2339, %v2034
  %v2356 = vadd.f32 %v2340, %v2034
  %v2357 = vadd.f32 %v2341, %v2034
  %v2358 = vadd.f32 %v2342, %v2034
  %v2359 = vadd.f32 %v2343, %v2034
  %v2360 = vadd.f32 %v2344, %v2034
  %v2361 = vadd.f32 %v2345, %v2034
  %v2362 = vadd.f32 %v2346, %v2034
  %v2363 = vadd.f32 %v2347, %v2034
  %v2364 = vadd.f32 %v2348, %v2034
  %v2365 = vadd.f32 %v2349, %v2034
  %v2366 = vadd.f32 %v2350, %v2034
  %v2367 = vadd.f32 %v2351, %v2034
  %v2368 = vadd.f32 %v2352, %v2034
  %v2369 = vadd.f32 %v2353, %v2034
  %v2370 = vadd.f32 %v2354, %v2034
  %v2371 = vmax.f32 %v2355, 0.0
  %v2372 = vmax.f32 %v2356, 0.0
  %v2373 = vmax.f32 %v2357, 0.0
  %v2374 = vmax.f32 %v2358, 0.0
  %v2375 = vmax.f32 %v2359, 0.0
  %v2376 = vmax.f32 %v2360, 0.0
  %v2377 = vmax.f32 %v2361, 0.0
  %v2378 = vmax.f32 %v2362, 0.0
  %v2379 = vmax.f32 %v2363, 0.0
  %v2380 = vmax.f32 %v2364, 0.0
  %v2381 = vmax.f32 %v2365, 0.0
  %v2382 = vmax.f32 %v2366, 0.0
  %v2383 = vmax.f32 %v2367, 0.0
  %v2384 = vmax.f32 %v2368, 0.0
  %v2385 = vmax.f32 %v2369, 0.0
  %v2386 = vmax.f32 %v2370, 0.0
  %v2387 = vpack.c.bf16 %v2372, %v2371
  %v2388 = vpack.c.bf16 %v2374, %v2373
  %v2389 = vpack.c.bf16 %v2376, %v2375
  %v2390 = vpack.c.bf16 %v2378, %v2377
  %v2391 = vpack.c.bf16 %v2380, %v2379
  %v2392 = vpack.c.bf16 %v2382, %v2381
  %v2393 = vpack.c.bf16 %v2384, %v2383
  %v2394 = vpack.c.bf16 %v2386, %v2385
  %v2403 = vunpack.c.l.b16 %v2387
  %v2404 = vunpack.c.h.b16 %v2387
  %v2405 = vunpack.c.l.b16 %v2388
  %v2406 = vunpack.c.h.b16 %v2388
  %v2407 = vunpack.c.l.b16 %v2389
  %v2408 = vunpack.c.h.b16 %v2389
  %v2409 = vunpack.c.l.b16 %v2390
  %v2410 = vunpack.c.h.b16 %v2390
  %v2411 = vunpack.c.l.b16 %v2391
  %v2412 = vunpack.c.h.b16 %v2391
  %v2413 = vunpack.c.l.b16 %v2392
  %v2414 = vunpack.c.h.b16 %v2392
  %v2415 = vunpack.c.l.b16 %v2393
  %v2416 = vunpack.c.h.b16 %v2393
  %v2417 = vunpack.c.l.b16 %v2394
  %v2418 = vunpack.c.h.b16 %v2394
  %v2419 = vpack.c.b16 %v2403, %v2403
  %v2420 = vpack.c.b16 %v2404, %v2404
  %v2421 = vpack.c.b16 %v2405, %v2405
  %v2422 = vpack.c.b16 %v2406, %v2406
  %v2423 = vpack.c.b16 %v2407, %v2407
  %v2424 = vpack.c.b16 %v2408, %v2408
  %v2425 = vpack.c.b16 %v2409, %v2409
  %v2426 = vpack.c.b16 %v2410, %v2410
  %v2427 = vpack.c.b16 %v2411, %v2411
  %v2428 = vpack.c.b16 %v2412, %v2412
  %v2429 = vpack.c.b16 %v2413, %v2413
  %v2430 = vpack.c.b16 %v2414, %v2414
  %v2431 = vpack.c.b16 %v2415, %v2415
  %v2432 = vpack.c.b16 %v2416, %v2416
  %v2433 = vpack.c.b16 %v2417, %v2417
  %v2434 = vpack.c.b16 %v2418, %v2418
  %2451 = vst [vmem:[%s3 + $0x80] sm:$0xf] %v2419
  %2452 = vst [vmem:[%s3 + $0x84] sm:$0xf] %v2420
  %2453 = vst [vmem:[%s3 + $0x88] sm:$0xf] %v2421
  %2454 = vst [vmem:[%s3 + $0x8c] sm:$0xf] %v2422
  %2455 = vst [vmem:[%s3 + $0x90] sm:$0xf] %v2423
  %2456 = vst [vmem:[%s3 + $0x94] sm:$0xf] %v2424
  %2457 = vst [vmem:[%s3 + $0x98] sm:$0xf] %v2425
  %2458 = vst [vmem:[%s3 + $0x9c] sm:$0xf] %v2426
  %2459 = vst [vmem:[%s3 + $0xa0] sm:$0xf] %v2427
  %2460 = vst [vmem:[%s3 + $0xa4] sm:$0xf] %v2428
  %2461 = vst [vmem:[%s3 + $0xa8] sm:$0xf] %v2429
  %2462 = vst [vmem:[%s3 + $0xac] sm:$0xf] %v2430
  %2463 = vst [vmem:[%s3 + $0xb0] sm:$0xf] %v2431
  %2464 = vst [vmem:[%s3 + $0xb4] sm:$0xf] %v2432
  %2465 = vst [vmem:[%s3 + $0xb8] sm:$0xf] %v2433
  %2466 = vst [vmem:[%s3 + $0xbc] sm:$0xf] %v2434
  %v2467 = vld [vmem:[%s3 + $0xc0] sm:$0xf]
  %v2468 = vld [vmem:[%s3 + $0xc4] sm:$0xf]
  %v2469 = vld [vmem:[%s3 + $0xc8] sm:$0xf]
  %v2470 = vld [vmem:[%s3 + $0xcc] sm:$0xf]
  %v2471 = vld [vmem:[%s3 + $0xd0] sm:$0xf]
  %v2472 = vld [vmem:[%s3 + $0xd4] sm:$0xf]
  %v2473 = vld [vmem:[%s3 + $0xd8] sm:$0xf]
  %v2474 = vld [vmem:[%s3 + $0xdc] sm:$0xf]
  %v2475 = vld [vmem:[%s3 + $0xe0] sm:$0xf]
  %v2476 = vld [vmem:[%s3 + $0xe4] sm:$0xf]
  %v2477 = vld [vmem:[%s3 + $0xe8] sm:$0xf]
  %v2478 = vld [vmem:[%s3 + $0xec] sm:$0xf]
  %v2479 = vld [vmem:[%s3 + $0xf0] sm:$0xf]
  %v2480 = vld [vmem:[%s3 + $0xf4] sm:$0xf]
  %v2481 = vld [vmem:[%s3 + $0xf8] sm:$0xf]
  %v2482 = vld [vmem:[%s3 + $0xfc] sm:$0xf]
  %v2483 = vunpack.c.l.bf16 %v2467
  %v2484 = vunpack.c.l.bf16 %v2468
  %v2485 = vunpack.c.l.bf16 %v2469
  %v2486 = vunpack.c.l.bf16 %v2470
  %v2487 = vunpack.c.l.bf16 %v2471
  %v2488 = vunpack.c.l.bf16 %v2472
  %v2489 = vunpack.c.l.bf16 %v2473
  %v2490 = vunpack.c.l.bf16 %v2474
  %v2491 = vunpack.c.l.bf16 %v2475
  %v2492 = vunpack.c.l.bf16 %v2476
  %v2493 = vunpack.c.l.bf16 %v2477
  %v2494 = vunpack.c.l.bf16 %v2478
  %v2495 = vunpack.c.l.bf16 %v2479
  %v2496 = vunpack.c.l.bf16 %v2480
  %v2497 = vunpack.c.l.bf16 %v2481
  %v2498 = vunpack.c.l.bf16 %v2482
  %v2499 = vmul.f32 %v2483, %v2014
  %v2500 = vmul.f32 %v2484, %v2014
  %v2501 = vmul.f32 %v2485, %v2014
  %v2502 = vmul.f32 %v2486, %v2014
  %v2503 = vmul.f32 %v2487, %v2014
  %v2504 = vmul.f32 %v2488, %v2014
  %v2505 = vmul.f32 %v2489, %v2014
  %v2506 = vmul.f32 %v2490, %v2014
  %v2507 = vmul.f32 %v2491, %v2014
  %v2508 = vmul.f32 %v2492, %v2014
  %v2509 = vmul.f32 %v2493, %v2014
  %v2510 = vmul.f32 %v2494, %v2014
  %v2511 = vmul.f32 %v2495, %v2014
  %v2512 = vmul.f32 %v2496, %v2014
  %v2513 = vmul.f32 %v2497, %v2014
  %v2514 = vmul.f32 %v2498, %v2014
  %v2515 = vadd.f32 %v2499, %v2034
  %v2516 = vadd.f32 %v2500, %v2034
  %v2517 = vadd.f32 %v2501, %v2034
  %v2518 = vadd.f32 %v2502, %v2034
  %v2519 = vadd.f32 %v2503, %v2034
  %v2520 = vadd.f32 %v2504, %v2034
  %v2521 = vadd.f32 %v2505, %v2034
  %v2522 = vadd.f32 %v2506, %v2034
  %v2523 = vadd.f32 %v2507, %v2034
  %v2524 = vadd.f32 %v2508, %v2034
  %v2525 = vadd.f32 %v2509, %v2034
  %v2526 = vadd.f32 %v2510, %v2034
  %v2527 = vadd.f32 %v2511, %v2034
  %v2528 = vadd.f32 %v2512, %v2034
  %v2529 = vadd.f32 %v2513, %v2034
  %v2530 = vadd.f32 %v2514, %v2034
  %v2531 = vmax.f32 %v2515, 0.0
  %v2532 = vmax.f32 %v2516, 0.0
  %v2533 = vmax.f32 %v2517, 0.0
  %v2534 = vmax.f32 %v2518, 0.0
  %v2535 = vmax.f32 %v2519, 0.0
  %v2536 = vmax.f32 %v2520, 0.0
  %v2537 = vmax.f32 %v2521, 0.0
  %v2538 = vmax.f32 %v2522, 0.0
  %v2539 = vmax.f32 %v2523, 0.0
  %v2540 = vmax.f32 %v2524, 0.0
  %v2541 = vmax.f32 %v2525, 0.0
  %v2542 = vmax.f32 %v2526, 0.0
  %v2543 = vmax.f32 %v2527, 0.0
  %v2544 = vmax.f32 %v2528, 0.0
  %v2545 = vmax.f32 %v2529, 0.0
  %v2546 = vmax.f32 %v2530, 0.0
  %v2547 = vpack.c.bf16 %v2532, %v2531
  %v2548 = vpack.c.bf16 %v2534, %v2533
  %v2549 = vpack.c.bf16 %v2536, %v2535
  %v2550 = vpack.c.bf16 %v2538, %v2537
  %v2551 = vpack.c.bf16 %v2540, %v2539
  %v2552 = vpack.c.bf16 %v2542, %v2541
  %v2553 = vpack.c.bf16 %v2544, %v2543
  %v2554 = vpack.c.bf16 %v2546, %v2545
  %v2563 = vunpack.c.l.b16 %v2547
  %v2564 = vunpack.c.h.b16 %v2547
  %v2565 = vunpack.c.l.b16 %v2548
  %v2566 = vunpack.c.h.b16 %v2548
  %v2567 = vunpack.c.l.b16 %v2549
  %v2568 = vunpack.c.h.b16 %v2549
  %v2569 = vunpack.c.l.b16 %v2550
  %v2570 = vunpack.c.h.b16 %v2550
  %v2571 = vunpack.c.l.b16 %v2551
  %v2572 = vunpack.c.h.b16 %v2551
  %v2573 = vunpack.c.l.b16 %v2552
  %v2574 = vunpack.c.h.b16 %v2552
  %v2575 = vunpack.c.l.b16 %v2553
  %v2576 = vunpack.c.h.b16 %v2553
  %v2577 = vunpack.c.l.b16 %v2554
  %v2578 = vunpack.c.h.b16 %v2554
  %v2579 = vpack.c.b16 %v2563, %v2563
  %v2580 = vpack.c.b16 %v2564, %v2564
  %v2581 = vpack.c.b16 %v2565, %v2565
  %v2582 = vpack.c.b16 %v2566, %v2566
  %v2583 = vpack.c.b16 %v2567, %v2567
  %v2584 = vpack.c.b16 %v2568, %v2568
  %v2585 = vpack.c.b16 %v2569, %v2569
  %v2586 = vpack.c.b16 %v2570, %v2570
  %v2587 = vpack.c.b16 %v2571, %v2571
  %v2588 = vpack.c.b16 %v2572, %v2572
  %v2589 = vpack.c.b16 %v2573, %v2573
  %v2590 = vpack.c.b16 %v2574, %v2574
  %v2591 = vpack.c.b16 %v2575, %v2575
  %v2592 = vpack.c.b16 %v2576, %v2576
  %v2593 = vpack.c.b16 %v2577, %v2577
  %v2594 = vpack.c.b16 %v2578, %v2578
  %2611 = vst [vmem:[%s3 + $0xc0] sm:$0xf] %v2579
  %2612 = vst [vmem:[%s3 + $0xc4] sm:$0xf] %v2580
  %2613 = vst [vmem:[%s3 + $0xc8] sm:$0xf] %v2581
  %2614 = vst [vmem:[%s3 + $0xcc] sm:$0xf] %v2582
  %2615 = vst [vmem:[%s3 + $0xd0] sm:$0xf] %v2583
  %2616 = vst [vmem:[%s3 + $0xd4] sm:$0xf] %v2584
  %2617 = vst [vmem:[%s3 + $0xd8] sm:$0xf] %v2585
  %2618 = vst [vmem:[%s3 + $0xdc] sm:$0xf] %v2586
  %2619 = vst [vmem:[%s3 + $0xe0] sm:$0xf] %v2587
  %2620 = vst [vmem:[%s3 + $0xe4] sm:$0xf] %v2588
  %2621 = vst [vmem:[%s3 + $0xe8] sm:$0xf] %v2589
  %2622 = vst [vmem:[%s3 + $0xec] sm:$0xf] %v2590
  %2623 = vst [vmem:[%s3 + $0xf0] sm:$0xf] %v2591
  %2624 = vst [vmem:[%s3 + $0xf4] sm:$0xf] %v2592
  %2625 = vst [vmem:[%s3 + $0xf8] sm:$0xf] %v2593
  %2626 = vst [vmem:[%s3 + $0xfc] sm:$0xf] %v2594
  %v2627 = vld [vmem:[%s3 + $0x100] sm:$0xf]
  %v2628 = vld [vmem:[%s3 + $0x104] sm:$0xf]
  %v2629 = vld [vmem:[%s3 + $0x108] sm:$0xf]
  %v2630 = vld [vmem:[%s3 + $0x10c] sm:$0xf]
  %v2631 = vld [vmem:[%s3 + $0x110] sm:$0xf]
  %v2632 = vld [vmem:[%s3 + $0x114] sm:$0xf]
  %v2633 = vld [vmem:[%s3 + $0x118] sm:$0xf]
  %v2634 = vld [vmem:[%s3 + $0x11c] sm:$0xf]
  %v2635 = vld [vmem:[%s3 + $0x120] sm:$0xf]
  %v2636 = vld [vmem:[%s3 + $0x124] sm:$0xf]
  %v2637 = vld [vmem:[%s3 + $0x128] sm:$0xf]
  %v2638 = vld [vmem:[%s3 + $0x12c] sm:$0xf]
  %v2639 = vld [vmem:[%s3 + $0x130] sm:$0xf]
  %v2640 = vld [vmem:[%s3 + $0x134] sm:$0xf]
  %v2641 = vld [vmem:[%s3 + $0x138] sm:$0xf]
  %v2642 = vld [vmem:[%s3 + $0x13c] sm:$0xf]
  %v2643 = vunpack.c.l.bf16 %v2627
  %v2644 = vunpack.c.l.bf16 %v2628
  %v2645 = vunpack.c.l.bf16 %v2629
  %v2646 = vunpack.c.l.bf16 %v2630
  %v2647 = vunpack.c.l.bf16 %v2631
  %v2648 = vunpack.c.l.bf16 %v2632
  %v2649 = vunpack.c.l.bf16 %v2633
  %v2650 = vunpack.c.l.bf16 %v2634
  %v2651 = vunpack.c.l.bf16 %v2635
  %v2652 = vunpack.c.l.bf16 %v2636
  %v2653 = vunpack.c.l.bf16 %v2637
  %v2654 = vunpack.c.l.bf16 %v2638
  %v2655 = vunpack.c.l.bf16 %v2639
  %v2656 = vunpack.c.l.bf16 %v2640
  %v2657 = vunpack.c.l.bf16 %v2641
  %v2658 = vunpack.c.l.bf16 %v2642
  %v2659 = vmul.f32 %v2643, %v2014
  %v2660 = vmul.f32 %v2644, %v2014
  %v2661 = vmul.f32 %v2645, %v2014
  %v2662 = vmul.f32 %v2646, %v2014
  %v2663 = vmul.f32 %v2647, %v2014
  %v2664 = vmul.f32 %v2648, %v2014
  %v2665 = vmul.f32 %v2649, %v2014
  %v2666 = vmul.f32 %v2650, %v2014
  %v2667 = vmul.f32 %v2651, %v2014
  %v2668 = vmul.f32 %v2652, %v2014
  %v2669 = vmul.f32 %v2653, %v2014
  %v2670 = vmul.f32 %v2654, %v2014
  %v2671 = vmul.f32 %v2655, %v2014
  %v2672 = vmul.f32 %v2656, %v2014
  %v2673 = vmul.f32 %v2657, %v2014
  %v2674 = vmul.f32 %v2658, %v2014
  %v2675 = vadd.f32 %v2659, %v2034
  %v2676 = vadd.f32 %v2660, %v2034
  %v2677 = vadd.f32 %v2661, %v2034
  %v2678 = vadd.f32 %v2662, %v2034
  %v2679 = vadd.f32 %v2663, %v2034
  %v2680 = vadd.f32 %v2664, %v2034
  %v2681 = vadd.f32 %v2665, %v2034
  %v2682 = vadd.f32 %v2666, %v2034
  %v2683 = vadd.f32 %v2667, %v2034
  %v2684 = vadd.f32 %v2668, %v2034
  %v2685 = vadd.f32 %v2669, %v2034
  %v2686 = vadd.f32 %v2670, %v2034
  %v2687 = vadd.f32 %v2671, %v2034
  %v2688 = vadd.f32 %v2672, %v2034
  %v2689 = vadd.f32 %v2673, %v2034
  %v2690 = vadd.f32 %v2674, %v2034
  %v2691 = vmax.f32 %v2675, 0.0
  %v2692 = vmax.f32 %v2676, 0.0
  %v2693 = vmax.f32 %v2677, 0.0
  %v2694 = vmax.f32 %v2678, 0.0
  %v2695 = vmax.f32 %v2679, 0.0
  %v2696 = vmax.f32 %v2680, 0.0
  %v2697 = vmax.f32 %v2681, 0.0
  %v2698 = vmax.f32 %v2682, 0.0
  %v2699 = vmax.f32 %v2683, 0.0
  %v2700 = vmax.f32 %v2684, 0.0
  %v2701 = vmax.f32 %v2685, 0.0
  %v2702 = vmax.f32 %v2686, 0.0
  %v2703 = vmax.f32 %v2687, 0.0
  %v2704 = vmax.f32 %v2688, 0.0
  %v2705 = vmax.f32 %v2689, 0.0
  %v2706 = vmax.f32 %v2690, 0.0
  %v2707 = vpack.c.bf16 %v2692, %v2691
  %v2708 = vpack.c.bf16 %v2694, %v2693
  %v2709 = vpack.c.bf16 %v2696, %v2695
  %v2710 = vpack.c.bf16 %v2698, %v2697
  %v2711 = vpack.c.bf16 %v2700, %v2699
  %v2712 = vpack.c.bf16 %v2702, %v2701
  %v2713 = vpack.c.bf16 %v2704, %v2703
  %v2714 = vpack.c.bf16 %v2706, %v2705
  %v2723 = vunpack.c.l.b16 %v2707
  %v2724 = vunpack.c.h.b16 %v2707
  %v2725 = vunpack.c.l.b16 %v2708
  %v2726 = vunpack.c.h.b16 %v2708
  %v2727 = vunpack.c.l.b16 %v2709
  %v2728 = vunpack.c.h.b16 %v2709
  %v2729 = vunpack.c.l.b16 %v2710
  %v2730 = vunpack.c.h.b16 %v2710
  %v2731 = vunpack.c.l.b16 %v2711
  %v2732 = vunpack.c.h.b16 %v2711
  %v2733 = vunpack.c.l.b16 %v2712
  %v2734 = vunpack.c.h.b16 %v2712
  %v2735 = vunpack.c.l.b16 %v2713
  %v2736 = vunpack.c.h.b16 %v2713
  %v2737 = vunpack.c.l.b16 %v2714
  %v2738 = vunpack.c.h.b16 %v2714
  %v2739 = vpack.c.b16 %v2723, %v2723
  %v2740 = vpack.c.b16 %v2724, %v2724
  %v2741 = vpack.c.b16 %v2725, %v2725
  %v2742 = vpack.c.b16 %v2726, %v2726
  %v2743 = vpack.c.b16 %v2727, %v2727
  %v2744 = vpack.c.b16 %v2728, %v2728
  %v2745 = vpack.c.b16 %v2729, %v2729
  %v2746 = vpack.c.b16 %v2730, %v2730
  %v2747 = vpack.c.b16 %v2731, %v2731
  %v2748 = vpack.c.b16 %v2732, %v2732
  %v2749 = vpack.c.b16 %v2733, %v2733
  %v2750 = vpack.c.b16 %v2734, %v2734
  %v2751 = vpack.c.b16 %v2735, %v2735
  %v2752 = vpack.c.b16 %v2736, %v2736
  %v2753 = vpack.c.b16 %v2737, %v2737
  %v2754 = vpack.c.b16 %v2738, %v2738
  %2771 = vst [vmem:[%s3 + $0x100] sm:$0xf] %v2739
  %2772 = vst [vmem:[%s3 + $0x104] sm:$0xf] %v2740
  %2773 = vst [vmem:[%s3 + $0x108] sm:$0xf] %v2741
  %2774 = vst [vmem:[%s3 + $0x10c] sm:$0xf] %v2742
  %2775 = vst [vmem:[%s3 + $0x110] sm:$0xf] %v2743
  %2776 = vst [vmem:[%s3 + $0x114] sm:$0xf] %v2744
  %2777 = vst [vmem:[%s3 + $0x118] sm:$0xf] %v2745
  %2778 = vst [vmem:[%s3 + $0x11c] sm:$0xf] %v2746
  %2779 = vst [vmem:[%s3 + $0x120] sm:$0xf] %v2747
  %2780 = vst [vmem:[%s3 + $0x124] sm:$0xf] %v2748
  %2781 = vst [vmem:[%s3 + $0x128] sm:$0xf] %v2749
  %2782 = vst [vmem:[%s3 + $0x12c] sm:$0xf] %v2750
  %2783 = vst [vmem:[%s3 + $0x130] sm:$0xf] %v2751
  %2784 = vst [vmem:[%s3 + $0x134] sm:$0xf] %v2752
  %2785 = vst [vmem:[%s3 + $0x138] sm:$0xf] %v2753
  %2786 = vst [vmem:[%s3 + $0x13c] sm:$0xf] %v2754
  %v2787 = vld [vmem:[%s3 + $0x140] sm:$0xf]
  %v2788 = vunpack.c.l.bf16 %v2787
  %v2789 = vmul.f32 %v2788, %v2014
  %v2790 = vadd.f32 %v2789, %v2034
  %v2791 = vmax.f32 %v2790, 0.0
  %v2792 = vpack.c.bf16 %v2791, %v2791
  %2793 = vst [vmem:[%s3 + $0x140] sm:$0xf] %v2792
  // Predicated region
  $region14: #{dqn_forward.2} parent=0 // pred_check
    _
  $region15: #{dqn_forward.2} parent=0 // pred_check_branch
    %2795 = sbr.rel (0) target = $region17
  $region16: #{dqn_forward.2} parent=0 // pred_region
    _
  $region17: #{dqn_forward.2} parent=0 // pred_fallthru
    _
  // Predicated region
  $region18: #{dqn_forward.2} parent=0 // pred_check
    _
  $region19: #{dqn_forward.2} parent=0 // pred_check_branch
    %2797 = sbr.rel (0) target = $region21
  $region20: #{dqn_forward.2} parent=0 // pred_region
    _
  $region21: #{dqn_forward.2} parent=0 // pred_fallthru
    _

// kernel: dqn_forward.3
$region0: #{dqn_forward.3}
  #allocation0 [shape = 'u32[]', space=smem, size = 0x4, offset = 0x4, fixed_abs, tag = 'smem constant byte address 0x4 - core index']
  #allocation1 [shape = 'u32[144,128]{1,0:T(1,128)}', space=vmem, size = 0x12000, scoped, tag = 'internal scratch']
  %s0 = inlined_call_operand.vmem [shape: bf16[98,512], index: 0, kind: input, shape index: {}]
  %s1 = inlined_call_operand.vmem [shape: bf16[512,128], index: 1, kind: input, shape index: {}]
  %s2 = inlined_call_operand.vmem [shape: bf16[200,98], index: 2, kind: input, shape index: {}]
  %s3 = inlined_call_operand.vmem [shape: bf16[25,32,128], index: 3, kind: input, shape index: {}]
  %s4 = inlined_call_operand.vmem [shape: bf16[4,128,128], index: 4, kind: input, shape index: {}]
  %s5 = inlined_call_operand.vmem [shape: f32[8,128], index: 5, kind: input, shape index: {}]
  %s6 = inlined_call_operand.hbm [shape: f32[2,4], index: 6, kind: output, shape index: {}]
  %s7 = sld [smem:[#allocation0]]
  $region34: #{dqn_forward.3} parent=0
    _
  %s9 = ssub.s32 1, %s7
  %s10 = scalar_select 0, %s9, %s7
  $region1: #{dqn_forward.3} parent=0
    #allocation2 [shape = 'u8[1024]{0}', space=vmem, size = 0x400, scoped, tag = 'output window, operand 0, single buffered']
    #allocation3 [shape = 's32[1]{0}', space=sflag, size = 0x4, scoped, tag = 'scoped memory for dqn_forward.3']
    %11 = vsyncpa [#allocation3], 0
    // Predicated region
    $region2: #{dqn_forward.3} parent=1 // pred_check
      _
    $region3: #{dqn_forward.3} parent=1 // pred_check_branch
      %13 = sbr.rel (0) target = $region5
    $region4: #{dqn_forward.3} parent=1 // pred_region
      _
    $region5: #{dqn_forward.3} parent=1 // pred_fallthru
      _
    // Predicated region
    $region6: #{dqn_forward.3} parent=1 // pred_check
      _
    $region7: #{dqn_forward.3} parent=1 // pred_check_branch
      %15 = sbr.rel (0) target = $region9
    $region8: #{dqn_forward.3} parent=1 // pred_region
      _
    $region9: #{dqn_forward.3} parent=1 // pred_fallthru
      _
    // Predicated region
    $region10: #{dqn_forward.3} parent=1 // pred_check
      _
    $region11: #{dqn_forward.3} parent=1 // pred_check_branch
      %17 = sbr.rel (0) target = $region13
    $region12: #{dqn_forward.3} parent=1 // pred_region
      _
    $region13: #{dqn_forward.3} parent=1 // pred_fallthru
      _
    // Predicated region
    $region14: #{dqn_forward.3} parent=1 // pred_check
      _
    $region15: #{dqn_forward.3} parent=1 // pred_check_branch
      %19 = sbr.rel (0) target = $region17
    $region16: #{dqn_forward.3} parent=1 // pred_region
      _
    $region17: #{dqn_forward.3} parent=1 // pred_fallthru
      _
    // Predicated region
    $region18: #{dqn_forward.3} parent=1 // pred_check
      _
    $region19: #{dqn_forward.3} parent=1 // pred_check_branch
      %21 = sbr.rel (0) target = $region21
    $region20: #{dqn_forward.3} parent=1 // pred_region
      _
    $region21: #{dqn_forward.3} parent=1 // pred_fallthru
      _
    // Predicated region
    $region22: #{dqn_forward.3} parent=1 // pred_check
      _
    $region23: #{dqn_forward.3} parent=1 // pred_check_branch
      %23 = sbr.rel (0) target = $region25
    $region24: #{dqn_forward.3} parent=1 // pred_region
      _
    $region25: #{dqn_forward.3} parent=1 // pred_fallthru
      _
    %v25 = vld [vmem:[%s0] sm:$0xff]
    %v26 = vld [vmem:[%s0 + $0x8] sm:$0xff]
    %v27 = vld [vmem:[%s0 + $0x10] sm:$0xff]
    %v28 = vld [vmem:[%s0 + $0x18] sm:$0xff]
    %v29 = vld [vmem:[%s0 + $0x20] sm:$0xff]
    %v30 = vld [vmem:[%s0 + $0x28] sm:$0xff]
    %v31 = vld [vmem:[%s0 + $0x30] sm:$0xff]
    %v32 = vld [vmem:[%s0 + $0x38] sm:$0xff]
    %v33 = vld [vmem:[%s0 + $0x40] sm:$0xff]
    %v34 = vld [vmem:[%s0 + $0x48] sm:$0xff]
    %v35 = vld [vmem:[%s0 + $0x50] sm:$0xff]
    %v36 = vld [vmem:[%s0 + $0x58] sm:$0xff]
    %v37 = vld [vmem:[%s0 + $0x60] sm:$0xff]
    %v38 = vld [vmem:[%s0 + $0x68] sm:$0xff]
    %v39 = vld [vmem:[%s0 + $0x70] sm:$0xff]
    %v40 = vld [vmem:[%s0 + $0x78] sm:$0xff]
    %v41 = vld [vmem:[%s0 + $0x80] sm:$0xff]
    %v42 = vld [vmem:[%s0 + $0x88] sm:$0xff]
    %v43 = vld [vmem:[%s0 + $0x90] sm:$0xff]
    %v44 = vld [vmem:[%s0 + $0x98] sm:$0xff]
    %v45 = vld [vmem:[%s0 + $0xa0] sm:$0xff]
    %v46 = vld [vmem:[%s0 + $0xa8] sm:$0xff]
    %v47 = vld [vmem:[%s0 + $0xb0] sm:$0xff]
    %v48 = vld [vmem:[%s0 + $0xb8] sm:$0xff]
    %v49 = vld [vmem:[%s0 + $0xc0] sm:$0x11]
    %v50 = vld [vmem:[%s0 + $0xc8] sm:$0x11]
    %v51 = vld [vmem:[%s1] sm:$0xf]
    %v52 = vld [vmem:[%s1 + $0x4] sm:$0xf]
    %v53 = vld [vmem:[%s1 + $0x8] sm:$0xf]
    %v54 = vld [vmem:[%s1 + $0xc] sm:$0xf]
    %v55 = vld [vmem:[%s1 + $0x10] sm:$0xf]
    %v56 = vld [vmem:[%s1 + $0x14] sm:$0xf]
    %v57 = vld [vmem:[%s1 + $0x18] sm:$0xf]
    %v58 = vld [vmem:[%s1 + $0x1c] sm:$0xf]
    %v59 = vld [vmem:[%s1 + $0x20] sm:$0xf]
    %v60 = vld [vmem:[%s1 + $0x24] sm:$0xf]
    %v61 = vld [vmem:[%s1 + $0x28] sm:$0xf]
    %v62 = vld [vmem:[%s1 + $0x2c] sm:$0xf]
    %v63 = vld [vmem:[%s1 + $0x30] sm:$0xf]
    %v64 = vld [vmem:[%s1 + $0x34] sm:$0xf]
    %v65 = vld [vmem:[%s1 + $0x38] sm:$0xf]
    %v66 = vld [vmem:[%s1 + $0x3c] sm:$0xf]
    %v67 = vld [vmem:[%s1 + $0x40] sm:$0xf]
    %v68 = vld [vmem:[%s1 + $0x44] sm:$0xf]
    %v69 = vld [vmem:[%s1 + $0x48] sm:$0xf]
    %v70 = vld [vmem:[%s1 + $0x4c] sm:$0xf]
    %v71 = vld [vmem:[%s1 + $0x50] sm:$0xf]
    %v72 = vld [vmem:[%s1 + $0x54] sm:$0xf]
    %v73 = vld [vmem:[%s1 + $0x58] sm:$0xf]
    %v74 = vld [vmem:[%s1 + $0x5c] sm:$0xf]
    %v75 = vld [vmem:[%s1 + $0x60] sm:$0xf]
    %v76 = vld [vmem:[%s1 + $0x64] sm:$0xf]
    %v77 = vld [vmem:[%s1 + $0x68] sm:$0xf]
    %v78 = vld [vmem:[%s1 + $0x6c] sm:$0xf]
    %v79 = vld [vmem:[%s1 + $0x70] sm:$0xf]
    %v80 = vld [vmem:[%s1 + $0x74] sm:$0xf]
    %v81 = vld [vmem:[%s1 + $0x78] sm:$0xf]
    %v82 = vld [vmem:[%s1 + $0x7c] sm:$0xf]
    %v83 = vld [vmem:[%s1 + $0x80] sm:$0xf]
    %v84 = vld [vmem:[%s1 + $0x84] sm:$0xf]
    %v85 = vld [vmem:[%s1 + $0x88] sm:$0xf]
    %v86 = vld [vmem:[%s1 + $0x8c] sm:$0xf]
    %v87 = vld [vmem:[%s1 + $0x90] sm:$0xf]
    %v88 = vld [vmem:[%s1 + $0x94] sm:$0xf]
    %v89 = vld [vmem:[%s1 + $0x98] sm:$0xf]
    %v90 = vld [vmem:[%s1 + $0x9c] sm:$0xf]
    %v91 = vld [vmem:[%s1 + $0xa0] sm:$0xf]
    %v92 = vld [vmem:[%s1 + $0xa4] sm:$0xf]
    %v93 = vld [vmem:[%s1 + $0xa8] sm:$0xf]
    %v94 = vld [vmem:[%s1 + $0xac] sm:$0xf]
    %v95 = vld [vmem:[%s1 + $0xb0] sm:$0xf]
    %v96 = vld [vmem:[%s1 + $0xb4] sm:$0xf]
    %v97 = vld [vmem:[%s1 + $0xb8] sm:$0xf]
    %v98 = vld [vmem:[%s1 + $0xbc] sm:$0xf]
    %v99 = vld [vmem:[%s1 + $0xc0] sm:$0xf]
    %v100 = vld [vmem:[%s1 + $0xc4] sm:$0xf]
    %v101 = vld [vmem:[%s1 + $0xc8] sm:$0xf]
    %v102 = vld [vmem:[%s1 + $0xcc] sm:$0xf]
    %v103 = vld [vmem:[%s1 + $0xd0] sm:$0xf]
    %v104 = vld [vmem:[%s1 + $0xd4] sm:$0xf]
    %v105 = vld [vmem:[%s1 + $0xd8] sm:$0xf]
    %v106 = vld [vmem:[%s1 + $0xdc] sm:$0xf]
    %v107 = vld [vmem:[%s1 + $0xe0] sm:$0xf]
    %v108 = vld [vmem:[%s1 + $0xe4] sm:$0xf]
    %v109 = vld [vmem:[%s1 + $0xe8] sm:$0xf]
    %v110 = vld [vmem:[%s1 + $0xec] sm:$0xf]
    %v111 = vld [vmem:[%s1 + $0xf0] sm:$0xf]
    %v112 = vld [vmem:[%s1 + $0xf4] sm:$0xf]
    %v113 = vld [vmem:[%s1 + $0xf8] sm:$0xf]
    %v114 = vld [vmem:[%s1 + $0xfc] sm:$0xf]
    %v115 = vld [vmem:[%s5] sm:$0x1]
    %v116 = vlaneseq
    %v117 = vshrl.u32 %v116, 7
    %v118 = vsub.s32 0, %v117
    %v119 = vrot.slane %v115, %v118
    %v146 = vunpack.c.l.b16 %v25
    %v147 = vunpack.c.h.b16 %v25
    %v148 = vunpack.c.l.b16 %v26
    %v149 = vunpack.c.h.b16 %v26
    %v150 = vunpack.c.l.b16 %v27
    %v151 = vunpack.c.h.b16 %v27
    %v152 = vunpack.c.l.b16 %v28
    %v153 = vunpack.c.h.b16 %v28
    %v154 = vunpack.c.l.b16 %v29
    %v155 = vunpack.c.h.b16 %v29
    %v156 = vunpack.c.l.b16 %v30
    %v157 = vunpack.c.h.b16 %v30
    %v158 = vunpack.c.l.b16 %v31
    %v159 = vunpack.c.h.b16 %v31
    %v160 = vunpack.c.l.b16 %v32
    %v161 = vunpack.c.h.b16 %v32
    %v162 = vunpack.c.l.b16 %v33
    %v163 = vunpack.c.h.b16 %v33
    %v164 = vunpack.c.l.b16 %v34
    %v165 = vunpack.c.h.b16 %v34
    %v166 = vunpack.c.l.b16 %v35
    %v167 = vunpack.c.h.b16 %v35
    %v168 = vunpack.c.l.b16 %v36
    %v169 = vunpack.c.h.b16 %v36
    %v170 = vunpack.c.l.b16 %v37
    %v171 = vunpack.c.h.b16 %v37
    %v172 = vunpack.c.l.b16 %v38
    %v173 = vunpack.c.h.b16 %v38
    %v174 = vunpack.c.l.b16 %v39
    %v175 = vunpack.c.h.b16 %v39
    %v176 = vunpack.c.l.b16 %v40
    %v177 = vunpack.c.h.b16 %v40
    %v178 = vunpack.c.l.b16 %v41
    %v179 = vunpack.c.h.b16 %v41
    %v180 = vunpack.c.l.b16 %v42
    %v181 = vunpack.c.h.b16 %v42
    %v182 = vunpack.c.l.b16 %v43
    %v183 = vunpack.c.h.b16 %v43
    %v184 = vunpack.c.l.b16 %v44
    %v185 = vunpack.c.h.b16 %v44
    %v186 = vunpack.c.l.b16 %v45
    %v187 = vunpack.c.h.b16 %v45
    %v188 = vunpack.c.l.b16 %v46
    %v189 = vunpack.c.h.b16 %v46
    %v190 = vunpack.c.l.b16 %v47
    %v191 = vunpack.c.h.b16 %v47
    %v192 = vunpack.c.l.b16 %v48
    %v193 = vunpack.c.h.b16 %v48
    %v194 = vunpack.c.l.b16 %v49
    %v195 = vunpack.c.h.b16 %v49
    %v196 = vunpack.c.l.b16 %v50
    %v197 = vunpack.c.h.b16 %v50
    %v198 = vpack.c.b16 %v150, %v146
    %v199 = vpack.c.b16 %v151, %v147
    %v200 = vpack.c.b16 %v152, %v148
    %v201 = vpack.c.b16 %v153, %v149
    %v202 = vpack.c.b16 %v158, %v154
    %v203 = vpack.c.b16 %v159, %v155
    %v204 = vpack.c.b16 %v160, %v156
    %v205 = vpack.c.b16 %v161, %v157
    %v206 = vpack.c.b16 %v166, %v162
    %v207 = vpack.c.b16 %v167, %v163
    %v208 = vpack.c.b16 %v168, %v164
    %v209 = vpack.c.b16 %v169, %v165
    %v210 = vpack.c.b16 %v174, %v170
    %v211 = vpack.c.b16 %v175, %v171
    %v212 = vpack.c.b16 %v176, %v172
    %v213 = vpack.c.b16 %v177, %v173
    %v214 = vpack.c.b16 %v182, %v178
    %v215 = vpack.c.b16 %v183, %v179
    %v216 = vpack.c.b16 %v184, %v180
    %v217 = vpack.c.b16 %v185, %v181
    %v218 = vpack.c.b16 %v190, %v186
    %v219 = vpack.c.b16 %v191, %v187
    %v220 = vpack.c.b16 %v192, %v188
    %v221 = vpack.c.b16 %v193, %v189
    %v222 = vpack.c.b16 %v194, %v194
    %v223 = vpack.c.b16 %v195, %v195
    %v224 = vpack.c.b16 %v196, %v196
    %v225 = vpack.c.b16 %v197, %v197
    %v318 = vunpack.c.l.b16 %v51
    %v319 = vunpack.c.l.b16 %v52
    %v320 = vunpack.c.l.b16 %v53
    %v321 = vunpack.c.l.b16 %v54
    %v322 = vunpack.c.l.b16 %v55
    %v323 = vunpack.c.l.b16 %v56
    %v324 = vunpack.c.l.b16 %v57
    %v325 = vunpack.c.l.b16 %v58
    %v326 = vunpack.c.l.b16 %v59
    %v327 = vunpack.c.l.b16 %v60
    %v328 = vunpack.c.l.b16 %v61
    %v329 = vunpack.c.l.b16 %v62
    %v330 = vunpack.c.l.b16 %v63
    %v331 = vunpack.c.l.b16 %v64
    %v332 = vunpack.c.l.b16 %v65
    %v333 = vunpack.c.l.b16 %v66
    %v334 = vunpack.c.l.b16 %v67
    %v335 = vunpack.c.l.b16 %v68
    %v336 = vunpack.c.l.b16 %v69
    %v337 = vunpack.c.l.b16 %v70
    %v338 = vunpack.c.l.b16 %v71
    %v339 = vunpack.c.l.b16 %v72
    %v340 = vunpack.c.l.b16 %v73
    %v341 = vunpack.c.l.b16 %v74
    %v342 = vunpack.c.l.b16 %v75
    %v343 = vunpack.c.l.b16 %v76
    %v344 = vunpack.c.l.b16 %v77
    %v345 = vunpack.c.l.b16 %v78
    %v346 = vunpack.c.l.b16 %v79
    %v347 = vunpack.c.l.b16 %v80
    %v348 = vunpack.c.l.b16 %v81
    %v349 = vunpack.c.l.b16 %v82
    %v350 = vunpack.c.l.b16 %v83
    %v351 = vunpack.c.l.b16 %v84
    %v352 = vunpack.c.l.b16 %v85
    %v353 = vunpack.c.l.b16 %v86
    %v354 = vunpack.c.l.b16 %v87
    %v355 = vunpack.c.l.b16 %v88
    %v356 = vunpack.c.l.b16 %v89
    %v357 = vunpack.c.l.b16 %v90
    %v358 = vunpack.c.l.b16 %v91
    %v359 = vunpack.c.l.b16 %v92
    %v360 = vunpack.c.l.b16 %v93
    %v361 = vunpack.c.l.b16 %v94
    %v362 = vunpack.c.l.b16 %v95
    %v363 = vunpack.c.l.b16 %v96
    %v364 = vunpack.c.l.b16 %v97
    %v365 = vunpack.c.l.b16 %v98
    %v366 = vunpack.c.l.b16 %v99
    %v367 = vunpack.c.l.b16 %v100
    %v368 = vunpack.c.l.b16 %v101
    %v369 = vunpack.c.l.b16 %v102
    %v370 = vunpack.c.l.b16 %v103
    %v371 = vunpack.c.l.b16 %v104
    %v372 = vunpack.c.l.b16 %v105
    %v373 = vunpack.c.l.b16 %v106
    %v374 = vunpack.c.l.b16 %v107
    %v375 = vunpack.c.l.b16 %v108
    %v376 = vunpack.c.l.b16 %v109
    %v377 = vunpack.c.l.b16 %v110
    %v378 = vunpack.c.l.b16 %v111
    %v379 = vunpack.c.l.b16 %v112
    %v380 = vunpack.c.l.b16 %v113
    %v381 = vunpack.c.l.b16 %v114
    %v382 = vpack.c.b16 %v319, %v318
    %v383 = vpack.c.b16 %v321, %v320
    %v384 = vpack.c.b16 %v323, %v322
    %v385 = vpack.c.b16 %v325, %v324
    %v386 = vpack.c.b16 %v327, %v326
    %v387 = vpack.c.b16 %v329, %v328
    %v388 = vpack.c.b16 %v331, %v330
    %v389 = vpack.c.b16 %v333, %v332
    %v390 = vpack.c.b16 %v335, %v334
    %v391 = vpack.c.b16 %v337, %v336
    %v392 = vpack.c.b16 %v339, %v338
    %v393 = vpack.c.b16 %v341, %v340
    %v394 = vpack.c.b16 %v343, %v342
    %v395 = vpack.c.b16 %v345, %v344
    %v396 = vpack.c.b16 %v347, %v346
    %v397 = vpack.c.b16 %v349, %v348
    %v398 = vpack.c.b16 %v351, %v350
    %v399 = vpack.c.b16 %v353, %v352
    %v400 = vpack.c.b16 %v355, %v354
    %v401 = vpack.c.b16 %v357, %v356
    %v402 = vpack.c.b16 %v359, %v358
    %v403 = vpack.c.b16 %v361, %v360
    %v404 = vpack.c.b16 %v363, %v362
    %v405 = vpack.c.b16 %v365, %v364
    %v406 = vpack.c.b16 %v367, %v366
    %v407 = vpack.c.b16 %v369, %v368
    %v408 = vpack.c.b16 %v371, %v370
    %v409 = vpack.c.b16 %v373, %v372
    %v410 = vpack.c.b16 %v375, %v374
    %v411 = vpack.c.b16 %v377, %v376
    %v412 = vpack.c.b16 %v379, %v378
    %v413 = vpack.c.b16 %v381, %v380
    %446 = vmatprep.subr.bf16.mxu0 0
    %447 = vmatpush1.bf16.msra.mxu0 %v389
    %448 = vmatprep.subr.bf16.mxu0 0
    %449 = vmatpush1.bf16.msra.mxu0 %v388
    %450 = vmatprep.subr.bf16.mxu0 0
    %451 = vmatpush1.bf16.msra.mxu0 %v387
    %452 = vmatprep.subr.bf16.mxu0 0
    %453 = vmatpush1.bf16.msra.mxu0 %v386
    %454 = vmatprep.subr.bf16.mxu0 0
    %455 = vmatpush1.bf16.msra.mxu0 %v385
    %456 = vmatprep.subr.bf16.mxu0 0
    %457 = vmatpush1.bf16.msra.mxu0 %v384
    %458 = vmatprep.subr.bf16.mxu0 0
    %459 = vmatpush1.bf16.msra.mxu0 %v383
    %460 = vmatprep.subr.bf16.mxu0 0
    %461 = vmatpush1.bf16.msra.mxu0 %v382
    %462 = vmatprep.subr.bf16.mxu0 0
    %463 = vmatpush2.bf16.msra.mxu0 %v397
    %464 = vmatprep.subr.bf16.mxu0 0
    %465 = vmatpush2.bf16.msra.mxu0 %v396
    %466 = vmatprep.subr.bf16.mxu0 0
    %467 = vmatpush2.bf16.msra.mxu0 %v395
    %468 = vmatprep.subr.bf16.mxu0 0
    %469 = vmatpush2.bf16.msra.mxu0 %v394
    %470 = vmatprep.subr.bf16.mxu0 0
    %471 = vmatpush2.bf16.msra.mxu0 %v393
    %472 = vmatprep.subr.bf16.mxu0 0
    %473 = vmatpush2.bf16.msra.mxu0 %v392
    %474 = vmatprep.subr.bf16.mxu0 0
    %475 = vmatpush2.bf16.msra.mxu0 %v391
    %476 = vmatprep.subr.bf16.mxu0 0
    %477 = vmatpush2.bf16.msra.mxu0 %v390
    %478 = vmatprep.mubr.bf16.mxu0 %v199
    %479 = vmatmul.mubr.bf16.gmra.mxu0 %v198
    %v480 = vpop.f32.mrf.mxu0
    %v481 = vadd.f32 %v119, %v480
    %v482 = vpop.f32.mrf.mxu0
    %v483 = vpop.f32.mrf.mxu0
    %v484 = vadd.f32 %v119, %v483
    %v485 = vpop.f32.mrf.mxu0
    %486 = vmatprep.mubr.bf16.mxu0 %v203
    %487 = vmatmul.mubr.bf16.gmra.mxu0 %v202
    %v488 = vpop.f32.mrf.mxu0
    %v489 = vadd.f32 %v119, %v488
    %v490 = vpop.f32.mrf.mxu0
    %v491 = vpop.f32.mrf.mxu0
    %v492 = vadd.f32 %v119, %v491
    %v493 = vpop.f32.mrf.mxu0
    %494 = vmatprep.mubr.bf16.mxu0 %v207
    %495 = vmatmul.mubr.bf16.gmra.mxu0 %v206
    %v496 = vpop.f32.mrf.mxu0
    %v497 = vadd.f32 %v119, %v496
    %v498 = vpop.f32.mrf.mxu0
    %v499 = vpop.f32.mrf.mxu0
    %v500 = vadd.f32 %v119, %v499
    %v501 = vpop.f32.mrf.mxu0
    %502 = vmatprep.mubr.bf16.mxu0 %v211
    %503 = vmatmul.mubr.bf16.gmra.mxu0 %v210
    %v504 = vpop.f32.mrf.mxu0
    %v505 = vadd.f32 %v119, %v504
    %v506 = vpop.f32.mrf.mxu0
    %v507 = vpop.f32.mrf.mxu0
    %v508 = vadd.f32 %v119, %v507
    %v509 = vpop.f32.mrf.mxu0
    %510 = vmatprep.mubr.bf16.mxu0 %v215
    %511 = vmatmul.mubr.bf16.gmra.mxu0 %v214
    %v512 = vpop.f32.mrf.mxu0
    %v513 = vadd.f32 %v119, %v512
    %v514 = vpop.f32.mrf.mxu0
    %v515 = vpop.f32.mrf.mxu0
    %v516 = vadd.f32 %v119, %v515
    %v517 = vpop.f32.mrf.mxu0
    %518 = vmatprep.mubr.bf16.mxu0 %v219
    %519 = vmatmul.mubr.bf16.gmra.mxu0 %v218
    %v520 = vpop.f32.mrf.mxu0
    %v521 = vadd.f32 %v119, %v520
    %v522 = vpop.f32.mrf.mxu0
    %v523 = vpop.f32.mrf.mxu0
    %v524 = vadd.f32 %v119, %v523
    %v525 = vpop.f32.mrf.mxu0
    %526 = vmatprep.mubr.bf16.mxu0 %v223
    %527 = vmatmul.mubr.bf16.gmra.mxu0 %v222
    %v528 = vpop.f32.mrf.mxu0
    %v529 = vadd.f32 %v119, %v528
    %v530 = vpop.f32.mrf.mxu0
    %v531 = vpop.f32.mrf.mxu0
    %v532 = vpop.f32.mrf.mxu0
    %533 = vdwg.mxu0
    %534 = vmatprep.subr.bf16.mxu0 0
    %535 = vmatpush1.bf16.msra.mxu0 %v405
    %536 = vmatprep.subr.bf16.mxu0 0
    %537 = vmatpush1.bf16.msra.mxu0 %v404
    %538 = vmatprep.subr.bf16.mxu0 0
    %539 = vmatpush1.bf16.msra.mxu0 %v403
    %540 = vmatprep.subr.bf16.mxu0 0
    %541 = vmatpush1.bf16.msra.mxu0 %v402
    %542 = vmatprep.subr.bf16.mxu0 0
    %543 = vmatpush1.bf16.msra.mxu0 %v401
    %544 = vmatprep.subr.bf16.mxu0 0
    %545 = vmatpush1.bf16.msra.mxu0 %v400
    %546 = vmatprep.subr.bf16.mxu0 0
    %547 = vmatpush1.bf16.msra.mxu0 %v399
    %548 = vmatprep.subr.bf16.mxu0 0
    %549 = vmatpush1.bf16.msra.mxu0 %v398
    %550 = vmatprep.subr.bf16.mxu0 0
    %551 = vmatpush2.bf16.msra.mxu0 %v413
    %552 = vmatprep.subr.bf16.mxu0 0
    %553 = vmatpush2.bf16.msra.mxu0 %v412
    %554 = vmatprep.subr.bf16.mxu0 0
    %555 = vmatpush2.bf16.msra.mxu0 %v411
    %556 = vmatprep.subr.bf16.mxu0 0
    %557 = vmatpush2.bf16.msra.mxu0 %v410
    %558 = vmatprep.subr.bf16.mxu0 0
    %559 = vmatpush2.bf16.msra.mxu0 %v409
    %560 = vmatprep.subr.bf16.mxu0 0
    %561 = vmatpush2.bf16.msra.mxu0 %v408
    %562 = vmatprep.subr.bf16.mxu0 0
    %563 = vmatpush2.bf16.msra.mxu0 %v407
    %564 = vmatprep.subr.bf16.mxu0 0
    %565 = vmatpush2.bf16.msra.mxu0 %v406
    %566 = vmatprep.mubr.bf16.mxu0 %v201
    %567 = vmatmul.mubr.bf16.gmra.mxu0 %v200
    %v568 = vpop.f32.mrf.mxu0
    %v569 = vadd.f32 %v481, %v568
    %v570 = vpop.f32.mrf.mxu0
    %v571 = vpop.f32.mrf.mxu0
    %v572 = vadd.f32 %v484, %v571
    %v573 = vpop.f32.mrf.mxu0
    %574 = vmatprep.mubr.bf16.mxu0 %v205
    %575 = vmatmul.mubr.bf16.gmra.mxu0 %v204
    %v576 = vpop.f32.mrf.mxu0
    %v577 = vadd.f32 %v489, %v576
    %v578 = vpop.f32.mrf.mxu0
    %v579 = vpop.f32.mrf.mxu0
    %v580 = vadd.f32 %v492, %v579
    %v581 = vpop.f32.mrf.mxu0
    %582 = vmatprep.mubr.bf16.mxu0 %v209
    %583 = vmatmul.mubr.bf16.gmra.mxu0 %v208
    %v584 = vpop.f32.mrf.mxu0
    %v585 = vadd.f32 %v497, %v584
    %v586 = vpop.f32.mrf.mxu0
    %v587 = vpop.f32.mrf.mxu0
    %v588 = vadd.f32 %v500, %v587
    %v589 = vpop.f32.mrf.mxu0
    %590 = vmatprep.mubr.bf16.mxu0 %v213
    %591 = vmatmul.mubr.bf16.gmra.mxu0 %v212
    %v592 = vpop.f32.mrf.mxu0
    %v593 = vadd.f32 %v505, %v592
    %v594 = vpop.f32.mrf.mxu0
    %v595 = vpop.f32.mrf.mxu0
    %v596 = vadd.f32 %v508, %v595
    %v597 = vpop.f32.mrf.mxu0
    %598 = vmatprep.mubr.bf16.mxu0 %v217
    %599 = vmatmul.mubr.bf16.gmra.mxu0 %v216
    %v600 = vpop.f32.mrf.mxu0
    %v601 = vadd.f32 %v513, %v600
    %v602 = vpop.f32.mrf.mxu0
    %v603 = vpop.f32.mrf.mxu0
    %v604 = vadd.f32 %v516, %v603
    %v605 = vpop.f32.mrf.mxu0
    %606 = vmatprep.mubr.bf16.mxu0 %v221
    %607 = vmatmul.mubr.bf16.gmra.mxu0 %v220
    %v608 = vpop.f32.mrf.mxu0
    %v609 = vadd.f32 %v521, %v608
    %v610 = vpop.f32.mrf.mxu0
    %v611 = vpop.f32.mrf.mxu0
    %v612 = vadd.f32 %v524, %v611
    %v613 = vpop.f32.mrf.mxu0
    %614 = vmatprep.mubr.bf16.mxu0 %v225
    %615 = vmatmul.mubr.bf16.gmra.mxu0 %v224
    %v616 = vpop.f32.mrf.mxu0
    %v617 = vadd.f32 %v529, %v616
    %v618 = vpop.f32.mrf.mxu0
    %v619 = vpop.f32.mrf.mxu0
    %v620 = vpop.f32.mrf.mxu0
    %621 = vdwg.mxu0
    %v622 = vadd.f32 %v569, %v572
    %v623 = vadd.f32 %v622, %v577
    %v624 = vadd.f32 %v623, %v580
    %v625 = vadd.f32 %v624, %v585
    %v626 = vadd.f32 %v625, %v588
    %v627 = vadd.f32 %v626, %v593
    %v628 = vadd.f32 %v627, %v596
    %v629 = vadd.f32 %v628, %v601
    %v630 = vadd.f32 %v629, %v604
    %v631 = vadd.f32 %v630, %v609
    %v632 = vadd.f32 %v631, %v612
    %vm633 = vcmask 1041408
    %v634 = vsel %vm633, %v617, 0.0
    %v635 = vadd.f32 %v632, %v634
    %v636 = vrot.slane %v635, 4
    %v637 = vadd.f32 %v635, %v636
    %v638 = vrot.slane %v637, 2
    %v639 = vadd.f32 %v637, %v638
    %v640 = vrot.slane %v639, 1
    %v641 = vadd.f32 %v639, %v640
    %v642 = vmul.f32 %v569, %v569
    %v643 = vmul.f32 %v572, %v572
    %v644 = vmul.f32 %v577, %v577
    %v645 = vmul.f32 %v580, %v580
    %v646 = vmul.f32 %v585, %v585
    %v647 = vmul.f32 %v588, %v588
    %v648 = vmul.f32 %v593, %v593
    %v649 = vmul.f32 %v596, %v596
    %v650 = vmul.f32 %v601, %v601
    %v651 = vmul.f32 %v604, %v604
    %v652 = vmul.f32 %v609, %v609
    %v653 = vmul.f32 %v612, %v612
    %v654 = vmul.f32 %v617, %v617
    %v655 = vadd.f32 %v642, %v643
    %v656 = vadd.f32 %v655, %v644
    %v657 = vadd.f32 %v656, %v645
    %v658 = vadd.f32 %v657, %v646
    %v659 = vadd.f32 %v658, %v647
    %v660 = vadd.f32 %v659, %v648
    %v661 = vadd.f32 %v660, %v649
    %v662 = vadd.f32 %v661, %v650
    %v663 = vadd.f32 %v662, %v651
    %v664 = vadd.f32 %v663, %v652
    %v665 = vadd.f32 %v664, %v653
    %v666 = vsel %vm633, %v654, 0.0
    %v667 = vadd.f32 %v665, %v666
    %v668 = vrot.slane %v667, 4
    %v669 = vadd.f32 %v667, %v668
    %v670 = vrot.slane %v669, 2
    %v671 = vadd.f32 %v669, %v670
    %v672 = vrot.slane %v671, 1
    %v673 = vadd.f32 %v671, %v672
    %v674 = vld [vmem:[%s5 + $0x1] sm:$0x1]
    %v675 = vld [vmem:[%s5 + $0x2] sm:$0x1]
    %v676 = vmul.f32 %v641, 0.010204081
    %v677 = vmul.f32 %v673, 0.010204081
    %v678 = vmul.f32 %v676, %v676
    %v679 = vsub.f32 %v677, %v678
    %v680 = vmax.f32 %v679, 0.0
    %v681 = vadd.f32 %v680, 1e-05
    %v682 = vrsqrt.pop %v681
    %v683 = vmul.f32 %v682, %v674
    %v684 = vmul.f32 %v676, %v683
    %v685 = vsub.f32 %v675, %v684
    %v686 = vlaneseq
    %v687 = vshrl.u32 %v686, 7
    %v688 = vsub.s32 0, %v687
    %v689 = vrot.slane %v683, %v688
    %v690 = vmul.f32 %v569, %v689
    %v691 = vmul.f32 %v572, %v689
    %v692 = vmul.f32 %v577, %v689
    %v693 = vmul.f32 %v580, %v689
    %v694 = vmul.f32 %v585, %v689
    %v695 = vmul.f32 %v588, %v689
    %v696 = vmul.f32 %v593, %v689
    %v697 = vmul.f32 %v596, %v689
    %v698 = vmul.f32 %v601, %v689
    %v699 = vmul.f32 %v604, %v689
    %v700 = vmul.f32 %v609, %v689
    %v701 = vmul.f32 %v612, %v689
    %v702 = vmul.f32 %v617, %v689
    %v703 = vlaneseq
    %v704 = vshrl.u32 %v703, 7
    %v705 = vsub.s32 0, %v704
    %v706 = vrot.slane %v685, %v705
    %v707 = vadd.f32 %v690, %v706
    %v708 = vadd.f32 %v691, %v706
    %v709 = vadd.f32 %v692, %v706
    %v710 = vadd.f32 %v693, %v706
    %v711 = vadd.f32 %v694, %v706
    %v712 = vadd.f32 %v695, %v706
    %v713 = vadd.f32 %v696, %v706
    %v714 = vadd.f32 %v697, %v706
    %v715 = vadd.f32 %v698, %v706
    %v716 = vadd.f32 %v699, %v706
    %v717 = vadd.f32 %v700, %v706
    %v718 = vadd.f32 %v701, %v706
    %v719 = vadd.f32 %v702, %v706
    %v720 = vmax.f32 %v707, 0.0
    %v721 = vmax.f32 %v708, 0.0
    %v722 = vmax.f32 %v709, 0.0
    %v723 = vmax.f32 %v710, 0.0
    %v724 = vmax.f32 %v711, 0.0
    %v725 = vmax.f32 %v712, 0.0
    %v726 = vmax.f32 %v713, 0.0
    %v727 = vmax.f32 %v714, 0.0
    %v728 = vmax.f32 %v715, 0.0
    %v729 = vmax.f32 %v716, 0.0
    %v730 = vmax.f32 %v717, 0.0
    %v731 = vmax.f32 %v718, 0.0
    %v732 = vmax.f32 %v719, 0.0
    %v733 = vpack.c.bf16 %v721, %v720
    %v734 = vpack.c.bf16 %v723, %v722
    %v735 = vpack.c.bf16 %v725, %v724
    %v736 = vpack.c.bf16 %v727, %v726
    %v737 = vpack.c.bf16 %v729, %v728
    %v738 = vpack.c.bf16 %v731, %v730
    %v739 = vpack.c.bf16 %v732, %v732
    %v740 = vld [vmem:[%s2] sm:$0xf]
    %v741 = vld [vmem:[%s2 + $0x4] sm:$0xf]
    %v742 = vld [vmem:[%s2 + $0x8] sm:$0xf]
    %v743 = vld [vmem:[%s2 + $0xc] sm:$0xf]
    %v744 = vld [vmem:[%s2 + $0x10] sm:$0xf]
    %v745 = vld [vmem:[%s2 + $0x14] sm:$0xf]
    %v746 = vld [vmem:[%s2 + $0x18] sm:$0xf]
    %v747 = vld [vmem:[%s2 + $0x1c] sm:$0xf]
    %v748 = vld [vmem:[%s2 + $0x20] sm:$0xf]
    %v749 = vld [vmem:[%s2 + $0x24] sm:$0xf]
    %v750 = vld [vmem:[%s2 + $0x28] sm:$0xf]
    %v751 = vld [vmem:[%s2 + $0x2c] sm:$0xf]
    %v752 = vld [vmem:[%s2 + $0x30] sm:$0xf]
    %v753 = vld [vmem:[%s2 + $0x34] sm:$0xf]
    %v754 = vld [vmem:[%s2 + $0x38] sm:$0xf]
    %v755 = vld [vmem:[%s2 + $0x3c] sm:$0xf]
    %v756 = vld [vmem:[%s2 + $0x40] sm:$0xf]
    %v757 = vld [vmem:[%s2 + $0x44] sm:$0xf]
    %v758 = vld [vmem:[%s2 + $0x48] sm:$0xf]
    %v759 = vld [vmem:[%s2 + $0x4c] sm:$0xf]
    %v760 = vld [vmem:[%s2 + $0x50] sm:$0xf]
    %v761 = vld [vmem:[%s2 + $0x54] sm:$0xf]
    %v762 = vld [vmem:[%s2 + $0x58] sm:$0xf]
    %v763 = vld [vmem:[%s2 + $0x5c] sm:$0xf]
    %v764 = vld [vmem:[%s2 + $0x60] sm:$0xf]
    %v790 = vunpack.c.l.b16 %v740
    %v791 = vunpack.c.l.b16 %v741
    %v792 = vunpack.c.l.b16 %v742
    %v793 = vunpack.c.l.b16 %v743
    %v794 = vunpack.c.l.b16 %v744
    %v795 = vunpack.c.l.b16 %v745
    %v796 = vunpack.c.l.b16 %v746
    %v797 = vunpack.c.l.b16 %v747
    %v798 = vunpack.c.l.b16 %v748
    %v799 = vunpack.c.l.b16 %v749
    %v800 = vunpack.c.l.b16 %v750
    %v801 = vunpack.c.l.b16 %v751
    %v802 = vunpack.c.l.b16 %v752
    %v803 = vunpack.c.l.b16 %v753
    %v804 = vunpack.c.l.b16 %v754
    %v805 = vunpack.c.l.b16 %v755
    %v806 = vunpack.c.l.b16 %v756
    %v807 = vunpack.c.l.b16 %v757
    %v808 = vunpack.c.l.b16 %v758
    %v809 = vunpack.c.l.b16 %v759
    %v810 = vunpack.c.l.b16 %v760
    %v811 = vunpack.c.l.b16 %v761
    %v812 = vunpack.c.l.b16 %v762
    %v813 = vunpack.c.l.b16 %v763
    %v814 = vunpack.c.l.b16 %v764
    %v815 = vpack.c.b16 %v791, %v790
    %v816 = vpack.c.b16 %v793, %v792
    %v817 = vpack.c.b16 %v795, %v794
    %v818 = vpack.c.b16 %v797, %v796
    %v819 = vpack.c.b16 %v799, %v798
    %v820 = vpack.c.b16 %v801, %v800
    %v821 = vpack.c.b16 %v803, %v802
    %v822 = vpack.c.b16 %v805, %v804
    %v823 = vpack.c.b16 %v807, %v806
    %v824 = vpack.c.b16 %v809, %v808
    %v825 = vpack.c.b16 %v811, %v810
    %v826 = vpack.c.b16 %v813, %v812
    %v827 = vpack.c.b16 %v814, %v814
    %vm828 = vcmask 801792
    %v830 = vsel %vm828, %v815, 0
    %v833 = vsel %vm828, %v816, 0
    %v836 = vsel %vm828, %v817, 0
    %v839 = vsel %vm828, %v818, 0
    %v842 = vsel %vm828, %v819, 0
    %v845 = vsel %vm828, %v820, 0
    %v848 = vsel %vm828, %v821, 0
    %v851 = vsel %vm828, %v822, 0
    %v854 = vsel %vm828, %v823, 0
    %v857 = vsel %vm828, %v824, 0
    %v860 = vsel %vm828, %v825, 0
    %v863 = vsel %vm828, %v826, 0
    %v866 = vsel %vm828, %v827, 0
    %vm868 = vcmask 1040384
    %v870 = vsel %vm868, %v739, 0
    %872 = vmatprep.subr.bf16.mxu0 0
    %873 = vmatpush1.bf16.msra.mxu0 0
    %874 = vmatprep.subr.bf16.mxu0 0
    %875 = vmatpush1.bf16.msra.mxu0 %v870
    %876 = vmatprep.subr.bf16.mxu0 0
    %877 = vmatpush1.bf16.msra.mxu0 %v738
    %878 = vmatprep.subr.bf16.mxu0 0
    %879 = vmatpush1.bf16.msra.mxu0 %v737
    %880 = vmatprep.subr.bf16.mxu0 0
    %881 = vmatpush1.bf16.msra.mxu0 %v736
    %882 = vmatprep.subr.bf16.mxu0 0
    %883 = vmatpush1.bf16.msra.mxu0 %v735
    %884 = vmatprep.subr.bf16.mxu0 0
    %885 = vmatpush1.bf16.msra.mxu0 %v734
    %886 = vmatprep.subr.bf16.mxu0 0
    %887 = vmatpush1.bf16.msra.mxu0 %v733
    %888 = vmatprep.subr.bf16.mxu0 0
    %889 = vmatpush2.bf16.msra.mxu0 0
    %890 = vmatprep.subr.bf16.mxu0 0
    %891 = vmatpush2.bf16.msra.mxu0 0
    %892 = vmatprep.subr.bf16.mxu0 0
    %893 = vmatpush2.bf16.msra.mxu0 0
    %894 = vmatprep.subr.bf16.mxu0 0
    %895 = vmatpush2.bf16.msra.mxu0 0
    %896 = vmatprep.subr.bf16.mxu0 0
    %897 = vmatpush2.bf16.msra.mxu0 0
    %898 = vmatprep.subr.bf16.mxu0 0
    %899 = vmatpush2.bf16.msra.mxu0 0
    %900 = vmatprep.subr.bf16.mxu0 0
    %901 = vmatpush2.bf16.msra.mxu0 0
    %902 = vmatprep.subr.bf16.mxu0 0
    %903 = vmatpush2.bf16.msra.mxu0 0
    %904 = vmatprep.mubr.bf16.mxu0 0
    %905 = vmatmul.mubr.bf16.gmra.mxu0 %v830
    %v906 = vpop.f32.mrf.mxu0
    %v907 = vadd.f32 0.0, %v906
    %v908 = vpop.f32.mrf.mxu0
    %v909 = vpop.f32.mrf.mxu0
    %v910 = vadd.f32 0.0, %v909
    %v911 = vpop.f32.mrf.mxu0
    %912 = vmatprep.mubr.bf16.mxu0 0
    %913 = vmatmul.mubr.bf16.gmra.mxu0 %v833
    %v914 = vpop.f32.mrf.mxu0
    %v915 = vadd.f32 0.0, %v914
    %v916 = vpop.f32.mrf.mxu0
    %v917 = vpop.f32.mrf.mxu0
    %v918 = vadd.f32 0.0, %v917
    %v919 = vpop.f32.mrf.mxu0
    %920 = vmatprep.mubr.bf16.mxu0 0
    %921 = vmatmul.mubr.bf16.gmra.mxu0 %v836
    %v922 = vpop.f32.mrf.mxu0
    %v923 = vadd.f32 0.0, %v922
    %v924 = vpop.f32.mrf.mxu0
    %v925 = vpop.f32.mrf.mxu0
    %v926 = vadd.f32 0.0, %v925
    %v927 = vpop.f32.mrf.mxu0
    %928 = vmatprep.mubr.bf16.mxu0 0
    %929 = vmatmul.mubr.bf16.gmra.mxu0 %v839
    %v930 = vpop.f32.mrf.mxu0
    %v931 = vadd.f32 0.0, %v930
    %v932 = vpop.f32.mrf.mxu0
    %v933 = vpop.f32.mrf.mxu0
    %v934 = vadd.f32 0.0, %v933
    %v935 = vpop.f32.mrf.mxu0
    %936 = vmatprep.mubr.bf16.mxu0 0
    %937 = vmatmul.mubr.bf16.gmra.mxu0 %v842
    %v938 = vpop.f32.mrf.mxu0
    %v939 = vadd.f32 0.0, %v938
    %v940 = vpop.f32.mrf.mxu0
    %v941 = vpop.f32.mrf.mxu0
    %v942 = vadd.f32 0.0, %v941
    %v943 = vpop.f32.mrf.mxu0
    %944 = vmatprep.mubr.bf16.mxu0 0
    %945 = vmatmul.mubr.bf16.gmra.mxu0 %v845
    %v946 = vpop.f32.mrf.mxu0
    %v947 = vadd.f32 0.0, %v946
    %v948 = vpop.f32.mrf.mxu0
    %v949 = vpop.f32.mrf.mxu0
    %v950 = vadd.f32 0.0, %v949
    %v951 = vpop.f32.mrf.mxu0
    %952 = vmatprep.mubr.bf16.mxu0 0
    %953 = vmatmul.mubr.bf16.gmra.mxu0 %v848
    %v954 = vpop.f32.mrf.mxu0
    %v955 = vadd.f32 0.0, %v954
    %v956 = vpop.f32.mrf.mxu0
    %v957 = vpop.f32.mrf.mxu0
    %v958 = vadd.f32 0.0, %v957
    %v959 = vpop.f32.mrf.mxu0
    %960 = vmatprep.mubr.bf16.mxu0 0
    %961 = vmatmul.mubr.bf16.gmra.mxu0 %v851
    %v962 = vpop.f32.mrf.mxu0
    %v963 = vadd.f32 0.0, %v962
    %v964 = vpop.f32.mrf.mxu0
    %v965 = vpop.f32.mrf.mxu0
    %v966 = vadd.f32 0.0, %v965
    %v967 = vpop.f32.mrf.mxu0
    %968 = vmatprep.mubr.bf16.mxu0 0
    %969 = vmatmul.mubr.bf16.gmra.mxu0 %v854
    %v970 = vpop.f32.mrf.mxu0
    %v971 = vadd.f32 0.0, %v970
    %v972 = vpop.f32.mrf.mxu0
    %v973 = vpop.f32.mrf.mxu0
    %v974 = vadd.f32 0.0, %v973
    %v975 = vpop.f32.mrf.mxu0
    %976 = vmatprep.mubr.bf16.mxu0 0
    %977 = vmatmul.mubr.bf16.gmra.mxu0 %v857
    %v978 = vpop.f32.mrf.mxu0
    %v979 = vadd.f32 0.0, %v978
    %v980 = vpop.f32.mrf.mxu0
    %v981 = vpop.f32.mrf.mxu0
    %v982 = vadd.f32 0.0, %v981
    %v983 = vpop.f32.mrf.mxu0
    %984 = vmatprep.mubr.bf16.mxu0 0
    %985 = vmatmul.mubr.bf16.gmra.mxu0 %v860
    %v986 = vpop.f32.mrf.mxu0
    %v987 = vadd.f32 0.0, %v986
    %v988 = vpop.f32.mrf.mxu0
    %v989 = vpop.f32.mrf.mxu0
    %v990 = vadd.f32 0.0, %v989
    %v991 = vpop.f32.mrf.mxu0
    %992 = vmatprep.mubr.bf16.mxu0 0
    %993 = vmatmul.mubr.bf16.gmra.mxu0 %v863
    %v994 = vpop.f32.mrf.mxu0
    %v995 = vadd.f32 0.0, %v994
    %v996 = vpop.f32.mrf.mxu0
    %v997 = vpop.f32.mrf.mxu0
    %v998 = vadd.f32 0.0, %v997
    %v999 = vpop.f32.mrf.mxu0
    %1000 = vmatprep.mubr.bf16.mxu0 0
    %1001 = vmatmul.mubr.bf16.gmra.mxu0 %v866
    %v1002 = vpop.f32.mrf.mxu0
    %v1003 = vadd.f32 0.0, %v1002
    %v1004 = vpop.f32.mrf.mxu0
    %v1005 = vpop.f32.mrf.mxu0
    %v1006 = vpop.f32.mrf.mxu0
    %1007 = vdwg.mxu0
    %v1008 = vpack.c.bf16 %v907, %v907
    %v1009 = vld [vmem:[%s3] sm:$0xf]
    %v1010 = vld [vmem:[%s3 + $0x4] sm:$0xf]
    %v1011 = vld [vmem:[%s3 + $0x8] sm:$0xf]
    %v1012 = vld [vmem:[%s3 + $0xc] sm:$0xf]
    %v1013 = vpack.c.bf16 %v910, %v910
    %s1014 = scalar_lea.vmem %s3, 16
    %v1015 = vld [vmem:[%s1014] sm:$0xf]
    %v1016 = vld [vmem:[%s1014 + $0x4] sm:$0xf]
    %v1017 = vld [vmem:[%s1014 + $0x8] sm:$0xf]
    %v1018 = vld [vmem:[%s1014 + $0xc] sm:$0xf]
    %v1023 = vunpack.c.l.b16 %v1015
    %v1024 = vunpack.c.l.b16 %v1016
    %v1025 = vunpack.c.l.b16 %v1017
    %v1026 = vunpack.c.l.b16 %v1018
    %v1027 = vpack.c.b16 %v1024, %v1023
    %v1028 = vpack.c.b16 %v1026, %v1025
    %vm1031 = vcmask 261120
    %v1033 = vsel %vm1031, %v1013, 0
    %1035 = vmatprep.subr.bf16.mxu0 0
    %1036 = vmatpush1.bf16.msra.mxu0 0
    %1037 = vmatprep.subr.bf16.mxu0 0
    %1038 = vmatpush1.bf16.msra.mxu0 0
    %1039 = vmatprep.subr.bf16.mxu0 0
    %1040 = vmatpush1.bf16.msra.mxu0 0
    %1041 = vmatprep.subr.bf16.mxu0 0
    %1042 = vmatpush1.bf16.msra.mxu0 0
    %1043 = vmatprep.subr.bf16.mxu0 0
    %1044 = vmatpush1.bf16.msra.mxu0 0
    %1045 = vmatprep.subr.bf16.mxu0 0
    %1046 = vmatpush1.bf16.msra.mxu0 0
    %1047 = vmatprep.subr.bf16.mxu0 0
    %1048 = vmatpush1.bf16.msra.mxu0 %v1028
    %1049 = vmatprep.subr.bf16.mxu0 0
    %1050 = vmatpush1.bf16.msra.mxu0 %v1027
    %1051 = vmatprep.subr.bf16.mxu0 0
    %1052 = vmatpush2.bf16.msra.mxu0 0
    %1053 = vmatprep.subr.bf16.mxu0 0
    %1054 = vmatpush2.bf16.msra.mxu0 0
    %1055 = vmatprep.subr.bf16.mxu0 0
    %1056 = vmatpush2.bf16.msra.mxu0 0
    %1057 = vmatprep.subr.bf16.mxu0 0
    %1058 = vmatpush2.bf16.msra.mxu0 0
    %1059 = vmatprep.subr.bf16.mxu0 0
    %1060 = vmatpush2.bf16.msra.mxu0 0
    %1061 = vmatprep.subr.bf16.mxu0 0
    %1062 = vmatpush2.bf16.msra.mxu0 0
    %1063 = vmatprep.subr.bf16.mxu0 0
    %1064 = vmatpush2.bf16.msra.mxu0 0
    %1065 = vmatprep.subr.bf16.mxu0 0
    %1066 = vmatpush2.bf16.msra.mxu0 0
    %1067 = vmatprep.mubr.bf16.mxu0 0
    %1068 = vmatmul.mubr.bf16.gmra.mxu0 %v1033
    %v1069 = vpop.f32.mrf.mxu0
    %v1070 = vadd.f32 0.0, %v1069
    %v1071 = vpop.f32.mrf.mxu0
    %v1072 = vpop.f32.mrf.mxu0
    %v1073 = vpop.f32.mrf.mxu0
    %1074 = vdwg.mxu0
    %v1079 = vunpack.c.l.b16 %v1009
    %v1080 = vunpack.c.l.b16 %v1010
    %v1081 = vunpack.c.l.b16 %v1011
    %v1082 = vunpack.c.l.b16 %v1012
    %v1083 = vpack.c.b16 %v1080, %v1079
    %v1084 = vpack.c.b16 %v1082, %v1081
    %v1088 = vsel %vm1031, %v1008, 0
    %1090 = vmatprep.subr.bf16.mxu0 0
    %1091 = vmatpush1.bf16.msra.mxu0 0
    %1092 = vmatprep.subr.bf16.mxu0 0
    %1093 = vmatpush1.bf16.msra.mxu0 0
    %1094 = vmatprep.subr.bf16.mxu0 0
    %1095 = vmatpush1.bf16.msra.mxu0 0
    %1096 = vmatprep.subr.bf16.mxu0 0
    %1097 = vmatpush1.bf16.msra.mxu0 0
    %1098 = vmatprep.subr.bf16.mxu0 0
    %1099 = vmatpush1.bf16.msra.mxu0 0
    %1100 = vmatprep.subr.bf16.mxu0 0
    %1101 = vmatpush1.bf16.msra.mxu0 0
    %1102 = vmatprep.subr.bf16.mxu0 0
    %1103 = vmatpush1.bf16.msra.mxu0 %v1084
    %1104 = vmatprep.subr.bf16.mxu0 0
    %1105 = vmatpush1.bf16.msra.mxu0 %v1083
    %1106 = vmatprep.subr.bf16.mxu0 0
    %1107 = vmatpush2.bf16.msra.mxu0 0
    %1108 = vmatprep.subr.bf16.mxu0 0
    %1109 = vmatpush2.bf16.msra.mxu0 0
    %1110 = vmatprep.subr.bf16.mxu0 0
    %1111 = vmatpush2.bf16.msra.mxu0 0
    %1112 = vmatprep.subr.bf16.mxu0 0
    %1113 = vmatpush2.bf16.msra.mxu0 0
    %1114 = vmatprep.subr.bf16.mxu0 0
    %1115 = vmatpush2.bf16.msra.mxu0 0
    %1116 = vmatprep.subr.bf16.mxu0 0
    %1117 = vmatpush2.bf16.msra.mxu0 0
    %1118 = vmatprep.subr.bf16.mxu0 0
    %1119 = vmatpush2.bf16.msra.mxu0 0
    %1120 = vmatprep.subr.bf16.mxu0 0
    %1121 = vmatpush2.bf16.msra.mxu0 0
    %1122 = vmatprep.mubr.bf16.mxu0 0
    %1123 = vmatmul.mubr.bf16.gmra.mxu0 %v1088
    %v1124 = vpop.f32.mrf.mxu0
    %v1125 = vadd.f32 %v1070, %v1124
    %v1126 = vpop.f32.mrf.mxu0
    %v1127 = vpop.f32.mrf.mxu0
    %v1128 = vpop.f32.mrf.mxu0
    %1129 = vdwg.mxu0
    %v1130 = vpack.c.bf16 %v915, %v915
    %s1131 = scalar_lea.vmem %s3, 32
    %v1132 = vld [vmem:[%s1131] sm:$0xf]
    %v1133 = vld [vmem:[%s1131 + $0x4] sm:$0xf]
    %v1134 = vld [vmem:[%s1131 + $0x8] sm:$0xf]
    %v1135 = vld [vmem:[%s1131 + $0xc] sm:$0xf]
    %v1140 = vunpack.c.l.b16 %v1132
    %v1141 = vunpack.c.l.b16 %v1133
    %v1142 = vunpack.c.l.b16 %v1134
    %v1143 = vunpack.c.l.b16 %v1135
    %v1144 = vpack.c.b16 %v1141, %v1140
    %v1145 = vpack.c.b16 %v1143, %v1142
    %v1149 = vsel %vm1031, %v1130, 0
    %1151 = vmatprep.subr.bf16.mxu0 0
    %1152 = vmatpush1.bf16.msra.mxu0 0
    %1153 = vmatprep.subr.bf16.mxu0 0
    %1154 = vmatpush1.bf16.msra.mxu0 0
    %1155 = vmatprep.subr.bf16.mxu0 0
    %1156 = vmatpush1.bf16.msra.mxu0 0
    %1157 = vmatprep.subr.bf16.mxu0 0
    %1158 = vmatpush1.bf16.msra.mxu0 0
    %1159 = vmatprep.subr.bf16.mxu0 0
    %1160 = vmatpush1.bf16.msra.mxu0 0
    %1161 = vmatprep.subr.bf16.mxu0 0
    %1162 = vmatpush1.bf16.msra.mxu0 0
    %1163 = vmatprep.subr.bf16.mxu0 0
    %1164 = vmatpush1.bf16.msra.mxu0 %v1145
    %1165 = vmatprep.subr.bf16.mxu0 0
    %1166 = vmatpush1.bf16.msra.mxu0 %v1144
    %1167 = vmatprep.subr.bf16.mxu0 0
    %1168 = vmatpush2.bf16.msra.mxu0 0
    %1169 = vmatprep.subr.bf16.mxu0 0
    %1170 = vmatpush2.bf16.msra.mxu0 0
    %1171 = vmatprep.subr.bf16.mxu0 0
    %1172 = vmatpush2.bf16.msra.mxu0 0
    %1173 = vmatprep.subr.bf16.mxu0 0
    %1174 = vmatpush2.bf16.msra.mxu0 0
    %1175 = vmatprep.subr.bf16.mxu0 0
    %1176 = vmatpush2.bf16.msra.mxu0 0
    %1177 = vmatprep.subr.bf16.mxu0 0
    %1178 = vmatpush2.bf16.msra.mxu0 0
    %1179 = vmatprep.subr.bf16.mxu0 0
    %1180 = vmatpush2.bf16.msra.mxu0 0
    %1181 = vmatprep.subr.bf16.mxu0 0
    %1182 = vmatpush2.bf16.msra.mxu0 0
    %1183 = vmatprep.mubr.bf16.mxu0 0
    %1184 = vmatmul.mubr.bf16.gmra.mxu0 %v1149
    %v1185 = vpop.f32.mrf.mxu0
    %v1186 = vadd.f32 0.0, %v1185
    %v1187 = vpop.f32.mrf.mxu0
    %v1188 = vpop.f32.mrf.mxu0
    %v1189 = vpop.f32.mrf.mxu0
    %1190 = vdwg.mxu0
    %v1191 = vadd.f32 %v1125, %v1186
    %v1192 = vpack.c.bf16 %v918, %v918
    %s1193 = scalar_lea.vmem %s3, 48
    %v1194 = vld [vmem:[%s1193] sm:$0xf]
    %v1195 = vld [vmem:[%s1193 + $0x4] sm:$0xf]
    %v1196 = vld [vmem:[%s1193 + $0x8] sm:$0xf]
    %v1197 = vld [vmem:[%s1193 + $0xc] sm:$0xf]
    %v1202 = vunpack.c.l.b16 %v1194
    %v1203 = vunpack.c.l.b16 %v1195
    %v1204 = vunpack.c.l.b16 %v1196
    %v1205 = vunpack.c.l.b16 %v1197
    %v1206 = vpack.c.b16 %v1203, %v1202
    %v1207 = vpack.c.b16 %v1205, %v1204
    %v1211 = vsel %vm1031, %v1192, 0
    %1213 = vmatprep.subr.bf16.mxu0 0
    %1214 = vmatpush1.bf16.msra.mxu0 0
    %1215 = vmatprep.subr.bf16.mxu0 0
    %1216 = vmatpush1.bf16.msra.mxu0 0
    %1217 = vmatprep.subr.bf16.mxu0 0
    %1218 = vmatpush1.bf16.msra.mxu0 0
    %1219 = vmatprep.subr.bf16.mxu0 0
    %1220 = vmatpush1.bf16.msra.mxu0 0
    %1221 = vmatprep.subr.bf16.mxu0 0
    %1222 = vmatpush1.bf16.msra.mxu0 0
    %1223 = vmatprep.subr.bf16.mxu0 0
    %1224 = vmatpush1.bf16.msra.mxu0 0
    %1225 = vmatprep.subr.bf16.mxu0 0
    %1226 = vmatpush1.bf16.msra.mxu0 %v1207
    %1227 = vmatprep.subr.bf16.mxu0 0
    %1228 = vmatpush1.bf16.msra.mxu0 %v1206
    %1229 = vmatprep.subr.bf16.mxu0 0
    %1230 = vmatpush2.bf16.msra.mxu0 0
    %1231 = vmatprep.subr.bf16.mxu0 0
    %1232 = vmatpush2.bf16.msra.mxu0 0
    %1233 = vmatprep.subr.bf16.mxu0 0
    %1234 = vmatpush2.bf16.msra.mxu0 0
    %1235 = vmatprep.subr.bf16.mxu0 0
    %1236 = vmatpush2.bf16.msra.mxu0 0
    %1237 = vmatprep.subr.bf16.mxu0 0
    %1238 = vmatpush2.bf16.msra.mxu0 0
    %1239 = vmatprep.subr.bf16.mxu0 0
    %1240 = vmatpush2.bf16.msra.mxu0 0
    %1241 = vmatprep.subr.bf16.mxu0 0
    %1242 = vmatpush2.bf16.msra.mxu0 0
    %1243 = vmatprep.subr.bf16.mxu0 0
    %1244 = vmatpush2.bf16.msra.mxu0 0
    %1245 = vmatprep.mubr.bf16.mxu0 0
    %1246 = vmatmul.mubr.bf16.gmra.mxu0 %v1211
    %v1247 = vpop.f32.mrf.mxu0
    %v1248 = vadd.f32 0.0, %v1247
    %v1249 = vpop.f32.mrf.mxu0
    %v1250 = vpop.f32.mrf.mxu0
    %v1251 = vpop.f32.mrf.mxu0
    %1252 = vdwg.mxu0
    %v1253 = vadd.f32 %v1191, %v1248
    %v1254 = vpack.c.bf16 %v923, %v923
    %s1255 = scalar_lea.vmem %s3, 64
    %v1256 = vld [vmem:[%s1255] sm:$0xf]
    %v1257 = vld [vmem:[%s1255 + $0x4] sm:$0xf]
    %v1258 = vld [vmem:[%s1255 + $0x8] sm:$0xf]
    %v1259 = vld [vmem:[%s1255 + $0xc] sm:$0xf]
    %v1264 = vunpack.c.l.b16 %v1256
    %v1265 = vunpack.c.l.b16 %v1257
    %v1266 = vunpack.c.l.b16 %v1258
    %v1267 = vunpack.c.l.b16 %v1259
    %v1268 = vpack.c.b16 %v1265, %v1264
    %v1269 = vpack.c.b16 %v1267, %v1266
    %v1273 = vsel %vm1031, %v1254, 0
    %1275 = vmatprep.subr.bf16.mxu0 0
    %1276 = vmatpush1.bf16.msra.mxu0 0
    %1277 = vmatprep.subr.bf16.mxu0 0
    %1278 = vmatpush1.bf16.msra.mxu0 0
    %1279 = vmatprep.subr.bf16.mxu0 0
    %1280 = vmatpush1.bf16.msra.mxu0 0
    %1281 = vmatprep.subr.bf16.mxu0 0
    %1282 = vmatpush1.bf16.msra.mxu0 0
    %1283 = vmatprep.subr.bf16.mxu0 0
    %1284 = vmatpush1.bf16.msra.mxu0 0
    %1285 = vmatprep.subr.bf16.mxu0 0
    %1286 = vmatpush1.bf16.msra.mxu0 0
    %1287 = vmatprep.subr.bf16.mxu0 0
    %1288 = vmatpush1.bf16.msra.mxu0 %v1269
    %1289 = vmatprep.subr.bf16.mxu0 0
    %1290 = vmatpush1.bf16.msra.mxu0 %v1268
    %1291 = vmatprep.subr.bf16.mxu0 0
    %1292 = vmatpush2.bf16.msra.mxu0 0
    %1293 = vmatprep.subr.bf16.mxu0 0
    %1294 = vmatpush2.bf16.msra.mxu0 0
    %1295 = vmatprep.subr.bf16.mxu0 0
    %1296 = vmatpush2.bf16.msra.mxu0 0
    %1297 = vmatprep.subr.bf16.mxu0 0
    %1298 = vmatpush2.bf16.msra.mxu0 0
    %1299 = vmatprep.subr.bf16.mxu0 0
    %1300 = vmatpush2.bf16.msra.mxu0 0
    %1301 = vmatprep.subr.bf16.mxu0 0
    %1302 = vmatpush2.bf16.msra.mxu0 0
    %1303 = vmatprep.subr.bf16.mxu0 0
    %1304 = vmatpush2.bf16.msra.mxu0 0
    %1305 = vmatprep.subr.bf16.mxu0 0
    %1306 = vmatpush2.bf16.msra.mxu0 0
    %1307 = vmatprep.mubr.bf16.mxu0 0
    %1308 = vmatmul.mubr.bf16.gmra.mxu0 %v1273
    %v1309 = vpop.f32.mrf.mxu0
    %v1310 = vadd.f32 0.0, %v1309
    %v1311 = vpop.f32.mrf.mxu0
    %v1312 = vpop.f32.mrf.mxu0
    %v1313 = vpop.f32.mrf.mxu0
    %1314 = vdwg.mxu0
    %v1315 = vadd.f32 %v1253, %v1310
    %v1316 = vpack.c.bf16 %v926, %v926
    %s1317 = scalar_lea.vmem %s3, 80
    %v1318 = vld [vmem:[%s1317] sm:$0xf]
    %v1319 = vld [vmem:[%s1317 + $0x4] sm:$0xf]
    %v1320 = vld [vmem:[%s1317 + $0x8] sm:$0xf]
    %v1321 = vld [vmem:[%s1317 + $0xc] sm:$0xf]
    %v1326 = vunpack.c.l.b16 %v1318
    %v1327 = vunpack.c.l.b16 %v1319
    %v1328 = vunpack.c.l.b16 %v1320
    %v1329 = vunpack.c.l.b16 %v1321
    %v1330 = vpack.c.b16 %v1327, %v1326
    %v1331 = vpack.c.b16 %v1329, %v1328
    %v1335 = vsel %vm1031, %v1316, 0
    %1337 = vmatprep.subr.bf16.mxu0 0
    %1338 = vmatpush1.bf16.msra.mxu0 0
    %1339 = vmatprep.subr.bf16.mxu0 0
    %1340 = vmatpush1.bf16.msra.mxu0 0
    %1341 = vmatprep.subr.bf16.mxu0 0
    %1342 = vmatpush1.bf16.msra.mxu0 0
    %1343 = vmatprep.subr.bf16.mxu0 0
    %1344 = vmatpush1.bf16.msra.mxu0 0
    %1345 = vmatprep.subr.bf16.mxu0 0
    %1346 = vmatpush1.bf16.msra.mxu0 0
    %1347 = vmatprep.subr.bf16.mxu0 0
    %1348 = vmatpush1.bf16.msra.mxu0 0
    %1349 = vmatprep.subr.bf16.mxu0 0
    %1350 = vmatpush1.bf16.msra.mxu0 %v1331
    %1351 = vmatprep.subr.bf16.mxu0 0
    %1352 = vmatpush1.bf16.msra.mxu0 %v1330
    %1353 = vmatprep.subr.bf16.mxu0 0
    %1354 = vmatpush2.bf16.msra.mxu0 0
    %1355 = vmatprep.subr.bf16.mxu0 0
    %1356 = vmatpush2.bf16.msra.mxu0 0
    %1357 = vmatprep.subr.bf16.mxu0 0
    %1358 = vmatpush2.bf16.msra.mxu0 0
    %1359 = vmatprep.subr.bf16.mxu0 0
    %1360 = vmatpush2.bf16.msra.mxu0 0
    %1361 = vmatprep.subr.bf16.mxu0 0
    %1362 = vmatpush2.bf16.msra.mxu0 0
    %1363 = vmatprep.subr.bf16.mxu0 0
    %1364 = vmatpush2.bf16.msra.mxu0 0
    %1365 = vmatprep.subr.bf16.mxu0 0
    %1366 = vmatpush2.bf16.msra.mxu0 0
    %1367 = vmatprep.subr.bf16.mxu0 0
    %1368 = vmatpush2.bf16.msra.mxu0 0
    %1369 = vmatprep.mubr.bf16.mxu0 0
    %1370 = vmatmul.mubr.bf16.gmra.mxu0 %v1335
    %v1371 = vpop.f32.mrf.mxu0
    %v1372 = vadd.f32 0.0, %v1371
    %v1373 = vpop.f32.mrf.mxu0
    %v1374 = vpop.f32.mrf.mxu0
    %v1375 = vpop.f32.mrf.mxu0
    %1376 = vdwg.mxu0
    %v1377 = vadd.f32 %v1315, %v1372
    %v1378 = vpack.c.bf16 %v931, %v931
    %s1379 = scalar_lea.vmem %s3, 96
    %v1380 = vld [vmem:[%s1379] sm:$0xf]
    %v1381 = vld [vmem:[%s1379 + $0x4] sm:$0xf]
    %v1382 = vld [vmem:[%s1379 + $0x8] sm:$0xf]
    %v1383 = vld [vmem:[%s1379 + $0xc] sm:$0xf]
    %v1388 = vunpack.c.l.b16 %v1380
    %v1389 = vunpack.c.l.b16 %v1381
    %v1390 = vunpack.c.l.b16 %v1382
    %v1391 = vunpack.c.l.b16 %v1383
    %v1392 = vpack.c.b16 %v1389, %v1388
    %v1393 = vpack.c.b16 %v1391, %v1390
    %v1397 = vsel %vm1031, %v1378, 0
    %1399 = vmatprep.subr.bf16.mxu0 0
    %1400 = vmatpush1.bf16.msra.mxu0 0
    %1401 = vmatprep.subr.bf16.mxu0 0
    %1402 = vmatpush1.bf16.msra.mxu0 0
    %1403 = vmatprep.subr.bf16.mxu0 0
    %1404 = vmatpush1.bf16.msra.mxu0 0
    %1405 = vmatprep.subr.bf16.mxu0 0
    %1406 = vmatpush1.bf16.msra.mxu0 0
    %1407 = vmatprep.subr.bf16.mxu0 0
    %1408 = vmatpush1.bf16.msra.mxu0 0
    %1409 = vmatprep.subr.bf16.mxu0 0
    %1410 = vmatpush1.bf16.msra.mxu0 0
    %1411 = vmatprep.subr.bf16.mxu0 0
    %1412 = vmatpush1.bf16.msra.mxu0 %v1393
    %1413 = vmatprep.subr.bf16.mxu0 0
    %1414 = vmatpush1.bf16.msra.mxu0 %v1392
    %1415 = vmatprep.subr.bf16.mxu0 0
    %1416 = vmatpush2.bf16.msra.mxu0 0
    %1417 = vmatprep.subr.bf16.mxu0 0
    %1418 = vmatpush2.bf16.msra.mxu0 0
    %1419 = vmatprep.subr.bf16.mxu0 0
    %1420 = vmatpush2.bf16.msra.mxu0 0
    %1421 = vmatprep.subr.bf16.mxu0 0
    %1422 = vmatpush2.bf16.msra.mxu0 0
    %1423 = vmatprep.subr.bf16.mxu0 0
    %1424 = vmatpush2.bf16.msra.mxu0 0
    %1425 = vmatprep.subr.bf16.mxu0 0
    %1426 = vmatpush2.bf16.msra.mxu0 0
    %1427 = vmatprep.subr.bf16.mxu0 0
    %1428 = vmatpush2.bf16.msra.mxu0 0
    %1429 = vmatprep.subr.bf16.mxu0 0
    %1430 = vmatpush2.bf16.msra.mxu0 0
    %1431 = vmatprep.mubr.bf16.mxu0 0
    %1432 = vmatmul.mubr.bf16.gmra.mxu0 %v1397
    %v1433 = vpop.f32.mrf.mxu0
    %v1434 = vadd.f32 0.0, %v1433
    %v1435 = vpop.f32.mrf.mxu0
    %v1436 = vpop.f32.mrf.mxu0
    %v1437 = vpop.f32.mrf.mxu0
    %1438 = vdwg.mxu0
    %v1439 = vadd.f32 %v1377, %v1434
    %v1440 = vpack.c.bf16 %v934, %v934
    %s1441 = scalar_lea.vmem %s3, 112
    %v1442 = vld [vmem:[%s1441] sm:$0xf]
    %v1443 = vld [vmem:[%s1441 + $0x4] sm:$0xf]
    %v1444 = vld [vmem:[%s1441 + $0x8] sm:$0xf]
    %v1445 = vld [vmem:[%s1441 + $0xc] sm:$0xf]
    %v1450 = vunpack.c.l.b16 %v1442
    %v1451 = vunpack.c.l.b16 %v1443
    %v1452 = vunpack.c.l.b16 %v1444
    %v1453 = vunpack.c.l.b16 %v1445
    %v1454 = vpack.c.b16 %v1451, %v1450
    %v1455 = vpack.c.b16 %v1453, %v1452
    %v1459 = vsel %vm1031, %v1440, 0
    %1461 = vmatprep.subr.bf16.mxu0 0
    %1462 = vmatpush1.bf16.msra.mxu0 0
    %1463 = vmatprep.subr.bf16.mxu0 0
    %1464 = vmatpush1.bf16.msra.mxu0 0
    %1465 = vmatprep.subr.bf16.mxu0 0
    %1466 = vmatpush1.bf16.msra.mxu0 0
    %1467 = vmatprep.subr.bf16.mxu0 0
    %1468 = vmatpush1.bf16.msra.mxu0 0
    %1469 = vmatprep.subr.bf16.mxu0 0
    %1470 = vmatpush1.bf16.msra.mxu0 0
    %1471 = vmatprep.subr.bf16.mxu0 0
    %1472 = vmatpush1.bf16.msra.mxu0 0
    %1473 = vmatprep.subr.bf16.mxu0 0
    %1474 = vmatpush1.bf16.msra.mxu0 %v1455
    %1475 = vmatprep.subr.bf16.mxu0 0
    %1476 = vmatpush1.bf16.msra.mxu0 %v1454
    %1477 = vmatprep.subr.bf16.mxu0 0
    %1478 = vmatpush2.bf16.msra.mxu0 0
    %1479 = vmatprep.subr.bf16.mxu0 0
    %1480 = vmatpush2.bf16.msra.mxu0 0
    %1481 = vmatprep.subr.bf16.mxu0 0
    %1482 = vmatpush2.bf16.msra.mxu0 0
    %1483 = vmatprep.subr.bf16.mxu0 0
    %1484 = vmatpush2.bf16.msra.mxu0 0
    %1485 = vmatprep.subr.bf16.mxu0 0
    %1486 = vmatpush2.bf16.msra.mxu0 0
    %1487 = vmatprep.subr.bf16.mxu0 0
    %1488 = vmatpush2.bf16.msra.mxu0 0
    %1489 = vmatprep.subr.bf16.mxu0 0
    %1490 = vmatpush2.bf16.msra.mxu0 0
    %1491 = vmatprep.subr.bf16.mxu0 0
    %1492 = vmatpush2.bf16.msra.mxu0 0
    %1493 = vmatprep.mubr.bf16.mxu0 0
    %1494 = vmatmul.mubr.bf16.gmra.mxu0 %v1459
    %v1495 = vpop.f32.mrf.mxu0
    %v1496 = vadd.f32 0.0, %v1495
    %v1497 = vpop.f32.mrf.mxu0
    %v1498 = vpop.f32.mrf.mxu0
    %v1499 = vpop.f32.mrf.mxu0
    %1500 = vdwg.mxu0
    %v1501 = vadd.f32 %v1439, %v1496
    %v1502 = vpack.c.bf16 %v939, %v939
    %s1503 = scalar_lea.vmem %s3, 128
    %v1504 = vld [vmem:[%s1503] sm:$0xf]
    %v1505 = vld [vmem:[%s1503 + $0x4] sm:$0xf]
    %v1506 = vld [vmem:[%s1503 + $0x8] sm:$0xf]
    %v1507 = vld [vmem:[%s1503 + $0xc] sm:$0xf]
    %v1512 = vunpack.c.l.b16 %v1504
    %v1513 = vunpack.c.l.b16 %v1505
    %v1514 = vunpack.c.l.b16 %v1506
    %v1515 = vunpack.c.l.b16 %v1507
    %v1516 = vpack.c.b16 %v1513, %v1512
    %v1517 = vpack.c.b16 %v1515, %v1514
    %v1521 = vsel %vm1031, %v1502, 0
    %1523 = vmatprep.subr.bf16.mxu0 0
    %1524 = vmatpush1.bf16.msra.mxu0 0
    %1525 = vmatprep.subr.bf16.mxu0 0
    %1526 = vmatpush1.bf16.msra.mxu0 0
    %1527 = vmatprep.subr.bf16.mxu0 0
    %1528 = vmatpush1.bf16.msra.mxu0 0
    %1529 = vmatprep.subr.bf16.mxu0 0
    %1530 = vmatpush1.bf16.msra.mxu0 0
    %1531 = vmatprep.subr.bf16.mxu0 0
    %1532 = vmatpush1.bf16.msra.mxu0 0
    %1533 = vmatprep.subr.bf16.mxu0 0
    %1534 = vmatpush1.bf16.msra.mxu0 0
    %1535 = vmatprep.subr.bf16.mxu0 0
    %1536 = vmatpush1.bf16.msra.mxu0 %v1517
    %1537 = vmatprep.subr.bf16.mxu0 0
    %1538 = vmatpush1.bf16.msra.mxu0 %v1516
    %1539 = vmatprep.subr.bf16.mxu0 0
    %1540 = vmatpush2.bf16.msra.mxu0 0
    %1541 = vmatprep.subr.bf16.mxu0 0
    %1542 = vmatpush2.bf16.msra.mxu0 0
    %1543 = vmatprep.subr.bf16.mxu0 0
    %1544 = vmatpush2.bf16.msra.mxu0 0
    %1545 = vmatprep.subr.bf16.mxu0 0
    %1546 = vmatpush2.bf16.msra.mxu0 0
    %1547 = vmatprep.subr.bf16.mxu0 0
    %1548 = vmatpush2.bf16.msra.mxu0 0
    %1549 = vmatprep.subr.bf16.mxu0 0
    %1550 = vmatpush2.bf16.msra.mxu0 0
    %1551 = vmatprep.subr.bf16.mxu0 0
    %1552 = vmatpush2.bf16.msra.mxu0 0
    %1553 = vmatprep.subr.bf16.mxu0 0
    %1554 = vmatpush2.bf16.msra.mxu0 0
    %1555 = vmatprep.mubr.bf16.mxu0 0
    %1556 = vmatmul.mubr.bf16.gmra.mxu0 %v1521
    %v1557 = vpop.f32.mrf.mxu0
    %v1558 = vadd.f32 0.0, %v1557
    %v1559 = vpop.f32.mrf.mxu0
    %v1560 = vpop.f32.mrf.mxu0
    %v1561 = vpop.f32.mrf.mxu0
    %1562 = vdwg.mxu0
    %v1563 = vadd.f32 %v1501, %v1558
    %v1564 = vpack.c.bf16 %v942, %v942
    %s1565 = scalar_lea.vmem %s3, 144
    %v1566 = vld [vmem:[%s1565] sm:$0xf]
    %v1567 = vld [vmem:[%s1565 + $0x4] sm:$0xf]
    %v1568 = vld [vmem:[%s1565 + $0x8] sm:$0xf]
    %v1569 = vld [vmem:[%s1565 + $0xc] sm:$0xf]
    %v1574 = vunpack.c.l.b16 %v1566
    %v1575 = vunpack.c.l.b16 %v1567
    %v1576 = vunpack.c.l.b16 %v1568
    %v1577 = vunpack.c.l.b16 %v1569
    %v1578 = vpack.c.b16 %v1575, %v1574
    %v1579 = vpack.c.b16 %v1577, %v1576
    %v1583 = vsel %vm1031, %v1564, 0
    %1585 = vmatprep.subr.bf16.mxu0 0
    %1586 = vmatpush1.bf16.msra.mxu0 0
    %1587 = vmatprep.subr.bf16.mxu0 0
    %1588 = vmatpush1.bf16.msra.mxu0 0
    %1589 = vmatprep.subr.bf16.mxu0 0
    %1590 = vmatpush1.bf16.msra.mxu0 0
    %1591 = vmatprep.subr.bf16.mxu0 0
    %1592 = vmatpush1.bf16.msra.mxu0 0
    %1593 = vmatprep.subr.bf16.mxu0 0
    %1594 = vmatpush1.bf16.msra.mxu0 0
    %1595 = vmatprep.subr.bf16.mxu0 0
    %1596 = vmatpush1.bf16.msra.mxu0 0
    %1597 = vmatprep.subr.bf16.mxu0 0
    %1598 = vmatpush1.bf16.msra.mxu0 %v1579
    %1599 = vmatprep.subr.bf16.mxu0 0
    %1600 = vmatpush1.bf16.msra.mxu0 %v1578
    %1601 = vmatprep.subr.bf16.mxu0 0
    %1602 = vmatpush2.bf16.msra.mxu0 0
    %1603 = vmatprep.subr.bf16.mxu0 0
    %1604 = vmatpush2.bf16.msra.mxu0 0
    %1605 = vmatprep.subr.bf16.mxu0 0
    %1606 = vmatpush2.bf16.msra.mxu0 0
    %1607 = vmatprep.subr.bf16.mxu0 0
    %1608 = vmatpush2.bf16.msra.mxu0 0
    %1609 = vmatprep.subr.bf16.mxu0 0
    %1610 = vmatpush2.bf16.msra.mxu0 0
    %1611 = vmatprep.subr.bf16.mxu0 0
    %1612 = vmatpush2.bf16.msra.mxu0 0
    %1613 = vmatprep.subr.bf16.mxu0 0
    %1614 = vmatpush2.bf16.msra.mxu0 0
    %1615 = vmatprep.subr.bf16.mxu0 0
    %1616 = vmatpush2.bf16.msra.mxu0 0
    %1617 = vmatprep.mubr.bf16.mxu0 0
    %1618 = vmatmul.mubr.bf16.gmra.mxu0 %v1583
    %v1619 = vpop.f32.mrf.mxu0
    %v1620 = vadd.f32 0.0, %v1619
    %v1621 = vpop.f32.mrf.mxu0
    %v1622 = vpop.f32.mrf.mxu0
    %v1623 = vpop.f32.mrf.mxu0
    %1624 = vdwg.mxu0
    %v1625 = vadd.f32 %v1563, %v1620
    %v1626 = vpack.c.bf16 %v947, %v947
    %s1627 = scalar_lea.vmem %s3, 160
    %v1628 = vld [vmem:[%s1627] sm:$0xf]
    %v1629 = vld [vmem:[%s1627 + $0x4] sm:$0xf]
    %v1630 = vld [vmem:[%s1627 + $0x8] sm:$0xf]
    %v1631 = vld [vmem:[%s1627 + $0xc] sm:$0xf]
    %v1636 = vunpack.c.l.b16 %v1628
    %v1637 = vunpack.c.l.b16 %v1629
    %v1638 = vunpack.c.l.b16 %v1630
    %v1639 = vunpack.c.l.b16 %v1631
    %v1640 = vpack.c.b16 %v1637, %v1636
    %v1641 = vpack.c.b16 %v1639, %v1638
    %v1645 = vsel %vm1031, %v1626, 0
    %1647 = vmatprep.subr.bf16.mxu0 0
    %1648 = vmatpush1.bf16.msra.mxu0 0
    %1649 = vmatprep.subr.bf16.mxu0 0
    %1650 = vmatpush1.bf16.msra.mxu0 0
    %1651 = vmatprep.subr.bf16.mxu0 0
    %1652 = vmatpush1.bf16.msra.mxu0 0
    %1653 = vmatprep.subr.bf16.mxu0 0
    %1654 = vmatpush1.bf16.msra.mxu0 0
    %1655 = vmatprep.subr.bf16.mxu0 0
    %1656 = vmatpush1.bf16.msra.mxu0 0
    %1657 = vmatprep.subr.bf16.mxu0 0
    %1658 = vmatpush1.bf16.msra.mxu0 0
    %1659 = vmatprep.subr.bf16.mxu0 0
    %1660 = vmatpush1.bf16.msra.mxu0 %v1641
    %1661 = vmatprep.subr.bf16.mxu0 0
    %1662 = vmatpush1.bf16.msra.mxu0 %v1640
    %1663 = vmatprep.subr.bf16.mxu0 0
    %1664 = vmatpush2.bf16.msra.mxu0 0
    %1665 = vmatprep.subr.bf16.mxu0 0
    %1666 = vmatpush2.bf16.msra.mxu0 0
    %1667 = vmatprep.subr.bf16.mxu0 0
    %1668 = vmatpush2.bf16.msra.mxu0 0
    %1669 = vmatprep.subr.bf16.mxu0 0
    %1670 = vmatpush2.bf16.msra.mxu0 0
    %1671 = vmatprep.subr.bf16.mxu0 0
    %1672 = vmatpush2.bf16.msra.mxu0 0
    %1673 = vmatprep.subr.bf16.mxu0 0
    %1674 = vmatpush2.bf16.msra.mxu0 0
    %1675 = vmatprep.subr.bf16.mxu0 0
    %1676 = vmatpush2.bf16.msra.mxu0 0
    %1677 = vmatprep.subr.bf16.mxu0 0
    %1678 = vmatpush2.bf16.msra.mxu0 0
    %1679 = vmatprep.mubr.bf16.mxu0 0
    %1680 = vmatmul.mubr.bf16.gmra.mxu0 %v1645
    %v1681 = vpop.f32.mrf.mxu0
    %v1682 = vadd.f32 0.0, %v1681
    %v1683 = vpop.f32.mrf.mxu0
    %v1684 = vpop.f32.mrf.mxu0
    %v1685 = vpop.f32.mrf.mxu0
    %1686 = vdwg.mxu0
    %v1687 = vadd.f32 %v1625, %v1682
    %v1688 = vpack.c.bf16 %v950, %v950
    %s1689 = scalar_lea.vmem %s3, 176
    %v1690 = vld [vmem:[%s1689] sm:$0xf]
    %v1691 = vld [vmem:[%s1689 + $0x4] sm:$0xf]
    %v1692 = vld [vmem:[%s1689 + $0x8] sm:$0xf]
    %v1693 = vld [vmem:[%s1689 + $0xc] sm:$0xf]
    %v1698 = vunpack.c.l.b16 %v1690
    %v1699 = vunpack.c.l.b16 %v1691
    %v1700 = vunpack.c.l.b16 %v1692
    %v1701 = vunpack.c.l.b16 %v1693
    %v1702 = vpack.c.b16 %v1699, %v1698
    %v1703 = vpack.c.b16 %v1701, %v1700
    %v1707 = vsel %vm1031, %v1688, 0
    %1709 = vmatprep.subr.bf16.mxu0 0
    %1710 = vmatpush1.bf16.msra.mxu0 0
    %1711 = vmatprep.subr.bf16.mxu0 0
    %1712 = vmatpush1.bf16.msra.mxu0 0
    %1713 = vmatprep.subr.bf16.mxu0 0
    %1714 = vmatpush1.bf16.msra.mxu0 0
    %1715 = vmatprep.subr.bf16.mxu0 0
    %1716 = vmatpush1.bf16.msra.mxu0 0
    %1717 = vmatprep.subr.bf16.mxu0 0
    %1718 = vmatpush1.bf16.msra.mxu0 0
    %1719 = vmatprep.subr.bf16.mxu0 0
    %1720 = vmatpush1.bf16.msra.mxu0 0
    %1721 = vmatprep.subr.bf16.mxu0 0
    %1722 = vmatpush1.bf16.msra.mxu0 %v1703
    %1723 = vmatprep.subr.bf16.mxu0 0
    %1724 = vmatpush1.bf16.msra.mxu0 %v1702
    %1725 = vmatprep.subr.bf16.mxu0 0
    %1726 = vmatpush2.bf16.msra.mxu0 0
    %1727 = vmatprep.subr.bf16.mxu0 0
    %1728 = vmatpush2.bf16.msra.mxu0 0
    %1729 = vmatprep.subr.bf16.mxu0 0
    %1730 = vmatpush2.bf16.msra.mxu0 0
    %1731 = vmatprep.subr.bf16.mxu0 0
    %1732 = vmatpush2.bf16.msra.mxu0 0
    %1733 = vmatprep.subr.bf16.mxu0 0
    %1734 = vmatpush2.bf16.msra.mxu0 0
    %1735 = vmatprep.subr.bf16.mxu0 0
    %1736 = vmatpush2.bf16.msra.mxu0 0
    %1737 = vmatprep.subr.bf16.mxu0 0
    %1738 = vmatpush2.bf16.msra.mxu0 0
    %1739 = vmatprep.subr.bf16.mxu0 0
    %1740 = vmatpush2.bf16.msra.mxu0 0
    %1741 = vmatprep.mubr.bf16.mxu0 0
    %1742 = vmatmul.mubr.bf16.gmra.mxu0 %v1707
    %v1743 = vpop.f32.mrf.mxu0
    %v1744 = vadd.f32 0.0, %v1743
    %v1745 = vpop.f32.mrf.mxu0
    %v1746 = vpop.f32.mrf.mxu0
    %v1747 = vpop.f32.mrf.mxu0
    %1748 = vdwg.mxu0
    %v1749 = vadd.f32 %v1687, %v1744
    %v1750 = vpack.c.bf16 %v955, %v955
    %s1751 = scalar_lea.vmem %s3, 192
    %v1752 = vld [vmem:[%s1751] sm:$0xf]
    %v1753 = vld [vmem:[%s1751 + $0x4] sm:$0xf]
    %v1754 = vld [vmem:[%s1751 + $0x8] sm:$0xf]
    %v1755 = vld [vmem:[%s1751 + $0xc] sm:$0xf]
    %v1760 = vunpack.c.l.b16 %v1752
    %v1761 = vunpack.c.l.b16 %v1753
    %v1762 = vunpack.c.l.b16 %v1754
    %v1763 = vunpack.c.l.b16 %v1755
    %v1764 = vpack.c.b16 %v1761, %v1760
    %v1765 = vpack.c.b16 %v1763, %v1762
    %v1769 = vsel %vm1031, %v1750, 0
    %1771 = vmatprep.subr.bf16.mxu0 0
    %1772 = vmatpush1.bf16.msra.mxu0 0
    %1773 = vmatprep.subr.bf16.mxu0 0
    %1774 = vmatpush1.bf16.msra.mxu0 0
    %1775 = vmatprep.subr.bf16.mxu0 0
    %1776 = vmatpush1.bf16.msra.mxu0 0
    %1777 = vmatprep.subr.bf16.mxu0 0
    %1778 = vmatpush1.bf16.msra.mxu0 0
    %1779 = vmatprep.subr.bf16.mxu0 0
    %1780 = vmatpush1.bf16.msra.mxu0 0
    %1781 = vmatprep.subr.bf16.mxu0 0
    %1782 = vmatpush1.bf16.msra.mxu0 0
    %1783 = vmatprep.subr.bf16.mxu0 0
    %1784 = vmatpush1.bf16.msra.mxu0 %v1765
    %1785 = vmatprep.subr.bf16.mxu0 0
    %1786 = vmatpush1.bf16.msra.mxu0 %v1764
    %1787 = vmatprep.subr.bf16.mxu0 0
    %1788 = vmatpush2.bf16.msra.mxu0 0
    %1789 = vmatprep.subr.bf16.mxu0 0
    %1790 = vmatpush2.bf16.msra.mxu0 0
    %1791 = vmatprep.subr.bf16.mxu0 0
    %1792 = vmatpush2.bf16.msra.mxu0 0
    %1793 = vmatprep.subr.bf16.mxu0 0
    %1794 = vmatpush2.bf16.msra.mxu0 0
    %1795 = vmatprep.subr.bf16.mxu0 0
    %1796 = vmatpush2.bf16.msra.mxu0 0
    %1797 = vmatprep.subr.bf16.mxu0 0
    %1798 = vmatpush2.bf16.msra.mxu0 0
    %1799 = vmatprep.subr.bf16.mxu0 0
    %1800 = vmatpush2.bf16.msra.mxu0 0
    %1801 = vmatprep.subr.bf16.mxu0 0
    %1802 = vmatpush2.bf16.msra.mxu0 0
    %1803 = vmatprep.mubr.bf16.mxu0 0
    %1804 = vmatmul.mubr.bf16.gmra.mxu0 %v1769
    %v1805 = vpop.f32.mrf.mxu0
    %v1806 = vadd.f32 0.0, %v1805
    %v1807 = vpop.f32.mrf.mxu0
    %v1808 = vpop.f32.mrf.mxu0
    %v1809 = vpop.f32.mrf.mxu0
    %1810 = vdwg.mxu0
    %v1811 = vadd.f32 %v1749, %v1806
    %v1812 = vpack.c.bf16 %v958, %v958
    %s1813 = scalar_lea.vmem %s3, 208
    %v1814 = vld [vmem:[%s1813] sm:$0xf]
    %v1815 = vld [vmem:[%s1813 + $0x4] sm:$0xf]
    %v1816 = vld [vmem:[%s1813 + $0x8] sm:$0xf]
    %v1817 = vld [vmem:[%s1813 + $0xc] sm:$0xf]
    %v1822 = vunpack.c.l.b16 %v1814
    %v1823 = vunpack.c.l.b16 %v1815
    %v1824 = vunpack.c.l.b16 %v1816
    %v1825 = vunpack.c.l.b16 %v1817
    %v1826 = vpack.c.b16 %v1823, %v1822
    %v1827 = vpack.c.b16 %v1825, %v1824
    %v1831 = vsel %vm1031, %v1812, 0
    %1833 = vmatprep.subr.bf16.mxu0 0
    %1834 = vmatpush1.bf16.msra.mxu0 0
    %1835 = vmatprep.subr.bf16.mxu0 0
    %1836 = vmatpush1.bf16.msra.mxu0 0
    %1837 = vmatprep.subr.bf16.mxu0 0
    %1838 = vmatpush1.bf16.msra.mxu0 0
    %1839 = vmatprep.subr.bf16.mxu0 0
    %1840 = vmatpush1.bf16.msra.mxu0 0
    %1841 = vmatprep.subr.bf16.mxu0 0
    %1842 = vmatpush1.bf16.msra.mxu0 0
    %1843 = vmatprep.subr.bf16.mxu0 0
    %1844 = vmatpush1.bf16.msra.mxu0 0
    %1845 = vmatprep.subr.bf16.mxu0 0
    %1846 = vmatpush1.bf16.msra.mxu0 %v1827
    %1847 = vmatprep.subr.bf16.mxu0 0
    %1848 = vmatpush1.bf16.msra.mxu0 %v1826
    %1849 = vmatprep.subr.bf16.mxu0 0
    %1850 = vmatpush2.bf16.msra.mxu0 0
    %1851 = vmatprep.subr.bf16.mxu0 0
    %1852 = vmatpush2.bf16.msra.mxu0 0
    %1853 = vmatprep.subr.bf16.mxu0 0
    %1854 = vmatpush2.bf16.msra.mxu0 0
    %1855 = vmatprep.subr.bf16.mxu0 0
    %1856 = vmatpush2.bf16.msra.mxu0 0
    %1857 = vmatprep.subr.bf16.mxu0 0
    %1858 = vmatpush2.bf16.msra.mxu0 0
    %1859 = vmatprep.subr.bf16.mxu0 0
    %1860 = vmatpush2.bf16.msra.mxu0 0
    %1861 = vmatprep.subr.bf16.mxu0 0
    %1862 = vmatpush2.bf16.msra.mxu0 0
    %1863 = vmatprep.subr.bf16.mxu0 0
    %1864 = vmatpush2.bf16.msra.mxu0 0
    %1865 = vmatprep.mubr.bf16.mxu0 0
    %1866 = vmatmul.mubr.bf16.gmra.mxu0 %v1831
    %v1867 = vpop.f32.mrf.mxu0
    %v1868 = vadd.f32 0.0, %v1867
    %v1869 = vpop.f32.mrf.mxu0
    %v1870 = vpop.f32.mrf.mxu0
    %v1871 = vpop.f32.mrf.mxu0
    %1872 = vdwg.mxu0
    %v1873 = vadd.f32 %v1811, %v1868
    %v1874 = vpack.c.bf16 %v963, %v963
    %s1875 = scalar_lea.vmem %s3, 224
    %v1876 = vld [vmem:[%s1875] sm:$0xf]
    %v1877 = vld [vmem:[%s1875 + $0x4] sm:$0xf]
    %v1878 = vld [vmem:[%s1875 + $0x8] sm:$0xf]
    %v1879 = vld [vmem:[%s1875 + $0xc] sm:$0xf]
    %v1884 = vunpack.c.l.b16 %v1876
    %v1885 = vunpack.c.l.b16 %v1877
    %v1886 = vunpack.c.l.b16 %v1878
    %v1887 = vunpack.c.l.b16 %v1879
    %v1888 = vpack.c.b16 %v1885, %v1884
    %v1889 = vpack.c.b16 %v1887, %v1886
    %v1893 = vsel %vm1031, %v1874, 0
    %1895 = vmatprep.subr.bf16.mxu0 0
    %1896 = vmatpush1.bf16.msra.mxu0 0
    %1897 = vmatprep.subr.bf16.mxu0 0
    %1898 = vmatpush1.bf16.msra.mxu0 0
    %1899 = vmatprep.subr.bf16.mxu0 0
    %1900 = vmatpush1.bf16.msra.mxu0 0
    %1901 = vmatprep.subr.bf16.mxu0 0
    %1902 = vmatpush1.bf16.msra.mxu0 0
    %1903 = vmatprep.subr.bf16.mxu0 0
    %1904 = vmatpush1.bf16.msra.mxu0 0
    %1905 = vmatprep.subr.bf16.mxu0 0
    %1906 = vmatpush1.bf16.msra.mxu0 0
    %1907 = vmatprep.subr.bf16.mxu0 0
    %1908 = vmatpush1.bf16.msra.mxu0 %v1889
    %1909 = vmatprep.subr.bf16.mxu0 0
    %1910 = vmatpush1.bf16.msra.mxu0 %v1888
    %1911 = vmatprep.subr.bf16.mxu0 0
    %1912 = vmatpush2.bf16.msra.mxu0 0
    %1913 = vmatprep.subr.bf16.mxu0 0
    %1914 = vmatpush2.bf16.msra.mxu0 0
    %1915 = vmatprep.subr.bf16.mxu0 0
    %1916 = vmatpush2.bf16.msra.mxu0 0
    %1917 = vmatprep.subr.bf16.mxu0 0
    %1918 = vmatpush2.bf16.msra.mxu0 0
    %1919 = vmatprep.subr.bf16.mxu0 0
    %1920 = vmatpush2.bf16.msra.mxu0 0
    %1921 = vmatprep.subr.bf16.mxu0 0
    %1922 = vmatpush2.bf16.msra.mxu0 0
    %1923 = vmatprep.subr.bf16.mxu0 0
    %1924 = vmatpush2.bf16.msra.mxu0 0
    %1925 = vmatprep.subr.bf16.mxu0 0
    %1926 = vmatpush2.bf16.msra.mxu0 0
    %1927 = vmatprep.mubr.bf16.mxu0 0
    %1928 = vmatmul.mubr.bf16.gmra.mxu0 %v1893
    %v1929 = vpop.f32.mrf.mxu0
    %v1930 = vadd.f32 0.0, %v1929
    %v1931 = vpop.f32.mrf.mxu0
    %v1932 = vpop.f32.mrf.mxu0
    %v1933 = vpop.f32.mrf.mxu0
    %1934 = vdwg.mxu0
    %v1935 = vadd.f32 %v1873, %v1930
    %v1936 = vpack.c.bf16 %v966, %v966
    %s1937 = scalar_lea.vmem %s3, 240
    %v1938 = vld [vmem:[%s1937] sm:$0xf]
    %v1939 = vld [vmem:[%s1937 + $0x4] sm:$0xf]
    %v1940 = vld [vmem:[%s1937 + $0x8] sm:$0xf]
    %v1941 = vld [vmem:[%s1937 + $0xc] sm:$0xf]
    %v1946 = vunpack.c.l.b16 %v1938
    %v1947 = vunpack.c.l.b16 %v1939
    %v1948 = vunpack.c.l.b16 %v1940
    %v1949 = vunpack.c.l.b16 %v1941
    %v1950 = vpack.c.b16 %v1947, %v1946
    %v1951 = vpack.c.b16 %v1949, %v1948
    %v1955 = vsel %vm1031, %v1936, 0
    %1957 = vmatprep.subr.bf16.mxu0 0
    %1958 = vmatpush1.bf16.msra.mxu0 0
    %1959 = vmatprep.subr.bf16.mxu0 0
    %1960 = vmatpush1.bf16.msra.mxu0 0
    %1961 = vmatprep.subr.bf16.mxu0 0
    %1962 = vmatpush1.bf16.msra.mxu0 0
    %1963 = vmatprep.subr.bf16.mxu0 0
    %1964 = vmatpush1.bf16.msra.mxu0 0
    %1965 = vmatprep.subr.bf16.mxu0 0
    %1966 = vmatpush1.bf16.msra.mxu0 0
    %1967 = vmatprep.subr.bf16.mxu0 0
    %1968 = vmatpush1.bf16.msra.mxu0 0
    %1969 = vmatprep.subr.bf16.mxu0 0
    %1970 = vmatpush1.bf16.msra.mxu0 %v1951
    %1971 = vmatprep.subr.bf16.mxu0 0
    %1972 = vmatpush1.bf16.msra.mxu0 %v1950
    %1973 = vmatprep.subr.bf16.mxu0 0
    %1974 = vmatpush2.bf16.msra.mxu0 0
    %1975 = vmatprep.subr.bf16.mxu0 0
    %1976 = vmatpush2.bf16.msra.mxu0 0
    %1977 = vmatprep.subr.bf16.mxu0 0
    %1978 = vmatpush2.bf16.msra.mxu0 0
    %1979 = vmatprep.subr.bf16.mxu0 0
    %1980 = vmatpush2.bf16.msra.mxu0 0
    %1981 = vmatprep.subr.bf16.mxu0 0
    %1982 = vmatpush2.bf16.msra.mxu0 0
    %1983 = vmatprep.subr.bf16.mxu0 0
    %1984 = vmatpush2.bf16.msra.mxu0 0
    %1985 = vmatprep.subr.bf16.mxu0 0
    %1986 = vmatpush2.bf16.msra.mxu0 0
    %1987 = vmatprep.subr.bf16.mxu0 0
    %1988 = vmatpush2.bf16.msra.mxu0 0
    %1989 = vmatprep.mubr.bf16.mxu0 0
    %1990 = vmatmul.mubr.bf16.gmra.mxu0 %v1955
    %v1991 = vpop.f32.mrf.mxu0
    %v1992 = vadd.f32 0.0, %v1991
    %v1993 = vpop.f32.mrf.mxu0
    %v1994 = vpop.f32.mrf.mxu0
    %v1995 = vpop.f32.mrf.mxu0
    %1996 = vdwg.mxu0
    %v1997 = vadd.f32 %v1935, %v1992
    %v1998 = vpack.c.bf16 %v971, %v971
    %s1999 = scalar_lea.vmem %s3, 256
    %v2000 = vld [vmem:[%s1999] sm:$0xf]
    %v2001 = vld [vmem:[%s1999 + $0x4] sm:$0xf]
    %v2002 = vld [vmem:[%s1999 + $0x8] sm:$0xf]
    %v2003 = vld [vmem:[%s1999 + $0xc] sm:$0xf]
    %v2008 = vunpack.c.l.b16 %v2000
    %v2009 = vunpack.c.l.b16 %v2001
    %v2010 = vunpack.c.l.b16 %v2002
    %v2011 = vunpack.c.l.b16 %v2003
    %v2012 = vpack.c.b16 %v2009, %v2008
    %v2013 = vpack.c.b16 %v2011, %v2010
    %v2017 = vsel %vm1031, %v1998, 0
    %2019 = vmatprep.subr.bf16.mxu0 0
    %2020 = vmatpush1.bf16.msra.mxu0 0
    %2021 = vmatprep.subr.bf16.mxu0 0
    %2022 = vmatpush1.bf16.msra.mxu0 0
    %2023 = vmatprep.subr.bf16.mxu0 0
    %2024 = vmatpush1.bf16.msra.mxu0 0
    %2025 = vmatprep.subr.bf16.mxu0 0
    %2026 = vmatpush1.bf16.msra.mxu0 0
    %2027 = vmatprep.subr.bf16.mxu0 0
    %2028 = vmatpush1.bf16.msra.mxu0 0
    %2029 = vmatprep.subr.bf16.mxu0 0
    %2030 = vmatpush1.bf16.msra.mxu0 0
    %2031 = vmatprep.subr.bf16.mxu0 0
    %2032 = vmatpush1.bf16.msra.mxu0 %v2013
    %2033 = vmatprep.subr.bf16.mxu0 0
    %2034 = vmatpush1.bf16.msra.mxu0 %v2012
    %2035 = vmatprep.subr.bf16.mxu0 0
    %2036 = vmatpush2.bf16.msra.mxu0 0
    %2037 = vmatprep.subr.bf16.mxu0 0
    %2038 = vmatpush2.bf16.msra.mxu0 0
    %2039 = vmatprep.subr.bf16.mxu0 0
    %2040 = vmatpush2.bf16.msra.mxu0 0
    %2041 = vmatprep.subr.bf16.mxu0 0
    %2042 = vmatpush2.bf16.msra.mxu0 0
    %2043 = vmatprep.subr.bf16.mxu0 0
    %2044 = vmatpush2.bf16.msra.mxu0 0
    %2045 = vmatprep.subr.bf16.mxu0 0
    %2046 = vmatpush2.bf16.msra.mxu0 0
    %2047 = vmatprep.subr.bf16.mxu0 0
    %2048 = vmatpush2.bf16.msra.mxu0 0
    %2049 = vmatprep.subr.bf16.mxu0 0
    %2050 = vmatpush2.bf16.msra.mxu0 0
    %2051 = vmatprep.mubr.bf16.mxu0 0
    %2052 = vmatmul.mubr.bf16.gmra.mxu0 %v2017
    %v2053 = vpop.f32.mrf.mxu0
    %v2054 = vadd.f32 0.0, %v2053
    %v2055 = vpop.f32.mrf.mxu0
    %v2056 = vpop.f32.mrf.mxu0
    %v2057 = vpop.f32.mrf.mxu0
    %2058 = vdwg.mxu0
    %v2059 = vadd.f32 %v1997, %v2054
    %v2060 = vpack.c.bf16 %v974, %v974
    %s2061 = scalar_lea.vmem %s3, 272
    %v2062 = vld [vmem:[%s2061] sm:$0xf]
    %v2063 = vld [vmem:[%s2061 + $0x4] sm:$0xf]
    %v2064 = vld [vmem:[%s2061 + $0x8] sm:$0xf]
    %v2065 = vld [vmem:[%s2061 + $0xc] sm:$0xf]
    %v2070 = vunpack.c.l.b16 %v2062
    %v2071 = vunpack.c.l.b16 %v2063
    %v2072 = vunpack.c.l.b16 %v2064
    %v2073 = vunpack.c.l.b16 %v2065
    %v2074 = vpack.c.b16 %v2071, %v2070
    %v2075 = vpack.c.b16 %v2073, %v2072
    %v2079 = vsel %vm1031, %v2060, 0
    %2081 = vmatprep.subr.bf16.mxu0 0
    %2082 = vmatpush1.bf16.msra.mxu0 0
    %2083 = vmatprep.subr.bf16.mxu0 0
    %2084 = vmatpush1.bf16.msra.mxu0 0
    %2085 = vmatprep.subr.bf16.mxu0 0
    %2086 = vmatpush1.bf16.msra.mxu0 0
    %2087 = vmatprep.subr.bf16.mxu0 0
    %2088 = vmatpush1.bf16.msra.mxu0 0
    %2089 = vmatprep.subr.bf16.mxu0 0
    %2090 = vmatpush1.bf16.msra.mxu0 0
    %2091 = vmatprep.subr.bf16.mxu0 0
    %2092 = vmatpush1.bf16.msra.mxu0 0
    %2093 = vmatprep.subr.bf16.mxu0 0
    %2094 = vmatpush1.bf16.msra.mxu0 %v2075
    %2095 = vmatprep.subr.bf16.mxu0 0
    %2096 = vmatpush1.bf16.msra.mxu0 %v2074
    %2097 = vmatprep.subr.bf16.mxu0 0
    %2098 = vmatpush2.bf16.msra.mxu0 0
    %2099 = vmatprep.subr.bf16.mxu0 0
    %2100 = vmatpush2.bf16.msra.mxu0 0
    %2101 = vmatprep.subr.bf16.mxu0 0
    %2102 = vmatpush2.bf16.msra.mxu0 0
    %2103 = vmatprep.subr.bf16.mxu0 0
    %2104 = vmatpush2.bf16.msra.mxu0 0
    %2105 = vmatprep.subr.bf16.mxu0 0
    %2106 = vmatpush2.bf16.msra.mxu0 0
    %2107 = vmatprep.subr.bf16.mxu0 0
    %2108 = vmatpush2.bf16.msra.mxu0 0
    %2109 = vmatprep.subr.bf16.mxu0 0
    %2110 = vmatpush2.bf16.msra.mxu0 0
    %2111 = vmatprep.subr.bf16.mxu0 0
    %2112 = vmatpush2.bf16.msra.mxu0 0
    %2113 = vmatprep.mubr.bf16.mxu0 0
    %2114 = vmatmul.mubr.bf16.gmra.mxu0 %v2079
    %v2115 = vpop.f32.mrf.mxu0
    %v2116 = vadd.f32 0.0, %v2115
    %v2117 = vpop.f32.mrf.mxu0
    %v2118 = vpop.f32.mrf.mxu0
    %v2119 = vpop.f32.mrf.mxu0
    %2120 = vdwg.mxu0
    %v2121 = vadd.f32 %v2059, %v2116
    %v2122 = vpack.c.bf16 %v979, %v979
    %s2123 = scalar_lea.vmem %s3, 288
    %v2124 = vld [vmem:[%s2123] sm:$0xf]
    %v2125 = vld [vmem:[%s2123 + $0x4] sm:$0xf]
    %v2126 = vld [vmem:[%s2123 + $0x8] sm:$0xf]
    %v2127 = vld [vmem:[%s2123 + $0xc] sm:$0xf]
    %v2132 = vunpack.c.l.b16 %v2124
    %v2133 = vunpack.c.l.b16 %v2125
    %v2134 = vunpack.c.l.b16 %v2126
    %v2135 = vunpack.c.l.b16 %v2127
    %v2136 = vpack.c.b16 %v2133, %v2132
    %v2137 = vpack.c.b16 %v2135, %v2134
    %v2141 = vsel %vm1031, %v2122, 0
    %2143 = vmatprep.subr.bf16.mxu0 0
    %2144 = vmatpush1.bf16.msra.mxu0 0
    %2145 = vmatprep.subr.bf16.mxu0 0
    %2146 = vmatpush1.bf16.msra.mxu0 0
    %2147 = vmatprep.subr.bf16.mxu0 0
    %2148 = vmatpush1.bf16.msra.mxu0 0
    %2149 = vmatprep.subr.bf16.mxu0 0
    %2150 = vmatpush1.bf16.msra.mxu0 0
    %2151 = vmatprep.subr.bf16.mxu0 0
    %2152 = vmatpush1.bf16.msra.mxu0 0
    %2153 = vmatprep.subr.bf16.mxu0 0
    %2154 = vmatpush1.bf16.msra.mxu0 0
    %2155 = vmatprep.subr.bf16.mxu0 0
    %2156 = vmatpush1.bf16.msra.mxu0 %v2137
    %2157 = vmatprep.subr.bf16.mxu0 0
    %2158 = vmatpush1.bf16.msra.mxu0 %v2136
    %2159 = vmatprep.subr.bf16.mxu0 0
    %2160 = vmatpush2.bf16.msra.mxu0 0
    %2161 = vmatprep.subr.bf16.mxu0 0
    %2162 = vmatpush2.bf16.msra.mxu0 0
    %2163 = vmatprep.subr.bf16.mxu0 0
    %2164 = vmatpush2.bf16.msra.mxu0 0
    %2165 = vmatprep.subr.bf16.mxu0 0
    %2166 = vmatpush2.bf16.msra.mxu0 0
    %2167 = vmatprep.subr.bf16.mxu0 0
    %2168 = vmatpush2.bf16.msra.mxu0 0
    %2169 = vmatprep.subr.bf16.mxu0 0
    %2170 = vmatpush2.bf16.msra.mxu0 0
    %2171 = vmatprep.subr.bf16.mxu0 0
    %2172 = vmatpush2.bf16.msra.mxu0 0
    %2173 = vmatprep.subr.bf16.mxu0 0
    %2174 = vmatpush2.bf16.msra.mxu0 0
    %2175 = vmatprep.mubr.bf16.mxu0 0
    %2176 = vmatmul.mubr.bf16.gmra.mxu0 %v2141
    %v2177 = vpop.f32.mrf.mxu0
    %v2178 = vadd.f32 0.0, %v2177
    %v2179 = vpop.f32.mrf.mxu0
    %v2180 = vpop.f32.mrf.mxu0
    %v2181 = vpop.f32.mrf.mxu0
    %2182 = vdwg.mxu0
    %v2183 = vadd.f32 %v2121, %v2178
    %v2184 = vpack.c.bf16 %v982, %v982
    %s2185 = scalar_lea.vmem %s3, 304
    %v2186 = vld [vmem:[%s2185] sm:$0xf]
    %v2187 = vld [vmem:[%s2185 + $0x4] sm:$0xf]
    %v2188 = vld [vmem:[%s2185 + $0x8] sm:$0xf]
    %v2189 = vld [vmem:[%s2185 + $0xc] sm:$0xf]
    %v2194 = vunpack.c.l.b16 %v2186
    %v2195 = vunpack.c.l.b16 %v2187
    %v2196 = vunpack.c.l.b16 %v2188
    %v2197 = vunpack.c.l.b16 %v2189
    %v2198 = vpack.c.b16 %v2195, %v2194
    %v2199 = vpack.c.b16 %v2197, %v2196
    %v2203 = vsel %vm1031, %v2184, 0
    %2205 = vmatprep.subr.bf16.mxu0 0
    %2206 = vmatpush1.bf16.msra.mxu0 0
    %2207 = vmatprep.subr.bf16.mxu0 0
    %2208 = vmatpush1.bf16.msra.mxu0 0
    %2209 = vmatprep.subr.bf16.mxu0 0
    %2210 = vmatpush1.bf16.msra.mxu0 0
    %2211 = vmatprep.subr.bf16.mxu0 0
    %2212 = vmatpush1.bf16.msra.mxu0 0
    %2213 = vmatprep.subr.bf16.mxu0 0
    %2214 = vmatpush1.bf16.msra.mxu0 0
    %2215 = vmatprep.subr.bf16.mxu0 0
    %2216 = vmatpush1.bf16.msra.mxu0 0
    %2217 = vmatprep.subr.bf16.mxu0 0
    %2218 = vmatpush1.bf16.msra.mxu0 %v2199
    %2219 = vmatprep.subr.bf16.mxu0 0
    %2220 = vmatpush1.bf16.msra.mxu0 %v2198
    %2221 = vmatprep.subr.bf16.mxu0 0
    %2222 = vmatpush2.bf16.msra.mxu0 0
    %2223 = vmatprep.subr.bf16.mxu0 0
    %2224 = vmatpush2.bf16.msra.mxu0 0
    %2225 = vmatprep.subr.bf16.mxu0 0
    %2226 = vmatpush2.bf16.msra.mxu0 0
    %2227 = vmatprep.subr.bf16.mxu0 0
    %2228 = vmatpush2.bf16.msra.mxu0 0
    %2229 = vmatprep.subr.bf16.mxu0 0
    %2230 = vmatpush2.bf16.msra.mxu0 0
    %2231 = vmatprep.subr.bf16.mxu0 0
    %2232 = vmatpush2.bf16.msra.mxu0 0
    %2233 = vmatprep.subr.bf16.mxu0 0
    %2234 = vmatpush2.bf16.msra.mxu0 0
    %2235 = vmatprep.subr.bf16.mxu0 0
    %2236 = vmatpush2.bf16.msra.mxu0 0
    %2237 = vmatprep.mubr.bf16.mxu0 0
    %2238 = vmatmul.mubr.bf16.gmra.mxu0 %v2203
    %v2239 = vpop.f32.mrf.mxu0
    %v2240 = vadd.f32 0.0, %v2239
    %v2241 = vpop.f32.mrf.mxu0
    %v2242 = vpop.f32.mrf.mxu0
    %v2243 = vpop.f32.mrf.mxu0
    %2244 = vdwg.mxu0
    %v2245 = vadd.f32 %v2183, %v2240
    %v2246 = vpack.c.bf16 %v987, %v987
    %s2247 = scalar_lea.vmem %s3, 320
    %v2248 = vld [vmem:[%s2247] sm:$0xf]
    %v2249 = vld [vmem:[%s2247 + $0x4] sm:$0xf]
    %v2250 = vld [vmem:[%s2247 + $0x8] sm:$0xf]
    %v2251 = vld [vmem:[%s2247 + $0xc] sm:$0xf]
    %v2256 = vunpack.c.l.b16 %v2248
    %v2257 = vunpack.c.l.b16 %v2249
    %v2258 = vunpack.c.l.b16 %v2250
    %v2259 = vunpack.c.l.b16 %v2251
    %v2260 = vpack.c.b16 %v2257, %v2256
    %v2261 = vpack.c.b16 %v2259, %v2258
    %v2265 = vsel %vm1031, %v2246, 0
    %2267 = vmatprep.subr.bf16.mxu0 0
    %2268 = vmatpush1.bf16.msra.mxu0 0
    %2269 = vmatprep.subr.bf16.mxu0 0
    %2270 = vmatpush1.bf16.msra.mxu0 0
    %2271 = vmatprep.subr.bf16.mxu0 0
    %2272 = vmatpush1.bf16.msra.mxu0 0
    %2273 = vmatprep.subr.bf16.mxu0 0
    %2274 = vmatpush1.bf16.msra.mxu0 0
    %2275 = vmatprep.subr.bf16.mxu0 0
    %2276 = vmatpush1.bf16.msra.mxu0 0
    %2277 = vmatprep.subr.bf16.mxu0 0
    %2278 = vmatpush1.bf16.msra.mxu0 0
    %2279 = vmatprep.subr.bf16.mxu0 0
    %2280 = vmatpush1.bf16.msra.mxu0 %v2261
    %2281 = vmatprep.subr.bf16.mxu0 0
    %2282 = vmatpush1.bf16.msra.mxu0 %v2260
    %2283 = vmatprep.subr.bf16.mxu0 0
    %2284 = vmatpush2.bf16.msra.mxu0 0
    %2285 = vmatprep.subr.bf16.mxu0 0
    %2286 = vmatpush2.bf16.msra.mxu0 0
    %2287 = vmatprep.subr.bf16.mxu0 0
    %2288 = vmatpush2.bf16.msra.mxu0 0
    %2289 = vmatprep.subr.bf16.mxu0 0
    %2290 = vmatpush2.bf16.msra.mxu0 0
    %2291 = vmatprep.subr.bf16.mxu0 0
    %2292 = vmatpush2.bf16.msra.mxu0 0
    %2293 = vmatprep.subr.bf16.mxu0 0
    %2294 = vmatpush2.bf16.msra.mxu0 0
    %2295 = vmatprep.subr.bf16.mxu0 0
    %2296 = vmatpush2.bf16.msra.mxu0 0
    %2297 = vmatprep.subr.bf16.mxu0 0
    %2298 = vmatpush2.bf16.msra.mxu0 0
    %2299 = vmatprep.mubr.bf16.mxu0 0
    %2300 = vmatmul.mubr.bf16.gmra.mxu0 %v2265
    %v2301 = vpop.f32.mrf.mxu0
    %v2302 = vadd.f32 0.0, %v2301
    %v2303 = vpop.f32.mrf.mxu0
    %v2304 = vpop.f32.mrf.mxu0
    %v2305 = vpop.f32.mrf.mxu0
    %2306 = vdwg.mxu0
    %v2307 = vadd.f32 %v2245, %v2302
    %v2308 = vpack.c.bf16 %v990, %v990
    %s2309 = scalar_lea.vmem %s3, 336
    %v2310 = vld [vmem:[%s2309] sm:$0xf]
    %v2311 = vld [vmem:[%s2309 + $0x4] sm:$0xf]
    %v2312 = vld [vmem:[%s2309 + $0x8] sm:$0xf]
    %v2313 = vld [vmem:[%s2309 + $0xc] sm:$0xf]
    %v2318 = vunpack.c.l.b16 %v2310
    %v2319 = vunpack.c.l.b16 %v2311
    %v2320 = vunpack.c.l.b16 %v2312
    %v2321 = vunpack.c.l.b16 %v2313
    %v2322 = vpack.c.b16 %v2319, %v2318
    %v2323 = vpack.c.b16 %v2321, %v2320
    %v2327 = vsel %vm1031, %v2308, 0
    %2329 = vmatprep.subr.bf16.mxu0 0
    %2330 = vmatpush1.bf16.msra.mxu0 0
    %2331 = vmatprep.subr.bf16.mxu0 0
    %2332 = vmatpush1.bf16.msra.mxu0 0
    %2333 = vmatprep.subr.bf16.mxu0 0
    %2334 = vmatpush1.bf16.msra.mxu0 0
    %2335 = vmatprep.subr.bf16.mxu0 0
    %2336 = vmatpush1.bf16.msra.mxu0 0
    %2337 = vmatprep.subr.bf16.mxu0 0
    %2338 = vmatpush1.bf16.msra.mxu0 0
    %2339 = vmatprep.subr.bf16.mxu0 0
    %2340 = vmatpush1.bf16.msra.mxu0 0
    %2341 = vmatprep.subr.bf16.mxu0 0
    %2342 = vmatpush1.bf16.msra.mxu0 %v2323
    %2343 = vmatprep.subr.bf16.mxu0 0
    %2344 = vmatpush1.bf16.msra.mxu0 %v2322
    %2345 = vmatprep.subr.bf16.mxu0 0
    %2346 = vmatpush2.bf16.msra.mxu0 0
    %2347 = vmatprep.subr.bf16.mxu0 0
    %2348 = vmatpush2.bf16.msra.mxu0 0
    %2349 = vmatprep.subr.bf16.mxu0 0
    %2350 = vmatpush2.bf16.msra.mxu0 0
    %2351 = vmatprep.subr.bf16.mxu0 0
    %2352 = vmatpush2.bf16.msra.mxu0 0
    %2353 = vmatprep.subr.bf16.mxu0 0
    %2354 = vmatpush2.bf16.msra.mxu0 0
    %2355 = vmatprep.subr.bf16.mxu0 0
    %2356 = vmatpush2.bf16.msra.mxu0 0
    %2357 = vmatprep.subr.bf16.mxu0 0
    %2358 = vmatpush2.bf16.msra.mxu0 0
    %2359 = vmatprep.subr.bf16.mxu0 0
    %2360 = vmatpush2.bf16.msra.mxu0 0
    %2361 = vmatprep.mubr.bf16.mxu0 0
    %2362 = vmatmul.mubr.bf16.gmra.mxu0 %v2327
    %v2363 = vpop.f32.mrf.mxu0
    %v2364 = vadd.f32 0.0, %v2363
    %v2365 = vpop.f32.mrf.mxu0
    %v2366 = vpop.f32.mrf.mxu0
    %v2367 = vpop.f32.mrf.mxu0
    %2368 = vdwg.mxu0
    %v2369 = vadd.f32 %v2307, %v2364
    %v2370 = vpack.c.bf16 %v995, %v995
    %s2371 = scalar_lea.vmem %s3, 352
    %v2372 = vld [vmem:[%s2371] sm:$0xf]
    %v2373 = vld [vmem:[%s2371 + $0x4] sm:$0xf]
    %v2374 = vld [vmem:[%s2371 + $0x8] sm:$0xf]
    %v2375 = vld [vmem:[%s2371 + $0xc] sm:$0xf]
    %v2380 = vunpack.c.l.b16 %v2372
    %v2381 = vunpack.c.l.b16 %v2373
    %v2382 = vunpack.c.l.b16 %v2374
    %v2383 = vunpack.c.l.b16 %v2375
    %v2384 = vpack.c.b16 %v2381, %v2380
    %v2385 = vpack.c.b16 %v2383, %v2382
    %v2389 = vsel %vm1031, %v2370, 0
    %2391 = vmatprep.subr.bf16.mxu0 0
    %2392 = vmatpush1.bf16.msra.mxu0 0
    %2393 = vmatprep.subr.bf16.mxu0 0
    %2394 = vmatpush1.bf16.msra.mxu0 0
    %2395 = vmatprep.subr.bf16.mxu0 0
    %2396 = vmatpush1.bf16.msra.mxu0 0
    %2397 = vmatprep.subr.bf16.mxu0 0
    %2398 = vmatpush1.bf16.msra.mxu0 0
    %2399 = vmatprep.subr.bf16.mxu0 0
    %2400 = vmatpush1.bf16.msra.mxu0 0
    %2401 = vmatprep.subr.bf16.mxu0 0
    %2402 = vmatpush1.bf16.msra.mxu0 0
    %2403 = vmatprep.subr.bf16.mxu0 0
    %2404 = vmatpush1.bf16.msra.mxu0 %v2385
    %2405 = vmatprep.subr.bf16.mxu0 0
    %2406 = vmatpush1.bf16.msra.mxu0 %v2384
    %2407 = vmatprep.subr.bf16.mxu0 0
    %2408 = vmatpush2.bf16.msra.mxu0 0
    %2409 = vmatprep.subr.bf16.mxu0 0
    %2410 = vmatpush2.bf16.msra.mxu0 0
    %2411 = vmatprep.subr.bf16.mxu0 0
    %2412 = vmatpush2.bf16.msra.mxu0 0
    %2413 = vmatprep.subr.bf16.mxu0 0
    %2414 = vmatpush2.bf16.msra.mxu0 0
    %2415 = vmatprep.subr.bf16.mxu0 0
    %2416 = vmatpush2.bf16.msra.mxu0 0
    %2417 = vmatprep.subr.bf16.mxu0 0
    %2418 = vmatpush2.bf16.msra.mxu0 0
    %2419 = vmatprep.subr.bf16.mxu0 0
    %2420 = vmatpush2.bf16.msra.mxu0 0
    %2421 = vmatprep.subr.bf16.mxu0 0
    %2422 = vmatpush2.bf16.msra.mxu0 0
    %2423 = vmatprep.mubr.bf16.mxu0 0
    %2424 = vmatmul.mubr.bf16.gmra.mxu0 %v2389
    %v2425 = vpop.f32.mrf.mxu0
    %v2426 = vadd.f32 0.0, %v2425
    %v2427 = vpop.f32.mrf.mxu0
    %v2428 = vpop.f32.mrf.mxu0
    %v2429 = vpop.f32.mrf.mxu0
    %2430 = vdwg.mxu0
    %v2431 = vadd.f32 %v2369, %v2426
    %v2432 = vpack.c.bf16 %v998, %v998
    %s2433 = scalar_lea.vmem %s3, 368
    %v2434 = vld [vmem:[%s2433] sm:$0xf]
    %v2435 = vld [vmem:[%s2433 + $0x4] sm:$0xf]
    %v2436 = vld [vmem:[%s2433 + $0x8] sm:$0xf]
    %v2437 = vld [vmem:[%s2433 + $0xc] sm:$0xf]
    %v2442 = vunpack.c.l.b16 %v2434
    %v2443 = vunpack.c.l.b16 %v2435
    %v2444 = vunpack.c.l.b16 %v2436
    %v2445 = vunpack.c.l.b16 %v2437
    %v2446 = vpack.c.b16 %v2443, %v2442
    %v2447 = vpack.c.b16 %v2445, %v2444
    %v2451 = vsel %vm1031, %v2432, 0
    %2453 = vmatprep.subr.bf16.mxu0 0
    %2454 = vmatpush1.bf16.msra.mxu0 0
    %2455 = vmatprep.subr.bf16.mxu0 0
    %2456 = vmatpush1.bf16.msra.mxu0 0
    %2457 = vmatprep.subr.bf16.mxu0 0
    %2458 = vmatpush1.bf16.msra.mxu0 0
    %2459 = vmatprep.subr.bf16.mxu0 0
    %2460 = vmatpush1.bf16.msra.mxu0 0
    %2461 = vmatprep.subr.bf16.mxu0 0
    %2462 = vmatpush1.bf16.msra.mxu0 0
    %2463 = vmatprep.subr.bf16.mxu0 0
    %2464 = vmatpush1.bf16.msra.mxu0 0
    %2465 = vmatprep.subr.bf16.mxu0 0
    %2466 = vmatpush1.bf16.msra.mxu0 %v2447
    %2467 = vmatprep.subr.bf16.mxu0 0
    %2468 = vmatpush1.bf16.msra.mxu0 %v2446
    %2469 = vmatprep.subr.bf16.mxu0 0
    %2470 = vmatpush2.bf16.msra.mxu0 0
    %2471 = vmatprep.subr.bf16.mxu0 0
    %2472 = vmatpush2.bf16.msra.mxu0 0
    %2473 = vmatprep.subr.bf16.mxu0 0
    %2474 = vmatpush2.bf16.msra.mxu0 0
    %2475 = vmatprep.subr.bf16.mxu0 0
    %2476 = vmatpush2.bf16.msra.mxu0 0
    %2477 = vmatprep.subr.bf16.mxu0 0
    %2478 = vmatpush2.bf16.msra.mxu0 0
    %2479 = vmatprep.subr.bf16.mxu0 0
    %2480 = vmatpush2.bf16.msra.mxu0 0
    %2481 = vmatprep.subr.bf16.mxu0 0
    %2482 = vmatpush2.bf16.msra.mxu0 0
    %2483 = vmatprep.subr.bf16.mxu0 0
    %2484 = vmatpush2.bf16.msra.mxu0 0
    %2485 = vmatprep.mubr.bf16.mxu0 0
    %2486 = vmatmul.mubr.bf16.gmra.mxu0 %v2451
    %v2487 = vpop.f32.mrf.mxu0
    %v2488 = vadd.f32 0.0, %v2487
    %v2489 = vpop.f32.mrf.mxu0
    %v2490 = vpop.f32.mrf.mxu0
    %v2491 = vpop.f32.mrf.mxu0
    %2492 = vdwg.mxu0
    %v2493 = vadd.f32 %v2431, %v2488
    %v2494 = vpack.c.bf16 %v1003, %v1003
    %s2495 = scalar_lea.vmem %s3, 384
    %v2496 = vld [vmem:[%s2495] sm:$0xf]
    %v2497 = vld [vmem:[%s2495 + $0x4] sm:$0xf]
    %v2498 = vld [vmem:[%s2495 + $0x8] sm:$0xf]
    %v2499 = vld [vmem:[%s2495 + $0xc] sm:$0xf]
    %v2504 = vunpack.c.l.b16 %v2496
    %v2505 = vunpack.c.l.b16 %v2497
    %v2506 = vunpack.c.l.b16 %v2498
    %v2507 = vunpack.c.l.b16 %v2499
    %v2508 = vpack.c.b16 %v2505, %v2504
    %v2509 = vpack.c.b16 %v2507, %v2506
    %v2513 = vsel %vm1031, %v2494, 0
    %2515 = vmatprep.subr.bf16.mxu0 0
    %2516 = vmatpush1.bf16.msra.mxu0 0
    %2517 = vmatprep.subr.bf16.mxu0 0
    %2518 = vmatpush1.bf16.msra.mxu0 0
    %2519 = vmatprep.subr.bf16.mxu0 0
    %2520 = vmatpush1.bf16.msra.mxu0 0
    %2521 = vmatprep.subr.bf16.mxu0 0
    %2522 = vmatpush1.bf16.msra.mxu0 0
    %2523 = vmatprep.subr.bf16.mxu0 0
    %2524 = vmatpush1.bf16.msra.mxu0 0
    %2525 = vmatprep.subr.bf16.mxu0 0
    %2526 = vmatpush1.bf16.msra.mxu0 0
    %2527 = vmatprep.subr.bf16.mxu0 0
    %2528 = vmatpush1.bf16.msra.mxu0 %v2509
    %2529 = vmatprep.subr.bf16.mxu0 0
    %2530 = vmatpush1.bf16.msra.mxu0 %v2508
    %2531 = vmatprep.subr.bf16.mxu0 0
    %2532 = vmatpush2.bf16.msra.mxu0 0
    %2533 = vmatprep.subr.bf16.mxu0 0
    %2534 = vmatpush2.bf16.msra.mxu0 0
    %2535 = vmatprep.subr.bf16.mxu0 0
    %2536 = vmatpush2.bf16.msra.mxu0 0
    %2537 = vmatprep.subr.bf16.mxu0 0
    %2538 = vmatpush2.bf16.msra.mxu0 0
    %2539 = vmatprep.subr.bf16.mxu0 0
    %2540 = vmatpush2.bf16.msra.mxu0 0
    %2541 = vmatprep.subr.bf16.mxu0 0
    %2542 = vmatpush2.bf16.msra.mxu0 0
    %2543 = vmatprep.subr.bf16.mxu0 0
    %2544 = vmatpush2.bf16.msra.mxu0 0
    %2545 = vmatprep.subr.bf16.mxu0 0
    %2546 = vmatpush2.bf16.msra.mxu0 0
    %2547 = vmatprep.mubr.bf16.mxu0 0
    %2548 = vmatmul.mubr.bf16.gmra.mxu0 %v2513
    %v2549 = vpop.f32.mrf.mxu0
    %v2550 = vadd.f32 0.0, %v2549
    %v2551 = vpop.f32.mrf.mxu0
    %v2552 = vpop.f32.mrf.mxu0
    %v2553 = vpop.f32.mrf.mxu0
    %2554 = vdwg.mxu0
    %v2555 = vadd.f32 %v2493, %v2550
    %v2556 = vld [vmem:[%s5 + $0x3] sm:$0x1]
    %v2557 = vlaneseq
    %v2558 = vshrl.u32 %v2557, 7
    %v2559 = vsub.s32 0, %v2558
    %v2560 = vrot.slane %v2556, %v2559
    %v2561 = vadd.f32 %v2555, %v2560
    %v2562 = vrot.slane %v2561, 4
    %v2563 = vadd.f32 %v2561, %v2562
    %v2564 = vrot.slane %v2563, 2
    %v2565 = vadd.f32 %v2563, %v2564
    %v2566 = vrot.slane %v2565, 1
    %v2567 = vadd.f32 %v2565, %v2566
    %v2568 = vmul.f32 %v2561, %v2561
    %v2569 = vrot.slane %v2568, 4
    %v2570 = vadd.f32 %v2568, %v2569
    %v2571 = vrot.slane %v2570, 2
    %v2572 = vadd.f32 %v2570, %v2571
    %v2573 = vrot.slane %v2572, 1
    %v2574 = vadd.f32 %v2572, %v2573
    %v2575 = vld [vmem:[%s5 + $0x4] sm:$0x1]
    %v2576 = vld [vmem:[%s5 + $0x5] sm:$0x1]
    %v2577 = vmul.f32 %v2567, 0.125
    %v2578 = vmul.f32 %v2574, 0.125
    %v2579 = vmul.f32 %v2577, %v2577
    %v2580 = vsub.f32 %v2578, %v2579
    %v2581 = vmax.f32 %v2580, 0.0
    %v2582 = vadd.f32 %v2581, 1e-05
    %v2583 = vrsqrt.pop %v2582
    %v2584 = vmul.f32 %v2583, %v2575
    %v2585 = vmul.f32 %v2577, %v2584
    %v2586 = vsub.f32 %v2576, %v2585
    %v2587 = vlaneseq
    %v2588 = vshrl.u32 %v2587, 7
    %v2589 = vsub.s32 0, %v2588
    %v2590 = vrot.slane %v2584, %v2589
    %v2591 = vmul.f32 %v2561, %v2590
    %v2592 = vlaneseq
    %v2593 = vshrl.u32 %v2592, 7
    %v2594 = vsub.s32 0, %v2593
    %v2595 = vrot.slane %v2586, %v2594
    %v2596 = vadd.f32 %v2591, %v2595
    %v2597 = vmax.f32 %v2596, 0.0
    %v2598 = vld [vmem:[%s5 + $0x6] sm:$0x1]
    %v2599 = vpack.c.bf16 %v2597, %v2597
    %v2600 = vld [vmem:[%s4] sm:$0xf]
    %v2601 = vld [vmem:[%s4 + $0x4] sm:$0xf]
    %v2602 = vld [vmem:[%s4 + $0x8] sm:$0xf]
    %v2603 = vld [vmem:[%s4 + $0xc] sm:$0xf]
    %v2604 = vld [vmem:[%s4 + $0x10] sm:$0xf]
    %v2605 = vld [vmem:[%s4 + $0x14] sm:$0xf]
    %v2606 = vld [vmem:[%s4 + $0x18] sm:$0xf]
    %v2607 = vld [vmem:[%s4 + $0x1c] sm:$0xf]
    %v2608 = vld [vmem:[%s4 + $0x20] sm:$0xf]
    %v2609 = vld [vmem:[%s4 + $0x24] sm:$0xf]
    %v2610 = vld [vmem:[%s4 + $0x28] sm:$0xf]
    %v2611 = vld [vmem:[%s4 + $0x2c] sm:$0xf]
    %v2612 = vld [vmem:[%s4 + $0x30] sm:$0xf]
    %v2613 = vld [vmem:[%s4 + $0x34] sm:$0xf]
    %v2614 = vld [vmem:[%s4 + $0x38] sm:$0xf]
    %v2615 = vld [vmem:[%s4 + $0x3c] sm:$0xf]
    %s2616 = scalar_lea.vmem %s4, 64
    %v2617 = vld [vmem:[%s2616] sm:$0xf]
    %v2618 = vld [vmem:[%s2616 + $0x4] sm:$0xf]
    %v2619 = vld [vmem:[%s2616 + $0x8] sm:$0xf]
    %v2620 = vld [vmem:[%s2616 + $0xc] sm:$0xf]
    %v2621 = vld [vmem:[%s2616 + $0x10] sm:$0xf]
    %v2622 = vld [vmem:[%s2616 + $0x14] sm:$0xf]
    %v2623 = vld [vmem:[%s2616 + $0x18] sm:$0xf]
    %v2624 = vld [vmem:[%s2616 + $0x1c] sm:$0xf]
    %v2625 = vld [vmem:[%s2616 + $0x20] sm:$0xf]
    %v2626 = vld [vmem:[%s2616 + $0x24] sm:$0xf]
    %v2627 = vld [vmem:[%s2616 + $0x28] sm:$0xf]
    %v2628 = vld [vmem:[%s2616 + $0x2c] sm:$0xf]
    %v2629 = vld [vmem:[%s2616 + $0x30] sm:$0xf]
    %v2630 = vld [vmem:[%s2616 + $0x34] sm:$0xf]
    %v2631 = vld [vmem:[%s2616 + $0x38] sm:$0xf]
    %v2632 = vld [vmem:[%s2616 + $0x3c] sm:$0xf]
    %v2634 = vshrl.u32 %v2599, 16
    %v2653 = vunpack.c.l.b16 %v2617
    %v2654 = vunpack.c.l.b16 %v2618
    %v2655 = vunpack.c.l.b16 %v2619
    %v2656 = vunpack.c.l.b16 %v2620
    %v2657 = vunpack.c.l.b16 %v2621
    %v2658 = vunpack.c.l.b16 %v2622
    %v2659 = vunpack.c.l.b16 %v2623
    %v2660 = vunpack.c.l.b16 %v2624
    %v2661 = vunpack.c.l.b16 %v2625
    %v2662 = vunpack.c.l.b16 %v2626
    %v2663 = vunpack.c.l.b16 %v2627
    %v2664 = vunpack.c.l.b16 %v2628
    %v2665 = vunpack.c.l.b16 %v2629
    %v2666 = vunpack.c.l.b16 %v2630
    %v2667 = vunpack.c.l.b16 %v2631
    %v2668 = vunpack.c.l.b16 %v2632
    %v2669 = vpack.c.b16 %v2654, %v2653
    %v2670 = vpack.c.b16 %v2656, %v2655
    %v2671 = vpack.c.b16 %v2658, %v2657
    %v2672 = vpack.c.b16 %v2660, %v2659
    %v2673 = vpack.c.b16 %v2662, %v2661
    %v2674 = vpack.c.b16 %v2664, %v2663
    %v2675 = vpack.c.b16 %v2666, %v2665
    %v2676 = vpack.c.b16 %v2668, %v2667
    %2685 = vmatprep.subr.bf16.mxu0 0
    %2686 = vmatpush1.bf16.msra.mxu0 %v2676
    %2687 = vmatprep.subr.bf16.mxu0 0
    %2688 = vmatpush1.bf16.msra.mxu0 %v2675
    %2689 = vmatprep.subr.bf16.mxu0 0
    %2690 = vmatpush1.bf16.msra.mxu0 %v2674
    %2691 = vmatprep.subr.bf16.mxu0 0
    %2692 = vmatpush1.bf16.msra.mxu0 %v2673
    %2693 = vmatprep.subr.bf16.mxu0 0
    %2694 = vmatpush1.bf16.msra.mxu0 %v2672
    %2695 = vmatprep.subr.bf16.mxu0 0
    %2696 = vmatpush1.bf16.msra.mxu0 %v2671
    %2697 = vmatprep.subr.bf16.mxu0 0
    %2698 = vmatpush1.bf16.msra.mxu0 %v2670
    %2699 = vmatprep.subr.bf16.mxu0 0
    %2700 = vmatpush1.bf16.msra.mxu0 %v2669
    %2701 = vmatprep.subr.bf16.mxu0 0
    %2702 = vmatpush2.bf16.msra.mxu0 0
    %2703 = vmatprep.subr.bf16.mxu0 0
    %2704 = vmatpush2.bf16.msra.mxu0 0
    %2705 = vmatprep.subr.bf16.mxu0 0
    %2706 = vmatpush2.bf16.msra.mxu0 0
    %2707 = vmatprep.subr.bf16.mxu0 0
    %2708 = vmatpush2.bf16.msra.mxu0 0
    %2709 = vmatprep.subr.bf16.mxu0 0
    %2710 = vmatpush2.bf16.msra.mxu0 0
    %2711 = vmatprep.subr.bf16.mxu0 0
    %2712 = vmatpush2.bf16.msra.mxu0 0
    %2713 = vmatprep.subr.bf16.mxu0 0
    %2714 = vmatpush2.bf16.msra.mxu0 0
    %2715 = vmatprep.subr.bf16.mxu0 0
    %2716 = vmatpush2.bf16.msra.mxu0 0
    %2717 = vmatprep.mubr.bf16.mxu0 0
    %2718 = vmatmul.mubr.bf16.gmra.mxu0 %v2634
    %v2719 = vpop.f32.mrf.mxu0
    %v2720 = vadd.f32 0.0, %v2719
    %v2721 = vpop.f32.mrf.mxu0
    %v2722 = vpop.f32.mrf.mxu0
    %v2723 = vpop.f32.mrf.mxu0
    %2724 = vdwg.mxu0
    %v2741 = vunpack.c.l.b16 %v2600
    %v2742 = vunpack.c.l.b16 %v2601
    %v2743 = vunpack.c.l.b16 %v2602
    %v2744 = vunpack.c.l.b16 %v2603
    %v2745 = vunpack.c.l.b16 %v2604
    %v2746 = vunpack.c.l.b16 %v2605
    %v2747 = vunpack.c.l.b16 %v2606
    %v2748 = vunpack.c.l.b16 %v2607
    %v2749 = vunpack.c.l.b16 %v2608
    %v2750 = vunpack.c.l.b16 %v2609
    %v2751 = vunpack.c.l.b16 %v2610
    %v2752 = vunpack.c.l.b16 %v2611
    %v2753 = vunpack.c.l.b16 %v2612
    %v2754 = vunpack.c.l.b16 %v2613
    %v2755 = vunpack.c.l.b16 %v2614
    %v2756 = vunpack.c.l.b16 %v2615
    %v2757 = vpack.c.b16 %v2742, %v2741
    %v2758 = vpack.c.b16 %v2744, %v2743
    %v2759 = vpack.c.b16 %v2746, %v2745
    %v2760 = vpack.c.b16 %v2748, %v2747
    %v2761 = vpack.c.b16 %v2750, %v2749
    %v2762 = vpack.c.b16 %v2752, %v2751
    %v2763 = vpack.c.b16 %v2754, %v2753
    %v2764 = vpack.c.b16 %v2756, %v2755
    %2773 = vmatprep.subr.bf16.mxu0 0
    %2774 = vmatpush1.bf16.msra.mxu0 %v2764
    %2775 = vmatprep.subr.bf16.mxu0 0
    %2776 = vmatpush1.bf16.msra.mxu0 %v2763
    %2777 = vmatprep.subr.bf16.mxu0 0
    %2778 = vmatpush1.bf16.msra.mxu0 %v2762
    %2779 = vmatprep.subr.bf16.mxu0 0
    %2780 = vmatpush1.bf16.msra.mxu0 %v2761
    %2781 = vmatprep.subr.bf16.mxu0 0
    %2782 = vmatpush1.bf16.msra.mxu0 %v2760
    %2783 = vmatprep.subr.bf16.mxu0 0
    %2784 = vmatpush1.bf16.msra.mxu0 %v2759
    %2785 = vmatprep.subr.bf16.mxu0 0
    %2786 = vmatpush1.bf16.msra.mxu0 %v2758
    %2787 = vmatprep.subr.bf16.mxu0 0
    %2788 = vmatpush1.bf16.msra.mxu0 %v2757
    %2789 = vmatprep.subr.bf16.mxu0 0
    %2790 = vmatpush2.bf16.msra.mxu0 0
    %2791 = vmatprep.subr.bf16.mxu0 0
    %2792 = vmatpush2.bf16.msra.mxu0 0
    %2793 = vmatprep.subr.bf16.mxu0 0
    %2794 = vmatpush2.bf16.msra.mxu0 0
    %2795 = vmatprep.subr.bf16.mxu0 0
    %2796 = vmatpush2.bf16.msra.mxu0 0
    %2797 = vmatprep.subr.bf16.mxu0 0
    %2798 = vmatpush2.bf16.msra.mxu0 0
    %2799 = vmatprep.subr.bf16.mxu0 0
    %2800 = vmatpush2.bf16.msra.mxu0 0
    %2801 = vmatprep.subr.bf16.mxu0 0
    %2802 = vmatpush2.bf16.msra.mxu0 0
    %2803 = vmatprep.subr.bf16.mxu0 0
    %2804 = vmatpush2.bf16.msra.mxu0 0
    %2805 = vmatprep.mubr.bf16.mxu0 0
    %2806 = vmatmul.mubr.bf16.gmra.mxu0 %v2599
    %v2807 = vpop.f32.mrf.mxu0
    %v2808 = vadd.f32 %v2720, %v2807
    %v2809 = vpop.f32.mrf.mxu0
    %v2810 = vpop.f32.mrf.mxu0
    %v2811 = vpop.f32.mrf.mxu0
    %2812 = vdwg.mxu0
    %s2813 = scalar_lea.vmem %s4, 128
    %v2814 = vld [vmem:[%s2813] sm:$0xf]
    %v2815 = vld [vmem:[%s2813 + $0x4] sm:$0xf]
    %v2816 = vld [vmem:[%s2813 + $0x8] sm:$0xf]
    %v2817 = vld [vmem:[%s2813 + $0xc] sm:$0xf]
    %v2818 = vld [vmem:[%s2813 + $0x10] sm:$0xf]
    %v2819 = vld [vmem:[%s2813 + $0x14] sm:$0xf]
    %v2820 = vld [vmem:[%s2813 + $0x18] sm:$0xf]
    %v2821 = vld [vmem:[%s2813 + $0x1c] sm:$0xf]
    %v2822 = vld [vmem:[%s2813 + $0x20] sm:$0xf]
    %v2823 = vld [vmem:[%s2813 + $0x24] sm:$0xf]
    %v2824 = vld [vmem:[%s2813 + $0x28] sm:$0xf]
    %v2825 = vld [vmem:[%s2813 + $0x2c] sm:$0xf]
    %v2826 = vld [vmem:[%s2813 + $0x30] sm:$0xf]
    %v2827 = vld [vmem:[%s2813 + $0x34] sm:$0xf]
    %v2828 = vld [vmem:[%s2813 + $0x38] sm:$0xf]
    %v2829 = vld [vmem:[%s2813 + $0x3c] sm:$0xf]
    %v2831 = vrot.slane %v2599, 1
    %v2849 = vunpack.c.l.b16 %v2814
    %v2850 = vunpack.c.l.b16 %v2815
    %v2851 = vunpack.c.l.b16 %v2816
    %v2852 = vunpack.c.l.b16 %v2817
    %v2853 = vunpack.c.l.b16 %v2818
    %v2854 = vunpack.c.l.b16 %v2819
    %v2855 = vunpack.c.l.b16 %v2820
    %v2856 = vunpack.c.l.b16 %v2821
    %v2857 = vunpack.c.l.b16 %v2822
    %v2858 = vunpack.c.l.b16 %v2823
    %v2859 = vunpack.c.l.b16 %v2824
    %v2860 = vunpack.c.l.b16 %v2825
    %v2861 = vunpack.c.l.b16 %v2826
    %v2862 = vunpack.c.l.b16 %v2827
    %v2863 = vunpack.c.l.b16 %v2828
    %v2864 = vunpack.c.l.b16 %v2829
    %v2865 = vpack.c.b16 %v2850, %v2849
    %v2866 = vpack.c.b16 %v2852, %v2851
    %v2867 = vpack.c.b16 %v2854, %v2853
    %v2868 = vpack.c.b16 %v2856, %v2855
    %v2869 = vpack.c.b16 %v2858, %v2857
    %v2870 = vpack.c.b16 %v2860, %v2859
    %v2871 = vpack.c.b16 %v2862, %v2861
    %v2872 = vpack.c.b16 %v2864, %v2863
    %2881 = vmatprep.subr.bf16.mxu0 0
    %2882 = vmatpush1.bf16.msra.mxu0 %v2872
    %2883 = vmatprep.subr.bf16.mxu0 0
    %2884 = vmatpush1.bf16.msra.mxu0 %v2871
    %2885 = vmatprep.subr.bf16.mxu0 0
    %2886 = vmatpush1.bf16.msra.mxu0 %v2870
    %2887 = vmatprep.subr.bf16.mxu0 0
    %2888 = vmatpush1.bf16.msra.mxu0 %v2869
    %2889 = vmatprep.subr.bf16.mxu0 0
    %2890 = vmatpush1.bf16.msra.mxu0 %v2868
    %2891 = vmatprep.subr.bf16.mxu0 0
    %2892 = vmatpush1.bf16.msra.mxu0 %v2867
    %2893 = vmatprep.subr.bf16.mxu0 0
    %2894 = vmatpush1.bf16.msra.mxu0 %v2866
    %2895 = vmatprep.subr.bf16.mxu0 0
    %2896 = vmatpush1.bf16.msra.mxu0 %v2865
    %2897 = vmatprep.subr.bf16.mxu0 0
    %2898 = vmatpush2.bf16.msra.mxu0 0
    %2899 = vmatprep.subr.bf16.mxu0 0
    %2900 = vmatpush2.bf16.msra.mxu0 0
    %2901 = vmatprep.subr.bf16.mxu0 0
    %2902 = vmatpush2.bf16.msra.mxu0 0
    %2903 = vmatprep.subr.bf16.mxu0 0
    %2904 = vmatpush2.bf16.msra.mxu0 0
    %2905 = vmatprep.subr.bf16.mxu0 0
    %2906 = vmatpush2.bf16.msra.mxu0 0
    %2907 = vmatprep.subr.bf16.mxu0 0
    %2908 = vmatpush2.bf16.msra.mxu0 0
    %2909 = vmatprep.subr.bf16.mxu0 0
    %2910 = vmatpush2.bf16.msra.mxu0 0
    %2911 = vmatprep.subr.bf16.mxu0 0
    %2912 = vmatpush2.bf16.msra.mxu0 0
    %2913 = vmatprep.mubr.bf16.mxu0 0
    %2914 = vmatmul.mubr.bf16.gmra.mxu0 %v2831
    %v2915 = vpop.f32.mrf.mxu0
    %v2916 = vadd.f32 0.0, %v2915
    %v2917 = vpop.f32.mrf.mxu0
    %v2918 = vpop.f32.mrf.mxu0
    %v2919 = vpop.f32.mrf.mxu0
    %2920 = vdwg.mxu0
    %v2921 = vadd.f32 %v2808, %v2916
    %s2922 = scalar_lea.vmem %s4, 192
    %v2923 = vld [vmem:[%s2922] sm:$0xf]
    %v2924 = vld [vmem:[%s2922 + $0x4] sm:$0xf]
    %v2925 = vld [vmem:[%s2922 + $0x8] sm:$0xf]
    %v2926 = vld [vmem:[%s2922 + $0xc] sm:$0xf]
    %v2927 = vld [vmem:[%s2922 + $0x10] sm:$0xf]
    %v2928 = vld [vmem:[%s2922 + $0x14] sm:$0xf]
    %v2929 = vld [vmem:[%s2922 + $0x18] sm:$0xf]
    %v2930 = vld [vmem:[%s2922 + $0x1c] sm:$0xf]
    %v2931 = vld [vmem:[%s2922 + $0x20] sm:$0xf]
    %v2932 = vld [vmem:[%s2922 + $0x24] sm:$0xf]
    %v2933 = vld [vmem:[%s2922 + $0x28] sm:$0xf]
    %v2934 = vld [vmem:[%s2922 + $0x2c] sm:$0xf]
    %v2935 = vld [vmem:[%s2922 + $0x30] sm:$0xf]
    %v2936 = vld [vmem:[%s2922 + $0x34] sm:$0xf]
    %v2937 = vld [vmem:[%s2922 + $0x38] sm:$0xf]
    %v2938 = vld [vmem:[%s2922 + $0x3c] sm:$0xf]
    %v2939 = vrot.slane %v2634, 1
    %v2957 = vunpack.c.l.b16 %v2923
    %v2958 = vunpack.c.l.b16 %v2924
    %v2959 = vunpack.c.l.b16 %v2925
    %v2960 = vunpack.c.l.b16 %v2926
    %v2961 = vunpack.c.l.b16 %v2927
    %v2962 = vunpack.c.l.b16 %v2928
    %v2963 = vunpack.c.l.b16 %v2929
    %v2964 = vunpack.c.l.b16 %v2930
    %v2965 = vunpack.c.l.b16 %v2931
    %v2966 = vunpack.c.l.b16 %v2932
    %v2967 = vunpack.c.l.b16 %v2933
    %v2968 = vunpack.c.l.b16 %v2934
    %v2969 = vunpack.c.l.b16 %v2935
    %v2970 = vunpack.c.l.b16 %v2936
    %v2971 = vunpack.c.l.b16 %v2937
    %v2972 = vunpack.c.l.b16 %v2938
    %v2973 = vpack.c.b16 %v2958, %v2957
    %v2974 = vpack.c.b16 %v2960, %v2959
    %v2975 = vpack.c.b16 %v2962, %v2961
    %v2976 = vpack.c.b16 %v2964, %v2963
    %v2977 = vpack.c.b16 %v2966, %v2965
    %v2978 = vpack.c.b16 %v2968, %v2967
    %v2979 = vpack.c.b16 %v2970, %v2969
    %v2980 = vpack.c.b16 %v2972, %v2971
    %2989 = vmatprep.subr.bf16.mxu0 0
    %2990 = vmatpush1.bf16.msra.mxu0 %v2980
    %2991 = vmatprep.subr.bf16.mxu0 0
    %2992 = vmatpush1.bf16.msra.mxu0 %v2979
    %2993 = vmatprep.subr.bf16.mxu0 0
    %2994 = vmatpush1.bf16.msra.mxu0 %v2978
    %2995 = vmatprep.subr.bf16.mxu0 0
    %2996 = vmatpush1.bf16.msra.mxu0 %v2977
    %2997 = vmatprep.subr.bf16.mxu0 0
    %2998 = vmatpush1.bf16.msra.mxu0 %v2976
    %2999 = vmatprep.subr.bf16.mxu0 0
    %3000 = vmatpush1.bf16.msra.mxu0 %v2975
    %3001 = vmatprep.subr.bf16.mxu0 0
    %3002 = vmatpush1.bf16.msra.mxu0 %v2974
    %3003 = vmatprep.subr.bf16.mxu0 0
    %3004 = vmatpush1.bf16.msra.mxu0 %v2973
    %3005 = vmatprep.subr.bf16.mxu0 0
    %3006 = vmatpush2.bf16.msra.mxu0 0
    %3007 = vmatprep.subr.bf16.mxu0 0
    %3008 = vmatpush2.bf16.msra.mxu0 0
    %3009 = vmatprep.subr.bf16.mxu0 0
    %3010 = vmatpush2.bf16.msra.mxu0 0
    %3011 = vmatprep.subr.bf16.mxu0 0
    %3012 = vmatpush2.bf16.msra.mxu0 0
    %3013 = vmatprep.subr.bf16.mxu0 0
    %3014 = vmatpush2.bf16.msra.mxu0 0
    %3015 = vmatprep.subr.bf16.mxu0 0
    %3016 = vmatpush2.bf16.msra.mxu0 0
    %3017 = vmatprep.subr.bf16.mxu0 0
    %3018 = vmatpush2.bf16.msra.mxu0 0
    %3019 = vmatprep.subr.bf16.mxu0 0
    %3020 = vmatpush2.bf16.msra.mxu0 0
    %3021 = vmatprep.mubr.bf16.mxu0 0
    %3022 = vmatmul.mubr.bf16.gmra.mxu0 %v2939
    %v3023 = vpop.f32.mrf.mxu0
    %v3024 = vadd.f32 0.0, %v3023
    %v3025 = vpop.f32.mrf.mxu0
    %v3026 = vpop.f32.mrf.mxu0
    %v3027 = vpop.f32.mrf.mxu0
    %3028 = vdwg.mxu0
    %v3029 = vadd.f32 %v2921, %v3024
    %v3030 = vadd.f32 %v3029, %v2598
    %vm3031 = vcmask 24576
    %3032 = vst.msk [vmem:[#allocation2] sm:$0x1] %vm3031, %v3030
    %v3033 = vld [vmem:[%s4] sm:$0xf]
    %v3034 = vld [vmem:[%s4 + $0x4] sm:$0xf]
    %v3035 = vld [vmem:[%s4 + $0x8] sm:$0xf]
    %v3036 = vld [vmem:[%s4 + $0xc] sm:$0xf]
    %v3037 = vld [vmem:[%s4 + $0x10] sm:$0xf]
    %v3038 = vld [vmem:[%s4 + $0x14] sm:$0xf]
    %v3039 = vld [vmem:[%s4 + $0x18] sm:$0xf]
    %v3040 = vld [vmem:[%s4 + $0x1c] sm:$0xf]
    %v3041 = vld [vmem:[%s4 + $0x20] sm:$0xf]
    %v3042 = vld [vmem:[%s4 + $0x24] sm:$0xf]
    %v3043 = vld [vmem:[%s4 + $0x28] sm:$0xf]
    %v3044 = vld [vmem:[%s4 + $0x2c] sm:$0xf]
    %v3045 = vld [vmem:[%s4 + $0x30] sm:$0xf]
    %v3046 = vld [vmem:[%s4 + $0x34] sm:$0xf]
    %v3047 = vld [vmem:[%s4 + $0x38] sm:$0xf]
    %v3048 = vld [vmem:[%s4 + $0x3c] sm:$0xf]
    %v3049 = vld [vmem:[%s2616] sm:$0xf]
    %v3050 = vld [vmem:[%s2616 + $0x4] sm:$0xf]
    %v3051 = vld [vmem:[%s2616 + $0x8] sm:$0xf]
    %v3052 = vld [vmem:[%s2616 + $0xc] sm:$0xf]
    %v3053 = vld [vmem:[%s2616 + $0x10] sm:$0xf]
    %v3054 = vld [vmem:[%s2616 + $0x14] sm:$0xf]
    %v3055 = vld [vmem:[%s2616 + $0x18] sm:$0xf]
    %v3056 = vld [vmem:[%s2616 + $0x1c] sm:$0xf]
    %v3057 = vld [vmem:[%s2616 + $0x20] sm:$0xf]
    %v3058 = vld [vmem:[%s2616 + $0x24] sm:$0xf]
    %v3059 = vld [vmem:[%s2616 + $0x28] sm:$0xf]
    %v3060 = vld [vmem:[%s2616 + $0x2c] sm:$0xf]
    %v3061 = vld [vmem:[%s2616 + $0x30] sm:$0xf]
    %v3062 = vld [vmem:[%s2616 + $0x34] sm:$0xf]
    %v3063 = vld [vmem:[%s2616 + $0x38] sm:$0xf]
    %v3064 = vld [vmem:[%s2616 + $0x3c] sm:$0xf]
    %v3065 = vrot.slane %v2634, 2
    %v3083 = vunpack.c.l.b16 %v3049
    %v3084 = vunpack.c.l.b16 %v3050
    %v3085 = vunpack.c.l.b16 %v3051
    %v3086 = vunpack.c.l.b16 %v3052
    %v3087 = vunpack.c.l.b16 %v3053
    %v3088 = vunpack.c.l.b16 %v3054
    %v3089 = vunpack.c.l.b16 %v3055
    %v3090 = vunpack.c.l.b16 %v3056
    %v3091 = vunpack.c.l.b16 %v3057
    %v3092 = vunpack.c.l.b16 %v3058
    %v3093 = vunpack.c.l.b16 %v3059
    %v3094 = vunpack.c.l.b16 %v3060
    %v3095 = vunpack.c.l.b16 %v3061
    %v3096 = vunpack.c.l.b16 %v3062
    %v3097 = vunpack.c.l.b16 %v3063
    %v3098 = vunpack.c.l.b16 %v3064
    %v3099 = vpack.c.b16 %v3084, %v3083
    %v3100 = vpack.c.b16 %v3086, %v3085
    %v3101 = vpack.c.b16 %v3088, %v3087
    %v3102 = vpack.c.b16 %v3090, %v3089
    %v3103 = vpack.c.b16 %v3092, %v3091
    %v3104 = vpack.c.b16 %v3094, %v3093
    %v3105 = vpack.c.b16 %v3096, %v3095
    %v3106 = vpack.c.b16 %v3098, %v3097
    %3115 = vmatprep.subr.bf16.mxu0 0
    %3116 = vmatpush1.bf16.msra.mxu0 %v3106
    %3117 = vmatprep.subr.bf16.mxu0 0
    %3118 = vmatpush1.bf16.msra.mxu0 %v3105
    %3119 = vmatprep.subr.bf16.mxu0 0
    %3120 = vmatpush1.bf16.msra.mxu0 %v3104
    %3121 = vmatprep.subr.bf16.mxu0 0
    %3122 = vmatpush1.bf16.msra.mxu0 %v3103
    %3123 = vmatprep.subr.bf16.mxu0 0
    %3124 = vmatpush1.bf16.msra.mxu0 %v3102
    %3125 = vmatprep.subr.bf16.mxu0 0
    %3126 = vmatpush1.bf16.msra.mxu0 %v3101
    %3127 = vmatprep.subr.bf16.mxu0 0
    %3128 = vmatpush1.bf16.msra.mxu0 %v3100
    %3129 = vmatprep.subr.bf16.mxu0 0
    %3130 = vmatpush1.bf16.msra.mxu0 %v3099
    %3131 = vmatprep.subr.bf16.mxu0 0
    %3132 = vmatpush2.bf16.msra.mxu0 0
    %3133 = vmatprep.subr.bf16.mxu0 0
    %3134 = vmatpush2.bf16.msra.mxu0 0
    %3135 = vmatprep.subr.bf16.mxu0 0
    %3136 = vmatpush2.bf16.msra.mxu0 0
    %3137 = vmatprep.subr.bf16.mxu0 0
    %3138 = vmatpush2.bf16.msra.mxu0 0
    %3139 = vmatprep.subr.bf16.mxu0 0
    %3140 = vmatpush2.bf16.msra.mxu0 0
    %3141 = vmatprep.subr.bf16.mxu0 0
    %3142 = vmatpush2.bf16.msra.mxu0 0
    %3143 = vmatprep.subr.bf16.mxu0 0
    %3144 = vmatpush2.bf16.msra.mxu0 0
    %3145 = vmatprep.subr.bf16.mxu0 0
    %3146 = vmatpush2.bf16.msra.mxu0 0
    %3147 = vmatprep.mubr.bf16.mxu0 0
    %3148 = vmatmul.mubr.bf16.gmra.mxu0 %v3065
    %v3149 = vpop.f32.mrf.mxu0
    %v3150 = vadd.f32 0.0, %v3149
    %v3151 = vpop.f32.mrf.mxu0
    %v3152 = vpop.f32.mrf.mxu0
    %v3153 = vpop.f32.mrf.mxu0
    %3154 = vdwg.mxu0
    %v3155 = vrot.slane %v2599, 2
    %v3173 = vunpack.c.l.b16 %v3033
    %v3174 = vunpack.c.l.b16 %v3034
    %v3175 = vunpack.c.l.b16 %v3035
    %v3176 = vunpack.c.l.b16 %v3036
    %v3177 = vunpack.c.l.b16 %v3037
    %v3178 = vunpack.c.l.b16 %v3038
    %v3179 = vunpack.c.l.b16 %v3039
    %v3180 = vunpack.c.l.b16 %v3040
    %v3181 = vunpack.c.l.b16 %v3041
    %v3182 = vunpack.c.l.b16 %v3042
    %v3183 = vunpack.c.l.b16 %v3043
    %v3184 = vunpack.c.l.b16 %v3044
    %v3185 = vunpack.c.l.b16 %v3045
    %v3186 = vunpack.c.l.b16 %v3046
    %v3187 = vunpack.c.l.b16 %v3047
    %v3188 = vunpack.c.l.b16 %v3048
    %v3189 = vpack.c.b16 %v3174, %v3173
    %v3190 = vpack.c.b16 %v3176, %v3175
    %v3191 = vpack.c.b16 %v3178, %v3177
    %v3192 = vpack.c.b16 %v3180, %v3179
    %v3193 = vpack.c.b16 %v3182, %v3181
    %v3194 = vpack.c.b16 %v3184, %v3183
    %v3195 = vpack.c.b16 %v3186, %v3185
    %v3196 = vpack.c.b16 %v3188, %v3187
    %3205 = vmatprep.subr.bf16.mxu0 0
    %3206 = vmatpush1.bf16.msra.mxu0 %v3196
    %3207 = vmatprep.subr.bf16.mxu0 0
    %3208 = vmatpush1.bf16.msra.mxu0 %v3195
    %3209 = vmatprep.subr.bf16.mxu0 0
    %3210 = vmatpush1.bf16.msra.mxu0 %v3194
    %3211 = vmatprep.subr.bf16.mxu0 0
    %3212 = vmatpush1.bf16.msra.mxu0 %v3193
    %3213 = vmatprep.subr.bf16.mxu0 0
    %3214 = vmatpush1.bf16.msra.mxu0 %v3192
    %3215 = vmatprep.subr.bf16.mxu0 0
    %3216 = vmatpush1.bf16.msra.mxu0 %v3191
    %3217 = vmatprep.subr.bf16.mxu0 0
    %3218 = vmatpush1.bf16.msra.mxu0 %v3190
    %3219 = vmatprep.subr.bf16.mxu0 0
    %3220 = vmatpush1.bf16.msra.mxu0 %v3189
    %3221 = vmatprep.subr.bf16.mxu0 0
    %3222 = vmatpush2.bf16.msra.mxu0 0
    %3223 = vmatprep.subr.bf16.mxu0 0
    %3224 = vmatpush2.bf16.msra.mxu0 0
    %3225 = vmatprep.subr.bf16.mxu0 0
    %3226 = vmatpush2.bf16.msra.mxu0 0
    %3227 = vmatprep.subr.bf16.mxu0 0
    %3228 = vmatpush2.bf16.msra.mxu0 0
    %3229 = vmatprep.subr.bf16.mxu0 0
    %3230 = vmatpush2.bf16.msra.mxu0 0
    %3231 = vmatprep.subr.bf16.mxu0 0
    %3232 = vmatpush2.bf16.msra.mxu0 0
    %3233 = vmatprep.subr.bf16.mxu0 0
    %3234 = vmatpush2.bf16.msra.mxu0 0
    %3235 = vmatprep.subr.bf16.mxu0 0
    %3236 = vmatpush2.bf16.msra.mxu0 0
    %3237 = vmatprep.mubr.bf16.mxu0 0
    %3238 = vmatmul.mubr.bf16.gmra.mxu0 %v3155
    %v3239 = vpop.f32.mrf.mxu0
    %v3240 = vadd.f32 %v3150, %v3239
    %v3241 = vpop.f32.mrf.mxu0
    %v3242 = vpop.f32.mrf.mxu0
    %v3243 = vpop.f32.mrf.mxu0
    %3244 = vdwg.mxu0
    %v3245 = vld [vmem:[%s2813] sm:$0xf]
    %v3246 = vld [vmem:[%s2813 + $0x4] sm:$0xf]
    %v3247 = vld [vmem:[%s2813 + $0x8] sm:$0xf]
    %v3248 = vld [vmem:[%s2813 + $0xc] sm:$0xf]
    %v3249 = vld [vmem:[%s2813 + $0x10] sm:$0xf]
    %v3250 = vld [vmem:[%s2813 + $0x14] sm:$0xf]
    %v3251 = vld [vmem:[%s2813 + $0x18] sm:$0xf]
    %v3252 = vld [vmem:[%s2813 + $0x1c] sm:$0xf]
    %v3253 = vld [vmem:[%s2813 + $0x20] sm:$0xf]
    %v3254 = vld [vmem:[%s2813 + $0x24] sm:$0xf]
    %v3255 = vld [vmem:[%s2813 + $0x28] sm:$0xf]
    %v3256 = vld [vmem:[%s2813 + $0x2c] sm:$0xf]
    %v3257 = vld [vmem:[%s2813 + $0x30] sm:$0xf]
    %v3258 = vld [vmem:[%s2813 + $0x34] sm:$0xf]
    %v3259 = vld [vmem:[%s2813 + $0x38] sm:$0xf]
    %v3260 = vld [vmem:[%s2813 + $0x3c] sm:$0xf]
    %v3261 = vrot.slane %v2599, 3
    %v3279 = vunpack.c.l.b16 %v3245
    %v3280 = vunpack.c.l.b16 %v3246
    %v3281 = vunpack.c.l.b16 %v3247
    %v3282 = vunpack.c.l.b16 %v3248
    %v3283 = vunpack.c.l.b16 %v3249
    %v3284 = vunpack.c.l.b16 %v3250
    %v3285 = vunpack.c.l.b16 %v3251
    %v3286 = vunpack.c.l.b16 %v3252
    %v3287 = vunpack.c.l.b16 %v3253
    %v3288 = vunpack.c.l.b16 %v3254
    %v3289 = vunpack.c.l.b16 %v3255
    %v3290 = vunpack.c.l.b16 %v3256
    %v3291 = vunpack.c.l.b16 %v3257
    %v3292 = vunpack.c.l.b16 %v3258
    %v3293 = vunpack.c.l.b16 %v3259
    %v3294 = vunpack.c.l.b16 %v3260
    %v3295 = vpack.c.b16 %v3280, %v3279
    %v3296 = vpack.c.b16 %v3282, %v3281
    %v3297 = vpack.c.b16 %v3284, %v3283
    %v3298 = vpack.c.b16 %v3286, %v3285
    %v3299 = vpack.c.b16 %v3288, %v3287
    %v3300 = vpack.c.b16 %v3290, %v3289
    %v3301 = vpack.c.b16 %v3292, %v3291
    %v3302 = vpack.c.b16 %v3294, %v3293
    %3311 = vmatprep.subr.bf16.mxu0 0
    %3312 = vmatpush1.bf16.msra.mxu0 %v3302
    %3313 = vmatprep.subr.bf16.mxu0 0
    %3314 = vmatpush1.bf16.msra.mxu0 %v3301
    %3315 = vmatprep.subr.bf16.mxu0 0
    %3316 = vmatpush1.bf16.msra.mxu0 %v3300
    %3317 = vmatprep.subr.bf16.mxu0 0
    %3318 = vmatpush1.bf16.msra.mxu0 %v3299
    %3319 = vmatprep.subr.bf16.mxu0 0
    %3320 = vmatpush1.bf16.msra.mxu0 %v3298
    %3321 = vmatprep.subr.bf16.mxu0 0
    %3322 = vmatpush1.bf16.msra.mxu0 %v3297
    %3323 = vmatprep.subr.bf16.mxu0 0
    %3324 = vmatpush1.bf16.msra.mxu0 %v3296
    %3325 = vmatprep.subr.bf16.mxu0 0
    %3326 = vmatpush1.bf16.msra.mxu0 %v3295
    %3327 = vmatprep.subr.bf16.mxu0 0
    %3328 = vmatpush2.bf16.msra.mxu0 0
    %3329 = vmatprep.subr.bf16.mxu0 0
    %3330 = vmatpush2.bf16.msra.mxu0 0
    %3331 = vmatprep.subr.bf16.mxu0 0
    %3332 = vmatpush2.bf16.msra.mxu0 0
    %3333 = vmatprep.subr.bf16.mxu0 0
    %3334 = vmatpush2.bf16.msra.mxu0 0
    %3335 = vmatprep.subr.bf16.mxu0 0
    %3336 = vmatpush2.bf16.msra.mxu0 0
    %3337 = vmatprep.subr.bf16.mxu0 0
    %3338 = vmatpush2.bf16.msra.mxu0 0
    %3339 = vmatprep.subr.bf16.mxu0 0
    %3340 = vmatpush2.bf16.msra.mxu0 0
    %3341 = vmatprep.subr.bf16.mxu0 0
    %3342 = vmatpush2.bf16.msra.mxu0 0
    %3343 = vmatprep.mubr.bf16.mxu0 0
    %3344 = vmatmul.mubr.bf16.gmra.mxu0 %v3261
    %v3345 = vpop.f32.mrf.mxu0
    %v3346 = vadd.f32 0.0, %v3345
    %v3347 = vpop.f32.mrf.mxu0
    %v3348 = vpop.f32.mrf.mxu0
    %v3349 = vpop.f32.mrf.mxu0
    %3350 = vdwg.mxu0
    %v3351 = vadd.f32 %v3240, %v3346
    %v3352 = vld [vmem:[%s2922] sm:$0xf]
    %v3353 = vld [vmem:[%s2922 + $0x4] sm:$0xf]
    %v3354 = vld [vmem:[%s2922 + $0x8] sm:$0xf]
    %v3355 = vld [vmem:[%s2922 + $0xc] sm:$0xf]
    %v3356 = vld [vmem:[%s2922 + $0x10] sm:$0xf]
    %v3357 = vld [vmem:[%s2922 + $0x14] sm:$0xf]
    %v3358 = vld [vmem:[%s2922 + $0x18] sm:$0xf]
    %v3359 = vld [vmem:[%s2922 + $0x1c] sm:$0xf]
    %v3360 = vld [vmem:[%s2922 + $0x20] sm:$0xf]
    %v3361 = vld [vmem:[%s2922 + $0x24] sm:$0xf]
    %v3362 = vld [vmem:[%s2922 + $0x28] sm:$0xf]
    %v3363 = vld [vmem:[%s2922 + $0x2c] sm:$0xf]
    %v3364 = vld [vmem:[%s2922 + $0x30] sm:$0xf]
    %v3365 = vld [vmem:[%s2922 + $0x34] sm:$0xf]
    %v3366 = vld [vmem:[%s2922 + $0x38] sm:$0xf]
    %v3367 = vld [vmem:[%s2922 + $0x3c] sm:$0xf]
    %v3368 = vrot.slane %v2634, 3
    %v3386 = vunpack.c.l.b16 %v3352
    %v3387 = vunpack.c.l.b16 %v3353
    %v3388 = vunpack.c.l.b16 %v3354
    %v3389 = vunpack.c.l.b16 %v3355
    %v3390 = vunpack.c.l.b16 %v3356
    %v3391 = vunpack.c.l.b16 %v3357
    %v3392 = vunpack.c.l.b16 %v3358
    %v3393 = vunpack.c.l.b16 %v3359
    %v3394 = vunpack.c.l.b16 %v3360
    %v3395 = vunpack.c.l.b16 %v3361
    %v3396 = vunpack.c.l.b16 %v3362
    %v3397 = vunpack.c.l.b16 %v3363
    %v3398 = vunpack.c.l.b16 %v3364
    %v3399 = vunpack.c.l.b16 %v3365
    %v3400 = vunpack.c.l.b16 %v3366
    %v3401 = vunpack.c.l.b16 %v3367
    %v3402 = vpack.c.b16 %v3387, %v3386
    %v3403 = vpack.c.b16 %v3389, %v3388
    %v3404 = vpack.c.b16 %v3391, %v3390
    %v3405 = vpack.c.b16 %v3393, %v3392
    %v3406 = vpack.c.b16 %v3395, %v3394
    %v3407 = vpack.c.b16 %v3397, %v3396
    %v3408 = vpack.c.b16 %v3399, %v3398
    %v3409 = vpack.c.b16 %v3401, %v3400
    %3418 = vmatprep.subr.bf16.mxu0 0
    %3419 = vmatpush1.bf16.msra.mxu0 %v3409
    %3420 = vmatprep.subr.bf16.mxu0 0
    %3421 = vmatpush1.bf16.msra.mxu0 %v3408
    %3422 = vmatprep.subr.bf16.mxu0 0
    %3423 = vmatpush1.bf16.msra.mxu0 %v3407
    %3424 = vmatprep.subr.bf16.mxu0 0
    %3425 = vmatpush1.bf16.msra.mxu0 %v3406
    %3426 = vmatprep.subr.bf16.mxu0 0
    %3427 = vmatpush1.bf16.msra.mxu0 %v3405
    %3428 = vmatprep.subr.bf16.mxu0 0
    %3429 = vmatpush1.bf16.msra.mxu0 %v3404
    %3430 = vmatprep.subr.bf16.mxu0 0
    %3431 = vmatpush1.bf16.msra.mxu0 %v3403
    %3432 = vmatprep.subr.bf16.mxu0 0
    %3433 = vmatpush1.bf16.msra.mxu0 %v3402
    %3434 = vmatprep.subr.bf16.mxu0 0
    %3435 = vmatpush2.bf16.msra.mxu0 0
    %3436 = vmatprep.subr.bf16.mxu0 0
    %3437 = vmatpush2.bf16.msra.mxu0 0
    %3438 = vmatprep.subr.bf16.mxu0 0
    %3439 = vmatpush2.bf16.msra.mxu0 0
    %3440 = vmatprep.subr.bf16.mxu0 0
    %3441 = vmatpush2.bf16.msra.mxu0 0
    %3442 = vmatprep.subr.bf16.mxu0 0
    %3443 = vmatpush2.bf16.msra.mxu0 0
    %3444 = vmatprep.subr.bf16.mxu0 0
    %3445 = vmatpush2.bf16.msra.mxu0 0
    %3446 = vmatprep.subr.bf16.mxu0 0
    %3447 = vmatpush2.bf16.msra.mxu0 0
    %3448 = vmatprep.subr.bf16.mxu0 0
    %3449 = vmatpush2.bf16.msra.mxu0 0
    %3450 = vmatprep.mubr.bf16.mxu0 0
    %3451 = vmatmul.mubr.bf16.gmra.mxu0 %v3368
    %v3452 = vpop.f32.mrf.mxu0
    %v3453 = vadd.f32 0.0, %v3452
    %v3454 = vpop.f32.mrf.mxu0
    %v3455 = vpop.f32.mrf.mxu0
    %v3456 = vpop.f32.mrf.mxu0
    %3457 = vdwg.mxu0
    %v3458 = vadd.f32 %v3351, %v3453
    %v3459 = vadd.f32 %v3458, %v2598
    %3460 = vst.msk [vmem:[#allocation2 + $0x1] sm:$0x1] %vm3031, %v3459
    // Predicated region
    $region26: #{dqn_forward.3} parent=1 // pred_check
      _
    $region27: #{dqn_forward.3} parent=1 // pred_check_branch
      %3462 = sbr.rel (0) target = $region29
    $region28: #{dqn_forward.3} parent=1 // pred_region
      %s3464 = ssub.s32 32, 32
      %3465 = vsyncadd [#allocation3], %s3464
      %s3467 = sshll.u32 [#allocation2], 4
      %s3468 = int_to_ptr.vmem [resolvable:$true] %s3467
      %3470 = dma.vmem_to_hbm [thread:$0]  %s3468, 32, %s6, [#allocation3]
    $region29: #{dqn_forward.3} parent=1 // pred_fallthru
      _
    // Predicated region
    $region30: #{dqn_forward.3} parent=1 // pred_check
      _
    $region31: #{dqn_forward.3} parent=1 // pred_check_branch
      %3472 = sbr.rel (0) target = $region33
    $region32: #{dqn_forward.3} parent=1 // pred_region
      %3473 = dma.done [#allocation3], 32
    $region33: #{dqn_forward.3} parent=1 // pred_fallthru
      _
    %3474 = vsyncpa [#allocation3], 1

</llo_original>
